<compile_context>
chip_gen: v7x
topology: tpu7x:2x2x1
jax: 0.10.0
libtpu: 0.0.40
codegen_flags: <defaults>
</compile_context>

<pallas_src>
import functools

import jax
import jax.numpy as jnp
from jax import lax
from jax.experimental import pallas as pl
from jax.experimental.pallas import tpu as pltpu

BN_EPS = 1e-5
CP = 128          # lane-padded channel width (keeps VPU ops / stores lane-dense)


# --------------------------------------------------------------------------
# in-kernel helpers
# --------------------------------------------------------------------------
def _conv3x3_halo(xpad, w_ref, H, W):
    """3x3 'SAME' conv of one spatially halo-padded image.

    xpad:  (H+2, W+2, CP) value in the matmul dtype (zero halo already applied).
    w_ref: (9, CP, CP) ref, taps stacked tap-major (k = 3*ky + kx), cin x cout.
    Returns (H*W, CP) f32: 9 accumulating MXU matmuls, no materialized patch.
    """
    acc = None
    for ky in range(3):
        for kx in range(3):
            tap = xpad[ky:ky + H, kx:kx + W, :].reshape(H * W, xpad.shape[-1])
            p = jnp.dot(tap, w_ref[3 * ky + kx],
                        preferred_element_type=jnp.float32)
            acc = p if acc is None else acc + p
    return acc


# --------------------------------------------------------------------------
# kernels
# --------------------------------------------------------------------------
def _conv1_stats_kernel(x_ref, w_ref, y_ref, psum_ref, pssq_ref, *, H, W):
    y = _conv3x3_halo(x_ref[0], w_ref, H, W)               # (HW, CP) f32
    y_ref[0] = y.astype(y_ref.dtype)
    psum_ref[0] = jnp.sum(y, axis=0, keepdims=True)
    pssq_ref[0] = jnp.sum(y * y, axis=0, keepdims=True)


def _bn_relu_conv_stats_kernel(scale_ref, shift_ref, y_in_ref, w_ref,
                               y_ref, psum_ref, pssq_ref, hpad_ref, *, H, W):
    # BN1 (precomputed per-channel scale/shift) + ReLU, in f32.
    h = jnp.maximum(
        y_in_ref[0].astype(jnp.float32) * scale_ref[...] + shift_ref[...], 0.0)
    # conv2's padding=1 zero-pads conv2's *input*, i.e. the post-BN-ReLU
    # activation -> build the zero halo in VMEM scratch each step.
    hpad_ref[...] = jnp.zeros(hpad_ref.shape, hpad_ref.dtype)
    hpad_ref[1:H + 1, 1:W + 1, :] = h.reshape(H, W, CP).astype(hpad_ref.dtype)
    y = _conv3x3_halo(hpad_ref[...], w_ref, H, W)           # (HW, CP) f32
    y_ref[0] = y.astype(y_ref.dtype)
    psum_ref[0] = jnp.sum(y, axis=0, keepdims=True)
    pssq_ref[0] = jnp.sum(y * y, axis=0, keepdims=True)


def _bn_relu_kernel(scale_ref, shift_ref, y_in_ref, o_ref):
    o_ref[0] = jnp.maximum(
        y_in_ref[0].astype(jnp.float32) * scale_ref[...] + shift_ref[...], 0.0)


# --------------------------------------------------------------------------
# wrapper
# --------------------------------------------------------------------------
def _vmem_limit_bytes():
    """Per-generation scoped-VMEM limit (64 MiB physical on v7x, 128 on v5e/v6e)."""
    try:
        cap = int(getattr(pltpu.get_tpu_info(), "vmem_capacity_bytes",
                          128 * 1024 * 1024))
    except Exception:
        cap = 128 * 1024 * 1024
    return min(100 * 1024 * 1024, (cap * 3) // 4)


@functools.partial(jax.jit, static_argnames=("use_bf16_matmul", "store_bf16"))
def double_conv_forward(x, params, *, use_bf16_matmul=True, store_bf16=True):
    """x: (N, Cin, H, W) f32 (NCHW, like PyTorch).  Returns (N, Cout, H, W) f32."""
    w1, g1, b1, w2, g2, b2 = params
    N, Cin, H, W = x.shape
    Cmid, Cout = w1.shape[0], w2.shape[0]
    assert max(Cin, Cmid, Cout) <= CP, "add a channel-block grid axis for C>128"
    HW = H * W
    count = N * HW
    mm_dtype = jnp.bfloat16 if use_bf16_matmul else jnp.float32
    act_dtype = jnp.bfloat16 if store_bf16 else jnp.float32

    # ---- layout glue (XLA): NCHW -> spatially halo-padded, lane-padded NHWC ----
    xp = jnp.transpose(x, (0, 2, 3, 1))
    xp = jnp.pad(xp, ((0, 0), (1, 1), (1, 1), (0, CP - Cin))).astype(mm_dtype)

    def pack_w(w):                    # (Co, Ci, 3, 3) -> (9, CP, CP), k = 3*ky+kx
        co, ci = w.shape[0], w.shape[1]
        wk = jnp.transpose(w, (2, 3, 1, 0)).reshape(9, ci, co)
        wk = jnp.pad(wk, ((0, 0), (0, CP - ci), (0, CP - co)))
        return wk.astype(mm_dtype)

    def pack_c(v):                    # (C,) -> (1, CP)
        return jnp.pad(v.reshape(1, -1), ((0, 0), (0, CP - v.shape[0])))

    def bn_scale_shift(psum, pssq, gamma_p, beta_p):
        # Exact batch statistics (biased var over N,H,W), reduced ONCE in XLA.
        mean = jnp.sum(psum, axis=0) / count                  # (1, CP)
        ex2 = jnp.sum(pssq, axis=0) / count
        var = jnp.maximum(ex2 - mean * mean, 0.0)
        scale = gamma_p * lax.rsqrt(var + BN_EPS)             # 0 on padded lanes
        shift = beta_p - mean * scale
        return scale, shift

    w1k, w2k = pack_w(w1), pack_w(w2)
    g1p, b1p, g2p, b2p = pack_c(g1), pack_c(b1), pack_c(g2), pack_c(b2)

    grid = (N,)
    cparams = pltpu.CompilerParams(
        dimension_semantics=("parallel",),       # batch steps are independent
        vmem_limit_bytes=_vmem_limit_bytes())

    xpad_spec = pl.BlockSpec((1, H + 2, W + 2, CP), lambda i: (i, 0, 0, 0))
    act_spec = pl.BlockSpec((1, HW, CP), lambda i: (i, 0, 0))
    stat_spec = pl.BlockSpec((1, 1, CP), lambda i: (i, 0, 0))

    def full_spec(shape):
        return pl.BlockSpec(shape, lambda i: (0,) * len(shape))

    act_shape = jax.ShapeDtypeStruct((N, HW, CP), act_dtype)
    stat_shape = jax.ShapeDtypeStruct((N, 1, CP), jnp.float32)
    act_bytes = 2 if store_bf16 else 4
    mm_bytes = 2 if use_bf16_matmul else 4
    conv_cost = pl.CostEstimate(
        flops=2 * N * HW * 9 * CP * CP,
        transcendentals=0,
        bytes_accessed=N * HW * CP * (mm_bytes + act_bytes)
        + 9 * CP * CP * mm_bytes)

    # ---- pass 1: conv1 + per-step per-channel partial sums ----
    y1, ps1, pss1 = pl.pallas_call(
        functools.partial(_conv1_stats_kernel, H=H, W=W),
        grid=grid,
        in_specs=[xpad_spec, full_spec((9, CP, CP))],
        out_specs=(act_spec, stat_spec, stat_spec),
        out_shape=(act_shape, stat_shape, stat_shape),
        compiler_params=cparams,
        cost_estimate=conv_cost,
    )(xp, w1k)

    scale1, shift1 = bn_scale_shift(ps1, pss1, g1p, b1p)

    # ---- pass 2: BN1 + ReLU + conv2 + partial sums ----
    y2, ps2, pss2 = pl.pallas_call(
        functools.partial(_bn_relu_conv_stats_kernel, H=H, W=W),
        grid=grid,
        in_specs=[full_spec((1, CP)), full_spec((1, CP)),
                  act_spec, full_spec((9, CP, CP))],
        out_specs=(act_spec, stat_spec, stat_spec),
        out_shape=(act_shape, stat_shape, stat_shape),
        scratch_shapes=[pltpu.VMEM((H + 2, W + 2, CP), mm_dtype)],
        compiler_params=cparams,
        cost_estimate=conv_cost,
    )(scale1, shift1, y1, w2k)

    scale2, shift2 = bn_scale_shift(ps2, pss2, g2p, b2p)

    # ---- pass 3: BN2 + ReLU ----
    out_p = pl.pallas_call(
        _bn_relu_kernel,
        grid=grid,
        in_specs=[full_spec((1, CP)), full_spec((1, CP)), act_spec],
        out_specs=act_spec,
        out_shape=jax.ShapeDtypeStruct((N, HW, CP), jnp.float32),
        compiler_params=cparams,
        cost_estimate=pl.CostEstimate(
            flops=3 * N * HW * CP, transcendentals=0,
            bytes_accessed=N * HW * CP * (act_bytes + 4)),
    )(scale2, shift2, y2)

    # back to NCHW like the PyTorch module (wrapper-side XLA glue).
    out = out_p[:, :, :Cout].reshape(N, H, W, Cout)
    return jnp.transpose(out, (0, 3, 1, 2))


# --------------------------------------------------------------------------
# pure-JAX reference (module semantics; mirrors the kernel's precision policy)
# --------------------------------------------------------------------------
def double_conv_reference(x, params, *, mm_dtype=jnp.float32,
                          store_dtype=jnp.float32):
    w1, g1, b1, w2, g2, b2 = params
    h = jnp.transpose(x, (0, 2, 3, 1))

    def conv_bn_relu(h, w, g, b):
        wk = jnp.transpose(w, (2, 3, 1, 0))                   # HWIO
        y = lax.conv_general_dilated(
            h.astype(mm_dtype), wk.astype(mm_dtype), (1, 1), 'SAME',
            dimension_numbers=('NHWC', 'HWIO', 'NHWC'),
            preferred_element_type=jnp.float32)
        mu = y.mean(axis=(0, 1, 2))                            # stats in f32
        var = ((y - mu) ** 2).mean(axis=(0, 1, 2))             # biased var
        yq = y.astype(store_dtype).astype(jnp.float32)         # inter-pass store
        return jnp.maximum(g * (yq - mu) * lax.rsqrt(var + BN_EPS) + b, 0.0)

    h = conv_bn_relu(h, w1, g1, b1)
    h = conv_bn_relu(h, w2, g2, b2)
    return jnp.transpose(h, (0, 3, 1, 2))


if __name__ == "__main__":
    key = jax.random.PRNGKey(0)
    N, Cin, H, W = 2, 4, 16, 16
    Cmid = Cout = 8

    k_x, k_w1, k_w2 = jax.random.split(key, 3)
    x = jax.random.normal(k_x, (N, Cin, H, W), jnp.float32)
    w1 = jax.random.normal(k_w1, (Cmid, Cin, 3, 3), jnp.float32) * (2.0 / (Cin * 9)) ** 0.5
    w2 = jax.random.normal(k_w2, (Cout, Cmid, 3, 3), jnp.float32) * (2.0 / (Cmid * 9)) ** 0.5
    g1 = jnp.ones((Cmid,), jnp.float32)
    b1 = jnp.zeros((Cmid,), jnp.float32)
    g2 = jnp.ones((Cout,), jnp.float32)
    b2 = jnp.zeros((Cout,), jnp.float32)
    params = (w1, g1, b1, w2, g2, b2)

    # Exact-precision path: matches the PyTorch module's f32 numerics.
    out_f32 = jax.block_until_ready(
        double_conv_forward(x, params, use_bf16_matmul=False, store_bf16=False))
    ref_f32 = jax.block_until_ready(double_conv_reference(x, params))
    assert out_f32.shape == (N, Cout, H, W), out_f32.shape
    err_f32 = float(jnp.max(jnp.abs(out_f32 - ref_f32)))
    assert err_f32 < 2e-3, f"f32 path mismatch vs reference: {err_f32}"

    # Perf path (default): bf16 MXU operands + bf16 inter-pass activations,
    # with f32 accumulation and f32 BN statistics.  Compared against a
    # reference applying the identical operand/storage quantization.
    out_perf = jax.block_until_ready(double_conv_forward(x, params))
    ref_perf = jax.block_until_ready(double_conv_reference(
        x, params, mm_dtype=jnp.bfloat16, store_dtype=jnp.bfloat16))
    err_perf = float(jnp.max(jnp.abs(out_perf - ref_perf)))
    assert err_perf < 1e-2, f"bf16 path mismatch vs bf16 reference: {err_perf}"

    print("KERNEL_OK")
</pallas_src>

<mosaic_0001>
module attributes {stable_mosaic.version = 11 : i64} {
  func.func @_conv1_stats_kernel(%arg0: i32, %arg1: memref<1x18x18x128xf32, #tpu.memory_space<vmem>>, %arg2: memref<9x128x128xf32, #tpu.memory_space<vmem>>, %arg3: memref<1x256x128xf32, #tpu.memory_space<vmem>>, %arg4: memref<1x1x128xf32, #tpu.memory_space<vmem>>, %arg5: memref<1x1x128xf32, #tpu.memory_space<vmem>>) attributes {dimension_semantics = [#tpu.dimension_semantics<parallel>], iteration_bounds = array<i64: 2>, scalar_prefetch = 0 : i64, scratch_operands = 0 : i64, tpu.core_type = #tpu.core_type<tc>, window_params = [{transform_indices = @transform_0, window_bounds = array<i64: 1, 18, 18, 128>}, {pipeline_mode = #tpu.pipeline_mode<synchronous>, transform_indices = @transform_1, window_bounds = array<i64: 9, 128, 128>}, {transform_indices = @transform_2, window_bounds = array<i64: 1, 256, 128>}, {transform_indices = @transform_3, window_bounds = array<i64: 1, 1, 128>}, {transform_indices = @transform_4, window_bounds = array<i64: 1, 1, 128>}]} {
    %c0 = arith.constant 0 : index
    %c0_0 = arith.constant 0 : index
    %c0_1 = arith.constant 0 : index
    %c0_2 = arith.constant 0 : index
    %0 = vector.load %arg1[%c0, %c0_0, %c0_1, %c0_2] : memref<1x18x18x128xf32, #tpu.memory_space<vmem>>, vector<1x18x18x128xf32>
    %1 = vector.shape_cast %0 : vector<1x18x18x128xf32> to vector<18x18x128xf32>
    %2 = vector.extract_strided_slice %1 {offsets = [0, 0, 0], sizes = [16, 16, 128], strides = [1, 1, 1]} : vector<18x18x128xf32> to vector<16x16x128xf32>
    %3 = vector.shape_cast %2 : vector<16x16x128xf32> to vector<256x128xf32>
    %c0_3 = arith.constant 0 : index
    %c0_4 = arith.constant 0 : index
    %c0_5 = arith.constant 0 : index
    %4 = vector.load %arg2[%c0_3, %c0_4, %c0_5] : memref<9x128x128xf32, #tpu.memory_space<vmem>>, vector<1x128x128xf32>
    %5 = vector.shape_cast %4 : vector<1x128x128xf32> to vector<128x128xf32>
    %cst = arith.constant dense<0.000000e+00> : vector<256x128xf32>
    %6 = tpu.matmul %3, %5, %cst {dimension_numbers = #tpu.dot_dimension_numbers<[1], [0], [0], [1], [0, 0, 1, 1], [], []>} : vector<256x128xf32>, vector<128x128xf32>, vector<256x128xf32> -> vector<256x128xf32>
    %7 = vector.extract_strided_slice %1 {offsets = [0, 1, 0], sizes = [16, 16, 128], strides = [1, 1, 1]} : vector<18x18x128xf32> to vector<16x16x128xf32>
    %8 = vector.shape_cast %7 : vector<16x16x128xf32> to vector<256x128xf32>
    %c1 = arith.constant 1 : index
    %c0_6 = arith.constant 0 : index
    %c0_7 = arith.constant 0 : index
    %9 = vector.load %arg2[%c1, %c0_6, %c0_7] : memref<9x128x128xf32, #tpu.memory_space<vmem>>, vector<1x128x128xf32>
    %10 = vector.shape_cast %9 : vector<1x128x128xf32> to vector<128x128xf32>
    %cst_8 = arith.constant dense<0.000000e+00> : vector<256x128xf32>
    %11 = tpu.matmul %8, %10, %cst_8 {dimension_numbers = #tpu.dot_dimension_numbers<[1], [0], [0], [1], [0, 0, 1, 1], [], []>} : vector<256x128xf32>, vector<128x128xf32>, vector<256x128xf32> -> vector<256x128xf32>
    %12 = arith.addf %6, %11 : vector<256x128xf32>
    %13 = vector.extract_strided_slice %1 {offsets = [0, 2, 0], sizes = [16, 16, 128], strides = [1, 1, 1]} : vector<18x18x128xf32> to vector<16x16x128xf32>
    %14 = vector.shape_cast %13 : vector<16x16x128xf32> to vector<256x128xf32>
    %c2 = arith.constant 2 : index
    %c0_9 = arith.constant 0 : index
    %c0_10 = arith.constant 0 : index
    %15 = vector.load %arg2[%c2, %c0_9, %c0_10] : memref<9x128x128xf32, #tpu.memory_space<vmem>>, vector<1x128x128xf32>
    %16 = vector.shape_cast %15 : vector<1x128x128xf32> to vector<128x128xf32>
    %cst_11 = arith.constant dense<0.000000e+00> : vector<256x128xf32>
    %17 = tpu.matmul %14, %16, %cst_11 {dimension_numbers = #tpu.dot_dimension_numbers<[1], [0], [0], [1], [0, 0, 1, 1], [], []>} : vector<256x128xf32>, vector<128x128xf32>, vector<256x128xf32> -> vector<256x128xf32>
    %18 = arith.addf %12, %17 : vector<256x128xf32>
    %19 = vector.extract_strided_slice %1 {offsets = [1, 0, 0], sizes = [16, 16, 128], strides = [1, 1, 1]} : vector<18x18x128xf32> to vector<16x16x128xf32>
    %20 = vector.shape_cast %19 : vector<16x16x128xf32> to vector<256x128xf32>
    %c3 = arith.constant 3 : index
    %c0_12 = arith.constant 0 : index
    %c0_13 = arith.constant 0 : index
    %21 = vector.load %arg2[%c3, %c0_12, %c0_13] : memref<9x128x128xf32, #tpu.memory_space<vmem>>, vector<1x128x128xf32>
    %22 = vector.shape_cast %21 : vector<1x128x128xf32> to vector<128x128xf32>
    %cst_14 = arith.constant dense<0.000000e+00> : vector<256x128xf32>
    %23 = tpu.matmul %20, %22, %cst_14 {dimension_numbers = #tpu.dot_dimension_numbers<[1], [0], [0], [1], [0, 0, 1, 1], [], []>} : vector<256x128xf32>, vector<128x128xf32>, vector<256x128xf32> -> vector<256x128xf32>
    %24 = arith.addf %18, %23 : vector<256x128xf32>
    %25 = vector.extract_strided_slice %1 {offsets = [1, 1, 0], sizes = [16, 16, 128], strides = [1, 1, 1]} : vector<18x18x128xf32> to vector<16x16x128xf32>
    %26 = vector.shape_cast %25 : vector<16x16x128xf32> to vector<256x128xf32>
    %c4 = arith.constant 4 : index
    %c0_15 = arith.constant 0 : index
    %c0_16 = arith.constant 0 : index
    %27 = vector.load %arg2[%c4, %c0_15, %c0_16] : memref<9x128x128xf32, #tpu.memory_space<vmem>>, vector<1x128x128xf32>
    %28 = vector.shape_cast %27 : vector<1x128x128xf32> to vector<128x128xf32>
    %cst_17 = arith.constant dense<0.000000e+00> : vector<256x128xf32>
    %29 = tpu.matmul %26, %28, %cst_17 {dimension_numbers = #tpu.dot_dimension_numbers<[1], [0], [0], [1], [0, 0, 1, 1], [], []>} : vector<256x128xf32>, vector<128x128xf32>, vector<256x128xf32> -> vector<256x128xf32>
    %30 = arith.addf %24, %29 : vector<256x128xf32>
    %31 = vector.extract_strided_slice %1 {offsets = [1, 2, 0], sizes = [16, 16, 128], strides = [1, 1, 1]} : vector<18x18x128xf32> to vector<16x16x128xf32>
    %32 = vector.shape_cast %31 : vector<16x16x128xf32> to vector<256x128xf32>
    %c5 = arith.constant 5 : index
    %c0_18 = arith.constant 0 : index
    %c0_19 = arith.constant 0 : index
    %33 = vector.load %arg2[%c5, %c0_18, %c0_19] : memref<9x128x128xf32, #tpu.memory_space<vmem>>, vector<1x128x128xf32>
    %34 = vector.shape_cast %33 : vector<1x128x128xf32> to vector<128x128xf32>
    %cst_20 = arith.constant dense<0.000000e+00> : vector<256x128xf32>
    %35 = tpu.matmul %32, %34, %cst_20 {dimension_numbers = #tpu.dot_dimension_numbers<[1], [0], [0], [1], [0, 0, 1, 1], [], []>} : vector<256x128xf32>, vector<128x128xf32>, vector<256x128xf32> -> vector<256x128xf32>
    %36 = arith.addf %30, %35 : vector<256x128xf32>
    %37 = vector.extract_strided_slice %1 {offsets = [2, 0, 0], sizes = [16, 16, 128], strides = [1, 1, 1]} : vector<18x18x128xf32> to vector<16x16x128xf32>
    %38 = vector.shape_cast %37 : vector<16x16x128xf32> to vector<256x128xf32>
    %c6 = arith.constant 6 : index
    %c0_21 = arith.constant 0 : index
    %c0_22 = arith.constant 0 : index
    %39 = vector.load %arg2[%c6, %c0_21, %c0_22] : memref<9x128x128xf32, #tpu.memory_space<vmem>>, vector<1x128x128xf32>
    %40 = vector.shape_cast %39 : vector<1x128x128xf32> to vector<128x128xf32>
    %cst_23 = arith.constant dense<0.000000e+00> : vector<256x128xf32>
    %41 = tpu.matmul %38, %40, %cst_23 {dimension_numbers = #tpu.dot_dimension_numbers<[1], [0], [0], [1], [0, 0, 1, 1], [], []>} : vector<256x128xf32>, vector<128x128xf32>, vector<256x128xf32> -> vector<256x128xf32>
    %42 = arith.addf %36, %41 : vector<256x128xf32>
    %43 = vector.extract_strided_slice %1 {offsets = [2, 1, 0], sizes = [16, 16, 128], strides = [1, 1, 1]} : vector<18x18x128xf32> to vector<16x16x128xf32>
    %44 = vector.shape_cast %43 : vector<16x16x128xf32> to vector<256x128xf32>
    %c7 = arith.constant 7 : index
    %c0_24 = arith.constant 0 : index
    %c0_25 = arith.constant 0 : index
    %45 = vector.load %arg2[%c7, %c0_24, %c0_25] : memref<9x128x128xf32, #tpu.memory_space<vmem>>, vector<1x128x128xf32>
    %46 = vector.shape_cast %45 : vector<1x128x128xf32> to vector<128x128xf32>
    %cst_26 = arith.constant dense<0.000000e+00> : vector<256x128xf32>
    %47 = tpu.matmul %44, %46, %cst_26 {dimension_numbers = #tpu.dot_dimension_numbers<[1], [0], [0], [1], [0, 0, 1, 1], [], []>} : vector<256x128xf32>, vector<128x128xf32>, vector<256x128xf32> -> vector<256x128xf32>
    %48 = arith.addf %42, %47 : vector<256x128xf32>
    %49 = vector.extract_strided_slice %1 {offsets = [2, 2, 0], sizes = [16, 16, 128], strides = [1, 1, 1]} : vector<18x18x128xf32> to vector<16x16x128xf32>
    %50 = vector.shape_cast %49 : vector<16x16x128xf32> to vector<256x128xf32>
    %c8 = arith.constant 8 : index
    %c0_27 = arith.constant 0 : index
    %c0_28 = arith.constant 0 : index
    %51 = vector.load %arg2[%c8, %c0_27, %c0_28] : memref<9x128x128xf32, #tpu.memory_space<vmem>>, vector<1x128x128xf32>
    %52 = vector.shape_cast %51 : vector<1x128x128xf32> to vector<128x128xf32>
    %cst_29 = arith.constant dense<0.000000e+00> : vector<256x128xf32>
    %53 = tpu.matmul %50, %52, %cst_29 {dimension_numbers = #tpu.dot_dimension_numbers<[1], [0], [0], [1], [0, 0, 1, 1], [], []>} : vector<256x128xf32>, vector<128x128xf32>, vector<256x128xf32> -> vector<256x128xf32>
    %54 = arith.addf %48, %53 : vector<256x128xf32>
    %c0_30 = arith.constant 0 : index
    %c0_31 = arith.constant 0 : index
    %c0_32 = arith.constant 0 : index
    %55 = vector.load %arg3[%c0_30, %c0_31, %c0_32] : memref<1x256x128xf32, #tpu.memory_space<vmem>>, vector<1x256x128xf32>
    %56 = vector.shape_cast %55 : vector<1x256x128xf32> to vector<256x128xf32>
    %57 = vector.shape_cast %54 : vector<256x128xf32> to vector<1x256x128xf32>
    tpu.vector_store %arg3[%c0_30, %c0_31, %c0_32], %57 {strides = array<i32>} : memref<1x256x128xf32, #tpu.memory_space<vmem>>, vector<1x256x128xf32>,
    %cst_33 = arith.constant dense<0.000000e+00> : vector<128xf32>
    %58 = vector.multi_reduction <add>, %54, %cst_33 [0] : vector<256x128xf32> to vector<128xf32>
    %59 = vector.shape_cast %58 : vector<128xf32> to vector<1x128xf32>
    %c0_34 = arith.constant 0 : index
    %c0_35 = arith.constant 0 : index
    %c0_36 = arith.constant 0 : index
    %60 = vector.load %arg4[%c0_34, %c0_35, %c0_36] : memref<1x1x128xf32, #tpu.memory_space<vmem>>, vector<1x1x128xf32>
    %61 = vector.shape_cast %60 : vector<1x1x128xf32> to vector<1x128xf32>
    %62 = vector.shape_cast %59 : vector<1x128xf32> to vector<1x1x128xf32>
    tpu.vector_store %arg4[%c0_34, %c0_35, %c0_36], %62 {strides = array<i32>} : memref<1x1x128xf32, #tpu.memory_space<vmem>>, vector<1x1x128xf32>,
    %63 = arith.mulf %54, %54 : vector<256x128xf32>
    %cst_37 = arith.constant dense<0.000000e+00> : vector<128xf32>
    %64 = vector.multi_reduction <add>, %63, %cst_37 [0] : vector<256x128xf32> to vector<128xf32>
    %65 = vector.shape_cast %64 : vector<128xf32> to vector<1x128xf32>
    %c0_38 = arith.constant 0 : index
    %c0_39 = arith.constant 0 : index
    %c0_40 = arith.constant 0 : index
    %66 = vector.load %arg5[%c0_38, %c0_39, %c0_40] : memref<1x1x128xf32, #tpu.memory_space<vmem>>, vector<1x1x128xf32>
    %67 = vector.shape_cast %66 : vector<1x1x128xf32> to vector<1x128xf32>
    %68 = vector.shape_cast %65 : vector<1x128xf32> to vector<1x1x128xf32>
    tpu.vector_store %arg5[%c0_38, %c0_39, %c0_40], %68 {strides = array<i32>} : memref<1x1x128xf32, #tpu.memory_space<vmem>>, vector<1x1x128xf32>,
    return
  }
  func.func @transform_0(%arg0: i32) -> (i32, i32, i32, i32) {
    %c0_i32 = arith.constant 0 : i32
    %c0_i32_0 = arith.constant 0 : i32
    %c0_i32_1 = arith.constant 0 : i32
    %c0_i32_2 = arith.constant 0 : i32
    return %arg0, %c0_i32, %c0_i32_0, %c0_i32_1 : i32, i32, i32, i32
  }
  func.func @transform_1(%arg0: i32) -> (i32, i32, i32) {
    %c0_i32 = arith.constant 0 : i32
    %c0_i32_0 = arith.constant 0 : i32
    %c0_i32_1 = arith.constant 0 : i32
    %c0_i32_2 = arith.constant 0 : i32
    return %c0_i32, %c0_i32_0, %c0_i32_1 : i32, i32, i32
  }
  func.func @transform_2(%arg0: i32) -> (i32, i32, i32) {
    %c0_i32 = arith.constant 0 : i32
    %c0_i32_0 = arith.constant 0 : i32
    %c0_i32_1 = arith.constant 0 : i32
    return %arg0, %c0_i32, %c0_i32_0 : i32, i32, i32
  }
  func.func @transform_3(%arg0: i32) -> (i32, i32, i32) {
    %c0_i32 = arith.constant 0 : i32
    %c0_i32_0 = arith.constant 0 : i32
    %c0_i32_1 = arith.constant 0 : i32
    return %arg0, %c0_i32, %c0_i32_0 : i32, i32, i32
  }
  func.func @transform_4(%arg0: i32) -> (i32, i32, i32) {
    %c0_i32 = arith.constant 0 : i32
    %c0_i32_0 = arith.constant 0 : i32
    %c0_i32_1 = arith.constant 0 : i32
    return %arg0, %c0_i32, %c0_i32_0 : i32, i32, i32
  }
}

module attributes {stable_mosaic.version = 11 : i64} {
  func.func @_bn_relu_kernel(%arg0: i32, %arg1: memref<1x128xf32, #tpu.memory_space<vmem>>, %arg2: memref<1x128xf32, #tpu.memory_space<vmem>>, %arg3: memref<1x256x128xf32, #tpu.memory_space<vmem>>, %arg4: memref<1x256x128xf32, #tpu.memory_space<vmem>>) attributes {dimension_semantics = [#tpu.dimension_semantics<parallel>], iteration_bounds = array<i64: 2>, scalar_prefetch = 0 : i64, scratch_operands = 0 : i64, tpu.core_type = #tpu.core_type<tc>, window_params = [{pipeline_mode = #tpu.pipeline_mode<synchronous>, transform_indices = @transform_0, window_bounds = array<i64: 1, 128>}, {pipeline_mode = #tpu.pipeline_mode<synchronous>, transform_indices = @transform_1, window_bounds = array<i64: 1, 128>}, {transform_indices = @transform_2, window_bounds = array<i64: 1, 256, 128>}, {transform_indices = @transform_3, window_bounds = array<i64: 1, 256, 128>}]} {
    %c0 = arith.constant 0 : index
    %c0_0 = arith.constant 0 : index
    %c0_1 = arith.constant 0 : index
    %0 = vector.load %arg3[%c0, %c0_0, %c0_1] : memref<1x256x128xf32, #tpu.memory_space<vmem>>, vector<1x256x128xf32>
    %1 = vector.shape_cast %0 : vector<1x256x128xf32> to vector<256x128xf32>
    %c0_2 = arith.constant 0 : index
    %c0_3 = arith.constant 0 : index
    %2 = vector.load %arg1[%c0_2, %c0_3] : memref<1x128xf32, #tpu.memory_space<vmem>>, vector<1x128xf32>
    %3 = vector.broadcast %2 : vector<1x128xf32> to vector<256x128xf32>
    %4 = arith.mulf %1, %3 : vector<256x128xf32>
    %c0_4 = arith.constant 0 : index
    %c0_5 = arith.constant 0 : index
    %5 = vector.load %arg2[%c0_4, %c0_5] : memref<1x128xf32, #tpu.memory_space<vmem>>, vector<1x128xf32>
    %6 = vector.broadcast %5 : vector<1x128xf32> to vector<256x128xf32>
    %7 = arith.addf %4, %6 : vector<256x128xf32>
    %cst = arith.constant 0.000000e+00 : f32
    %8 = vector.broadcast %cst : f32 to vector<256x128xf32>
    %9 = arith.maximumf %7, %8 : vector<256x128xf32>
    %c0_6 = arith.constant 0 : index
    %c0_7 = arith.constant 0 : index
    %c0_8 = arith.constant 0 : index
    %10 = vector.load %arg4[%c0_6, %c0_7, %c0_8] : memref<1x256x128xf32, #tpu.memory_space<vmem>>, vector<1x256x128xf32>
    %11 = vector.shape_cast %10 : vector<1x256x128xf32> to vector<256x128xf32>
    %12 = vector.shape_cast %9 : vector<256x128xf32> to vector<1x256x128xf32>
    tpu.vector_store %arg4[%c0_6, %c0_7, %c0_8], %12 {strides = array<i32>} : memref<1x256x128xf32, #tpu.memory_space<vmem>>, vector<1x256x128xf32>,
    return
  }
  func.func @transform_0(%arg0: i32) -> (i32, i32) {
    %c0_i32 = arith.constant 0 : i32
    %c0_i32_0 = arith.constant 0 : i32
    %c0_i32_1 = arith.constant 0 : i32
    return %c0_i32, %c0_i32_0 : i32, i32
  }
  func.func @transform_1(%arg0: i32) -> (i32, i32) {
    %c0_i32 = arith.constant 0 : i32
    %c0_i32_0 = arith.constant 0 : i32
    %c0_i32_1 = arith.constant 0 : i32
    return %c0_i32, %c0_i32_0 : i32, i32
  }
  func.func @transform_2(%arg0: i32) -> (i32, i32, i32) {
    %c0_i32 = arith.constant 0 : i32
    %c0_i32_0 = arith.constant 0 : i32
    %c0_i32_1 = arith.constant 0 : i32
    return %arg0, %c0_i32, %c0_i32_0 : i32, i32, i32
  }
  func.func @transform_3(%arg0: i32) -> (i32, i32, i32) {
    %c0_i32 = arith.constant 0 : i32
    %c0_i32_0 = arith.constant 0 : i32
    %c0_i32_1 = arith.constant 0 : i32
    return %arg0, %c0_i32, %c0_i32_0 : i32, i32, i32
  }
}

module attributes {stable_mosaic.version = 11 : i64} {
  func.func @_bn_relu_conv_stats_kernel(%arg0: i32, %arg1: memref<1x128xf32, #tpu.memory_space<vmem>>, %arg2: memref<1x128xf32, #tpu.memory_space<vmem>>, %arg3: memref<1x256x128xf32, #tpu.memory_space<vmem>>, %arg4: memref<9x128x128xf32, #tpu.memory_space<vmem>>, %arg5: memref<1x256x128xf32, #tpu.memory_space<vmem>>, %arg6: memref<1x1x128xf32, #tpu.memory_space<vmem>>, %arg7: memref<1x1x128xf32, #tpu.memory_space<vmem>>, %arg8: memref<18x18x128xf32, #tpu.memory_space<vmem>>) attributes {dimension_semantics = [#tpu.dimension_semantics<parallel>], iteration_bounds = array<i64: 2>, scalar_prefetch = 0 : i64, scratch_operands = 1 : i64, tpu.core_type = #tpu.core_type<tc>, window_params = [{pipeline_mode = #tpu.pipeline_mode<synchronous>, transform_indices = @transform_0, window_bounds = array<i64: 1, 128>}, {pipeline_mode = #tpu.pipeline_mode<synchronous>, transform_indices = @transform_1, window_bounds = array<i64: 1, 128>}, {transform_indices = @transform_2, window_bounds = array<i64: 1, 256, 128>}, {pipeline_mode = #tpu.pipeline_mode<synchronous>, transform_indices = @transform_3, window_bounds = array<i64: 9, 128, 128>}, {transform_indices = @transform_4, window_bounds = array<i64: 1, 256, 128>}, {transform_indices = @transform_5, window_bounds = array<i64: 1, 1, 128>}, {transform_indices = @transform_6, window_bounds = array<i64: 1, 1, 128>}]} {
    %c0 = arith.constant 0 : index
    %c0_0 = arith.constant 0 : index
    %c0_1 = arith.constant 0 : index
    %0 = vector.load %arg3[%c0, %c0_0, %c0_1] : memref<1x256x128xf32, #tpu.memory_space<vmem>>, vector<1x256x128xf32>
    %1 = vector.shape_cast %0 : vector<1x256x128xf32> to vector<256x128xf32>
    %c0_2 = arith.constant 0 : index
    %c0_3 = arith.constant 0 : index
    %2 = vector.load %arg1[%c0_2, %c0_3] : memref<1x128xf32, #tpu.memory_space<vmem>>, vector<1x128xf32>
    %3 = vector.broadcast %2 : vector<1x128xf32> to vector<256x128xf32>
    %4 = arith.mulf %1, %3 : vector<256x128xf32>
    %c0_4 = arith.constant 0 : index
    %c0_5 = arith.constant 0 : index
    %5 = vector.load %arg2[%c0_4, %c0_5] : memref<1x128xf32, #tpu.memory_space<vmem>>, vector<1x128xf32>
    %6 = vector.broadcast %5 : vector<1x128xf32> to vector<256x128xf32>
    %7 = arith.addf %4, %6 : vector<256x128xf32>
    %cst = arith.constant 0.000000e+00 : f32
    %8 = vector.broadcast %cst : f32 to vector<256x128xf32>
    %9 = arith.maximumf %7, %8 : vector<256x128xf32>
    %cst_6 = arith.constant 0.000000e+00 : f32
    %10 = vector.broadcast %cst_6 : f32 to vector<18x18x128xf32>
    %c0_7 = arith.constant 0 : index
    %c0_8 = arith.constant 0 : index
    %c0_9 = arith.constant 0 : index
    %11 = vector.load %arg8[%c0_7, %c0_8, %c0_9] : memref<18x18x128xf32, #tpu.memory_space<vmem>>, vector<18x18x128xf32>
    tpu.vector_store %arg8[%c0_7, %c0_8, %c0_9], %10 {strides = array<i32>} : memref<18x18x128xf32, #tpu.memory_space<vmem>>, vector<18x18x128xf32>,
    %12 = vector.shape_cast %9 : vector<256x128xf32> to vector<16x16x128xf32>
    %c1 = arith.constant 1 : index
    %c1_10 = arith.constant 1 : index
    %c0_11 = arith.constant 0 : index
    %13 = vector.load %arg8[%c1, %c1_10, %c0_11] : memref<18x18x128xf32, #tpu.memory_space<vmem>>, vector<16x16x128xf32>
    tpu.vector_store %arg8[%c1, %c1_10, %c0_11], %12 {strides = array<i32>} : memref<18x18x128xf32, #tpu.memory_space<vmem>>, vector<16x16x128xf32>,
    %c0_12 = arith.constant 0 : index
    %c0_13 = arith.constant 0 : index
    %c0_14 = arith.constant 0 : index
    %14 = vector.load %arg8[%c0_12, %c0_13, %c0_14] : memref<18x18x128xf32, #tpu.memory_space<vmem>>, vector<18x18x128xf32>
    %15 = vector.extract_strided_slice %14 {offsets = [0, 0, 0], sizes = [16, 16, 128], strides = [1, 1, 1]} : vector<18x18x128xf32> to vector<16x16x128xf32>
    %16 = vector.shape_cast %15 : vector<16x16x128xf32> to vector<256x128xf32>
    %c0_15 = arith.constant 0 : index
    %c0_16 = arith.constant 0 : index
    %c0_17 = arith.constant 0 : index
    %17 = vector.load %arg4[%c0_15, %c0_16, %c0_17] : memref<9x128x128xf32, #tpu.memory_space<vmem>>, vector<1x128x128xf32>
    %18 = vector.shape_cast %17 : vector<1x128x128xf32> to vector<128x128xf32>
    %cst_18 = arith.constant dense<0.000000e+00> : vector<256x128xf32>
    %19 = tpu.matmul %16, %18, %cst_18 {dimension_numbers = #tpu.dot_dimension_numbers<[1], [0], [0], [1], [0, 0, 1, 1], [], []>} : vector<256x128xf32>, vector<128x128xf32>, vector<256x128xf32> -> vector<256x128xf32>
    %20 = vector.extract_strided_slice %14 {offsets = [0, 1, 0], sizes = [16, 16, 128], strides = [1, 1, 1]} : vector<18x18x128xf32> to vector<16x16x128xf32>
    %21 = vector.shape_cast %20 : vector<16x16x128xf32> to vector<256x128xf32>
    %c1_19 = arith.constant 1 : index
    %c0_20 = arith.constant 0 : index
    %c0_21 = arith.constant 0 : index
    %22 = vector.load %arg4[%c1_19, %c0_20, %c0_21] : memref<9x128x128xf32, #tpu.memory_space<vmem>>, vector<1x128x128xf32>
    %23 = vector.shape_cast %22 : vector<1x128x128xf32> to vector<128x128xf32>
    %cst_22 = arith.constant dense<0.000000e+00> : vector<256x128xf32>
    %24 = tpu.matmul %21, %23, %cst_22 {dimension_numbers = #tpu.dot_dimension_numbers<[1], [0], [0], [1], [0, 0, 1, 1], [], []>} : vector<256x128xf32>, vector<128x128xf32>, vector<256x128xf32> -> vector<256x128xf32>
    %25 = arith.addf %19, %24 : vector<256x128xf32>
    %26 = vector.extract_strided_slice %14 {offsets = [0, 2, 0], sizes = [16, 16, 128], strides = [1, 1, 1]} : vector<18x18x128xf32> to vector<16x16x128xf32>
    %27 = vector.shape_cast %26 : vector<16x16x128xf32> to vector<256x128xf32>
    %c2 = arith.constant 2 : index
    %c0_23 = arith.constant 0 : index
    %c0_24 = arith.constant 0 : index
    %28 = vector.load %arg4[%c2, %c0_23, %c0_24] : memref<9x128x128xf32, #tpu.memory_space<vmem>>, vector<1x128x128xf32>
    %29 = vector.shape_cast %28 : vector<1x128x128xf32> to vector<128x128xf32>
    %cst_25 = arith.constant dense<0.000000e+00> : vector<256x128xf32>
    %30 = tpu.matmul %27, %29, %cst_25 {dimension_numbers = #tpu.dot_dimension_numbers<[1], [0], [0], [1], [0, 0, 1, 1], [], []>} : vector<256x128xf32>, vector<128x128xf32>, vector<256x128xf32> -> vector<256x128xf32>
    %31 = arith.addf %25, %30 : vector<256x128xf32>
    %32 = vector.extract_strided_slice %14 {offsets = [1, 0, 0], sizes = [16, 16, 128], strides = [1, 1, 1]} : vector<18x18x128xf32> to vector<16x16x128xf32>
    %33 = vector.shape_cast %32 : vector<16x16x128xf32> to vector<256x128xf32>
    %c3 = arith.constant 3 : index
    %c0_26 = arith.constant 0 : index
    %c0_27 = arith.constant 0 : index
    %34 = vector.load %arg4[%c3, %c0_26, %c0_27] : memref<9x128x128xf32, #tpu.memory_space<vmem>>, vector<1x128x128xf32>
    %35 = vector.shape_cast %34 : vector<1x128x128xf32> to vector<128x128xf32>
    %cst_28 = arith.constant dense<0.000000e+00> : vector<256x128xf32>
    %36 = tpu.matmul %33, %35, %cst_28 {dimension_numbers = #tpu.dot_dimension_numbers<[1], [0], [0], [1], [0, 0, 1, 1], [], []>} : vector<256x128xf32>, vector<128x128xf32>, vector<256x128xf32> -> vector<256x128xf32>
    %37 = arith.addf %31, %36 : vector<256x128xf32>
    %38 = vector.extract_strided_slice %14 {offsets = [1, 1, 0], sizes = [16, 16, 128], strides = [1, 1, 1]} : vector<18x18x128xf32> to vector<16x16x128xf32>
    %39 = vector.shape_cast %38 : vector<16x16x128xf32> to vector<256x128xf32>
    %c4 = arith.constant 4 : index
    %c0_29 = arith.constant 0 : index
    %c0_30 = arith.constant 0 : index
    %40 = vector.load %arg4[%c4, %c0_29, %c0_30] : memref<9x128x128xf32, #tpu.memory_space<vmem>>, vector<1x128x128xf32>
    %41 = vector.shape_cast %40 : vector<1x128x128xf32> to vector<128x128xf32>
    %cst_31 = arith.constant dense<0.000000e+00> : vector<256x128xf32>
    %42 = tpu.matmul %39, %41, %cst_31 {dimension_numbers = #tpu.dot_dimension_numbers<[1], [0], [0], [1], [0, 0, 1, 1], [], []>} : vector<256x128xf32>, vector<128x128xf32>, vector<256x128xf32> -> vector<256x128xf32>
    %43 = arith.addf %37, %42 : vector<256x128xf32>
    %44 = vector.extract_strided_slice %14 {offsets = [1, 2, 0], sizes = [16, 16, 128], strides = [1, 1, 1]} : vector<18x18x128xf32> to vector<16x16x128xf32>
    %45 = vector.shape_cast %44 : vector<16x16x128xf32> to vector<256x128xf32>
    %c5 = arith.constant 5 : index
    %c0_32 = arith.constant 0 : index
    %c0_33 = arith.constant 0 : index
    %46 = vector.load %arg4[%c5, %c0_32, %c0_33] : memref<9x128x128xf32, #tpu.memory_space<vmem>>, vector<1x128x128xf32>
    %47 = vector.shape_cast %46 : vector<1x128x128xf32> to vector<128x128xf32>
    %cst_34 = arith.constant dense<0.000000e+00> : vector<256x128xf32>
    %48 = tpu.matmul %45, %47, %cst_34 {dimension_numbers = #tpu.dot_dimension_numbers<[1], [0], [0], [1], [0, 0, 1, 1], [], []>} : vector<256x128xf32>, vector<128x128xf32>, vector<256x128xf32> -> vector<256x128xf32>
    %49 = arith.addf %43, %48 : vector<256x128xf32>
    %50 = vector.extract_strided_slice %14 {offsets = [2, 0, 0], sizes = [16, 16, 128], strides = [1, 1, 1]} : vector<18x18x128xf32> to vector<16x16x128xf32>
    %51 = vector.shape_cast %50 : vector<16x16x128xf32> to vector<256x128xf32>
    %c6 = arith.constant 6 : index
    %c0_35 = arith.constant 0 : index
    %c0_36 = arith.constant 0 : index
    %52 = vector.load %arg4[%c6, %c0_35, %c0_36] : memref<9x128x128xf32, #tpu.memory_space<vmem>>, vector<1x128x128xf32>
    %53 = vector.shape_cast %52 : vector<1x128x128xf32> to vector<128x128xf32>
    %cst_37 = arith.constant dense<0.000000e+00> : vector<256x128xf32>
    %54 = tpu.matmul %51, %53, %cst_37 {dimension_numbers = #tpu.dot_dimension_numbers<[1], [0], [0], [1], [0, 0, 1, 1], [], []>} : vector<256x128xf32>, vector<128x128xf32>, vector<256x128xf32> -> vector<256x128xf32>
    %55 = arith.addf %49, %54 : vector<256x128xf32>
    %56 = vector.extract_strided_slice %14 {offsets = [2, 1, 0], sizes = [16, 16, 128], strides = [1, 1, 1]} : vector<18x18x128xf32> to vector<16x16x128xf32>
    %57 = vector.shape_cast %56 : vector<16x16x128xf32> to vector<256x128xf32>
    %c7 = arith.constant 7 : index
    %c0_38 = arith.constant 0 : index
    %c0_39 = arith.constant 0 : index
    %58 = vector.load %arg4[%c7, %c0_38, %c0_39] : memref<9x128x128xf32, #tpu.memory_space<vmem>>, vector<1x128x128xf32>
    %59 = vector.shape_cast %58 : vector<1x128x128xf32> to vector<128x128xf32>
    %cst_40 = arith.constant dense<0.000000e+00> : vector<256x128xf32>
    %60 = tpu.matmul %57, %59, %cst_40 {dimension_numbers = #tpu.dot_dimension_numbers<[1], [0], [0], [1], [0, 0, 1, 1], [], []>} : vector<256x128xf32>, vector<128x128xf32>, vector<256x128xf32> -> vector<256x128xf32>
    %61 = arith.addf %55, %60 : vector<256x128xf32>
    %62 = vector.extract_strided_slice %14 {offsets = [2, 2, 0], sizes = [16, 16, 128], strides = [1, 1, 1]} : vector<18x18x128xf32> to vector<16x16x128xf32>
    %63 = vector.shape_cast %62 : vector<16x16x128xf32> to vector<256x128xf32>
    %c8 = arith.constant 8 : index
    %c0_41 = arith.constant 0 : index
    %c0_42 = arith.constant 0 : index
    %64 = vector.load %arg4[%c8, %c0_41, %c0_42] : memref<9x128x128xf32, #tpu.memory_space<vmem>>, vector<1x128x128xf32>
    %65 = vector.shape_cast %64 : vector<1x128x128xf32> to vector<128x128xf32>
    %cst_43 = arith.constant dense<0.000000e+00> : vector<256x128xf32>
    %66 = tpu.matmul %63, %65, %cst_43 {dimension_numbers = #tpu.dot_dimension_numbers<[1], [0], [0], [1], [0, 0, 1, 1], [], []>} : vector<256x128xf32>, vector<128x128xf32>, vector<256x128xf32> -> vector<256x128xf32>
    %67 = arith.addf %61, %66 : vector<256x128xf32>
    %c0_44 = arith.constant 0 : index
    %c0_45 = arith.constant 0 : index
    %c0_46 = arith.constant 0 : index
    %68 = vector.load %arg5[%c0_44, %c0_45, %c0_46] : memref<1x256x128xf32, #tpu.memory_space<vmem>>, vector<1x256x128xf32>
    %69 = vector.shape_cast %68 : vector<1x256x128xf32> to vector<256x128xf32>
    %70 = vector.shape_cast %67 : vector<256x128xf32> to vector<1x256x128xf32>
    tpu.vector_store %arg5[%c0_44, %c0_45, %c0_46], %70 {strides = array<i32>} : memref<1x256x128xf32, #tpu.memory_space<vmem>>, vector<1x256x128xf32>,
    %cst_47 = arith.constant dense<0.000000e+00> : vector<128xf32>
    %71 = vector.multi_reduction <add>, %67, %cst_47 [0] : vector<256x128xf32> to vector<128xf32>
    %72 = vector.shape_cast %71 : vector<128xf32> to vector<1x128xf32>
    %c0_48 = arith.constant 0 : index
    %c0_49 = arith.constant 0 : index
    %c0_50 = arith.constant 0 : index
    %73 = vector.load %arg6[%c0_48, %c0_49, %c0_50] : memref<1x1x128xf32, #tpu.memory_space<vmem>>, vector<1x1x128xf32>
    %74 = vector.shape_cast %73 : vector<1x1x128xf32> to vector<1x128xf32>
    %75 = vector.shape_cast %72 : vector<1x128xf32> to vector<1x1x128xf32>
    tpu.vector_store %arg6[%c0_48, %c0_49, %c0_50], %75 {strides = array<i32>} : memref<1x1x128xf32, #tpu.memory_space<vmem>>, vector<1x1x128xf32>,
    %76 = arith.mulf %67, %67 : vector<256x128xf32>
    %cst_51 = arith.constant dense<0.000000e+00> : vector<128xf32>
    %77 = vector.multi_reduction <add>, %76, %cst_51 [0] : vector<256x128xf32> to vector<128xf32>
    %78 = vector.shape_cast %77 : vector<128xf32> to vector<1x128xf32>
    %c0_52 = arith.constant 0 : index
    %c0_53 = arith.constant 0 : index
    %c0_54 = arith.constant 0 : index
    %79 = vector.load %arg7[%c0_52, %c0_53, %c0_54] : memref<1x1x128xf32, #tpu.memory_space<vmem>>, vector<1x1x128xf32>
    %80 = vector.shape_cast %79 : vector<1x1x128xf32> to vector<1x128xf32>
    %81 = vector.shape_cast %78 : vector<1x128xf32> to vector<1x1x128xf32>
    tpu.vector_store %arg7[%c0_52, %c0_53, %c0_54], %81 {strides = array<i32>} : memref<1x1x128xf32, #tpu.memory_space<vmem>>, vector<1x1x128xf32>,
    return
  }
  func.func @transform_0(%arg0: i32) -> (i32, i32) {
    %c0_i32 = arith.constant 0 : i32
    %c0_i32_0 = arith.constant 0 : i32
    %c0_i32_1 = arith.constant 0 : i32
    return %c0_i32, %c0_i32_0 : i32, i32
  }
  func.func @transform_1(%arg0: i32) -> (i32, i32) {
    %c0_i32 = arith.constant 0 : i32
    %c0_i32_0 = arith.constant 0 : i32
    %c0_i32_1 = arith.constant 0 : i32
    return %c0_i32, %c0_i32_0 : i32, i32
  }
  func.func @transform_2(%arg0: i32) -> (i32, i32, i32) {
    %c0_i32 = arith.constant 0 : i32
    %c0_i32_0 = arith.constant 0 : i32
    %c0_i32_1 = arith.constant 0 : i32
    return %arg0, %c0_i32, %c0_i32_0 : i32, i32, i32
  }
  func.func @transform_3(%arg0: i32) -> (i32, i32, i32) {
    %c0_i32 = arith.constant 0 : i32
    %c0_i32_0 = arith.constant 0 : i32
    %c0_i32_1 = arith.constant 0 : i32
    %c0_i32_2 = arith.constant 0 : i32
    return %c0_i32, %c0_i32_0, %c0_i32_1 : i32, i32, i32
  }
  func.func @transform_4(%arg0: i32) -> (i32, i32, i32) {
    %c0_i32 = arith.constant 0 : i32
    %c0_i32_0 = arith.constant 0 : i32
    %c0_i32_1 = arith.constant 0 : i32
    return %arg0, %c0_i32, %c0_i32_0 : i32, i32, i32
  }
  func.func @transform_5(%arg0: i32) -> (i32, i32, i32) {
    %c0_i32 = arith.constant 0 : i32
    %c0_i32_0 = arith.constant 0 : i32
    %c0_i32_1 = arith.constant 0 : i32
    return %arg0, %c0_i32, %c0_i32_0 : i32, i32, i32
  }
  func.func @transform_6(%arg0: i32) -> (i32, i32, i32) {
    %c0_i32 = arith.constant 0 : i32
    %c0_i32_0 = arith.constant 0 : i32
    %c0_i32_1 = arith.constant 0 : i32
    return %arg0, %c0_i32, %c0_i32_0 : i32, i32, i32
  }
}

</mosaic_0001>

<llo_original>
// kernel: double_conv_forward.5
$region0: #{double_conv_forward.5}
  #allocation0 [shape = 'u32[]', space=smem, size = 0x4, offset = 0x4, fixed_abs, tag = 'smem constant byte address 0x4 - core index']
  #allocation1 [shape = 'u32[144,128]{1,0:T(1,128)}', space=vmem, size = 0x12000, scoped, tag = 'internal scratch']
  %s0 = inlined_call_operand.hbm [shape: f32[1,128], index: 0, kind: input, shape index: {}]
  %s1 = inlined_call_operand.hbm [shape: f32[1,128], index: 1, kind: input, shape index: {}]
  %s2 = inlined_call_operand.hbm [shape: f32[2,256,128], index: 2, kind: input, shape index: {}]
  %s3 = inlined_call_operand.hbm [shape: f32[2,256,128], index: 3, kind: output, shape index: {}]
  %s4 = sld [smem:[#allocation0]]
  $region57: #{double_conv_forward.5} parent=0
    _
  %s6 = ssub.s32 1, %s4
  %s7 = scalar_select 0, %s6, %s4
  $region1: #{double_conv_forward.5} parent=0
    #allocation2 [shape = 'u8[512]{0}', space=vmem, size = 0x400, scoped, tag = 'input window, operand 0, single buffered']
    #allocation3 [shape = 's32[2]{0}', space=sflag, size = 0x8, scoped, tag = 'scoped memory for double_conv_forward.5']
    #allocation4 [shape = 's32[2]{0}', space=sflag, size = 0x8, scoped, tag = 'scoped memory for double_conv_forward.5']
    #allocation5 [shape = 'u8[512]{0}', space=vmem, size = 0x400, scoped, tag = 'input window, operand 1, single buffered']
    #allocation6 [shape = 's32[1]{0}', space=sflag, size = 0x4, scoped, tag = 'scoped memory for double_conv_forward.5']
    #allocation7 [shape = 'u8[262144]{0}', space=vmem, size = 0x40000, scoped, tag = 'input window, operand 2']
    #allocation8 [shape = 'u8[262144]{0}', space=vmem, size = 0x40000, scoped, tag = 'output window, operand 0']
    %8 = vsyncpa [#allocation3], 0
    %9 = vsyncpa [#allocation6], 0
    %10 = vsyncpa [#allocation4], 0
    %s11 = scalar_lea.sflag [#allocation4], 1
    %12 = vsyncpa %s11, 0
    loop: start=0, step=1, limit=4
    $region2: #{double_conv_forward.5} parent=1 // loop_pre_header
      _
    $region3: #{double_conv_forward.5} parent=1 // loop_header
      %s14 = sphi 0, %s18
      %p15 = scmp.ge.s32.totalorder %s14, 4
      %s22 = sphi 0, %s22
      %s24 = sphi 0, %s22
      %s25 = sphi 0, %s24
      %s39 = sphi 0, %s25
      %s43 = sphi 0, %s43
      %s45 = sphi 0, %s43
      %s46 = sphi 0, %s45
      %s60 = sphi 0, %s46
      %s66 = sphi 0, %s68
      %s69 = sphi 0, %s66
      %s70 = sphi 0, %s69
      %s86 = sphi 0, %s70
      %s92 = sphi 0, %s94
      %s95 = sphi 0, %s92
      %s96 = sphi 0, %s95
      %s112 = sphi 0, %s96
    $region4: #{double_conv_forward.5} parent=1 // loop_header_branch
      %17 = sbr.rel (%p15) target = $region8
    $region5: #{double_conv_forward.5} parent=1 // loop_body
      %s19 = ssub.s32 %s14, 1
      %s20 = ssub.s32 %s14, 2
      %s21 = sadd.s32 %s14, 1
      %s23 = sadd.s32 %s22, 1
      %p26 = scmp.eq.s32.totalorder %s14, 1
      %p27 = scmp.ne.s32.totalorder %s22, %s24
      %p28 = scmp.eq.s32.totalorder %s14, 0
      %p29 = por %p27, %p28
      %p30 = scmp.ne.s32.totalorder %s22, %s24
      %p31 = scmp.eq.s32.totalorder %s19, 1
      %p32 = por %p30, %p31
      %p33 = scmp.ne.s32.totalorder %s24, %s25
      %p34 = scmp.eq.s32.totalorder %s19, 0
      %p35 = por %p33, %p34
      %p36 = scmp.ne.s32.totalorder %s24, %s25
      %p37 = scmp.eq.s32.totalorder %s20, 1
      %p38 = por %p36, %p37
      %p40 = scmp.ne.s32.totalorder %s25, %s39
      %p41 = scmp.eq.s32.totalorder %s20, 0
      %p42 = por %p40, %p41
      %s44 = sadd.s32 %s43, 1
      %p47 = scmp.eq.s32.totalorder %s14, 1
      %p48 = scmp.ne.s32.totalorder %s43, %s45
      %p49 = scmp.eq.s32.totalorder %s14, 0
      %p50 = por %p48, %p49
      %p51 = scmp.ne.s32.totalorder %s43, %s45
      %p52 = scmp.eq.s32.totalorder %s19, 1
      %p53 = por %p51, %p52
      %p54 = scmp.ne.s32.totalorder %s45, %s46
      %p55 = scmp.eq.s32.totalorder %s19, 0
      %p56 = por %p54, %p55
      %p57 = scmp.ne.s32.totalorder %s45, %s46
      %p58 = scmp.eq.s32.totalorder %s20, 1
      %p59 = por %p57, %p58
      %p61 = scmp.ne.s32.totalorder %s46, %s60
      %p62 = scmp.eq.s32.totalorder %s20, 0
      %p63 = por %p61, %p62
      %s64 = ssub.s32 %s14, %s21
      %p65 = scmp.eq.s32.totalorder %s64, 0
      %s67 = sadd.s32 %s66, 1
      %s68 = scalar_select %p65, %s66, %s67
      %p71 = pneg %p65
      %p72 = scmp.eq.s32.totalorder %s14, 1
      %p73 = por %p71, %p72
      %p74 = scmp.ne.s32.totalorder %s66, %s69
      %p75 = scmp.eq.s32.totalorder %s14, 0
      %p76 = por %p74, %p75
      %p77 = scmp.ne.s32.totalorder %s66, %s69
      %p78 = scmp.eq.s32.totalorder %s19, 1
      %p79 = por %p77, %p78
      %p80 = scmp.ne.s32.totalorder %s69, %s70
      %p81 = scmp.eq.s32.totalorder %s19, 0
      %p82 = por %p80, %p81
      %p83 = scmp.ne.s32.totalorder %s69, %s70
      %p84 = scmp.eq.s32.totalorder %s20, 1
      %p85 = por %p83, %p84
      %p87 = scmp.ne.s32.totalorder %s70, %s86
      %p88 = scmp.eq.s32.totalorder %s20, 0
      %p89 = por %p87, %p88
      %s90 = ssub.s32 %s14, %s21
      %p91 = scmp.eq.s32.totalorder %s90, 0
      %s93 = sadd.s32 %s92, 1
      %s94 = scalar_select %p91, %s92, %s93
      %p97 = pneg %p91
      %p98 = scmp.eq.s32.totalorder %s14, 1
      %p99 = por %p97, %p98
      %p100 = scmp.ne.s32.totalorder %s92, %s95
      %p101 = scmp.eq.s32.totalorder %s14, 0
      %p102 = por %p100, %p101
      %p103 = scmp.ne.s32.totalorder %s92, %s95
      %p104 = scmp.eq.s32.totalorder %s19, 1
      %p105 = por %p103, %p104
      %p106 = scmp.ne.s32.totalorder %s95, %s96
      %p107 = scmp.eq.s32.totalorder %s19, 0
      %p108 = por %p106, %p107
      %p109 = scmp.ne.s32.totalorder %s95, %s96
      %p110 = scmp.eq.s32.totalorder %s20, 1
      %p111 = por %p109, %p110
      %p113 = scmp.ne.s32.totalorder %s96, %s112
      %p114 = scmp.eq.s32.totalorder %s20, 0
      %p115 = por %p113, %p114
      %p116 = scmp.le.s32.totalorder 1, %s14
      %p117 = scmp.lt.s32.totalorder %s14, 3
      %p118 = pnand %p116, %p117
      %p119 = pneg %p118
      // Predicated region
      $region9: #{double_conv_forward.5} parent=5 // pred_check
        _
      $region10: #{double_conv_forward.5} parent=5 // pred_check_branch
        %121 = sbr.rel (%p118) target = $region12
      $region11: #{double_conv_forward.5} parent=5 // pred_region
        %s122 = ssub.s32 %s14, 1
        // Predicated region
        $region13: #{double_conv_forward.5} parent=11 // pred_check
          %p123 = pneg %p35
        $region14: #{double_conv_forward.5} parent=11 // pred_check_branch
          %125 = sbr.rel (%p123) target = $region16
        $region15: #{double_conv_forward.5} parent=11 // pred_region
          %s127 = ssub.s32 16, 16
          %128 = vsyncadd [#allocation3], %s127
          %s130 = sshll.u32 [#allocation2], 4
          %s131 = int_to_ptr.vmem [resolvable:$true] %s130
          %133 = dma.hbm_to_vmem [thread:$0]  %s0, 16, %s131, [#allocation3]
        $region16: #{double_conv_forward.5} parent=11 // pred_fallthru
          _
        // Predicated region
        $region17: #{double_conv_forward.5} parent=11 // pred_check
          %p134 = pneg %p56
        $region18: #{double_conv_forward.5} parent=11 // pred_check_branch
          %136 = sbr.rel (%p134) target = $region20
        $region19: #{double_conv_forward.5} parent=11 // pred_region
          %s138 = ssub.s32 16, 16
          %139 = vsyncadd [#allocation6], %s138
          %s141 = sshll.u32 [#allocation5], 4
          %s142 = int_to_ptr.vmem [resolvable:$true] %s141
          %144 = dma.hbm_to_vmem [thread:$0]  %s1, 16, %s142, [#allocation6]
        $region20: #{double_conv_forward.5} parent=11 // pred_fallthru
          _
      $region12: #{double_conv_forward.5} parent=5 // pred_fallthru
        _
      %p145 = scmp.lt.s32.totalorder %s14, 2
      // Predicated region
      $region21: #{double_conv_forward.5} parent=5 // pred_check
        %p146 = pneg %p145
      $region22: #{double_conv_forward.5} parent=5 // pred_check_branch
        %148 = sbr.rel (%p146) target = $region24
      $region23: #{double_conv_forward.5} parent=5 // pred_region
        // Predicated region
        $region25: #{double_conv_forward.5} parent=23 // pred_check
          %p149 = pneg %p76
        $region26: #{double_conv_forward.5} parent=23 // pred_check_branch
          %151 = sbr.rel (%p149) target = $region28
        $region27: #{double_conv_forward.5} parent=23 // pred_region
          %s152 = sand.u32 %s14, 1
          %s153 = scalar_lea.sflag [#allocation3], %s152
          %s154 = sand.u32 %s66, 1
          %s155 = smul.addr %s154, 256
          %s156 = scalar_lea.vmem [#allocation7], %s155
          %s158 = ssub.s32 4096, 4096
          %159 = vsyncadd %s153, %s158
          %s160 = smul.addr %s14, 32
          %s161 = smul.addr %s160, 128
          %s162 = scalar_lea.hbm %s2, %s161
          %s163 = sshll.u32 %s156, 4
          %s164 = int_to_ptr.vmem [resolvable:$true] %s163
          %169 = dma.hbm_to_vmem [thread:$0]  %s162, 4096, %s164, %s153, 128, 128, 8
        $region28: #{double_conv_forward.5} parent=23 // pred_fallthru
          _
      $region24: #{double_conv_forward.5} parent=5 // pred_fallthru
        _
      %p170 = scmp.le.s32.totalorder 1, %s14
      %p171 = scmp.lt.s32.totalorder %s14, 3
      %p172 = pnand %p170, %p171
      %p173 = pneg %p172
      // Predicated region
      $region29: #{double_conv_forward.5} parent=5 // pred_check
        _
      $region30: #{double_conv_forward.5} parent=5 // pred_check_branch
        %175 = sbr.rel (%p172) target = $region32
      $region31: #{double_conv_forward.5} parent=5 // pred_region
        %s176 = ssub.s32 %s14, 1
        // Predicated region
        $region33: #{double_conv_forward.5} parent=31 // pred_check
          %p177 = pneg %p35
        $region34: #{double_conv_forward.5} parent=31 // pred_check_branch
          %179 = sbr.rel (%p177) target = $region36
        $region35: #{double_conv_forward.5} parent=31 // pred_region
          %180 = dma.done [#allocation3], 16
        $region36: #{double_conv_forward.5} parent=31 // pred_fallthru
          _
        // Predicated region
        $region37: #{double_conv_forward.5} parent=31 // pred_check
          %p181 = pneg %p56
        $region38: #{double_conv_forward.5} parent=31 // pred_check_branch
          %183 = sbr.rel (%p181) target = $region40
        $region39: #{double_conv_forward.5} parent=31 // pred_region
          %184 = dma.done [#allocation6], 16
        $region40: #{double_conv_forward.5} parent=31 // pred_fallthru
          _
        %s185 = sand.u32 %s19, 1
        %s186 = scalar_lea.sflag [#allocation3], %s185
        %s187 = sand.u32 %s69, 1
        %s188 = smul.addr %s187, 256
        %s189 = scalar_lea.vmem [#allocation7], %s188
        // Predicated region
        $region41: #{double_conv_forward.5} parent=31 // pred_check
          %p190 = pneg %p82
        $region42: #{double_conv_forward.5} parent=31 // pred_check_branch
          %192 = sbr.rel (%p190) target = $region44
        $region43: #{double_conv_forward.5} parent=31 // pred_region
          %193 = dma.done %s186, 4096
        $region44: #{double_conv_forward.5} parent=31 // pred_fallthru
          _
        %p194 = pneg %p35
        %p195 = pneg %p32
        %p196 = pneg %p56
        %p197 = pneg %p53
        %s198 = sand.u32 %s19, 1
        %s199 = scalar_lea.sflag [#allocation3], %s198
        %s200 = sand.u32 %s69, 1
        %s201 = smul.addr %s200, 256
        %s202 = scalar_lea.vmem [#allocation7], %s201
        %p203 = pneg %p82
        %p204 = pneg %p79
        %p205 = pneg %p108
        %p206 = pneg %p105
        %s207 = sand.u32 %s95, 1
        %s208 = scalar_lea.sflag [#allocation4], %s207
        %s209 = sand.u32 %s95, 1
        %s210 = smul.addr %s209, 256
        %s211 = scalar_lea.vmem [#allocation8], %s210
        %v212 = vld [vmem:[%s189] sm:$0xff]
        %v213 = vld [vmem:[%s189 + $0x8] sm:$0xff]
        %v214 = vld [vmem:[%s189 + $0x10] sm:$0xff]
        %v215 = vld [vmem:[%s189 + $0x18] sm:$0xff]
        %v216 = vld [vmem:[%s189 + $0x20] sm:$0xff]
        %v217 = vld [vmem:[%s189 + $0x28] sm:$0xff]
        %v218 = vld [vmem:[%s189 + $0x30] sm:$0xff]
        %v219 = vld [vmem:[%s189 + $0x38] sm:$0xff]
        %v220 = vld [vmem:[%s189 + $0x40] sm:$0xff]
        %v221 = vld [vmem:[%s189 + $0x48] sm:$0xff]
        %v222 = vld [vmem:[%s189 + $0x50] sm:$0xff]
        %v223 = vld [vmem:[%s189 + $0x58] sm:$0xff]
        %v224 = vld [vmem:[%s189 + $0x60] sm:$0xff]
        %v225 = vld [vmem:[%s189 + $0x68] sm:$0xff]
        %v226 = vld [vmem:[%s189 + $0x70] sm:$0xff]
        %v227 = vld [vmem:[%s189 + $0x78] sm:$0xff]
        %v228 = vld [vmem:[%s189 + $0x80] sm:$0xff]
        %v229 = vld [vmem:[%s189 + $0x88] sm:$0xff]
        %v230 = vld [vmem:[%s189 + $0x90] sm:$0xff]
        %v231 = vld [vmem:[%s189 + $0x98] sm:$0xff]
        %v232 = vld [vmem:[%s189 + $0xa0] sm:$0xff]
        %v233 = vld [vmem:[%s189 + $0xa8] sm:$0xff]
        %v234 = vld [vmem:[%s189 + $0xb0] sm:$0xff]
        %v235 = vld [vmem:[%s189 + $0xb8] sm:$0xff]
        %v236 = vld [vmem:[%s189 + $0xc0] sm:$0xff]
        %v237 = vld [vmem:[%s189 + $0xc8] sm:$0xff]
        %v238 = vld [vmem:[%s189 + $0xd0] sm:$0xff]
        %v239 = vld [vmem:[%s189 + $0xd8] sm:$0xff]
        %v240 = vld [vmem:[%s189 + $0xe0] sm:$0xff]
        %v241 = vld [vmem:[%s189 + $0xe8] sm:$0xff]
        %v242 = vld [vmem:[%s189 + $0xf0] sm:$0xff]
        %v243 = vld [vmem:[%s189 + $0xf8] sm:$0xff]
        %v244 = vld [vmem:[#allocation2] sm:$0x1]
        %v246 = vlaneseq
        %v247 = vshrl.u32 %v246, 7
        %v248 = vsub.s32 0, %v247
        %v249 = vrot.slane %v244, %v248
        %v251 = vmul.f32 %v212, %v249
        %v252 = vmul.f32 %v213, %v249
        %v253 = vmul.f32 %v214, %v249
        %v254 = vmul.f32 %v215, %v249
        %v255 = vmul.f32 %v216, %v249
        %v256 = vmul.f32 %v217, %v249
        %v257 = vmul.f32 %v218, %v249
        %v258 = vmul.f32 %v219, %v249
        %v259 = vmul.f32 %v220, %v249
        %v260 = vmul.f32 %v221, %v249
        %v261 = vmul.f32 %v222, %v249
        %v262 = vmul.f32 %v223, %v249
        %v263 = vmul.f32 %v224, %v249
        %v264 = vmul.f32 %v225, %v249
        %v265 = vmul.f32 %v226, %v249
        %v266 = vmul.f32 %v227, %v249
        %v267 = vmul.f32 %v228, %v249
        %v268 = vmul.f32 %v229, %v249
        %v269 = vmul.f32 %v230, %v249
        %v270 = vmul.f32 %v231, %v249
        %v271 = vmul.f32 %v232, %v249
        %v272 = vmul.f32 %v233, %v249
        %v273 = vmul.f32 %v234, %v249
        %v274 = vmul.f32 %v235, %v249
        %v275 = vmul.f32 %v236, %v249
        %v276 = vmul.f32 %v237, %v249
        %v277 = vmul.f32 %v238, %v249
        %v278 = vmul.f32 %v239, %v249
        %v279 = vmul.f32 %v240, %v249
        %v280 = vmul.f32 %v241, %v249
        %v281 = vmul.f32 %v242, %v249
        %v282 = vmul.f32 %v243, %v249
        %v283 = vld [vmem:[#allocation5] sm:$0x1]
        %v285 = vlaneseq
        %v286 = vshrl.u32 %v285, 7
        %v287 = vsub.s32 0, %v286
        %v288 = vrot.slane %v283, %v287
        %v290 = vadd.f32 %v251, %v288
        %v291 = vadd.f32 %v252, %v288
        %v292 = vadd.f32 %v253, %v288
        %v293 = vadd.f32 %v254, %v288
        %v294 = vadd.f32 %v255, %v288
        %v295 = vadd.f32 %v256, %v288
        %v296 = vadd.f32 %v257, %v288
        %v297 = vadd.f32 %v258, %v288
        %v298 = vadd.f32 %v259, %v288
        %v299 = vadd.f32 %v260, %v288
        %v300 = vadd.f32 %v261, %v288
        %v301 = vadd.f32 %v262, %v288
        %v302 = vadd.f32 %v263, %v288
        %v303 = vadd.f32 %v264, %v288
        %v304 = vadd.f32 %v265, %v288
        %v305 = vadd.f32 %v266, %v288
        %v306 = vadd.f32 %v267, %v288
        %v307 = vadd.f32 %v268, %v288
        %v308 = vadd.f32 %v269, %v288
        %v309 = vadd.f32 %v270, %v288
        %v310 = vadd.f32 %v271, %v288
        %v311 = vadd.f32 %v272, %v288
        %v312 = vadd.f32 %v273, %v288
        %v313 = vadd.f32 %v274, %v288
        %v314 = vadd.f32 %v275, %v288
        %v315 = vadd.f32 %v276, %v288
        %v316 = vadd.f32 %v277, %v288
        %v317 = vadd.f32 %v278, %v288
        %v318 = vadd.f32 %v279, %v288
        %v319 = vadd.f32 %v280, %v288
        %v320 = vadd.f32 %v281, %v288
        %v321 = vadd.f32 %v282, %v288
        %v322 = vmax.f32 %v290, 0.0
        %v323 = vmax.f32 %v291, 0.0
        %v324 = vmax.f32 %v292, 0.0
        %v325 = vmax.f32 %v293, 0.0
        %v326 = vmax.f32 %v294, 0.0
        %v327 = vmax.f32 %v295, 0.0
        %v328 = vmax.f32 %v296, 0.0
        %v329 = vmax.f32 %v297, 0.0
        %v330 = vmax.f32 %v298, 0.0
        %v331 = vmax.f32 %v299, 0.0
        %v332 = vmax.f32 %v300, 0.0
        %v333 = vmax.f32 %v301, 0.0
        %v334 = vmax.f32 %v302, 0.0
        %v335 = vmax.f32 %v303, 0.0
        %v336 = vmax.f32 %v304, 0.0
        %v337 = vmax.f32 %v305, 0.0
        %v338 = vmax.f32 %v306, 0.0
        %v339 = vmax.f32 %v307, 0.0
        %v340 = vmax.f32 %v308, 0.0
        %v341 = vmax.f32 %v309, 0.0
        %v342 = vmax.f32 %v310, 0.0
        %v343 = vmax.f32 %v311, 0.0
        %v344 = vmax.f32 %v312, 0.0
        %v345 = vmax.f32 %v313, 0.0
        %v346 = vmax.f32 %v314, 0.0
        %v347 = vmax.f32 %v315, 0.0
        %v348 = vmax.f32 %v316, 0.0
        %v349 = vmax.f32 %v317, 0.0
        %v350 = vmax.f32 %v318, 0.0
        %v351 = vmax.f32 %v319, 0.0
        %v352 = vmax.f32 %v320, 0.0
        %v353 = vmax.f32 %v321, 0.0
        %354 = vst [vmem:[%s211] sm:$0xff] %v322
        %355 = vst [vmem:[%s211 + $0x8] sm:$0xff] %v323
        %356 = vst [vmem:[%s211 + $0x10] sm:$0xff] %v324
        %357 = vst [vmem:[%s211 + $0x18] sm:$0xff] %v325
        %358 = vst [vmem:[%s211 + $0x20] sm:$0xff] %v326
        %359 = vst [vmem:[%s211 + $0x28] sm:$0xff] %v327
        %360 = vst [vmem:[%s211 + $0x30] sm:$0xff] %v328
        %361 = vst [vmem:[%s211 + $0x38] sm:$0xff] %v329
        %362 = vst [vmem:[%s211 + $0x40] sm:$0xff] %v330
        %363 = vst [vmem:[%s211 + $0x48] sm:$0xff] %v331
        %364 = vst [vmem:[%s211 + $0x50] sm:$0xff] %v332
        %365 = vst [vmem:[%s211 + $0x58] sm:$0xff] %v333
        %366 = vst [vmem:[%s211 + $0x60] sm:$0xff] %v334
        %367 = vst [vmem:[%s211 + $0x68] sm:$0xff] %v335
        %368 = vst [vmem:[%s211 + $0x70] sm:$0xff] %v336
        %369 = vst [vmem:[%s211 + $0x78] sm:$0xff] %v337
        %370 = vst [vmem:[%s211 + $0x80] sm:$0xff] %v338
        %371 = vst [vmem:[%s211 + $0x88] sm:$0xff] %v339
        %372 = vst [vmem:[%s211 + $0x90] sm:$0xff] %v340
        %373 = vst [vmem:[%s211 + $0x98] sm:$0xff] %v341
        %374 = vst [vmem:[%s211 + $0xa0] sm:$0xff] %v342
        %375 = vst [vmem:[%s211 + $0xa8] sm:$0xff] %v343
        %376 = vst [vmem:[%s211 + $0xb0] sm:$0xff] %v344
        %377 = vst [vmem:[%s211 + $0xb8] sm:$0xff] %v345
        %378 = vst [vmem:[%s211 + $0xc0] sm:$0xff] %v346
        %379 = vst [vmem:[%s211 + $0xc8] sm:$0xff] %v347
        %380 = vst [vmem:[%s211 + $0xd0] sm:$0xff] %v348
        %381 = vst [vmem:[%s211 + $0xd8] sm:$0xff] %v349
        %382 = vst [vmem:[%s211 + $0xe0] sm:$0xff] %v350
        %383 = vst [vmem:[%s211 + $0xe8] sm:$0xff] %v351
        %384 = vst [vmem:[%s211 + $0xf0] sm:$0xff] %v352
        %385 = vst [vmem:[%s211 + $0xf8] sm:$0xff] %v353
        %s386 = sand.u32 %s95, 1
        %s387 = scalar_lea.sflag [#allocation4], %s386
        %s388 = sand.u32 %s95, 1
        %s389 = smul.addr %s388, 256
        %s390 = scalar_lea.vmem [#allocation8], %s389
        // Predicated region
        $region45: #{double_conv_forward.5} parent=31 // pred_check
          %p391 = pneg %p105
        $region46: #{double_conv_forward.5} parent=31 // pred_check_branch
          %393 = sbr.rel (%p391) target = $region48
        $region47: #{double_conv_forward.5} parent=31 // pred_region
          %s395 = ssub.s32 4096, 4096
          %396 = vsyncadd %s387, %s395
          %s397 = smul.addr %s19, 32
          %s398 = smul.addr %s397, 128
          %s399 = scalar_lea.hbm %s3, %s398
          %s400 = sshll.u32 %s390, 4
          %s401 = int_to_ptr.vmem [resolvable:$true] %s400
          %406 = dma.vmem_to_hbm [thread:$0]  %s401, 4096, %s399, %s387, 128, 128, 8
        $region48: #{double_conv_forward.5} parent=31 // pred_fallthru
          _
      $region32: #{double_conv_forward.5} parent=5 // pred_fallthru
        _
      %p407 = scmp.le.s32.totalorder 2, %s14
      // Predicated region
      $region49: #{double_conv_forward.5} parent=5 // pred_check
        %p408 = pneg %p407
      $region50: #{double_conv_forward.5} parent=5 // pred_check_branch
        %410 = sbr.rel (%p408) target = $region52
      $region51: #{double_conv_forward.5} parent=5 // pred_region
        %s411 = ssub.s32 %s14, 2
        // Predicated region
        $region53: #{double_conv_forward.5} parent=51 // pred_check
          %p412 = pneg %p111
        $region54: #{double_conv_forward.5} parent=51 // pred_check_branch
          %414 = sbr.rel (%p412) target = $region56
        $region55: #{double_conv_forward.5} parent=51 // pred_region
          %s415 = sand.u32 %s96, 1
          %s416 = scalar_lea.sflag [#allocation4], %s415
          %s417 = sand.u32 %s96, 1
          %s418 = smul.addr %s417, 256
          %s419 = scalar_lea.vmem [#allocation8], %s418
          %420 = dma.done %s416, 4096
        $region56: #{double_conv_forward.5} parent=51 // pred_fallthru
          _
      $region52: #{double_conv_forward.5} parent=5 // pred_fallthru
        _
    $region6: #{double_conv_forward.5} parent=1 // loop_footer
      %s18 = sadd.s32 1, %s14
    $region7: #{double_conv_forward.5} parent=1 // loop_footer_branch
      %13 = sbr.rel target = $region3
    $region8: #{double_conv_forward.5} parent=1 // loop_exit
      _
    %421 = vsyncpa [#allocation3], 1
    %s422 = scalar_lea.sflag [#allocation3], 1
    %423 = vsyncpa %s422, 1
    %424 = vsyncpa [#allocation6], 1
    %425 = vsyncpa [#allocation4], 1
    %s426 = scalar_lea.sflag [#allocation4], 1
    %427 = vsyncpa %s426, 1

// kernel: double_conv_forward.3
$region0: #{double_conv_forward.3}
  #allocation0 [shape = 'u32[]', space=smem, size = 0x4, offset = 0x4, fixed_abs, tag = 'smem constant byte address 0x4 - core index']
  #allocation1 [shape = 'u32[144,128]{1,0:T(1,128)}', space=vmem, size = 0x12000, scoped, tag = 'internal scratch']
  %s0 = inlined_call_operand.hbm [shape: f32[2,18,18,128], index: 0, kind: input, shape index: {}]
  %s1 = inlined_call_operand.hbm [shape: f32[9,128,128], index: 1, kind: input, shape index: {}]
  %s2 = inlined_call_operand.hbm [shape: f32[2,256,128], index: 2, kind: output, shape index: {0}]
  %s3 = inlined_call_operand.hbm [shape: f32[2,1,128], index: 3, kind: output, shape index: {1}]
  %s4 = inlined_call_operand.hbm [shape: f32[2,1,128], index: 4, kind: output, shape index: {2}]
  %5 = xla_tuple %s2, %s3, %s4
  %s6 = sld [smem:[#allocation0]]
  $region65: #{double_conv_forward.3} parent=0
    _
  %s8 = ssub.s32 1, %s6
  %s9 = scalar_select 0, %s8, %s6
  $region1: #{double_conv_forward.3} parent=0
    #allocation2 [shape = 'u8[442368]{0}', space=vmem, size = 0x6c000, scoped, tag = 'input window, operand 0']
    #allocation3 [shape = 's32[2]{0}', space=sflag, size = 0x8, scoped, tag = 'scoped memory for double_conv_forward.3']
    #allocation4 [shape = 's32[2]{0}', space=sflag, size = 0x8, scoped, tag = 'scoped memory for double_conv_forward.3']
    #allocation5 [shape = 'u8[589824]{0}', space=vmem, size = 0x90000, scoped, tag = 'input window, operand 1, single buffered']
    #allocation6 [shape = 's32[1]{0}', space=sflag, size = 0x4, scoped, tag = 'scoped memory for double_conv_forward.3']
    #allocation7 [shape = 'u8[262144]{0}', space=vmem, size = 0x40000, scoped, tag = 'output window, operand 0']
    #allocation8 [shape = 'u8[1024]{0}', space=vmem, size = 0x400, scoped, tag = 'output window, operand 1']
    #allocation9 [shape = 's32[2]{0}', space=sflag, size = 0x8, scoped, tag = 'scoped memory for double_conv_forward.3']
    #allocation10 [shape = 'u8[1024]{0}', space=vmem, size = 0x400, scoped, tag = 'output window, operand 2']
    %10 = vsyncpa [#allocation3], 0
    %s11 = scalar_lea.sflag [#allocation3], 1
    %12 = vsyncpa %s11, 0
    %13 = vsyncpa [#allocation6], 0
    %14 = vsyncpa [#allocation4], 0
    %s15 = scalar_lea.sflag [#allocation4], 1
    %16 = vsyncpa %s15, 0
    %17 = vsyncpa [#allocation9], 0
    %s18 = scalar_lea.sflag [#allocation9], 1
    %19 = vsyncpa %s18, 0
    loop: start=0, step=1, limit=4
    $region2: #{double_conv_forward.3} parent=1 // loop_pre_header
      _
    $region3: #{double_conv_forward.3} parent=1 // loop_header
      %s21 = sphi 0, %s25
      %p22 = scmp.ge.s32.totalorder %s21, 4
      %s31 = sphi 0, %s33
      %s34 = sphi 0, %s31
      %s35 = sphi 0, %s34
      %s51 = sphi 0, %s35
      %s55 = sphi 0, %s55
      %s57 = sphi 0, %s55
      %s58 = sphi 0, %s57
      %s72 = sphi 0, %s58
      %s78 = sphi 0, %s80
      %s81 = sphi 0, %s78
      %s82 = sphi 0, %s81
      %s98 = sphi 0, %s82
      %s104 = sphi 0, %s106
      %s107 = sphi 0, %s104
      %s108 = sphi 0, %s107
      %s124 = sphi 0, %s108
      %s130 = sphi 0, %s132
      %s133 = sphi 0, %s130
      %s134 = sphi 0, %s133
      %s150 = sphi 0, %s134
    $region4: #{double_conv_forward.3} parent=1 // loop_header_branch
      %24 = sbr.rel (%p22) target = $region8
    $region5: #{double_conv_forward.3} parent=1 // loop_body
      %s26 = ssub.s32 %s21, 1
      %s27 = ssub.s32 %s21, 2
      %s28 = sadd.s32 %s21, 1
      %s29 = ssub.s32 %s21, %s28
      %p30 = scmp.eq.s32.totalorder %s29, 0
      %s32 = sadd.s32 %s31, 1
      %s33 = scalar_select %p30, %s31, %s32
      %p36 = pneg %p30
      %p37 = scmp.eq.s32.totalorder %s21, 1
      %p38 = por %p36, %p37
      %p39 = scmp.ne.s32.totalorder %s31, %s34
      %p40 = scmp.eq.s32.totalorder %s21, 0
      %p41 = por %p39, %p40
      %p42 = scmp.ne.s32.totalorder %s31, %s34
      %p43 = scmp.eq.s32.totalorder %s26, 1
      %p44 = por %p42, %p43
      %p45 = scmp.ne.s32.totalorder %s34, %s35
      %p46 = scmp.eq.s32.totalorder %s26, 0
      %p47 = por %p45, %p46
      %p48 = scmp.ne.s32.totalorder %s34, %s35
      %p49 = scmp.eq.s32.totalorder %s27, 1
      %p50 = por %p48, %p49
      %p52 = scmp.ne.s32.totalorder %s35, %s51
      %p53 = scmp.eq.s32.totalorder %s27, 0
      %p54 = por %p52, %p53
      %s56 = sadd.s32 %s55, 1
      %p59 = scmp.eq.s32.totalorder %s21, 1
      %p60 = scmp.ne.s32.totalorder %s55, %s57
      %p61 = scmp.eq.s32.totalorder %s21, 0
      %p62 = por %p60, %p61
      %p63 = scmp.ne.s32.totalorder %s55, %s57
      %p64 = scmp.eq.s32.totalorder %s26, 1
      %p65 = por %p63, %p64
      %p66 = scmp.ne.s32.totalorder %s57, %s58
      %p67 = scmp.eq.s32.totalorder %s26, 0
      %p68 = por %p66, %p67
      %p69 = scmp.ne.s32.totalorder %s57, %s58
      %p70 = scmp.eq.s32.totalorder %s27, 1
      %p71 = por %p69, %p70
      %p73 = scmp.ne.s32.totalorder %s58, %s72
      %p74 = scmp.eq.s32.totalorder %s27, 0
      %p75 = por %p73, %p74
      %s76 = ssub.s32 %s21, %s28
      %p77 = scmp.eq.s32.totalorder %s76, 0
      %s79 = sadd.s32 %s78, 1
      %s80 = scalar_select %p77, %s78, %s79
      %p83 = pneg %p77
      %p84 = scmp.eq.s32.totalorder %s21, 1
      %p85 = por %p83, %p84
      %p86 = scmp.ne.s32.totalorder %s78, %s81
      %p87 = scmp.eq.s32.totalorder %s21, 0
      %p88 = por %p86, %p87
      %p89 = scmp.ne.s32.totalorder %s78, %s81
      %p90 = scmp.eq.s32.totalorder %s26, 1
      %p91 = por %p89, %p90
      %p92 = scmp.ne.s32.totalorder %s81, %s82
      %p93 = scmp.eq.s32.totalorder %s26, 0
      %p94 = por %p92, %p93
      %p95 = scmp.ne.s32.totalorder %s81, %s82
      %p96 = scmp.eq.s32.totalorder %s27, 1
      %p97 = por %p95, %p96
      %p99 = scmp.ne.s32.totalorder %s82, %s98
      %p100 = scmp.eq.s32.totalorder %s27, 0
      %p101 = por %p99, %p100
      %s102 = ssub.s32 %s21, %s28
      %p103 = scmp.eq.s32.totalorder %s102, 0
      %s105 = sadd.s32 %s104, 1
      %s106 = scalar_select %p103, %s104, %s105
      %p109 = pneg %p103
      %p110 = scmp.eq.s32.totalorder %s21, 1
      %p111 = por %p109, %p110
      %p112 = scmp.ne.s32.totalorder %s104, %s107
      %p113 = scmp.eq.s32.totalorder %s21, 0
      %p114 = por %p112, %p113
      %p115 = scmp.ne.s32.totalorder %s104, %s107
      %p116 = scmp.eq.s32.totalorder %s26, 1
      %p117 = por %p115, %p116
      %p118 = scmp.ne.s32.totalorder %s107, %s108
      %p119 = scmp.eq.s32.totalorder %s26, 0
      %p120 = por %p118, %p119
      %p121 = scmp.ne.s32.totalorder %s107, %s108
      %p122 = scmp.eq.s32.totalorder %s27, 1
      %p123 = por %p121, %p122
      %p125 = scmp.ne.s32.totalorder %s108, %s124
      %p126 = scmp.eq.s32.totalorder %s27, 0
      %p127 = por %p125, %p126
      %s128 = ssub.s32 %s21, %s28
      %p129 = scmp.eq.s32.totalorder %s128, 0
      %s131 = sadd.s32 %s130, 1
      %s132 = scalar_select %p129, %s130, %s131
      %p135 = pneg %p129
      %p136 = scmp.eq.s32.totalorder %s21, 1
      %p137 = por %p135, %p136
      %p138 = scmp.ne.s32.totalorder %s130, %s133
      %p139 = scmp.eq.s32.totalorder %s21, 0
      %p140 = por %p138, %p139
      %p141 = scmp.ne.s32.totalorder %s130, %s133
      %p142 = scmp.eq.s32.totalorder %s26, 1
      %p143 = por %p141, %p142
      %p144 = scmp.ne.s32.totalorder %s133, %s134
      %p145 = scmp.eq.s32.totalorder %s26, 0
      %p146 = por %p144, %p145
      %p147 = scmp.ne.s32.totalorder %s133, %s134
      %p148 = scmp.eq.s32.totalorder %s27, 1
      %p149 = por %p147, %p148
      %p151 = scmp.ne.s32.totalorder %s134, %s150
      %p152 = scmp.eq.s32.totalorder %s27, 0
      %p153 = por %p151, %p152
      %p154 = scmp.le.s32.totalorder 1, %s21
      %p155 = scmp.lt.s32.totalorder %s21, 3
      %p156 = pnand %p154, %p155
      %p157 = pneg %p156
      // Predicated region
      $region9: #{double_conv_forward.3} parent=5 // pred_check
        _
      $region10: #{double_conv_forward.3} parent=5 // pred_check_branch
        %159 = sbr.rel (%p156) target = $region12
      $region11: #{double_conv_forward.3} parent=5 // pred_region
        %s160 = ssub.s32 %s21, 1
        // Predicated region
        $region13: #{double_conv_forward.3} parent=11 // pred_check
          %p161 = pneg %p68
        $region14: #{double_conv_forward.3} parent=11 // pred_check_branch
          %163 = sbr.rel (%p161) target = $region16
        $region15: #{double_conv_forward.3} parent=11 // pred_region
          %s165 = ssub.s32 18432, 18432
          %166 = vsyncadd [#allocation6], %s165
          %s167 = sshll.u32 [#allocation5], 4
          %s168 = int_to_ptr.vmem [resolvable:$true] %s167
          %173 = dma.hbm_to_vmem [thread:$0]  %s1, 18432, %s168, [#allocation6], 128, 128, 8
        $region16: #{double_conv_forward.3} parent=11 // pred_fallthru
          _
      $region12: #{double_conv_forward.3} parent=5 // pred_fallthru
        _
      %p174 = scmp.lt.s32.totalorder %s21, 2
      // Predicated region
      $region17: #{double_conv_forward.3} parent=5 // pred_check
        %p175 = pneg %p174
      $region18: #{double_conv_forward.3} parent=5 // pred_check_branch
        %177 = sbr.rel (%p175) target = $region20
      $region19: #{double_conv_forward.3} parent=5 // pred_region
        // Predicated region
        $region21: #{double_conv_forward.3} parent=19 // pred_check
          %p178 = pneg %p41
        $region22: #{double_conv_forward.3} parent=19 // pred_check_branch
          %180 = sbr.rel (%p178) target = $region24
        $region23: #{double_conv_forward.3} parent=19 // pred_region
          %s181 = sand.u32 %s31, 1
          %s182 = scalar_lea.sflag [#allocation3], %s181
          %s183 = sand.u32 %s31, 1
          %s184 = smul.addr %s183, 432
          %s185 = scalar_lea.vmem [#allocation2], %s184
          %s187 = ssub.s32 6912, 6912
          %188 = vsyncadd %s182, %s187
          %s189 = smul.addr %s21, 54
          %s190 = smul.addr %s189, 128
          %s191 = scalar_lea.hbm %s0, %s190
          %s192 = sshll.u32 %s185, 4
          %s193 = int_to_ptr.vmem [resolvable:$true] %s192
          %198 = dma.hbm_to_vmem [thread:$0]  %s191, 6912, %s193, %s182, 128, 128, 8
        $region24: #{double_conv_forward.3} parent=19 // pred_fallthru
          _
      $region20: #{double_conv_forward.3} parent=5 // pred_fallthru
        _
      %p199 = scmp.le.s32.totalorder 1, %s21
      %p200 = scmp.lt.s32.totalorder %s21, 3
      %p201 = pnand %p199, %p200
      %p202 = pneg %p201
      // Predicated region
      $region25: #{double_conv_forward.3} parent=5 // pred_check
        _
      $region26: #{double_conv_forward.3} parent=5 // pred_check_branch
        %204 = sbr.rel (%p201) target = $region28
      $region27: #{double_conv_forward.3} parent=5 // pred_region
        %s205 = ssub.s32 %s21, 1
        %s206 = sand.u32 %s34, 1
        %s207 = scalar_lea.sflag [#allocation3], %s206
        %s208 = sand.u32 %s34, 1
        %s209 = smul.addr %s208, 432
        %s210 = scalar_lea.vmem [#allocation2], %s209
        // Predicated region
        $region29: #{double_conv_forward.3} parent=27 // pred_check
          %p211 = pneg %p47
        $region30: #{double_conv_forward.3} parent=27 // pred_check_branch
          %213 = sbr.rel (%p211) target = $region32
        $region31: #{double_conv_forward.3} parent=27 // pred_region
          %214 = dma.done %s207, 6912
        $region32: #{double_conv_forward.3} parent=27 // pred_fallthru
          _
        // Predicated region
        $region33: #{double_conv_forward.3} parent=27 // pred_check
          %p215 = pneg %p68
        $region34: #{double_conv_forward.3} parent=27 // pred_check_branch
          %217 = sbr.rel (%p215) target = $region36
        $region35: #{double_conv_forward.3} parent=27 // pred_region
          %218 = dma.done [#allocation6], 18432
        $region36: #{double_conv_forward.3} parent=27 // pred_fallthru
          _
        %s219 = sand.u32 %s34, 1
        %s220 = scalar_lea.sflag [#allocation3], %s219
        %s221 = sand.u32 %s34, 1
        %s222 = smul.addr %s221, 432
        %s223 = scalar_lea.vmem [#allocation2], %s222
        %p224 = pneg %p47
        %p225 = pneg %p44
        %p226 = pneg %p68
        %p227 = pneg %p65
        %p228 = pneg %p94
        %p229 = pneg %p91
        %s230 = sand.u32 %s81, 1
        %s231 = scalar_lea.sflag [#allocation4], %s230
        %s232 = sand.u32 %s81, 1
        %s233 = smul.addr %s232, 256
        %s234 = scalar_lea.vmem [#allocation7], %s233
        %p235 = pneg %p120
        %p236 = pneg %p117
        %s237 = sand.u32 %s26, 1
        %s238 = scalar_lea.sflag [#allocation9], %s237
        %s239 = sand.u32 %s107, 1
        %s240 = scalar_lea.vmem [#allocation8], %s239
        %p241 = pneg %p146
        %p242 = pneg %p143
        %s243 = sand.u32 %s26, 1
        %s244 = scalar_lea.sflag [#allocation9], %s243
        %s245 = sand.u32 %s133, 1
        %s246 = scalar_lea.vmem [#allocation10], %s245
        %v247 = vld [vmem:[%s210] sm:$0xff]
        %v248 = vld [vmem:[%s210 + $0x8] sm:$0xff]
        %v249 = vld [vmem:[%s210 + $0x10] sm:$0x3]
        %v250 = vld [vmem:[%s210 + $0x18] sm:$0xff]
        %v251 = vld [vmem:[%s210 + $0x20] sm:$0xff]
        %v252 = vld [vmem:[%s210 + $0x28] sm:$0x3]
        %v253 = vld [vmem:[%s210 + $0x30] sm:$0xff]
        %v254 = vld [vmem:[%s210 + $0x38] sm:$0xff]
        %v255 = vld [vmem:[%s210 + $0x40] sm:$0x3]
        %v256 = vld [vmem:[%s210 + $0x48] sm:$0xff]
        %v257 = vld [vmem:[%s210 + $0x50] sm:$0xff]
        %v258 = vld [vmem:[%s210 + $0x58] sm:$0x3]
        %v259 = vld [vmem:[%s210 + $0x60] sm:$0xff]
        %v260 = vld [vmem:[%s210 + $0x68] sm:$0xff]
        %v261 = vld [vmem:[%s210 + $0x70] sm:$0x3]
        %v262 = vld [vmem:[%s210 + $0x78] sm:$0xff]
        %v263 = vld [vmem:[%s210 + $0x80] sm:$0xff]
        %v264 = vld [vmem:[%s210 + $0x88] sm:$0x3]
        %v265 = vld [vmem:[%s210 + $0x90] sm:$0xff]
        %v266 = vld [vmem:[%s210 + $0x98] sm:$0xff]
        %v267 = vld [vmem:[%s210 + $0xa0] sm:$0x3]
        %v268 = vld [vmem:[%s210 + $0xa8] sm:$0xff]
        %v269 = vld [vmem:[%s210 + $0xb0] sm:$0xff]
        %v270 = vld [vmem:[%s210 + $0xb8] sm:$0x3]
        %v271 = vld [vmem:[%s210 + $0xc0] sm:$0xff]
        %v272 = vld [vmem:[%s210 + $0xc8] sm:$0xff]
        %v273 = vld [vmem:[%s210 + $0xd0] sm:$0x3]
        %v274 = vld [vmem:[%s210 + $0xd8] sm:$0xff]
        %v275 = vld [vmem:[%s210 + $0xe0] sm:$0xff]
        %v276 = vld [vmem:[%s210 + $0xe8] sm:$0x3]
        %v277 = vld [vmem:[%s210 + $0xf0] sm:$0xff]
        %v278 = vld [vmem:[%s210 + $0xf8] sm:$0xff]
        %v279 = vld [vmem:[%s210 + $0x100] sm:$0x3]
        %v280 = vld [vmem:[%s210 + $0x108] sm:$0xff]
        %v281 = vld [vmem:[%s210 + $0x110] sm:$0xff]
        %v282 = vld [vmem:[%s210 + $0x118] sm:$0x3]
        %v283 = vld [vmem:[%s210 + $0x120] sm:$0xff]
        %v284 = vld [vmem:[%s210 + $0x128] sm:$0xff]
        %v285 = vld [vmem:[%s210 + $0x130] sm:$0x3]
        %v286 = vld [vmem:[%s210 + $0x138] sm:$0xff]
        %v287 = vld [vmem:[%s210 + $0x140] sm:$0xff]
        %v288 = vld [vmem:[%s210 + $0x148] sm:$0x3]
        %v289 = vld [vmem:[%s210 + $0x150] sm:$0xff]
        %v290 = vld [vmem:[%s210 + $0x158] sm:$0xff]
        %v291 = vld [vmem:[%s210 + $0x160] sm:$0x3]
        %v292 = vld [vmem:[%s210 + $0x168] sm:$0xff]
        %v293 = vld [vmem:[%s210 + $0x170] sm:$0xff]
        %v294 = vld [vmem:[%s210 + $0x178] sm:$0x3]
        %v295 = vld [vmem:[%s210 + $0x180] sm:$0xff]
        %v296 = vld [vmem:[%s210 + $0x188] sm:$0xff]
        %v297 = vld [vmem:[%s210 + $0x190] sm:$0x3]
        %v298 = vld [vmem:[%s210 + $0x198] sm:$0xff]
        %v299 = vld [vmem:[%s210 + $0x1a0] sm:$0xff]
        %v300 = vld [vmem:[%s210 + $0x1a8] sm:$0x3]
        %v301 = vld [vmem:[#allocation5] sm:$0xff]
        %v302 = vld [vmem:[#allocation5 + $0x8] sm:$0xff]
        %v303 = vld [vmem:[#allocation5 + $0x10] sm:$0xff]
        %v304 = vld [vmem:[#allocation5 + $0x18] sm:$0xff]
        %v305 = vld [vmem:[#allocation5 + $0x20] sm:$0xff]
        %v306 = vld [vmem:[#allocation5 + $0x28] sm:$0xff]
        %v307 = vld [vmem:[#allocation5 + $0x30] sm:$0xff]
        %v308 = vld [vmem:[#allocation5 + $0x38] sm:$0xff]
        %v309 = vld [vmem:[#allocation5 + $0x40] sm:$0xff]
        %v310 = vld [vmem:[#allocation5 + $0x48] sm:$0xff]
        %v311 = vld [vmem:[#allocation5 + $0x50] sm:$0xff]
        %v312 = vld [vmem:[#allocation5 + $0x58] sm:$0xff]
        %v313 = vld [vmem:[#allocation5 + $0x60] sm:$0xff]
        %v314 = vld [vmem:[#allocation5 + $0x68] sm:$0xff]
        %v315 = vld [vmem:[#allocation5 + $0x70] sm:$0xff]
        %v316 = vld [vmem:[#allocation5 + $0x78] sm:$0xff]
        %vm365 = vcmask 1046528
        %v366 = vrot.slane %v247, 1
        %v367 = vrot.slane %v248, 1
        %v368 = vsel %vm365, %v366, %v367
        %v369 = vrot.slane %v249, 1
        %v370 = vsel %vm365, %v367, %v369
        %v371 = vrot.slane %v250, 1
        %v372 = vrot.slane %v251, 1
        %v373 = vsel %vm365, %v371, %v372
        %v374 = vrot.slane %v252, 1
        %v375 = vsel %vm365, %v372, %v374
        %v376 = vrot.slane %v253, 1
        %v377 = vrot.slane %v254, 1
        %v378 = vsel %vm365, %v376, %v377
        %v379 = vrot.slane %v255, 1
        %v380 = vsel %vm365, %v377, %v379
        %v381 = vrot.slane %v256, 1
        %v382 = vrot.slane %v257, 1
        %v383 = vsel %vm365, %v381, %v382
        %v384 = vrot.slane %v258, 1
        %v385 = vsel %vm365, %v382, %v384
        %v386 = vrot.slane %v259, 1
        %v387 = vrot.slane %v260, 1
        %v388 = vsel %vm365, %v386, %v387
        %v389 = vrot.slane %v261, 1
        %v390 = vsel %vm365, %v387, %v389
        %v391 = vrot.slane %v262, 1
        %v392 = vrot.slane %v263, 1
        %v393 = vsel %vm365, %v391, %v392
        %v394 = vrot.slane %v264, 1
        %v395 = vsel %vm365, %v392, %v394
        %v396 = vrot.slane %v265, 1
        %v397 = vrot.slane %v266, 1
        %v398 = vsel %vm365, %v396, %v397
        %v399 = vrot.slane %v267, 1
        %v400 = vsel %vm365, %v397, %v399
        %v401 = vrot.slane %v268, 1
        %v402 = vrot.slane %v269, 1
        %v403 = vsel %vm365, %v401, %v402
        %v404 = vrot.slane %v270, 1
        %v405 = vsel %vm365, %v402, %v404
        %v406 = vrot.slane %v271, 1
        %v407 = vrot.slane %v272, 1
        %v408 = vsel %vm365, %v406, %v407
        %v409 = vrot.slane %v273, 1
        %v410 = vsel %vm365, %v407, %v409
        %v411 = vrot.slane %v274, 1
        %v412 = vrot.slane %v275, 1
        %v413 = vsel %vm365, %v411, %v412
        %v414 = vrot.slane %v276, 1
        %v415 = vsel %vm365, %v412, %v414
        %v416 = vrot.slane %v277, 1
        %v417 = vrot.slane %v278, 1
        %v418 = vsel %vm365, %v416, %v417
        %v419 = vrot.slane %v279, 1
        %v420 = vsel %vm365, %v417, %v419
        %v421 = vrot.slane %v280, 1
        %v422 = vrot.slane %v281, 1
        %v423 = vsel %vm365, %v421, %v422
        %v424 = vrot.slane %v282, 1
        %v425 = vsel %vm365, %v422, %v424
        %v426 = vrot.slane %v283, 1
        %v427 = vrot.slane %v284, 1
        %v428 = vsel %vm365, %v426, %v427
        %v429 = vrot.slane %v285, 1
        %v430 = vsel %vm365, %v427, %v429
        %v431 = vrot.slane %v286, 1
        %v432 = vrot.slane %v287, 1
        %v433 = vsel %vm365, %v431, %v432
        %v434 = vrot.slane %v288, 1
        %v435 = vsel %vm365, %v432, %v434
        %v436 = vrot.slane %v289, 1
        %v437 = vrot.slane %v290, 1
        %v438 = vsel %vm365, %v436, %v437
        %v439 = vrot.slane %v291, 1
        %v440 = vsel %vm365, %v437, %v439
        %v441 = vrot.slane %v292, 1
        %v442 = vrot.slane %v293, 1
        %v443 = vsel %vm365, %v441, %v442
        %v444 = vrot.slane %v294, 1
        %v445 = vsel %vm365, %v442, %v444
        %s478 = scalar_lea.vmem [#allocation5], 128
        %v479 = vld [vmem:[%s478] sm:$0xff]
        %v480 = vld [vmem:[%s478 + $0x8] sm:$0xff]
        %v481 = vld [vmem:[%s478 + $0x10] sm:$0xff]
        %v482 = vld [vmem:[%s478 + $0x18] sm:$0xff]
        %v483 = vld [vmem:[%s478 + $0x20] sm:$0xff]
        %v484 = vld [vmem:[%s478 + $0x28] sm:$0xff]
        %v485 = vld [vmem:[%s478 + $0x30] sm:$0xff]
        %v486 = vld [vmem:[%s478 + $0x38] sm:$0xff]
        %v487 = vld [vmem:[%s478 + $0x40] sm:$0xff]
        %v488 = vld [vmem:[%s478 + $0x48] sm:$0xff]
        %v489 = vld [vmem:[%s478 + $0x50] sm:$0xff]
        %v490 = vld [vmem:[%s478 + $0x58] sm:$0xff]
        %v491 = vld [vmem:[%s478 + $0x60] sm:$0xff]
        %v492 = vld [vmem:[%s478 + $0x68] sm:$0xff]
        %v493 = vld [vmem:[%s478 + $0x70] sm:$0xff]
        %v494 = vld [vmem:[%s478 + $0x78] sm:$0xff]
        %495 = vmatprep.subr.mxu0 0.0
        %496 = vmatpush1.msra.mxu0 %v479
        %497 = vmatprep.subr.mxu0 0.0
        %498 = vmatpush1.msra.mxu0 %v480
        %499 = vmatprep.subr.mxu0 0.0
        %500 = vmatpush1.msra.mxu0 %v481
        %501 = vmatprep.subr.mxu0 0.0
        %502 = vmatpush1.msra.mxu0 %v482
        %503 = vmatprep.subr.mxu0 0.0
        %504 = vmatpush1.msra.mxu0 %v483
        %505 = vmatprep.subr.mxu0 0.0
        %506 = vmatpush1.msra.mxu0 %v484
        %507 = vmatprep.subr.mxu0 0.0
        %508 = vmatpush1.msra.mxu0 %v485
        %509 = vmatprep.subr.mxu0 0.0
        %510 = vmatpush1.msra.mxu0 %v486
        %511 = vmatprep.subr.mxu0 0.0
        %512 = vmatpush1.msra.mxu0 %v487
        %513 = vmatprep.subr.mxu0 0.0
        %514 = vmatpush1.msra.mxu0 %v488
        %515 = vmatprep.subr.mxu0 0.0
        %516 = vmatpush1.msra.mxu0 %v489
        %517 = vmatprep.subr.mxu0 0.0
        %518 = vmatpush1.msra.mxu0 %v490
        %519 = vmatprep.subr.mxu0 0.0
        %520 = vmatpush1.msra.mxu0 %v491
        %521 = vmatprep.subr.mxu0 0.0
        %522 = vmatpush1.msra.mxu0 %v492
        %523 = vmatprep.subr.mxu0 0.0
        %524 = vmatpush1.msra.mxu0 %v493
        %525 = vmatprep.subr.mxu0 0.0
        %526 = vmatpush1.msra.mxu0 %v494
        %527 = vmatprep.subr.mxu0 0.0
        %528 = vmatpush1.msra.mxu0 0.0
        %529 = vmatprep.subr.mxu0 0.0
        %530 = vmatpush1.msra.mxu0 0.0
        %531 = vmatprep.subr.mxu0 0.0
        %532 = vmatpush1.msra.mxu0 0.0
        %533 = vmatprep.subr.mxu0 0.0
        %534 = vmatpush1.msra.mxu0 0.0
        %535 = vmatprep.subr.mxu0 0.0
        %536 = vmatpush1.msra.mxu0 0.0
        %537 = vmatprep.subr.mxu0 0.0
        %538 = vmatpush1.msra.mxu0 0.0
        %539 = vmatprep.subr.mxu0 0.0
        %540 = vmatpush1.msra.mxu0 0.0
        %541 = vmatprep.subr.mxu0 0.0
        %542 = vmatpush1.msra.mxu0 0.0
        %543 = vmatprep.subr.mxu0 0.0
        %544 = vmatpush1.msra.mxu0 0.0
        %545 = vmatprep.subr.mxu0 0.0
        %546 = vmatpush1.msra.mxu0 0.0
        %547 = vmatprep.subr.mxu0 0.0
        %548 = vmatpush1.msra.mxu0 0.0
        %549 = vmatprep.subr.mxu0 0.0
        %550 = vmatpush1.msra.mxu0 0.0
        %551 = vmatprep.subr.mxu0 0.0
        %552 = vmatpush1.msra.mxu0 0.0
        %553 = vmatprep.subr.mxu0 0.0
        %554 = vmatpush1.msra.mxu0 0.0
        %555 = vmatprep.subr.mxu0 0.0
        %556 = vmatpush1.msra.mxu0 0.0
        %557 = vmatprep.subr.mxu0 0.0
        %558 = vmatpush1.msra.mxu0 0.0
        %559 = vmatprep.mubr.f32.mxu0 0.0
        %560 = vmatmul.mubr.f32.gmra.mrb[0].mxu0 %v368
        %v561 = vpop.f32.mrb[0].mxu0
        %v562 = vadd.f32 0.0, %v561
        %v563 = vpop.f32.mrb[0].mxu0
        %564 = vmatprep.mubr.f32.mxu0 0.0
        %565 = vmatmul.mubr.f32.gmra.mrb[0].mxu0 %v370
        %v566 = vpop.f32.mrb[0].mxu0
        %v567 = vadd.f32 0.0, %v566
        %v568 = vpop.f32.mrb[0].mxu0
        %569 = vmatprep.mubr.f32.mxu0 0.0
        %570 = vmatmul.mubr.f32.gmra.mrb[0].mxu0 %v373
        %v571 = vpop.f32.mrb[0].mxu0
        %v572 = vadd.f32 0.0, %v571
        %v573 = vpop.f32.mrb[0].mxu0
        %574 = vmatprep.mubr.f32.mxu0 0.0
        %575 = vmatmul.mubr.f32.gmra.mrb[0].mxu0 %v375
        %v576 = vpop.f32.mrb[0].mxu0
        %v577 = vadd.f32 0.0, %v576
        %v578 = vpop.f32.mrb[0].mxu0
        %579 = vmatprep.mubr.f32.mxu0 0.0
        %580 = vmatmul.mubr.f32.gmra.mrb[0].mxu0 %v378
        %v581 = vpop.f32.mrb[0].mxu0
        %v582 = vadd.f32 0.0, %v581
        %v583 = vpop.f32.mrb[0].mxu0
        %584 = vmatprep.mubr.f32.mxu0 0.0
        %585 = vmatmul.mubr.f32.gmra.mrb[0].mxu0 %v380
        %v586 = vpop.f32.mrb[0].mxu0
        %v587 = vadd.f32 0.0, %v586
        %v588 = vpop.f32.mrb[0].mxu0
        %589 = vmatprep.mubr.f32.mxu0 0.0
        %590 = vmatmul.mubr.f32.gmra.mrb[0].mxu0 %v383
        %v591 = vpop.f32.mrb[0].mxu0
        %v592 = vadd.f32 0.0, %v591
        %v593 = vpop.f32.mrb[0].mxu0
        %594 = vmatprep.mubr.f32.mxu0 0.0
        %595 = vmatmul.mubr.f32.gmra.mrb[0].mxu0 %v385
        %v596 = vpop.f32.mrb[0].mxu0
        %v597 = vadd.f32 0.0, %v596
        %v598 = vpop.f32.mrb[0].mxu0
        %599 = vmatprep.mubr.f32.mxu0 0.0
        %600 = vmatmul.mubr.f32.gmra.mrb[0].mxu0 %v388
        %v601 = vpop.f32.mrb[0].mxu0
        %v602 = vadd.f32 0.0, %v601
        %v603 = vpop.f32.mrb[0].mxu0
        %604 = vmatprep.mubr.f32.mxu0 0.0
        %605 = vmatmul.mubr.f32.gmra.mrb[0].mxu0 %v390
        %v606 = vpop.f32.mrb[0].mxu0
        %v607 = vadd.f32 0.0, %v606
        %v608 = vpop.f32.mrb[0].mxu0
        %609 = vmatprep.mubr.f32.mxu0 0.0
        %610 = vmatmul.mubr.f32.gmra.mrb[0].mxu0 %v393
        %v611 = vpop.f32.mrb[0].mxu0
        %v612 = vadd.f32 0.0, %v611
        %v613 = vpop.f32.mrb[0].mxu0
        %614 = vmatprep.mubr.f32.mxu0 0.0
        %615 = vmatmul.mubr.f32.gmra.mrb[0].mxu0 %v395
        %v616 = vpop.f32.mrb[0].mxu0
        %v617 = vadd.f32 0.0, %v616
        %v618 = vpop.f32.mrb[0].mxu0
        %619 = vmatprep.mubr.f32.mxu0 0.0
        %620 = vmatmul.mubr.f32.gmra.mrb[0].mxu0 %v398
        %v621 = vpop.f32.mrb[0].mxu0
        %v622 = vadd.f32 0.0, %v621
        %v623 = vpop.f32.mrb[0].mxu0
        %624 = vmatprep.mubr.f32.mxu0 0.0
        %625 = vmatmul.mubr.f32.gmra.mrb[0].mxu0 %v400
        %v626 = vpop.f32.mrb[0].mxu0
        %v627 = vadd.f32 0.0, %v626
        %v628 = vpop.f32.mrb[0].mxu0
        %629 = vmatprep.mubr.f32.mxu0 0.0
        %630 = vmatmul.mubr.f32.gmra.mrb[0].mxu0 %v403
        %v631 = vpop.f32.mrb[0].mxu0
        %v632 = vadd.f32 0.0, %v631
        %v633 = vpop.f32.mrb[0].mxu0
        %634 = vmatprep.mubr.f32.mxu0 0.0
        %635 = vmatmul.mubr.f32.gmra.mrb[0].mxu0 %v405
        %v636 = vpop.f32.mrb[0].mxu0
        %v637 = vadd.f32 0.0, %v636
        %v638 = vpop.f32.mrb[0].mxu0
        %639 = vmatprep.mubr.f32.mxu0 0.0
        %640 = vmatmul.mubr.f32.gmra.mrb[0].mxu0 %v408
        %v641 = vpop.f32.mrb[0].mxu0
        %v642 = vadd.f32 0.0, %v641
        %v643 = vpop.f32.mrb[0].mxu0
        %644 = vmatprep.mubr.f32.mxu0 0.0
        %645 = vmatmul.mubr.f32.gmra.mrb[0].mxu0 %v410
        %v646 = vpop.f32.mrb[0].mxu0
        %v647 = vadd.f32 0.0, %v646
        %v648 = vpop.f32.mrb[0].mxu0
        %649 = vmatprep.mubr.f32.mxu0 0.0
        %650 = vmatmul.mubr.f32.gmra.mrb[0].mxu0 %v413
        %v651 = vpop.f32.mrb[0].mxu0
        %v652 = vadd.f32 0.0, %v651
        %v653 = vpop.f32.mrb[0].mxu0
        %654 = vmatprep.mubr.f32.mxu0 0.0
        %655 = vmatmul.mubr.f32.gmra.mrb[0].mxu0 %v415
        %v656 = vpop.f32.mrb[0].mxu0
        %v657 = vadd.f32 0.0, %v656
        %v658 = vpop.f32.mrb[0].mxu0
        %659 = vmatprep.mubr.f32.mxu0 0.0
        %660 = vmatmul.mubr.f32.gmra.mrb[0].mxu0 %v418
        %v661 = vpop.f32.mrb[0].mxu0
        %v662 = vadd.f32 0.0, %v661
        %v663 = vpop.f32.mrb[0].mxu0
        %664 = vmatprep.mubr.f32.mxu0 0.0
        %665 = vmatmul.mubr.f32.gmra.mrb[0].mxu0 %v420
        %v666 = vpop.f32.mrb[0].mxu0
        %v667 = vadd.f32 0.0, %v666
        %v668 = vpop.f32.mrb[0].mxu0
        %669 = vmatprep.mubr.f32.mxu0 0.0
        %670 = vmatmul.mubr.f32.gmra.mrb[0].mxu0 %v423
        %v671 = vpop.f32.mrb[0].mxu0
        %v672 = vadd.f32 0.0, %v671
        %v673 = vpop.f32.mrb[0].mxu0
        %674 = vmatprep.mubr.f32.mxu0 0.0
        %675 = vmatmul.mubr.f32.gmra.mrb[0].mxu0 %v425
        %v676 = vpop.f32.mrb[0].mxu0
        %v677 = vadd.f32 0.0, %v676
        %v678 = vpop.f32.mrb[0].mxu0
        %679 = vmatprep.mubr.f32.mxu0 0.0
        %680 = vmatmul.mubr.f32.gmra.mrb[0].mxu0 %v428
        %v681 = vpop.f32.mrb[0].mxu0
        %v682 = vadd.f32 0.0, %v681
        %v683 = vpop.f32.mrb[0].mxu0
        %684 = vmatprep.mubr.f32.mxu0 0.0
        %685 = vmatmul.mubr.f32.gmra.mrb[0].mxu0 %v430
        %v686 = vpop.f32.mrb[0].mxu0
        %v687 = vadd.f32 0.0, %v686
        %v688 = vpop.f32.mrb[0].mxu0
        %689 = vmatprep.mubr.f32.mxu0 0.0
        %690 = vmatmul.mubr.f32.gmra.mrb[0].mxu0 %v433
        %v691 = vpop.f32.mrb[0].mxu0
        %v692 = vadd.f32 0.0, %v691
        %v693 = vpop.f32.mrb[0].mxu0
        %694 = vmatprep.mubr.f32.mxu0 0.0
        %695 = vmatmul.mubr.f32.gmra.mrb[0].mxu0 %v435
        %v696 = vpop.f32.mrb[0].mxu0
        %v697 = vadd.f32 0.0, %v696
        %v698 = vpop.f32.mrb[0].mxu0
        %699 = vmatprep.mubr.f32.mxu0 0.0
        %700 = vmatmul.mubr.f32.gmra.mrb[0].mxu0 %v438
        %v701 = vpop.f32.mrb[0].mxu0
        %v702 = vadd.f32 0.0, %v701
        %v703 = vpop.f32.mrb[0].mxu0
        %704 = vmatprep.mubr.f32.mxu0 0.0
        %705 = vmatmul.mubr.f32.gmra.mrb[0].mxu0 %v440
        %v706 = vpop.f32.mrb[0].mxu0
        %v707 = vadd.f32 0.0, %v706
        %v708 = vpop.f32.mrb[0].mxu0
        %709 = vmatprep.mubr.f32.mxu0 0.0
        %710 = vmatmul.mubr.f32.gmra.mrb[0].mxu0 %v443
        %v711 = vpop.f32.mrb[0].mxu0
        %v712 = vadd.f32 0.0, %v711
        %v713 = vpop.f32.mrb[0].mxu0
        %714 = vmatprep.mubr.f32.mxu0 0.0
        %715 = vmatmul.mubr.f32.gmra.mrb[0].mxu0 %v445
        %v716 = vpop.f32.mrb[0].mxu0
        %v717 = vadd.f32 0.0, %v716
        %v718 = vpop.f32.mrb[0].mxu0
        %719 = vdwg.mxu0
        %720 = vmatprep.subr.mxu0 0.0
        %721 = vmatpush1.msra.mxu0 %v301
        %722 = vmatprep.subr.mxu0 0.0
        %723 = vmatpush1.msra.mxu0 %v302
        %724 = vmatprep.subr.mxu0 0.0
        %725 = vmatpush1.msra.mxu0 %v303
        %726 = vmatprep.subr.mxu0 0.0
        %727 = vmatpush1.msra.mxu0 %v304
        %728 = vmatprep.subr.mxu0 0.0
        %729 = vmatpush1.msra.mxu0 %v305
        %730 = vmatprep.subr.mxu0 0.0
        %731 = vmatpush1.msra.mxu0 %v306
        %732 = vmatprep.subr.mxu0 0.0
        %733 = vmatpush1.msra.mxu0 %v307
        %734 = vmatprep.subr.mxu0 0.0
        %735 = vmatpush1.msra.mxu0 %v308
        %736 = vmatprep.subr.mxu0 0.0
        %737 = vmatpush1.msra.mxu0 %v309
        %738 = vmatprep.subr.mxu0 0.0
        %739 = vmatpush1.msra.mxu0 %v310
        %740 = vmatprep.subr.mxu0 0.0
        %741 = vmatpush1.msra.mxu0 %v311
        %742 = vmatprep.subr.mxu0 0.0
        %743 = vmatpush1.msra.mxu0 %v312
        %744 = vmatprep.subr.mxu0 0.0
        %745 = vmatpush1.msra.mxu0 %v313
        %746 = vmatprep.subr.mxu0 0.0
        %747 = vmatpush1.msra.mxu0 %v314
        %748 = vmatprep.subr.mxu0 0.0
        %749 = vmatpush1.msra.mxu0 %v315
        %750 = vmatprep.subr.mxu0 0.0
        %751 = vmatpush1.msra.mxu0 %v316
        %752 = vmatprep.subr.mxu0 0.0
        %753 = vmatpush1.msra.mxu0 0.0
        %754 = vmatprep.subr.mxu0 0.0
        %755 = vmatpush1.msra.mxu0 0.0
        %756 = vmatprep.subr.mxu0 0.0
        %757 = vmatpush1.msra.mxu0 0.0
        %758 = vmatprep.subr.mxu0 0.0
        %759 = vmatpush1.msra.mxu0 0.0
        %760 = vmatprep.subr.mxu0 0.0
        %761 = vmatpush1.msra.mxu0 0.0
        %762 = vmatprep.subr.mxu0 0.0
        %763 = vmatpush1.msra.mxu0 0.0
        %764 = vmatprep.subr.mxu0 0.0
        %765 = vmatpush1.msra.mxu0 0.0
        %766 = vmatprep.subr.mxu0 0.0
        %767 = vmatpush1.msra.mxu0 0.0
        %768 = vmatprep.subr.mxu0 0.0
        %769 = vmatpush1.msra.mxu0 0.0
        %770 = vmatprep.subr.mxu0 0.0
        %771 = vmatpush1.msra.mxu0 0.0
        %772 = vmatprep.subr.mxu0 0.0
        %773 = vmatpush1.msra.mxu0 0.0
        %774 = vmatprep.subr.mxu0 0.0
        %775 = vmatpush1.msra.mxu0 0.0
        %776 = vmatprep.subr.mxu0 0.0
        %777 = vmatpush1.msra.mxu0 0.0
        %778 = vmatprep.subr.mxu0 0.0
        %779 = vmatpush1.msra.mxu0 0.0
        %780 = vmatprep.subr.mxu0 0.0
        %781 = vmatpush1.msra.mxu0 0.0
        %782 = vmatprep.subr.mxu0 0.0
        %783 = vmatpush1.msra.mxu0 0.0
        %784 = vmatprep.mubr.f32.mxu0 0.0
        %785 = vmatmul.mubr.f32.gmra.mrb[0].mxu0 %v247
        %v786 = vpop.f32.mrb[0].mxu0
        %v787 = vadd.f32 %v562, %v786
        %v788 = vpop.f32.mrb[0].mxu0
        %789 = vmatprep.mubr.f32.mxu0 0.0
        %790 = vmatmul.mubr.f32.gmra.mrb[0].mxu0 %v248
        %v791 = vpop.f32.mrb[0].mxu0
        %v792 = vadd.f32 %v567, %v791
        %v793 = vpop.f32.mrb[0].mxu0
        %794 = vmatprep.mubr.f32.mxu0 0.0
        %795 = vmatmul.mubr.f32.gmra.mrb[0].mxu0 %v250
        %v796 = vpop.f32.mrb[0].mxu0
        %v797 = vadd.f32 %v572, %v796
        %v798 = vpop.f32.mrb[0].mxu0
        %799 = vmatprep.mubr.f32.mxu0 0.0
        %800 = vmatmul.mubr.f32.gmra.mrb[0].mxu0 %v251
        %v801 = vpop.f32.mrb[0].mxu0
        %v802 = vadd.f32 %v577, %v801
        %v803 = vpop.f32.mrb[0].mxu0
        %804 = vmatprep.mubr.f32.mxu0 0.0
        %805 = vmatmul.mubr.f32.gmra.mrb[0].mxu0 %v253
        %v806 = vpop.f32.mrb[0].mxu0
        %v807 = vadd.f32 %v582, %v806
        %v808 = vpop.f32.mrb[0].mxu0
        %809 = vmatprep.mubr.f32.mxu0 0.0
        %810 = vmatmul.mubr.f32.gmra.mrb[0].mxu0 %v254
        %v811 = vpop.f32.mrb[0].mxu0
        %v812 = vadd.f32 %v587, %v811
        %v813 = vpop.f32.mrb[0].mxu0
        %814 = vmatprep.mubr.f32.mxu0 0.0
        %815 = vmatmul.mubr.f32.gmra.mrb[0].mxu0 %v256
        %v816 = vpop.f32.mrb[0].mxu0
        %v817 = vadd.f32 %v592, %v816
        %v818 = vpop.f32.mrb[0].mxu0
        %819 = vmatprep.mubr.f32.mxu0 0.0
        %820 = vmatmul.mubr.f32.gmra.mrb[0].mxu0 %v257
        %v821 = vpop.f32.mrb[0].mxu0
        %v822 = vadd.f32 %v597, %v821
        %v823 = vpop.f32.mrb[0].mxu0
        %824 = vmatprep.mubr.f32.mxu0 0.0
        %825 = vmatmul.mubr.f32.gmra.mrb[0].mxu0 %v259
        %v826 = vpop.f32.mrb[0].mxu0
        %v827 = vadd.f32 %v602, %v826
        %v828 = vpop.f32.mrb[0].mxu0
        %829 = vmatprep.mubr.f32.mxu0 0.0
        %830 = vmatmul.mubr.f32.gmra.mrb[0].mxu0 %v260
        %v831 = vpop.f32.mrb[0].mxu0
        %v832 = vadd.f32 %v607, %v831
        %v833 = vpop.f32.mrb[0].mxu0
        %834 = vmatprep.mubr.f32.mxu0 0.0
        %835 = vmatmul.mubr.f32.gmra.mrb[0].mxu0 %v262
        %v836 = vpop.f32.mrb[0].mxu0
        %v837 = vadd.f32 %v612, %v836
        %v838 = vpop.f32.mrb[0].mxu0
        %839 = vmatprep.mubr.f32.mxu0 0.0
        %840 = vmatmul.mubr.f32.gmra.mrb[0].mxu0 %v263
        %v841 = vpop.f32.mrb[0].mxu0
        %v842 = vadd.f32 %v617, %v841
        %v843 = vpop.f32.mrb[0].mxu0
        %844 = vmatprep.mubr.f32.mxu0 0.0
        %845 = vmatmul.mubr.f32.gmra.mrb[0].mxu0 %v265
        %v846 = vpop.f32.mrb[0].mxu0
        %v847 = vadd.f32 %v622, %v846
        %v848 = vpop.f32.mrb[0].mxu0
        %849 = vmatprep.mubr.f32.mxu0 0.0
        %850 = vmatmul.mubr.f32.gmra.mrb[0].mxu0 %v266
        %v851 = vpop.f32.mrb[0].mxu0
        %v852 = vadd.f32 %v627, %v851
        %v853 = vpop.f32.mrb[0].mxu0
        %854 = vmatprep.mubr.f32.mxu0 0.0
        %855 = vmatmul.mubr.f32.gmra.mrb[0].mxu0 %v268
        %v856 = vpop.f32.mrb[0].mxu0
        %v857 = vadd.f32 %v632, %v856
        %v858 = vpop.f32.mrb[0].mxu0
        %859 = vmatprep.mubr.f32.mxu0 0.0
        %860 = vmatmul.mubr.f32.gmra.mrb[0].mxu0 %v269
        %v861 = vpop.f32.mrb[0].mxu0
        %v862 = vadd.f32 %v637, %v861
        %v863 = vpop.f32.mrb[0].mxu0
        %864 = vmatprep.mubr.f32.mxu0 0.0
        %865 = vmatmul.mubr.f32.gmra.mrb[0].mxu0 %v271
        %v866 = vpop.f32.mrb[0].mxu0
        %v867 = vadd.f32 %v642, %v866
        %v868 = vpop.f32.mrb[0].mxu0
        %869 = vmatprep.mubr.f32.mxu0 0.0
        %870 = vmatmul.mubr.f32.gmra.mrb[0].mxu0 %v272
        %v871 = vpop.f32.mrb[0].mxu0
        %v872 = vadd.f32 %v647, %v871
        %v873 = vpop.f32.mrb[0].mxu0
        %874 = vmatprep.mubr.f32.mxu0 0.0
        %875 = vmatmul.mubr.f32.gmra.mrb[0].mxu0 %v274
        %v876 = vpop.f32.mrb[0].mxu0
        %v877 = vadd.f32 %v652, %v876
        %v878 = vpop.f32.mrb[0].mxu0
        %879 = vmatprep.mubr.f32.mxu0 0.0
        %880 = vmatmul.mubr.f32.gmra.mrb[0].mxu0 %v275
        %v881 = vpop.f32.mrb[0].mxu0
        %v882 = vadd.f32 %v657, %v881
        %v883 = vpop.f32.mrb[0].mxu0
        %884 = vmatprep.mubr.f32.mxu0 0.0
        %885 = vmatmul.mubr.f32.gmra.mrb[0].mxu0 %v277
        %v886 = vpop.f32.mrb[0].mxu0
        %v887 = vadd.f32 %v662, %v886
        %v888 = vpop.f32.mrb[0].mxu0
        %889 = vmatprep.mubr.f32.mxu0 0.0
        %890 = vmatmul.mubr.f32.gmra.mrb[0].mxu0 %v278
        %v891 = vpop.f32.mrb[0].mxu0
        %v892 = vadd.f32 %v667, %v891
        %v893 = vpop.f32.mrb[0].mxu0
        %894 = vmatprep.mubr.f32.mxu0 0.0
        %895 = vmatmul.mubr.f32.gmra.mrb[0].mxu0 %v280
        %v896 = vpop.f32.mrb[0].mxu0
        %v897 = vadd.f32 %v672, %v896
        %v898 = vpop.f32.mrb[0].mxu0
        %899 = vmatprep.mubr.f32.mxu0 0.0
        %900 = vmatmul.mubr.f32.gmra.mrb[0].mxu0 %v281
        %v901 = vpop.f32.mrb[0].mxu0
        %v902 = vadd.f32 %v677, %v901
        %v903 = vpop.f32.mrb[0].mxu0
        %904 = vmatprep.mubr.f32.mxu0 0.0
        %905 = vmatmul.mubr.f32.gmra.mrb[0].mxu0 %v283
        %v906 = vpop.f32.mrb[0].mxu0
        %v907 = vadd.f32 %v682, %v906
        %v908 = vpop.f32.mrb[0].mxu0
        %909 = vmatprep.mubr.f32.mxu0 0.0
        %910 = vmatmul.mubr.f32.gmra.mrb[0].mxu0 %v284
        %v911 = vpop.f32.mrb[0].mxu0
        %v912 = vadd.f32 %v687, %v911
        %v913 = vpop.f32.mrb[0].mxu0
        %914 = vmatprep.mubr.f32.mxu0 0.0
        %915 = vmatmul.mubr.f32.gmra.mrb[0].mxu0 %v286
        %v916 = vpop.f32.mrb[0].mxu0
        %v917 = vadd.f32 %v692, %v916
        %v918 = vpop.f32.mrb[0].mxu0
        %919 = vmatprep.mubr.f32.mxu0 0.0
        %920 = vmatmul.mubr.f32.gmra.mrb[0].mxu0 %v287
        %v921 = vpop.f32.mrb[0].mxu0
        %v922 = vadd.f32 %v697, %v921
        %v923 = vpop.f32.mrb[0].mxu0
        %924 = vmatprep.mubr.f32.mxu0 0.0
        %925 = vmatmul.mubr.f32.gmra.mrb[0].mxu0 %v289
        %v926 = vpop.f32.mrb[0].mxu0
        %v927 = vadd.f32 %v702, %v926
        %v928 = vpop.f32.mrb[0].mxu0
        %929 = vmatprep.mubr.f32.mxu0 0.0
        %930 = vmatmul.mubr.f32.gmra.mrb[0].mxu0 %v290
        %v931 = vpop.f32.mrb[0].mxu0
        %v932 = vadd.f32 %v707, %v931
        %v933 = vpop.f32.mrb[0].mxu0
        %934 = vmatprep.mubr.f32.mxu0 0.0
        %935 = vmatmul.mubr.f32.gmra.mrb[0].mxu0 %v292
        %v936 = vpop.f32.mrb[0].mxu0
        %v937 = vadd.f32 %v712, %v936
        %v938 = vpop.f32.mrb[0].mxu0
        %939 = vmatprep.mubr.f32.mxu0 0.0
        %940 = vmatmul.mubr.f32.gmra.mrb[0].mxu0 %v293
        %v941 = vpop.f32.mrb[0].mxu0
        %v942 = vadd.f32 %v717, %v941
        %v943 = vpop.f32.mrb[0].mxu0
        %944 = vdwg.mxu0
        %vm945 = vcmask 1045504
        %v946 = vrot.slane %v247, 2
        %v947 = vrot.slane %v248, 2
        %v948 = vsel %vm945, %v946, %v947
        %v949 = vrot.slane %v249, 2
        %v950 = vsel %vm945, %v947, %v949
        %v951 = vrot.slane %v250, 2
        %v952 = vrot.slane %v251, 2
        %v953 = vsel %vm945, %v951, %v952
        %v954 = vrot.slane %v252, 2
        %v955 = vsel %vm945, %v952, %v954
        %v956 = vrot.slane %v253, 2
        %v957 = vrot.slane %v254, 2
        %v958 = vsel %vm945, %v956, %v957
        %v959 = vrot.slane %v255, 2
        %v960 = vsel %vm945, %v957, %v959
        %v961 = vrot.slane %v256, 2
        %v962 = vrot.slane %v257, 2
        %v963 = vsel %vm945, %v961, %v962
        %v964 = vrot.slane %v258, 2
        %v965 = vsel %vm945, %v962, %v964
        %v966 = vrot.slane %v259, 2
        %v967 = vrot.slane %v260, 2
        %v968 = vsel %vm945, %v966, %v967
        %v969 = vrot.slane %v261, 2
        %v970 = vsel %vm945, %v967, %v969
        %v971 = vrot.slane %v262, 2
        %v972 = vrot.slane %v263, 2
        %v973 = vsel %vm945, %v971, %v972
        %v974 = vrot.slane %v264, 2
        %v975 = vsel %vm945, %v972, %v974
        %v976 = vrot.slane %v265, 2
        %v977 = vrot.slane %v266, 2
        %v978 = vsel %vm945, %v976, %v977
        %v979 = vrot.slane %v267, 2
        %v980 = vsel %vm945, %v977, %v979
        %v981 = vrot.slane %v268, 2
        %v982 = vrot.slane %v269, 2
        %v983 = vsel %vm945, %v981, %v982
        %v984 = vrot.slane %v270, 2
        %v985 = vsel %vm945, %v982, %v984
        %v986 = vrot.slane %v271, 2
        %v987 = vrot.slane %v272, 2
        %v988 = vsel %vm945, %v986, %v987
        %v989 = vrot.slane %v273, 2
        %v990 = vsel %vm945, %v987, %v989
        %v991 = vrot.slane %v274, 2
        %v992 = vrot.slane %v275, 2
        %v993 = vsel %vm945, %v991, %v992
        %v994 = vrot.slane %v276, 2
        %v995 = vsel %vm945, %v992, %v994
        %v996 = vrot.slane %v277, 2
        %v997 = vrot.slane %v278, 2
        %v998 = vsel %vm945, %v996, %v997
        %v999 = vrot.slane %v279, 2
        %v1000 = vsel %vm945, %v997, %v999
        %v1001 = vrot.slane %v280, 2
        %v1002 = vrot.slane %v281, 2
        %v1003 = vsel %vm945, %v1001, %v1002
        %v1004 = vrot.slane %v282, 2
        %v1005 = vsel %vm945, %v1002, %v1004
        %v1006 = vrot.slane %v283, 2
        %v1007 = vrot.slane %v284, 2
        %v1008 = vsel %vm945, %v1006, %v1007
        %v1009 = vrot.slane %v285, 2
        %v1010 = vsel %vm945, %v1007, %v1009
        %v1011 = vrot.slane %v286, 2
        %v1012 = vrot.slane %v287, 2
        %v1013 = vsel %vm945, %v1011, %v1012
        %v1014 = vrot.slane %v288, 2
        %v1015 = vsel %vm945, %v1012, %v1014
        %v1016 = vrot.slane %v289, 2
        %v1017 = vrot.slane %v290, 2
        %v1018 = vsel %vm945, %v1016, %v1017
        %v1019 = vrot.slane %v291, 2
        %v1020 = vsel %vm945, %v1017, %v1019
        %v1021 = vrot.slane %v292, 2
        %v1022 = vrot.slane %v293, 2
        %v1023 = vsel %vm945, %v1021, %v1022
        %v1024 = vrot.slane %v294, 2
        %v1025 = vsel %vm945, %v1022, %v1024
        %s1058 = scalar_lea.vmem [#allocation5], 256
        %v1059 = vld [vmem:[%s1058] sm:$0xff]
        %v1060 = vld [vmem:[%s1058 + $0x8] sm:$0xff]
        %v1061 = vld [vmem:[%s1058 + $0x10] sm:$0xff]
        %v1062 = vld [vmem:[%s1058 + $0x18] sm:$0xff]
        %v1063 = vld [vmem:[%s1058 + $0x20] sm:$0xff]
        %v1064 = vld [vmem:[%s1058 + $0x28] sm:$0xff]
        %v1065 = vld [vmem:[%s1058 + $0x30] sm:$0xff]
        %v1066 = vld [vmem:[%s1058 + $0x38] sm:$0xff]
        %v1067 = vld [vmem:[%s1058 + $0x40] sm:$0xff]
        %v1068 = vld [vmem:[%s1058 + $0x48] sm:$0xff]
        %v1069 = vld [vmem:[%s1058 + $0x50] sm:$0xff]
        %v1070 = vld [vmem:[%s1058 + $0x58] sm:$0xff]
        %v1071 = vld [vmem:[%s1058 + $0x60] sm:$0xff]
        %v1072 = vld [vmem:[%s1058 + $0x68] sm:$0xff]
        %v1073 = vld [vmem:[%s1058 + $0x70] sm:$0xff]
        %v1074 = vld [vmem:[%s1058 + $0x78] sm:$0xff]
        %1075 = vmatprep.subr.mxu0 0.0
        %1076 = vmatpush1.msra.mxu0 %v1059
        %1077 = vmatprep.subr.mxu0 0.0
        %1078 = vmatpush1.msra.mxu0 %v1060
        %1079 = vmatprep.subr.mxu0 0.0
        %1080 = vmatpush1.msra.mxu0 %v1061
        %1081 = vmatprep.subr.mxu0 0.0
        %1082 = vmatpush1.msra.mxu0 %v1062
        %1083 = vmatprep.subr.mxu0 0.0
        %1084 = vmatpush1.msra.mxu0 %v1063
        %1085 = vmatprep.subr.mxu0 0.0
        %1086 = vmatpush1.msra.mxu0 %v1064
        %1087 = vmatprep.subr.mxu0 0.0
        %1088 = vmatpush1.msra.mxu0 %v1065
        %1089 = vmatprep.subr.mxu0 0.0
        %1090 = vmatpush1.msra.mxu0 %v1066
        %1091 = vmatprep.subr.mxu0 0.0
        %1092 = vmatpush1.msra.mxu0 %v1067
        %1093 = vmatprep.subr.mxu0 0.0
        %1094 = vmatpush1.msra.mxu0 %v1068
        %1095 = vmatprep.subr.mxu0 0.0
        %1096 = vmatpush1.msra.mxu0 %v1069
        %1097 = vmatprep.subr.mxu0 0.0
        %1098 = vmatpush1.msra.mxu0 %v1070
        %1099 = vmatprep.subr.mxu0 0.0
        %1100 = vmatpush1.msra.mxu0 %v1071
        %1101 = vmatprep.subr.mxu0 0.0
        %1102 = vmatpush1.msra.mxu0 %v1072
        %1103 = vmatprep.subr.mxu0 0.0
        %1104 = vmatpush1.msra.mxu0 %v1073
        %1105 = vmatprep.subr.mxu0 0.0
        %1106 = vmatpush1.msra.mxu0 %v1074
        %1107 = vmatprep.subr.mxu0 0.0
        %1108 = vmatpush1.msra.mxu0 0.0
        %1109 = vmatprep.subr.mxu0 0.0
        %1110 = vmatpush1.msra.mxu0 0.0
        %1111 = vmatprep.subr.mxu0 0.0
        %1112 = vmatpush1.msra.mxu0 0.0
        %1113 = vmatprep.subr.mxu0 0.0
        %1114 = vmatpush1.msra.mxu0 0.0
        %1115 = vmatprep.subr.mxu0 0.0
        %1116 = vmatpush1.msra.mxu0 0.0
        %1117 = vmatprep.subr.mxu0 0.0
        %1118 = vmatpush1.msra.mxu0 0.0
        %1119 = vmatprep.subr.mxu0 0.0
        %1120 = vmatpush1.msra.mxu0 0.0
        %1121 = vmatprep.subr.mxu0 0.0
        %1122 = vmatpush1.msra.mxu0 0.0
        %1123 = vmatprep.subr.mxu0 0.0
        %1124 = vmatpush1.msra.mxu0 0.0
        %1125 = vmatprep.subr.mxu0 0.0
        %1126 = vmatpush1.msra.mxu0 0.0
        %1127 = vmatprep.subr.mxu0 0.0
        %1128 = vmatpush1.msra.mxu0 0.0
        %1129 = vmatprep.subr.mxu0 0.0
        %1130 = vmatpush1.msra.mxu0 0.0
        %1131 = vmatprep.subr.mxu0 0.0
        %1132 = vmatpush1.msra.mxu0 0.0
        %1133 = vmatprep.subr.mxu0 0.0
        %1134 = vmatpush1.msra.mxu0 0.0
        %1135 = vmatprep.subr.mxu0 0.0
        %1136 = vmatpush1.msra.mxu0 0.0
        %1137 = vmatprep.subr.mxu0 0.0
        %1138 = vmatpush1.msra.mxu0 0.0
        %1139 = vmatprep.mubr.f32.mxu0 0.0
        %1140 = vmatmul.mubr.f32.gmra.mrb[0].mxu0 %v948
        %v1141 = vpop.f32.mrb[0].mxu0
        %v1142 = vadd.f32 0.0, %v1141
        %v1143 = vpop.f32.mrb[0].mxu0
        %1144 = vmatprep.mubr.f32.mxu0 0.0
        %1145 = vmatmul.mubr.f32.gmra.mrb[0].mxu0 %v950
        %v1146 = vpop.f32.mrb[0].mxu0
        %v1147 = vadd.f32 0.0, %v1146
        %v1148 = vpop.f32.mrb[0].mxu0
        %1149 = vmatprep.mubr.f32.mxu0 0.0
        %1150 = vmatmul.mubr.f32.gmra.mrb[0].mxu0 %v953
        %v1151 = vpop.f32.mrb[0].mxu0
        %v1152 = vadd.f32 0.0, %v1151
        %v1153 = vpop.f32.mrb[0].mxu0
        %1154 = vmatprep.mubr.f32.mxu0 0.0
        %1155 = vmatmul.mubr.f32.gmra.mrb[0].mxu0 %v955
        %v1156 = vpop.f32.mrb[0].mxu0
        %v1157 = vadd.f32 0.0, %v1156
        %v1158 = vpop.f32.mrb[0].mxu0
        %1159 = vmatprep.mubr.f32.mxu0 0.0
        %1160 = vmatmul.mubr.f32.gmra.mrb[0].mxu0 %v958
        %v1161 = vpop.f32.mrb[0].mxu0
        %v1162 = vadd.f32 0.0, %v1161
        %v1163 = vpop.f32.mrb[0].mxu0
        %1164 = vmatprep.mubr.f32.mxu0 0.0
        %1165 = vmatmul.mubr.f32.gmra.mrb[0].mxu0 %v960
        %v1166 = vpop.f32.mrb[0].mxu0
        %v1167 = vadd.f32 0.0, %v1166
        %v1168 = vpop.f32.mrb[0].mxu0
        %1169 = vmatprep.mubr.f32.mxu0 0.0
        %1170 = vmatmul.mubr.f32.gmra.mrb[0].mxu0 %v963
        %v1171 = vpop.f32.mrb[0].mxu0
        %v1172 = vadd.f32 0.0, %v1171
        %v1173 = vpop.f32.mrb[0].mxu0
        %1174 = vmatprep.mubr.f32.mxu0 0.0
        %1175 = vmatmul.mubr.f32.gmra.mrb[0].mxu0 %v965
        %v1176 = vpop.f32.mrb[0].mxu0
        %v1177 = vadd.f32 0.0, %v1176
        %v1178 = vpop.f32.mrb[0].mxu0
        %1179 = vmatprep.mubr.f32.mxu0 0.0
        %1180 = vmatmul.mubr.f32.gmra.mrb[0].mxu0 %v968
        %v1181 = vpop.f32.mrb[0].mxu0
        %v1182 = vadd.f32 0.0, %v1181
        %v1183 = vpop.f32.mrb[0].mxu0
        %1184 = vmatprep.mubr.f32.mxu0 0.0
        %1185 = vmatmul.mubr.f32.gmra.mrb[0].mxu0 %v970
        %v1186 = vpop.f32.mrb[0].mxu0
        %v1187 = vadd.f32 0.0, %v1186
        %v1188 = vpop.f32.mrb[0].mxu0
        %1189 = vmatprep.mubr.f32.mxu0 0.0
        %1190 = vmatmul.mubr.f32.gmra.mrb[0].mxu0 %v973
        %v1191 = vpop.f32.mrb[0].mxu0
        %v1192 = vadd.f32 0.0, %v1191
        %v1193 = vpop.f32.mrb[0].mxu0
        %1194 = vmatprep.mubr.f32.mxu0 0.0
        %1195 = vmatmul.mubr.f32.gmra.mrb[0].mxu0 %v975
        %v1196 = vpop.f32.mrb[0].mxu0
        %v1197 = vadd.f32 0.0, %v1196
        %v1198 = vpop.f32.mrb[0].mxu0
        %1199 = vmatprep.mubr.f32.mxu0 0.0
        %1200 = vmatmul.mubr.f32.gmra.mrb[0].mxu0 %v978
        %v1201 = vpop.f32.mrb[0].mxu0
        %v1202 = vadd.f32 0.0, %v1201
        %v1203 = vpop.f32.mrb[0].mxu0
        %1204 = vmatprep.mubr.f32.mxu0 0.0
        %1205 = vmatmul.mubr.f32.gmra.mrb[0].mxu0 %v980
        %v1206 = vpop.f32.mrb[0].mxu0
        %v1207 = vadd.f32 0.0, %v1206
        %v1208 = vpop.f32.mrb[0].mxu0
        %1209 = vmatprep.mubr.f32.mxu0 0.0
        %1210 = vmatmul.mubr.f32.gmra.mrb[0].mxu0 %v983
        %v1211 = vpop.f32.mrb[0].mxu0
        %v1212 = vadd.f32 0.0, %v1211
        %v1213 = vpop.f32.mrb[0].mxu0
        %1214 = vmatprep.mubr.f32.mxu0 0.0
        %1215 = vmatmul.mubr.f32.gmra.mrb[0].mxu0 %v985
        %v1216 = vpop.f32.mrb[0].mxu0
        %v1217 = vadd.f32 0.0, %v1216
        %v1218 = vpop.f32.mrb[0].mxu0
        %1219 = vmatprep.mubr.f32.mxu0 0.0
        %1220 = vmatmul.mubr.f32.gmra.mrb[0].mxu0 %v988
        %v1221 = vpop.f32.mrb[0].mxu0
        %v1222 = vadd.f32 0.0, %v1221
        %v1223 = vpop.f32.mrb[0].mxu0
        %1224 = vmatprep.mubr.f32.mxu0 0.0
        %1225 = vmatmul.mubr.f32.gmra.mrb[0].mxu0 %v990
        %v1226 = vpop.f32.mrb[0].mxu0
        %v1227 = vadd.f32 0.0, %v1226
        %v1228 = vpop.f32.mrb[0].mxu0
        %1229 = vmatprep.mubr.f32.mxu0 0.0
        %1230 = vmatmul.mubr.f32.gmra.mrb[0].mxu0 %v993
        %v1231 = vpop.f32.mrb[0].mxu0
        %v1232 = vadd.f32 0.0, %v1231
        %v1233 = vpop.f32.mrb[0].mxu0
        %1234 = vmatprep.mubr.f32.mxu0 0.0
        %1235 = vmatmul.mubr.f32.gmra.mrb[0].mxu0 %v995
        %v1236 = vpop.f32.mrb[0].mxu0
        %v1237 = vadd.f32 0.0, %v1236
        %v1238 = vpop.f32.mrb[0].mxu0
        %1239 = vmatprep.mubr.f32.mxu0 0.0
        %1240 = vmatmul.mubr.f32.gmra.mrb[0].mxu0 %v998
        %v1241 = vpop.f32.mrb[0].mxu0
        %v1242 = vadd.f32 0.0, %v1241
        %v1243 = vpop.f32.mrb[0].mxu0
        %1244 = vmatprep.mubr.f32.mxu0 0.0
        %1245 = vmatmul.mubr.f32.gmra.mrb[0].mxu0 %v1000
        %v1246 = vpop.f32.mrb[0].mxu0
        %v1247 = vadd.f32 0.0, %v1246
        %v1248 = vpop.f32.mrb[0].mxu0
        %1249 = vmatprep.mubr.f32.mxu0 0.0
        %1250 = vmatmul.mubr.f32.gmra.mrb[0].mxu0 %v1003
        %v1251 = vpop.f32.mrb[0].mxu0
        %v1252 = vadd.f32 0.0, %v1251
        %v1253 = vpop.f32.mrb[0].mxu0
        %1254 = vmatprep.mubr.f32.mxu0 0.0
        %1255 = vmatmul.mubr.f32.gmra.mrb[0].mxu0 %v1005
        %v1256 = vpop.f32.mrb[0].mxu0
        %v1257 = vadd.f32 0.0, %v1256
        %v1258 = vpop.f32.mrb[0].mxu0
        %1259 = vmatprep.mubr.f32.mxu0 0.0
        %1260 = vmatmul.mubr.f32.gmra.mrb[0].mxu0 %v1008
        %v1261 = vpop.f32.mrb[0].mxu0
        %v1262 = vadd.f32 0.0, %v1261
        %v1263 = vpop.f32.mrb[0].mxu0
        %1264 = vmatprep.mubr.f32.mxu0 0.0
        %1265 = vmatmul.mubr.f32.gmra.mrb[0].mxu0 %v1010
        %v1266 = vpop.f32.mrb[0].mxu0
        %v1267 = vadd.f32 0.0, %v1266
        %v1268 = vpop.f32.mrb[0].mxu0
        %1269 = vmatprep.mubr.f32.mxu0 0.0
        %1270 = vmatmul.mubr.f32.gmra.mrb[0].mxu0 %v1013
        %v1271 = vpop.f32.mrb[0].mxu0
        %v1272 = vadd.f32 0.0, %v1271
        %v1273 = vpop.f32.mrb[0].mxu0
        %1274 = vmatprep.mubr.f32.mxu0 0.0
        %1275 = vmatmul.mubr.f32.gmra.mrb[0].mxu0 %v1015
        %v1276 = vpop.f32.mrb[0].mxu0
        %v1277 = vadd.f32 0.0, %v1276
        %v1278 = vpop.f32.mrb[0].mxu0
        %1279 = vmatprep.mubr.f32.mxu0 0.0
        %1280 = vmatmul.mubr.f32.gmra.mrb[0].mxu0 %v1018
        %v1281 = vpop.f32.mrb[0].mxu0
        %v1282 = vadd.f32 0.0, %v1281
        %v1283 = vpop.f32.mrb[0].mxu0
        %1284 = vmatprep.mubr.f32.mxu0 0.0
        %1285 = vmatmul.mubr.f32.gmra.mrb[0].mxu0 %v1020
        %v1286 = vpop.f32.mrb[0].mxu0
        %v1287 = vadd.f32 0.0, %v1286
        %v1288 = vpop.f32.mrb[0].mxu0
        %1289 = vmatprep.mubr.f32.mxu0 0.0
        %1290 = vmatmul.mubr.f32.gmra.mrb[0].mxu0 %v1023
        %v1291 = vpop.f32.mrb[0].mxu0
        %v1292 = vadd.f32 0.0, %v1291
        %v1293 = vpop.f32.mrb[0].mxu0
        %1294 = vmatprep.mubr.f32.mxu0 0.0
        %1295 = vmatmul.mubr.f32.gmra.mrb[0].mxu0 %v1025
        %v1296 = vpop.f32.mrb[0].mxu0
        %v1297 = vadd.f32 0.0, %v1296
        %v1298 = vpop.f32.mrb[0].mxu0
        %1299 = vdwg.mxu0
        %v1300 = vadd.f32 %v787, %v1142
        %v1301 = vadd.f32 %v792, %v1147
        %v1302 = vadd.f32 %v797, %v1152
        %v1303 = vadd.f32 %v802, %v1157
        %v1304 = vadd.f32 %v807, %v1162
        %v1305 = vadd.f32 %v812, %v1167
        %v1306 = vadd.f32 %v817, %v1172
        %v1307 = vadd.f32 %v822, %v1177
        %v1308 = vadd.f32 %v827, %v1182
        %v1309 = vadd.f32 %v832, %v1187
        %v1310 = vadd.f32 %v837, %v1192
        %v1311 = vadd.f32 %v842, %v1197
        %v1312 = vadd.f32 %v847, %v1202
        %v1313 = vadd.f32 %v852, %v1207
        %v1314 = vadd.f32 %v857, %v1212
        %v1315 = vadd.f32 %v862, %v1217
        %v1316 = vadd.f32 %v867, %v1222
        %v1317 = vadd.f32 %v872, %v1227
        %v1318 = vadd.f32 %v877, %v1232
        %v1319 = vadd.f32 %v882, %v1237
        %v1320 = vadd.f32 %v887, %v1242
        %v1321 = vadd.f32 %v892, %v1247
        %v1322 = vadd.f32 %v897, %v1252
        %v1323 = vadd.f32 %v902, %v1257
        %v1324 = vadd.f32 %v907, %v1262
        %v1325 = vadd.f32 %v912, %v1267
        %v1326 = vadd.f32 %v917, %v1272
        %v1327 = vadd.f32 %v922, %v1277
        %v1328 = vadd.f32 %v927, %v1282
        %v1329 = vadd.f32 %v932, %v1287
        %v1330 = vadd.f32 %v937, %v1292
        %v1331 = vadd.f32 %v942, %v1297
        %s1332 = scalar_lea.vmem [#allocation5], 384
        %v1333 = vld [vmem:[%s1332] sm:$0xff]
        %v1334 = vld [vmem:[%s1332 + $0x8] sm:$0xff]
        %v1335 = vld [vmem:[%s1332 + $0x10] sm:$0xff]
        %v1336 = vld [vmem:[%s1332 + $0x18] sm:$0xff]
        %v1337 = vld [vmem:[%s1332 + $0x20] sm:$0xff]
        %v1338 = vld [vmem:[%s1332 + $0x28] sm:$0xff]
        %v1339 = vld [vmem:[%s1332 + $0x30] sm:$0xff]
        %v1340 = vld [vmem:[%s1332 + $0x38] sm:$0xff]
        %v1341 = vld [vmem:[%s1332 + $0x40] sm:$0xff]
        %v1342 = vld [vmem:[%s1332 + $0x48] sm:$0xff]
        %v1343 = vld [vmem:[%s1332 + $0x50] sm:$0xff]
        %v1344 = vld [vmem:[%s1332 + $0x58] sm:$0xff]
        %v1345 = vld [vmem:[%s1332 + $0x60] sm:$0xff]
        %v1346 = vld [vmem:[%s1332 + $0x68] sm:$0xff]
        %v1347 = vld [vmem:[%s1332 + $0x70] sm:$0xff]
        %v1348 = vld [vmem:[%s1332 + $0x78] sm:$0xff]
        %1349 = vmatprep.subr.mxu0 0.0
        %1350 = vmatpush1.msra.mxu0 %v1333
        %1351 = vmatprep.subr.mxu0 0.0
        %1352 = vmatpush1.msra.mxu0 %v1334
        %1353 = vmatprep.subr.mxu0 0.0
        %1354 = vmatpush1.msra.mxu0 %v1335
        %1355 = vmatprep.subr.mxu0 0.0
        %1356 = vmatpush1.msra.mxu0 %v1336
        %1357 = vmatprep.subr.mxu0 0.0
        %1358 = vmatpush1.msra.mxu0 %v1337
        %1359 = vmatprep.subr.mxu0 0.0
        %1360 = vmatpush1.msra.mxu0 %v1338
        %1361 = vmatprep.subr.mxu0 0.0
        %1362 = vmatpush1.msra.mxu0 %v1339
        %1363 = vmatprep.subr.mxu0 0.0
        %1364 = vmatpush1.msra.mxu0 %v1340
        %1365 = vmatprep.subr.mxu0 0.0
        %1366 = vmatpush1.msra.mxu0 %v1341
        %1367 = vmatprep.subr.mxu0 0.0
        %1368 = vmatpush1.msra.mxu0 %v1342
        %1369 = vmatprep.subr.mxu0 0.0
        %1370 = vmatpush1.msra.mxu0 %v1343
        %1371 = vmatprep.subr.mxu0 0.0
        %1372 = vmatpush1.msra.mxu0 %v1344
        %1373 = vmatprep.subr.mxu0 0.0
        %1374 = vmatpush1.msra.mxu0 %v1345
        %1375 = vmatprep.subr.mxu0 0.0
        %1376 = vmatpush1.msra.mxu0 %v1346
        %1377 = vmatprep.subr.mxu0 0.0
        %1378 = vmatpush1.msra.mxu0 %v1347
        %1379 = vmatprep.subr.mxu0 0.0
        %1380 = vmatpush1.msra.mxu0 %v1348
        %1381 = vmatprep.subr.mxu0 0.0
        %1382 = vmatpush1.msra.mxu0 0.0
        %1383 = vmatprep.subr.mxu0 0.0
        %1384 = vmatpush1.msra.mxu0 0.0
        %1385 = vmatprep.subr.mxu0 0.0
        %1386 = vmatpush1.msra.mxu0 0.0
        %1387 = vmatprep.subr.mxu0 0.0
        %1388 = vmatpush1.msra.mxu0 0.0
        %1389 = vmatprep.subr.mxu0 0.0
        %1390 = vmatpush1.msra.mxu0 0.0
        %1391 = vmatprep.subr.mxu0 0.0
        %1392 = vmatpush1.msra.mxu0 0.0
        %1393 = vmatprep.subr.mxu0 0.0
        %1394 = vmatpush1.msra.mxu0 0.0
        %1395 = vmatprep.subr.mxu0 0.0
        %1396 = vmatpush1.msra.mxu0 0.0
        %1397 = vmatprep.subr.mxu0 0.0
        %1398 = vmatpush1.msra.mxu0 0.0
        %1399 = vmatprep.subr.mxu0 0.0
        %1400 = vmatpush1.msra.mxu0 0.0
        %1401 = vmatprep.subr.mxu0 0.0
        %1402 = vmatpush1.msra.mxu0 0.0
        %1403 = vmatprep.subr.mxu0 0.0
        %1404 = vmatpush1.msra.mxu0 0.0
        %1405 = vmatprep.subr.mxu0 0.0
        %1406 = vmatpush1.msra.mxu0 0.0
        %1407 = vmatprep.subr.mxu0 0.0
        %1408 = vmatpush1.msra.mxu0 0.0
        %1409 = vmatprep.subr.mxu0 0.0
        %1410 = vmatpush1.msra.mxu0 0.0
        %1411 = vmatprep.subr.mxu0 0.0
        %1412 = vmatpush1.msra.mxu0 0.0
        %1413 = vmatprep.mubr.f32.mxu0 0.0
        %1414 = vmatmul.mubr.f32.gmra.mrb[0].mxu0 %v250
        %v1415 = vpop.f32.mrb[0].mxu0
        %v1416 = vadd.f32 0.0, %v1415
        %v1417 = vpop.f32.mrb[0].mxu0
        %1418 = vmatprep.mubr.f32.mxu0 0.0
        %1419 = vmatmul.mubr.f32.gmra.mrb[0].mxu0 %v251
        %v1420 = vpop.f32.mrb[0].mxu0
        %v1421 = vadd.f32 0.0, %v1420
        %v1422 = vpop.f32.mrb[0].mxu0
        %1423 = vmatprep.mubr.f32.mxu0 0.0
        %1424 = vmatmul.mubr.f32.gmra.mrb[0].mxu0 %v253
        %v1425 = vpop.f32.mrb[0].mxu0
        %v1426 = vadd.f32 0.0, %v1425
        %v1427 = vpop.f32.mrb[0].mxu0
        %1428 = vmatprep.mubr.f32.mxu0 0.0
        %1429 = vmatmul.mubr.f32.gmra.mrb[0].mxu0 %v254
        %v1430 = vpop.f32.mrb[0].mxu0
        %v1431 = vadd.f32 0.0, %v1430
        %v1432 = vpop.f32.mrb[0].mxu0
        %1433 = vmatprep.mubr.f32.mxu0 0.0
        %1434 = vmatmul.mubr.f32.gmra.mrb[0].mxu0 %v256
        %v1435 = vpop.f32.mrb[0].mxu0
        %v1436 = vadd.f32 0.0, %v1435
        %v1437 = vpop.f32.mrb[0].mxu0
        %1438 = vmatprep.mubr.f32.mxu0 0.0
        %1439 = vmatmul.mubr.f32.gmra.mrb[0].mxu0 %v257
        %v1440 = vpop.f32.mrb[0].mxu0
        %v1441 = vadd.f32 0.0, %v1440
        %v1442 = vpop.f32.mrb[0].mxu0
        %1443 = vmatprep.mubr.f32.mxu0 0.0
        %1444 = vmatmul.mubr.f32.gmra.mrb[0].mxu0 %v259
        %v1445 = vpop.f32.mrb[0].mxu0
        %v1446 = vadd.f32 0.0, %v1445
        %v1447 = vpop.f32.mrb[0].mxu0
        %1448 = vmatprep.mubr.f32.mxu0 0.0
        %1449 = vmatmul.mubr.f32.gmra.mrb[0].mxu0 %v260
        %v1450 = vpop.f32.mrb[0].mxu0
        %v1451 = vadd.f32 0.0, %v1450
        %v1452 = vpop.f32.mrb[0].mxu0
        %1453 = vmatprep.mubr.f32.mxu0 0.0
        %1454 = vmatmul.mubr.f32.gmra.mrb[0].mxu0 %v262
        %v1455 = vpop.f32.mrb[0].mxu0
        %v1456 = vadd.f32 0.0, %v1455
        %v1457 = vpop.f32.mrb[0].mxu0
        %1458 = vmatprep.mubr.f32.mxu0 0.0
        %1459 = vmatmul.mubr.f32.gmra.mrb[0].mxu0 %v263
        %v1460 = vpop.f32.mrb[0].mxu0
        %v1461 = vadd.f32 0.0, %v1460
        %v1462 = vpop.f32.mrb[0].mxu0
        %1463 = vmatprep.mubr.f32.mxu0 0.0
        %1464 = vmatmul.mubr.f32.gmra.mrb[0].mxu0 %v265
        %v1465 = vpop.f32.mrb[0].mxu0
        %v1466 = vadd.f32 0.0, %v1465
        %v1467 = vpop.f32.mrb[0].mxu0
        %1468 = vmatprep.mubr.f32.mxu0 0.0
        %1469 = vmatmul.mubr.f32.gmra.mrb[0].mxu0 %v266
        %v1470 = vpop.f32.mrb[0].mxu0
        %v1471 = vadd.f32 0.0, %v1470
        %v1472 = vpop.f32.mrb[0].mxu0
        %1473 = vmatprep.mubr.f32.mxu0 0.0
        %1474 = vmatmul.mubr.f32.gmra.mrb[0].mxu0 %v268
        %v1475 = vpop.f32.mrb[0].mxu0
        %v1476 = vadd.f32 0.0, %v1475
        %v1477 = vpop.f32.mrb[0].mxu0
        %1478 = vmatprep.mubr.f32.mxu0 0.0
        %1479 = vmatmul.mubr.f32.gmra.mrb[0].mxu0 %v269
        %v1480 = vpop.f32.mrb[0].mxu0
        %v1481 = vadd.f32 0.0, %v1480
        %v1482 = vpop.f32.mrb[0].mxu0
        %1483 = vmatprep.mubr.f32.mxu0 0.0
        %1484 = vmatmul.mubr.f32.gmra.mrb[0].mxu0 %v271
        %v1485 = vpop.f32.mrb[0].mxu0
        %v1486 = vadd.f32 0.0, %v1485
        %v1487 = vpop.f32.mrb[0].mxu0
        %1488 = vmatprep.mubr.f32.mxu0 0.0
        %1489 = vmatmul.mubr.f32.gmra.mrb[0].mxu0 %v272
        %v1490 = vpop.f32.mrb[0].mxu0
        %v1491 = vadd.f32 0.0, %v1490
        %v1492 = vpop.f32.mrb[0].mxu0
        %1493 = vmatprep.mubr.f32.mxu0 0.0
        %1494 = vmatmul.mubr.f32.gmra.mrb[0].mxu0 %v274
        %v1495 = vpop.f32.mrb[0].mxu0
        %v1496 = vadd.f32 0.0, %v1495
        %v1497 = vpop.f32.mrb[0].mxu0
        %1498 = vmatprep.mubr.f32.mxu0 0.0
        %1499 = vmatmul.mubr.f32.gmra.mrb[0].mxu0 %v275
        %v1500 = vpop.f32.mrb[0].mxu0
        %v1501 = vadd.f32 0.0, %v1500
        %v1502 = vpop.f32.mrb[0].mxu0
        %1503 = vmatprep.mubr.f32.mxu0 0.0
        %1504 = vmatmul.mubr.f32.gmra.mrb[0].mxu0 %v277
        %v1505 = vpop.f32.mrb[0].mxu0
        %v1506 = vadd.f32 0.0, %v1505
        %v1507 = vpop.f32.mrb[0].mxu0
        %1508 = vmatprep.mubr.f32.mxu0 0.0
        %1509 = vmatmul.mubr.f32.gmra.mrb[0].mxu0 %v278
        %v1510 = vpop.f32.mrb[0].mxu0
        %v1511 = vadd.f32 0.0, %v1510
        %v1512 = vpop.f32.mrb[0].mxu0
        %1513 = vmatprep.mubr.f32.mxu0 0.0
        %1514 = vmatmul.mubr.f32.gmra.mrb[0].mxu0 %v280
        %v1515 = vpop.f32.mrb[0].mxu0
        %v1516 = vadd.f32 0.0, %v1515
        %v1517 = vpop.f32.mrb[0].mxu0
        %1518 = vmatprep.mubr.f32.mxu0 0.0
        %1519 = vmatmul.mubr.f32.gmra.mrb[0].mxu0 %v281
        %v1520 = vpop.f32.mrb[0].mxu0
        %v1521 = vadd.f32 0.0, %v1520
        %v1522 = vpop.f32.mrb[0].mxu0
        %1523 = vmatprep.mubr.f32.mxu0 0.0
        %1524 = vmatmul.mubr.f32.gmra.mrb[0].mxu0 %v283
        %v1525 = vpop.f32.mrb[0].mxu0
        %v1526 = vadd.f32 0.0, %v1525
        %v1527 = vpop.f32.mrb[0].mxu0
        %1528 = vmatprep.mubr.f32.mxu0 0.0
        %1529 = vmatmul.mubr.f32.gmra.mrb[0].mxu0 %v284
        %v1530 = vpop.f32.mrb[0].mxu0
        %v1531 = vadd.f32 0.0, %v1530
        %v1532 = vpop.f32.mrb[0].mxu0
        %1533 = vmatprep.mubr.f32.mxu0 0.0
        %1534 = vmatmul.mubr.f32.gmra.mrb[0].mxu0 %v286
        %v1535 = vpop.f32.mrb[0].mxu0
        %v1536 = vadd.f32 0.0, %v1535
        %v1537 = vpop.f32.mrb[0].mxu0
        %1538 = vmatprep.mubr.f32.mxu0 0.0
        %1539 = vmatmul.mubr.f32.gmra.mrb[0].mxu0 %v287
        %v1540 = vpop.f32.mrb[0].mxu0
        %v1541 = vadd.f32 0.0, %v1540
        %v1542 = vpop.f32.mrb[0].mxu0
        %1543 = vmatprep.mubr.f32.mxu0 0.0
        %1544 = vmatmul.mubr.f32.gmra.mrb[0].mxu0 %v289
        %v1545 = vpop.f32.mrb[0].mxu0
        %v1546 = vadd.f32 0.0, %v1545
        %v1547 = vpop.f32.mrb[0].mxu0
        %1548 = vmatprep.mubr.f32.mxu0 0.0
        %1549 = vmatmul.mubr.f32.gmra.mrb[0].mxu0 %v290
        %v1550 = vpop.f32.mrb[0].mxu0
        %v1551 = vadd.f32 0.0, %v1550
        %v1552 = vpop.f32.mrb[0].mxu0
        %1553 = vmatprep.mubr.f32.mxu0 0.0
        %1554 = vmatmul.mubr.f32.gmra.mrb[0].mxu0 %v292
        %v1555 = vpop.f32.mrb[0].mxu0
        %v1556 = vadd.f32 0.0, %v1555
        %v1557 = vpop.f32.mrb[0].mxu0
        %1558 = vmatprep.mubr.f32.mxu0 0.0
        %1559 = vmatmul.mubr.f32.gmra.mrb[0].mxu0 %v293
        %v1560 = vpop.f32.mrb[0].mxu0
        %v1561 = vadd.f32 0.0, %v1560
        %v1562 = vpop.f32.mrb[0].mxu0
        %1563 = vmatprep.mubr.f32.mxu0 0.0
        %1564 = vmatmul.mubr.f32.gmra.mrb[0].mxu0 %v295
        %v1565 = vpop.f32.mrb[0].mxu0
        %v1566 = vadd.f32 0.0, %v1565
        %v1567 = vpop.f32.mrb[0].mxu0
        %1568 = vmatprep.mubr.f32.mxu0 0.0
        %1569 = vmatmul.mubr.f32.gmra.mrb[0].mxu0 %v296
        %v1570 = vpop.f32.mrb[0].mxu0
        %v1571 = vadd.f32 0.0, %v1570
        %v1572 = vpop.f32.mrb[0].mxu0
        %1573 = vdwg.mxu0
        %v1574 = vadd.f32 %v1300, %v1416
        %v1575 = vadd.f32 %v1301, %v1421
        %v1576 = vadd.f32 %v1302, %v1426
        %v1577 = vadd.f32 %v1303, %v1431
        %v1578 = vadd.f32 %v1304, %v1436
        %v1579 = vadd.f32 %v1305, %v1441
        %v1580 = vadd.f32 %v1306, %v1446
        %v1581 = vadd.f32 %v1307, %v1451
        %v1582 = vadd.f32 %v1308, %v1456
        %v1583 = vadd.f32 %v1309, %v1461
        %v1584 = vadd.f32 %v1310, %v1466
        %v1585 = vadd.f32 %v1311, %v1471
        %v1586 = vadd.f32 %v1312, %v1476
        %v1587 = vadd.f32 %v1313, %v1481
        %v1588 = vadd.f32 %v1314, %v1486
        %v1589 = vadd.f32 %v1315, %v1491
        %v1590 = vadd.f32 %v1316, %v1496
        %v1591 = vadd.f32 %v1317, %v1501
        %v1592 = vadd.f32 %v1318, %v1506
        %v1593 = vadd.f32 %v1319, %v1511
        %v1594 = vadd.f32 %v1320, %v1516
        %v1595 = vadd.f32 %v1321, %v1521
        %v1596 = vadd.f32 %v1322, %v1526
        %v1597 = vadd.f32 %v1323, %v1531
        %v1598 = vadd.f32 %v1324, %v1536
        %v1599 = vadd.f32 %v1325, %v1541
        %v1600 = vadd.f32 %v1326, %v1546
        %v1601 = vadd.f32 %v1327, %v1551
        %v1602 = vadd.f32 %v1328, %v1556
        %v1603 = vadd.f32 %v1329, %v1561
        %v1604 = vadd.f32 %v1330, %v1566
        %v1605 = vadd.f32 %v1331, %v1571
        %v1609 = vrot.slane %v295, 1
        %v1610 = vrot.slane %v296, 1
        %v1611 = vsel %vm365, %v1609, %v1610
        %v1612 = vrot.slane %v297, 1
        %v1613 = vsel %vm365, %v1610, %v1612
        %s1616 = scalar_lea.vmem [#allocation5], 512
        %v1617 = vld [vmem:[%s1616] sm:$0xff]
        %v1618 = vld [vmem:[%s1616 + $0x8] sm:$0xff]
        %v1619 = vld [vmem:[%s1616 + $0x10] sm:$0xff]
        %v1620 = vld [vmem:[%s1616 + $0x18] sm:$0xff]
        %v1621 = vld [vmem:[%s1616 + $0x20] sm:$0xff]
        %v1622 = vld [vmem:[%s1616 + $0x28] sm:$0xff]
        %v1623 = vld [vmem:[%s1616 + $0x30] sm:$0xff]
        %v1624 = vld [vmem:[%s1616 + $0x38] sm:$0xff]
        %v1625 = vld [vmem:[%s1616 + $0x40] sm:$0xff]
        %v1626 = vld [vmem:[%s1616 + $0x48] sm:$0xff]
        %v1627 = vld [vmem:[%s1616 + $0x50] sm:$0xff]
        %v1628 = vld [vmem:[%s1616 + $0x58] sm:$0xff]
        %v1629 = vld [vmem:[%s1616 + $0x60] sm:$0xff]
        %v1630 = vld [vmem:[%s1616 + $0x68] sm:$0xff]
        %v1631 = vld [vmem:[%s1616 + $0x70] sm:$0xff]
        %v1632 = vld [vmem:[%s1616 + $0x78] sm:$0xff]
        %1633 = vmatprep.subr.mxu0 0.0
        %1634 = vmatpush1.msra.mxu0 %v1617
        %1635 = vmatprep.subr.mxu0 0.0
        %1636 = vmatpush1.msra.mxu0 %v1618
        %1637 = vmatprep.subr.mxu0 0.0
        %1638 = vmatpush1.msra.mxu0 %v1619
        %1639 = vmatprep.subr.mxu0 0.0
        %1640 = vmatpush1.msra.mxu0 %v1620
        %1641 = vmatprep.subr.mxu0 0.0
        %1642 = vmatpush1.msra.mxu0 %v1621
        %1643 = vmatprep.subr.mxu0 0.0
        %1644 = vmatpush1.msra.mxu0 %v1622
        %1645 = vmatprep.subr.mxu0 0.0
        %1646 = vmatpush1.msra.mxu0 %v1623
        %1647 = vmatprep.subr.mxu0 0.0
        %1648 = vmatpush1.msra.mxu0 %v1624
        %1649 = vmatprep.subr.mxu0 0.0
        %1650 = vmatpush1.msra.mxu0 %v1625
        %1651 = vmatprep.subr.mxu0 0.0
        %1652 = vmatpush1.msra.mxu0 %v1626
        %1653 = vmatprep.subr.mxu0 0.0
        %1654 = vmatpush1.msra.mxu0 %v1627
        %1655 = vmatprep.subr.mxu0 0.0
        %1656 = vmatpush1.msra.mxu0 %v1628
        %1657 = vmatprep.subr.mxu0 0.0
        %1658 = vmatpush1.msra.mxu0 %v1629
        %1659 = vmatprep.subr.mxu0 0.0
        %1660 = vmatpush1.msra.mxu0 %v1630
        %1661 = vmatprep.subr.mxu0 0.0
        %1662 = vmatpush1.msra.mxu0 %v1631
        %1663 = vmatprep.subr.mxu0 0.0
        %1664 = vmatpush1.msra.mxu0 %v1632
        %1665 = vmatprep.subr.mxu0 0.0
        %1666 = vmatpush1.msra.mxu0 0.0
        %1667 = vmatprep.subr.mxu0 0.0
        %1668 = vmatpush1.msra.mxu0 0.0
        %1669 = vmatprep.subr.mxu0 0.0
        %1670 = vmatpush1.msra.mxu0 0.0
        %1671 = vmatprep.subr.mxu0 0.0
        %1672 = vmatpush1.msra.mxu0 0.0
        %1673 = vmatprep.subr.mxu0 0.0
        %1674 = vmatpush1.msra.mxu0 0.0
        %1675 = vmatprep.subr.mxu0 0.0
        %1676 = vmatpush1.msra.mxu0 0.0
        %1677 = vmatprep.subr.mxu0 0.0
        %1678 = vmatpush1.msra.mxu0 0.0
        %1679 = vmatprep.subr.mxu0 0.0
        %1680 = vmatpush1.msra.mxu0 0.0
        %1681 = vmatprep.subr.mxu0 0.0
        %1682 = vmatpush1.msra.mxu0 0.0
        %1683 = vmatprep.subr.mxu0 0.0
        %1684 = vmatpush1.msra.mxu0 0.0
        %1685 = vmatprep.subr.mxu0 0.0
        %1686 = vmatpush1.msra.mxu0 0.0
        %1687 = vmatprep.subr.mxu0 0.0
        %1688 = vmatpush1.msra.mxu0 0.0
        %1689 = vmatprep.subr.mxu0 0.0
        %1690 = vmatpush1.msra.mxu0 0.0
        %1691 = vmatprep.subr.mxu0 0.0
        %1692 = vmatpush1.msra.mxu0 0.0
        %1693 = vmatprep.subr.mxu0 0.0
        %1694 = vmatpush1.msra.mxu0 0.0
        %1695 = vmatprep.subr.mxu0 0.0
        %1696 = vmatpush1.msra.mxu0 0.0
        %1697 = vmatprep.mubr.f32.mxu0 0.0
        %1698 = vmatmul.mubr.f32.gmra.mrb[0].mxu0 %v373
        %v1699 = vpop.f32.mrb[0].mxu0
        %v1700 = vadd.f32 0.0, %v1699
        %v1701 = vpop.f32.mrb[0].mxu0
        %1702 = vmatprep.mubr.f32.mxu0 0.0
        %1703 = vmatmul.mubr.f32.gmra.mrb[0].mxu0 %v375
        %v1704 = vpop.f32.mrb[0].mxu0
        %v1705 = vadd.f32 0.0, %v1704
        %v1706 = vpop.f32.mrb[0].mxu0
        %1707 = vmatprep.mubr.f32.mxu0 0.0
        %1708 = vmatmul.mubr.f32.gmra.mrb[0].mxu0 %v378
        %v1709 = vpop.f32.mrb[0].mxu0
        %v1710 = vadd.f32 0.0, %v1709
        %v1711 = vpop.f32.mrb[0].mxu0
        %1712 = vmatprep.mubr.f32.mxu0 0.0
        %1713 = vmatmul.mubr.f32.gmra.mrb[0].mxu0 %v380
        %v1714 = vpop.f32.mrb[0].mxu0
        %v1715 = vadd.f32 0.0, %v1714
        %v1716 = vpop.f32.mrb[0].mxu0
        %1717 = vmatprep.mubr.f32.mxu0 0.0
        %1718 = vmatmul.mubr.f32.gmra.mrb[0].mxu0 %v383
        %v1719 = vpop.f32.mrb[0].mxu0
        %v1720 = vadd.f32 0.0, %v1719
        %v1721 = vpop.f32.mrb[0].mxu0
        %1722 = vmatprep.mubr.f32.mxu0 0.0
        %1723 = vmatmul.mubr.f32.gmra.mrb[0].mxu0 %v385
        %v1724 = vpop.f32.mrb[0].mxu0
        %v1725 = vadd.f32 0.0, %v1724
        %v1726 = vpop.f32.mrb[0].mxu0
        %1727 = vmatprep.mubr.f32.mxu0 0.0
        %1728 = vmatmul.mubr.f32.gmra.mrb[0].mxu0 %v388
        %v1729 = vpop.f32.mrb[0].mxu0
        %v1730 = vadd.f32 0.0, %v1729
        %v1731 = vpop.f32.mrb[0].mxu0
        %1732 = vmatprep.mubr.f32.mxu0 0.0
        %1733 = vmatmul.mubr.f32.gmra.mrb[0].mxu0 %v390
        %v1734 = vpop.f32.mrb[0].mxu0
        %v1735 = vadd.f32 0.0, %v1734
        %v1736 = vpop.f32.mrb[0].mxu0
        %1737 = vmatprep.mubr.f32.mxu0 0.0
        %1738 = vmatmul.mubr.f32.gmra.mrb[0].mxu0 %v393
        %v1739 = vpop.f32.mrb[0].mxu0
        %v1740 = vadd.f32 0.0, %v1739
        %v1741 = vpop.f32.mrb[0].mxu0
        %1742 = vmatprep.mubr.f32.mxu0 0.0
        %1743 = vmatmul.mubr.f32.gmra.mrb[0].mxu0 %v395
        %v1744 = vpop.f32.mrb[0].mxu0
        %v1745 = vadd.f32 0.0, %v1744
        %v1746 = vpop.f32.mrb[0].mxu0
        %1747 = vmatprep.mubr.f32.mxu0 0.0
        %1748 = vmatmul.mubr.f32.gmra.mrb[0].mxu0 %v398
        %v1749 = vpop.f32.mrb[0].mxu0
        %v1750 = vadd.f32 0.0, %v1749
        %v1751 = vpop.f32.mrb[0].mxu0
        %1752 = vmatprep.mubr.f32.mxu0 0.0
        %1753 = vmatmul.mubr.f32.gmra.mrb[0].mxu0 %v400
        %v1754 = vpop.f32.mrb[0].mxu0
        %v1755 = vadd.f32 0.0, %v1754
        %v1756 = vpop.f32.mrb[0].mxu0
        %1757 = vmatprep.mubr.f32.mxu0 0.0
        %1758 = vmatmul.mubr.f32.gmra.mrb[0].mxu0 %v403
        %v1759 = vpop.f32.mrb[0].mxu0
        %v1760 = vadd.f32 0.0, %v1759
        %v1761 = vpop.f32.mrb[0].mxu0
        %1762 = vmatprep.mubr.f32.mxu0 0.0
        %1763 = vmatmul.mubr.f32.gmra.mrb[0].mxu0 %v405
        %v1764 = vpop.f32.mrb[0].mxu0
        %v1765 = vadd.f32 0.0, %v1764
        %v1766 = vpop.f32.mrb[0].mxu0
        %1767 = vmatprep.mubr.f32.mxu0 0.0
        %1768 = vmatmul.mubr.f32.gmra.mrb[0].mxu0 %v408
        %v1769 = vpop.f32.mrb[0].mxu0
        %v1770 = vadd.f32 0.0, %v1769
        %v1771 = vpop.f32.mrb[0].mxu0
        %1772 = vmatprep.mubr.f32.mxu0 0.0
        %1773 = vmatmul.mubr.f32.gmra.mrb[0].mxu0 %v410
        %v1774 = vpop.f32.mrb[0].mxu0
        %v1775 = vadd.f32 0.0, %v1774
        %v1776 = vpop.f32.mrb[0].mxu0
        %1777 = vmatprep.mubr.f32.mxu0 0.0
        %1778 = vmatmul.mubr.f32.gmra.mrb[0].mxu0 %v413
        %v1779 = vpop.f32.mrb[0].mxu0
        %v1780 = vadd.f32 0.0, %v1779
        %v1781 = vpop.f32.mrb[0].mxu0
        %1782 = vmatprep.mubr.f32.mxu0 0.0
        %1783 = vmatmul.mubr.f32.gmra.mrb[0].mxu0 %v415
        %v1784 = vpop.f32.mrb[0].mxu0
        %v1785 = vadd.f32 0.0, %v1784
        %v1786 = vpop.f32.mrb[0].mxu0
        %1787 = vmatprep.mubr.f32.mxu0 0.0
        %1788 = vmatmul.mubr.f32.gmra.mrb[0].mxu0 %v418
        %v1789 = vpop.f32.mrb[0].mxu0
        %v1790 = vadd.f32 0.0, %v1789
        %v1791 = vpop.f32.mrb[0].mxu0
        %1792 = vmatprep.mubr.f32.mxu0 0.0
        %1793 = vmatmul.mubr.f32.gmra.mrb[0].mxu0 %v420
        %v1794 = vpop.f32.mrb[0].mxu0
        %v1795 = vadd.f32 0.0, %v1794
        %v1796 = vpop.f32.mrb[0].mxu0
        %1797 = vmatprep.mubr.f32.mxu0 0.0
        %1798 = vmatmul.mubr.f32.gmra.mrb[0].mxu0 %v423
        %v1799 = vpop.f32.mrb[0].mxu0
        %v1800 = vadd.f32 0.0, %v1799
        %v1801 = vpop.f32.mrb[0].mxu0
        %1802 = vmatprep.mubr.f32.mxu0 0.0
        %1803 = vmatmul.mubr.f32.gmra.mrb[0].mxu0 %v425
        %v1804 = vpop.f32.mrb[0].mxu0
        %v1805 = vadd.f32 0.0, %v1804
        %v1806 = vpop.f32.mrb[0].mxu0
        %1807 = vmatprep.mubr.f32.mxu0 0.0
        %1808 = vmatmul.mubr.f32.gmra.mrb[0].mxu0 %v428
        %v1809 = vpop.f32.mrb[0].mxu0
        %v1810 = vadd.f32 0.0, %v1809
        %v1811 = vpop.f32.mrb[0].mxu0
        %1812 = vmatprep.mubr.f32.mxu0 0.0
        %1813 = vmatmul.mubr.f32.gmra.mrb[0].mxu0 %v430
        %v1814 = vpop.f32.mrb[0].mxu0
        %v1815 = vadd.f32 0.0, %v1814
        %v1816 = vpop.f32.mrb[0].mxu0
        %1817 = vmatprep.mubr.f32.mxu0 0.0
        %1818 = vmatmul.mubr.f32.gmra.mrb[0].mxu0 %v433
        %v1819 = vpop.f32.mrb[0].mxu0
        %v1820 = vadd.f32 0.0, %v1819
        %v1821 = vpop.f32.mrb[0].mxu0
        %1822 = vmatprep.mubr.f32.mxu0 0.0
        %1823 = vmatmul.mubr.f32.gmra.mrb[0].mxu0 %v435
        %v1824 = vpop.f32.mrb[0].mxu0
        %v1825 = vadd.f32 0.0, %v1824
        %v1826 = vpop.f32.mrb[0].mxu0
        %1827 = vmatprep.mubr.f32.mxu0 0.0
        %1828 = vmatmul.mubr.f32.gmra.mrb[0].mxu0 %v438
        %v1829 = vpop.f32.mrb[0].mxu0
        %v1830 = vadd.f32 0.0, %v1829
        %v1831 = vpop.f32.mrb[0].mxu0
        %1832 = vmatprep.mubr.f32.mxu0 0.0
        %1833 = vmatmul.mubr.f32.gmra.mrb[0].mxu0 %v440
        %v1834 = vpop.f32.mrb[0].mxu0
        %v1835 = vadd.f32 0.0, %v1834
        %v1836 = vpop.f32.mrb[0].mxu0
        %1837 = vmatprep.mubr.f32.mxu0 0.0
        %1838 = vmatmul.mubr.f32.gmra.mrb[0].mxu0 %v443
        %v1839 = vpop.f32.mrb[0].mxu0
        %v1840 = vadd.f32 0.0, %v1839
        %v1841 = vpop.f32.mrb[0].mxu0
        %1842 = vmatprep.mubr.f32.mxu0 0.0
        %1843 = vmatmul.mubr.f32.gmra.mrb[0].mxu0 %v445
        %v1844 = vpop.f32.mrb[0].mxu0
        %v1845 = vadd.f32 0.0, %v1844
        %v1846 = vpop.f32.mrb[0].mxu0
        %1847 = vmatprep.mubr.f32.mxu0 0.0
        %1848 = vmatmul.mubr.f32.gmra.mrb[0].mxu0 %v1611
        %v1849 = vpop.f32.mrb[0].mxu0
        %v1850 = vadd.f32 0.0, %v1849
        %v1851 = vpop.f32.mrb[0].mxu0
        %1852 = vmatprep.mubr.f32.mxu0 0.0
        %1853 = vmatmul.mubr.f32.gmra.mrb[0].mxu0 %v1613
        %v1854 = vpop.f32.mrb[0].mxu0
        %v1855 = vadd.f32 0.0, %v1854
        %v1856 = vpop.f32.mrb[0].mxu0
        %1857 = vdwg.mxu0
        %v1858 = vadd.f32 %v1574, %v1700
        %v1859 = vadd.f32 %v1575, %v1705
        %v1860 = vadd.f32 %v1576, %v1710
        %v1861 = vadd.f32 %v1577, %v1715
        %v1862 = vadd.f32 %v1578, %v1720
        %v1863 = vadd.f32 %v1579, %v1725
        %v1864 = vadd.f32 %v1580, %v1730
        %v1865 = vadd.f32 %v1581, %v1735
        %v1866 = vadd.f32 %v1582, %v1740
        %v1867 = vadd.f32 %v1583, %v1745
        %v1868 = vadd.f32 %v1584, %v1750
        %v1869 = vadd.f32 %v1585, %v1755
        %v1870 = vadd.f32 %v1586, %v1760
        %v1871 = vadd.f32 %v1587, %v1765
        %v1872 = vadd.f32 %v1588, %v1770
        %v1873 = vadd.f32 %v1589, %v1775
        %v1874 = vadd.f32 %v1590, %v1780
        %v1875 = vadd.f32 %v1591, %v1785
        %v1876 = vadd.f32 %v1592, %v1790
        %v1877 = vadd.f32 %v1593, %v1795
        %v1878 = vadd.f32 %v1594, %v1800
        %v1879 = vadd.f32 %v1595, %v1805
        %v1880 = vadd.f32 %v1596, %v1810
        %v1881 = vadd.f32 %v1597, %v1815
        %v1882 = vadd.f32 %v1598, %v1820
        %v1883 = vadd.f32 %v1599, %v1825
        %v1884 = vadd.f32 %v1600, %v1830
        %v1885 = vadd.f32 %v1601, %v1835
        %v1886 = vadd.f32 %v1602, %v1840
        %v1887 = vadd.f32 %v1603, %v1845
        %v1888 = vadd.f32 %v1604, %v1850
        %v1889 = vadd.f32 %v1605, %v1855
        %v1890 = vrot.slane %v295, 2
        %v1891 = vrot.slane %v296, 2
        %v1892 = vsel %vm945, %v1890, %v1891
        %v1893 = vrot.slane %v297, 2
        %v1894 = vsel %vm945, %v1891, %v1893
        %s1897 = scalar_lea.vmem [#allocation5], 640
        %v1898 = vld [vmem:[%s1897] sm:$0xff]
        %v1899 = vld [vmem:[%s1897 + $0x8] sm:$0xff]
        %v1900 = vld [vmem:[%s1897 + $0x10] sm:$0xff]
        %v1901 = vld [vmem:[%s1897 + $0x18] sm:$0xff]
        %v1902 = vld [vmem:[%s1897 + $0x20] sm:$0xff]
        %v1903 = vld [vmem:[%s1897 + $0x28] sm:$0xff]
        %v1904 = vld [vmem:[%s1897 + $0x30] sm:$0xff]
        %v1905 = vld [vmem:[%s1897 + $0x38] sm:$0xff]
        %v1906 = vld [vmem:[%s1897 + $0x40] sm:$0xff]
        %v1907 = vld [vmem:[%s1897 + $0x48] sm:$0xff]
        %v1908 = vld [vmem:[%s1897 + $0x50] sm:$0xff]
        %v1909 = vld [vmem:[%s1897 + $0x58] sm:$0xff]
        %v1910 = vld [vmem:[%s1897 + $0x60] sm:$0xff]
        %v1911 = vld [vmem:[%s1897 + $0x68] sm:$0xff]
        %v1912 = vld [vmem:[%s1897 + $0x70] sm:$0xff]
        %v1913 = vld [vmem:[%s1897 + $0x78] sm:$0xff]
        %1914 = vmatprep.subr.mxu0 0.0
        %1915 = vmatpush1.msra.mxu0 %v1898
        %1916 = vmatprep.subr.mxu0 0.0
        %1917 = vmatpush1.msra.mxu0 %v1899
        %1918 = vmatprep.subr.mxu0 0.0
        %1919 = vmatpush1.msra.mxu0 %v1900
        %1920 = vmatprep.subr.mxu0 0.0
        %1921 = vmatpush1.msra.mxu0 %v1901
        %1922 = vmatprep.subr.mxu0 0.0
        %1923 = vmatpush1.msra.mxu0 %v1902
        %1924 = vmatprep.subr.mxu0 0.0
        %1925 = vmatpush1.msra.mxu0 %v1903
        %1926 = vmatprep.subr.mxu0 0.0
        %1927 = vmatpush1.msra.mxu0 %v1904
        %1928 = vmatprep.subr.mxu0 0.0
        %1929 = vmatpush1.msra.mxu0 %v1905
        %1930 = vmatprep.subr.mxu0 0.0
        %1931 = vmatpush1.msra.mxu0 %v1906
        %1932 = vmatprep.subr.mxu0 0.0
        %1933 = vmatpush1.msra.mxu0 %v1907
        %1934 = vmatprep.subr.mxu0 0.0
        %1935 = vmatpush1.msra.mxu0 %v1908
        %1936 = vmatprep.subr.mxu0 0.0
        %1937 = vmatpush1.msra.mxu0 %v1909
        %1938 = vmatprep.subr.mxu0 0.0
        %1939 = vmatpush1.msra.mxu0 %v1910
        %1940 = vmatprep.subr.mxu0 0.0
        %1941 = vmatpush1.msra.mxu0 %v1911
        %1942 = vmatprep.subr.mxu0 0.0
        %1943 = vmatpush1.msra.mxu0 %v1912
        %1944 = vmatprep.subr.mxu0 0.0
        %1945 = vmatpush1.msra.mxu0 %v1913
        %1946 = vmatprep.subr.mxu0 0.0
        %1947 = vmatpush1.msra.mxu0 0.0
        %1948 = vmatprep.subr.mxu0 0.0
        %1949 = vmatpush1.msra.mxu0 0.0
        %1950 = vmatprep.subr.mxu0 0.0
        %1951 = vmatpush1.msra.mxu0 0.0
        %1952 = vmatprep.subr.mxu0 0.0
        %1953 = vmatpush1.msra.mxu0 0.0
        %1954 = vmatprep.subr.mxu0 0.0
        %1955 = vmatpush1.msra.mxu0 0.0
        %1956 = vmatprep.subr.mxu0 0.0
        %1957 = vmatpush1.msra.mxu0 0.0
        %1958 = vmatprep.subr.mxu0 0.0
        %1959 = vmatpush1.msra.mxu0 0.0
        %1960 = vmatprep.subr.mxu0 0.0
        %1961 = vmatpush1.msra.mxu0 0.0
        %1962 = vmatprep.subr.mxu0 0.0
        %1963 = vmatpush1.msra.mxu0 0.0
        %1964 = vmatprep.subr.mxu0 0.0
        %1965 = vmatpush1.msra.mxu0 0.0
        %1966 = vmatprep.subr.mxu0 0.0
        %1967 = vmatpush1.msra.mxu0 0.0
        %1968 = vmatprep.subr.mxu0 0.0
        %1969 = vmatpush1.msra.mxu0 0.0
        %1970 = vmatprep.subr.mxu0 0.0
        %1971 = vmatpush1.msra.mxu0 0.0
        %1972 = vmatprep.subr.mxu0 0.0
        %1973 = vmatpush1.msra.mxu0 0.0
        %1974 = vmatprep.subr.mxu0 0.0
        %1975 = vmatpush1.msra.mxu0 0.0
        %1976 = vmatprep.subr.mxu0 0.0
        %1977 = vmatpush1.msra.mxu0 0.0
        %1978 = vmatprep.mubr.f32.mxu0 0.0
        %1979 = vmatmul.mubr.f32.gmra.mrb[0].mxu0 %v953
        %v1980 = vpop.f32.mrb[0].mxu0
        %v1981 = vadd.f32 0.0, %v1980
        %v1982 = vpop.f32.mrb[0].mxu0
        %1983 = vmatprep.mubr.f32.mxu0 0.0
        %1984 = vmatmul.mubr.f32.gmra.mrb[0].mxu0 %v955
        %v1985 = vpop.f32.mrb[0].mxu0
        %v1986 = vadd.f32 0.0, %v1985
        %v1987 = vpop.f32.mrb[0].mxu0
        %1988 = vmatprep.mubr.f32.mxu0 0.0
        %1989 = vmatmul.mubr.f32.gmra.mrb[0].mxu0 %v958
        %v1990 = vpop.f32.mrb[0].mxu0
        %v1991 = vadd.f32 0.0, %v1990
        %v1992 = vpop.f32.mrb[0].mxu0
        %1993 = vmatprep.mubr.f32.mxu0 0.0
        %1994 = vmatmul.mubr.f32.gmra.mrb[0].mxu0 %v960
        %v1995 = vpop.f32.mrb[0].mxu0
        %v1996 = vadd.f32 0.0, %v1995
        %v1997 = vpop.f32.mrb[0].mxu0
        %1998 = vmatprep.mubr.f32.mxu0 0.0
        %1999 = vmatmul.mubr.f32.gmra.mrb[0].mxu0 %v963
        %v2000 = vpop.f32.mrb[0].mxu0
        %v2001 = vadd.f32 0.0, %v2000
        %v2002 = vpop.f32.mrb[0].mxu0
        %2003 = vmatprep.mubr.f32.mxu0 0.0
        %2004 = vmatmul.mubr.f32.gmra.mrb[0].mxu0 %v965
        %v2005 = vpop.f32.mrb[0].mxu0
        %v2006 = vadd.f32 0.0, %v2005
        %v2007 = vpop.f32.mrb[0].mxu0
        %2008 = vmatprep.mubr.f32.mxu0 0.0
        %2009 = vmatmul.mubr.f32.gmra.mrb[0].mxu0 %v968
        %v2010 = vpop.f32.mrb[0].mxu0
        %v2011 = vadd.f32 0.0, %v2010
        %v2012 = vpop.f32.mrb[0].mxu0
        %2013 = vmatprep.mubr.f32.mxu0 0.0
        %2014 = vmatmul.mubr.f32.gmra.mrb[0].mxu0 %v970
        %v2015 = vpop.f32.mrb[0].mxu0
        %v2016 = vadd.f32 0.0, %v2015
        %v2017 = vpop.f32.mrb[0].mxu0
        %2018 = vmatprep.mubr.f32.mxu0 0.0
        %2019 = vmatmul.mubr.f32.gmra.mrb[0].mxu0 %v973
        %v2020 = vpop.f32.mrb[0].mxu0
        %v2021 = vadd.f32 0.0, %v2020
        %v2022 = vpop.f32.mrb[0].mxu0
        %2023 = vmatprep.mubr.f32.mxu0 0.0
        %2024 = vmatmul.mubr.f32.gmra.mrb[0].mxu0 %v975
        %v2025 = vpop.f32.mrb[0].mxu0
        %v2026 = vadd.f32 0.0, %v2025
        %v2027 = vpop.f32.mrb[0].mxu0
        %2028 = vmatprep.mubr.f32.mxu0 0.0
        %2029 = vmatmul.mubr.f32.gmra.mrb[0].mxu0 %v978
        %v2030 = vpop.f32.mrb[0].mxu0
        %v2031 = vadd.f32 0.0, %v2030
        %v2032 = vpop.f32.mrb[0].mxu0
        %2033 = vmatprep.mubr.f32.mxu0 0.0
        %2034 = vmatmul.mubr.f32.gmra.mrb[0].mxu0 %v980
        %v2035 = vpop.f32.mrb[0].mxu0
        %v2036 = vadd.f32 0.0, %v2035
        %v2037 = vpop.f32.mrb[0].mxu0
        %2038 = vmatprep.mubr.f32.mxu0 0.0
        %2039 = vmatmul.mubr.f32.gmra.mrb[0].mxu0 %v983
        %v2040 = vpop.f32.mrb[0].mxu0
        %v2041 = vadd.f32 0.0, %v2040
        %v2042 = vpop.f32.mrb[0].mxu0
        %2043 = vmatprep.mubr.f32.mxu0 0.0
        %2044 = vmatmul.mubr.f32.gmra.mrb[0].mxu0 %v985
        %v2045 = vpop.f32.mrb[0].mxu0
        %v2046 = vadd.f32 0.0, %v2045
        %v2047 = vpop.f32.mrb[0].mxu0
        %2048 = vmatprep.mubr.f32.mxu0 0.0
        %2049 = vmatmul.mubr.f32.gmra.mrb[0].mxu0 %v988
        %v2050 = vpop.f32.mrb[0].mxu0
        %v2051 = vadd.f32 0.0, %v2050
        %v2052 = vpop.f32.mrb[0].mxu0
        %2053 = vmatprep.mubr.f32.mxu0 0.0
        %2054 = vmatmul.mubr.f32.gmra.mrb[0].mxu0 %v990
        %v2055 = vpop.f32.mrb[0].mxu0
        %v2056 = vadd.f32 0.0, %v2055
        %v2057 = vpop.f32.mrb[0].mxu0
        %2058 = vmatprep.mubr.f32.mxu0 0.0
        %2059 = vmatmul.mubr.f32.gmra.mrb[0].mxu0 %v993
        %v2060 = vpop.f32.mrb[0].mxu0
        %v2061 = vadd.f32 0.0, %v2060
        %v2062 = vpop.f32.mrb[0].mxu0
        %2063 = vmatprep.mubr.f32.mxu0 0.0
        %2064 = vmatmul.mubr.f32.gmra.mrb[0].mxu0 %v995
        %v2065 = vpop.f32.mrb[0].mxu0
        %v2066 = vadd.f32 0.0, %v2065
        %v2067 = vpop.f32.mrb[0].mxu0
        %2068 = vmatprep.mubr.f32.mxu0 0.0
        %2069 = vmatmul.mubr.f32.gmra.mrb[0].mxu0 %v998
        %v2070 = vpop.f32.mrb[0].mxu0
        %v2071 = vadd.f32 0.0, %v2070
        %v2072 = vpop.f32.mrb[0].mxu0
        %2073 = vmatprep.mubr.f32.mxu0 0.0
        %2074 = vmatmul.mubr.f32.gmra.mrb[0].mxu0 %v1000
        %v2075 = vpop.f32.mrb[0].mxu0
        %v2076 = vadd.f32 0.0, %v2075
        %v2077 = vpop.f32.mrb[0].mxu0
        %2078 = vmatprep.mubr.f32.mxu0 0.0
        %2079 = vmatmul.mubr.f32.gmra.mrb[0].mxu0 %v1003
        %v2080 = vpop.f32.mrb[0].mxu0
        %v2081 = vadd.f32 0.0, %v2080
        %v2082 = vpop.f32.mrb[0].mxu0
        %2083 = vmatprep.mubr.f32.mxu0 0.0
        %2084 = vmatmul.mubr.f32.gmra.mrb[0].mxu0 %v1005
        %v2085 = vpop.f32.mrb[0].mxu0
        %v2086 = vadd.f32 0.0, %v2085
        %v2087 = vpop.f32.mrb[0].mxu0
        %2088 = vmatprep.mubr.f32.mxu0 0.0
        %2089 = vmatmul.mubr.f32.gmra.mrb[0].mxu0 %v1008
        %v2090 = vpop.f32.mrb[0].mxu0
        %v2091 = vadd.f32 0.0, %v2090
        %v2092 = vpop.f32.mrb[0].mxu0
        %2093 = vmatprep.mubr.f32.mxu0 0.0
        %2094 = vmatmul.mubr.f32.gmra.mrb[0].mxu0 %v1010
        %v2095 = vpop.f32.mrb[0].mxu0
        %v2096 = vadd.f32 0.0, %v2095
        %v2097 = vpop.f32.mrb[0].mxu0
        %2098 = vmatprep.mubr.f32.mxu0 0.0
        %2099 = vmatmul.mubr.f32.gmra.mrb[0].mxu0 %v1013
        %v2100 = vpop.f32.mrb[0].mxu0
        %v2101 = vadd.f32 0.0, %v2100
        %v2102 = vpop.f32.mrb[0].mxu0
        %2103 = vmatprep.mubr.f32.mxu0 0.0
        %2104 = vmatmul.mubr.f32.gmra.mrb[0].mxu0 %v1015
        %v2105 = vpop.f32.mrb[0].mxu0
        %v2106 = vadd.f32 0.0, %v2105
        %v2107 = vpop.f32.mrb[0].mxu0
        %2108 = vmatprep.mubr.f32.mxu0 0.0
        %2109 = vmatmul.mubr.f32.gmra.mrb[0].mxu0 %v1018
        %v2110 = vpop.f32.mrb[0].mxu0
        %v2111 = vadd.f32 0.0, %v2110
        %v2112 = vpop.f32.mrb[0].mxu0
        %2113 = vmatprep.mubr.f32.mxu0 0.0
        %2114 = vmatmul.mubr.f32.gmra.mrb[0].mxu0 %v1020
        %v2115 = vpop.f32.mrb[0].mxu0
        %v2116 = vadd.f32 0.0, %v2115
        %v2117 = vpop.f32.mrb[0].mxu0
        %2118 = vmatprep.mubr.f32.mxu0 0.0
        %2119 = vmatmul.mubr.f32.gmra.mrb[0].mxu0 %v1023
        %v2120 = vpop.f32.mrb[0].mxu0
        %v2121 = vadd.f32 0.0, %v2120
        %v2122 = vpop.f32.mrb[0].mxu0
        %2123 = vmatprep.mubr.f32.mxu0 0.0
        %2124 = vmatmul.mubr.f32.gmra.mrb[0].mxu0 %v1025
        %v2125 = vpop.f32.mrb[0].mxu0
        %v2126 = vadd.f32 0.0, %v2125
        %v2127 = vpop.f32.mrb[0].mxu0
        %2128 = vmatprep.mubr.f32.mxu0 0.0
        %2129 = vmatmul.mubr.f32.gmra.mrb[0].mxu0 %v1892
        %v2130 = vpop.f32.mrb[0].mxu0
        %v2131 = vadd.f32 0.0, %v2130
        %v2132 = vpop.f32.mrb[0].mxu0
        %2133 = vmatprep.mubr.f32.mxu0 0.0
        %2134 = vmatmul.mubr.f32.gmra.mrb[0].mxu0 %v1894
        %v2135 = vpop.f32.mrb[0].mxu0
        %v2136 = vadd.f32 0.0, %v2135
        %v2137 = vpop.f32.mrb[0].mxu0
        %2138 = vdwg.mxu0
        %v2139 = vadd.f32 %v1858, %v1981
        %v2140 = vadd.f32 %v1859, %v1986
        %v2141 = vadd.f32 %v1860, %v1991
        %v2142 = vadd.f32 %v1861, %v1996
        %v2143 = vadd.f32 %v1862, %v2001
        %v2144 = vadd.f32 %v1863, %v2006
        %v2145 = vadd.f32 %v1864, %v2011
        %v2146 = vadd.f32 %v1865, %v2016
        %v2147 = vadd.f32 %v1866, %v2021
        %v2148 = vadd.f32 %v1867, %v2026
        %v2149 = vadd.f32 %v1868, %v2031
        %v2150 = vadd.f32 %v1869, %v2036
        %v2151 = vadd.f32 %v1870, %v2041
        %v2152 = vadd.f32 %v1871, %v2046
        %v2153 = vadd.f32 %v1872, %v2051
        %v2154 = vadd.f32 %v1873, %v2056
        %v2155 = vadd.f32 %v1874, %v2061
        %v2156 = vadd.f32 %v1875, %v2066
        %v2157 = vadd.f32 %v1876, %v2071
        %v2158 = vadd.f32 %v1877, %v2076
        %v2159 = vadd.f32 %v1878, %v2081
        %v2160 = vadd.f32 %v1879, %v2086
        %v2161 = vadd.f32 %v1880, %v2091
        %v2162 = vadd.f32 %v1881, %v2096
        %v2163 = vadd.f32 %v1882, %v2101
        %v2164 = vadd.f32 %v1883, %v2106
        %v2165 = vadd.f32 %v1884, %v2111
        %v2166 = vadd.f32 %v1885, %v2116
        %v2167 = vadd.f32 %v1886, %v2121
        %v2168 = vadd.f32 %v1887, %v2126
        %v2169 = vadd.f32 %v1888, %v2131
        %v2170 = vadd.f32 %v1889, %v2136
        %s2171 = scalar_lea.vmem [#allocation5], 768
        %v2172 = vld [vmem:[%s2171] sm:$0xff]
        %v2173 = vld [vmem:[%s2171 + $0x8] sm:$0xff]
        %v2174 = vld [vmem:[%s2171 + $0x10] sm:$0xff]
        %v2175 = vld [vmem:[%s2171 + $0x18] sm:$0xff]
        %v2176 = vld [vmem:[%s2171 + $0x20] sm:$0xff]
        %v2177 = vld [vmem:[%s2171 + $0x28] sm:$0xff]
        %v2178 = vld [vmem:[%s2171 + $0x30] sm:$0xff]
        %v2179 = vld [vmem:[%s2171 + $0x38] sm:$0xff]
        %v2180 = vld [vmem:[%s2171 + $0x40] sm:$0xff]
        %v2181 = vld [vmem:[%s2171 + $0x48] sm:$0xff]
        %v2182 = vld [vmem:[%s2171 + $0x50] sm:$0xff]
        %v2183 = vld [vmem:[%s2171 + $0x58] sm:$0xff]
        %v2184 = vld [vmem:[%s2171 + $0x60] sm:$0xff]
        %v2185 = vld [vmem:[%s2171 + $0x68] sm:$0xff]
        %v2186 = vld [vmem:[%s2171 + $0x70] sm:$0xff]
        %v2187 = vld [vmem:[%s2171 + $0x78] sm:$0xff]
        %2188 = vmatprep.subr.mxu0 0.0
        %2189 = vmatpush1.msra.mxu0 %v2172
        %2190 = vmatprep.subr.mxu0 0.0
        %2191 = vmatpush1.msra.mxu0 %v2173
        %2192 = vmatprep.subr.mxu0 0.0
        %2193 = vmatpush1.msra.mxu0 %v2174
        %2194 = vmatprep.subr.mxu0 0.0
        %2195 = vmatpush1.msra.mxu0 %v2175
        %2196 = vmatprep.subr.mxu0 0.0
        %2197 = vmatpush1.msra.mxu0 %v2176
        %2198 = vmatprep.subr.mxu0 0.0
        %2199 = vmatpush1.msra.mxu0 %v2177
        %2200 = vmatprep.subr.mxu0 0.0
        %2201 = vmatpush1.msra.mxu0 %v2178
        %2202 = vmatprep.subr.mxu0 0.0
        %2203 = vmatpush1.msra.mxu0 %v2179
        %2204 = vmatprep.subr.mxu0 0.0
        %2205 = vmatpush1.msra.mxu0 %v2180
        %2206 = vmatprep.subr.mxu0 0.0
        %2207 = vmatpush1.msra.mxu0 %v2181
        %2208 = vmatprep.subr.mxu0 0.0
        %2209 = vmatpush1.msra.mxu0 %v2182
        %2210 = vmatprep.subr.mxu0 0.0
        %2211 = vmatpush1.msra.mxu0 %v2183
        %2212 = vmatprep.subr.mxu0 0.0
        %2213 = vmatpush1.msra.mxu0 %v2184
        %2214 = vmatprep.subr.mxu0 0.0
        %2215 = vmatpush1.msra.mxu0 %v2185
        %2216 = vmatprep.subr.mxu0 0.0
        %2217 = vmatpush1.msra.mxu0 %v2186
        %2218 = vmatprep.subr.mxu0 0.0
        %2219 = vmatpush1.msra.mxu0 %v2187
        %2220 = vmatprep.subr.mxu0 0.0
        %2221 = vmatpush1.msra.mxu0 0.0
        %2222 = vmatprep.subr.mxu0 0.0
        %2223 = vmatpush1.msra.mxu0 0.0
        %2224 = vmatprep.subr.mxu0 0.0
        %2225 = vmatpush1.msra.mxu0 0.0
        %2226 = vmatprep.subr.mxu0 0.0
        %2227 = vmatpush1.msra.mxu0 0.0
        %2228 = vmatprep.subr.mxu0 0.0
        %2229 = vmatpush1.msra.mxu0 0.0
        %2230 = vmatprep.subr.mxu0 0.0
        %2231 = vmatpush1.msra.mxu0 0.0
        %2232 = vmatprep.subr.mxu0 0.0
        %2233 = vmatpush1.msra.mxu0 0.0
        %2234 = vmatprep.subr.mxu0 0.0
        %2235 = vmatpush1.msra.mxu0 0.0
        %2236 = vmatprep.subr.mxu0 0.0
        %2237 = vmatpush1.msra.mxu0 0.0
        %2238 = vmatprep.subr.mxu0 0.0
        %2239 = vmatpush1.msra.mxu0 0.0
        %2240 = vmatprep.subr.mxu0 0.0
        %2241 = vmatpush1.msra.mxu0 0.0
        %2242 = vmatprep.subr.mxu0 0.0
        %2243 = vmatpush1.msra.mxu0 0.0
        %2244 = vmatprep.subr.mxu0 0.0
        %2245 = vmatpush1.msra.mxu0 0.0
        %2246 = vmatprep.subr.mxu0 0.0
        %2247 = vmatpush1.msra.mxu0 0.0
        %2248 = vmatprep.subr.mxu0 0.0
        %2249 = vmatpush1.msra.mxu0 0.0
        %2250 = vmatprep.subr.mxu0 0.0
        %2251 = vmatpush1.msra.mxu0 0.0
        %2252 = vmatprep.mubr.f32.mxu0 0.0
        %2253 = vmatmul.mubr.f32.gmra.mrb[0].mxu0 %v253
        %v2254 = vpop.f32.mrb[0].mxu0
        %v2255 = vadd.f32 0.0, %v2254
        %v2256 = vpop.f32.mrb[0].mxu0
        %2257 = vmatprep.mubr.f32.mxu0 0.0
        %2258 = vmatmul.mubr.f32.gmra.mrb[0].mxu0 %v254
        %v2259 = vpop.f32.mrb[0].mxu0
        %v2260 = vadd.f32 0.0, %v2259
        %v2261 = vpop.f32.mrb[0].mxu0
        %2262 = vmatprep.mubr.f32.mxu0 0.0
        %2263 = vmatmul.mubr.f32.gmra.mrb[0].mxu0 %v256
        %v2264 = vpop.f32.mrb[0].mxu0
        %v2265 = vadd.f32 0.0, %v2264
        %v2266 = vpop.f32.mrb[0].mxu0
        %2267 = vmatprep.mubr.f32.mxu0 0.0
        %2268 = vmatmul.mubr.f32.gmra.mrb[0].mxu0 %v257
        %v2269 = vpop.f32.mrb[0].mxu0
        %v2270 = vadd.f32 0.0, %v2269
        %v2271 = vpop.f32.mrb[0].mxu0
        %2272 = vmatprep.mubr.f32.mxu0 0.0
        %2273 = vmatmul.mubr.f32.gmra.mrb[0].mxu0 %v259
        %v2274 = vpop.f32.mrb[0].mxu0
        %v2275 = vadd.f32 0.0, %v2274
        %v2276 = vpop.f32.mrb[0].mxu0
        %2277 = vmatprep.mubr.f32.mxu0 0.0
        %2278 = vmatmul.mubr.f32.gmra.mrb[0].mxu0 %v260
        %v2279 = vpop.f32.mrb[0].mxu0
        %v2280 = vadd.f32 0.0, %v2279
        %v2281 = vpop.f32.mrb[0].mxu0
        %2282 = vmatprep.mubr.f32.mxu0 0.0
        %2283 = vmatmul.mubr.f32.gmra.mrb[0].mxu0 %v262
        %v2284 = vpop.f32.mrb[0].mxu0
        %v2285 = vadd.f32 0.0, %v2284
        %v2286 = vpop.f32.mrb[0].mxu0
        %2287 = vmatprep.mubr.f32.mxu0 0.0
        %2288 = vmatmul.mubr.f32.gmra.mrb[0].mxu0 %v263
        %v2289 = vpop.f32.mrb[0].mxu0
        %v2290 = vadd.f32 0.0, %v2289
        %v2291 = vpop.f32.mrb[0].mxu0
        %2292 = vmatprep.mubr.f32.mxu0 0.0
        %2293 = vmatmul.mubr.f32.gmra.mrb[0].mxu0 %v265
        %v2294 = vpop.f32.mrb[0].mxu0
        %v2295 = vadd.f32 0.0, %v2294
        %v2296 = vpop.f32.mrb[0].mxu0
        %2297 = vmatprep.mubr.f32.mxu0 0.0
        %2298 = vmatmul.mubr.f32.gmra.mrb[0].mxu0 %v266
        %v2299 = vpop.f32.mrb[0].mxu0
        %v2300 = vadd.f32 0.0, %v2299
        %v2301 = vpop.f32.mrb[0].mxu0
        %2302 = vmatprep.mubr.f32.mxu0 0.0
        %2303 = vmatmul.mubr.f32.gmra.mrb[0].mxu0 %v268
        %v2304 = vpop.f32.mrb[0].mxu0
        %v2305 = vadd.f32 0.0, %v2304
        %v2306 = vpop.f32.mrb[0].mxu0
        %2307 = vmatprep.mubr.f32.mxu0 0.0
        %2308 = vmatmul.mubr.f32.gmra.mrb[0].mxu0 %v269
        %v2309 = vpop.f32.mrb[0].mxu0
        %v2310 = vadd.f32 0.0, %v2309
        %v2311 = vpop.f32.mrb[0].mxu0
        %2312 = vmatprep.mubr.f32.mxu0 0.0
        %2313 = vmatmul.mubr.f32.gmra.mrb[0].mxu0 %v271
        %v2314 = vpop.f32.mrb[0].mxu0
        %v2315 = vadd.f32 0.0, %v2314
        %v2316 = vpop.f32.mrb[0].mxu0
        %2317 = vmatprep.mubr.f32.mxu0 0.0
        %2318 = vmatmul.mubr.f32.gmra.mrb[0].mxu0 %v272
        %v2319 = vpop.f32.mrb[0].mxu0
        %v2320 = vadd.f32 0.0, %v2319
        %v2321 = vpop.f32.mrb[0].mxu0
        %2322 = vmatprep.mubr.f32.mxu0 0.0
        %2323 = vmatmul.mubr.f32.gmra.mrb[0].mxu0 %v274
        %v2324 = vpop.f32.mrb[0].mxu0
        %v2325 = vadd.f32 0.0, %v2324
        %v2326 = vpop.f32.mrb[0].mxu0
        %2327 = vmatprep.mubr.f32.mxu0 0.0
        %2328 = vmatmul.mubr.f32.gmra.mrb[0].mxu0 %v275
        %v2329 = vpop.f32.mrb[0].mxu0
        %v2330 = vadd.f32 0.0, %v2329
        %v2331 = vpop.f32.mrb[0].mxu0
        %2332 = vmatprep.mubr.f32.mxu0 0.0
        %2333 = vmatmul.mubr.f32.gmra.mrb[0].mxu0 %v277
        %v2334 = vpop.f32.mrb[0].mxu0
        %v2335 = vadd.f32 0.0, %v2334
        %v2336 = vpop.f32.mrb[0].mxu0
        %2337 = vmatprep.mubr.f32.mxu0 0.0
        %2338 = vmatmul.mubr.f32.gmra.mrb[0].mxu0 %v278
        %v2339 = vpop.f32.mrb[0].mxu0
        %v2340 = vadd.f32 0.0, %v2339
        %v2341 = vpop.f32.mrb[0].mxu0
        %2342 = vmatprep.mubr.f32.mxu0 0.0
        %2343 = vmatmul.mubr.f32.gmra.mrb[0].mxu0 %v280
        %v2344 = vpop.f32.mrb[0].mxu0
        %v2345 = vadd.f32 0.0, %v2344
        %v2346 = vpop.f32.mrb[0].mxu0
        %2347 = vmatprep.mubr.f32.mxu0 0.0
        %2348 = vmatmul.mubr.f32.gmra.mrb[0].mxu0 %v281
        %v2349 = vpop.f32.mrb[0].mxu0
        %v2350 = vadd.f32 0.0, %v2349
        %v2351 = vpop.f32.mrb[0].mxu0
        %2352 = vmatprep.mubr.f32.mxu0 0.0
        %2353 = vmatmul.mubr.f32.gmra.mrb[0].mxu0 %v283
        %v2354 = vpop.f32.mrb[0].mxu0
        %v2355 = vadd.f32 0.0, %v2354
        %v2356 = vpop.f32.mrb[0].mxu0
        %2357 = vmatprep.mubr.f32.mxu0 0.0
        %2358 = vmatmul.mubr.f32.gmra.mrb[0].mxu0 %v284
        %v2359 = vpop.f32.mrb[0].mxu0
        %v2360 = vadd.f32 0.0, %v2359
        %v2361 = vpop.f32.mrb[0].mxu0
        %2362 = vmatprep.mubr.f32.mxu0 0.0
        %2363 = vmatmul.mubr.f32.gmra.mrb[0].mxu0 %v286
        %v2364 = vpop.f32.mrb[0].mxu0
        %v2365 = vadd.f32 0.0, %v2364
        %v2366 = vpop.f32.mrb[0].mxu0
        %2367 = vmatprep.mubr.f32.mxu0 0.0
        %2368 = vmatmul.mubr.f32.gmra.mrb[0].mxu0 %v287
        %v2369 = vpop.f32.mrb[0].mxu0
        %v2370 = vadd.f32 0.0, %v2369
        %v2371 = vpop.f32.mrb[0].mxu0
        %2372 = vmatprep.mubr.f32.mxu0 0.0
        %2373 = vmatmul.mubr.f32.gmra.mrb[0].mxu0 %v289
        %v2374 = vpop.f32.mrb[0].mxu0
        %v2375 = vadd.f32 0.0, %v2374
        %v2376 = vpop.f32.mrb[0].mxu0
        %2377 = vmatprep.mubr.f32.mxu0 0.0
        %2378 = vmatmul.mubr.f32.gmra.mrb[0].mxu0 %v290
        %v2379 = vpop.f32.mrb[0].mxu0
        %v2380 = vadd.f32 0.0, %v2379
        %v2381 = vpop.f32.mrb[0].mxu0
        %2382 = vmatprep.mubr.f32.mxu0 0.0
        %2383 = vmatmul.mubr.f32.gmra.mrb[0].mxu0 %v292
        %v2384 = vpop.f32.mrb[0].mxu0
        %v2385 = vadd.f32 0.0, %v2384
        %v2386 = vpop.f32.mrb[0].mxu0
        %2387 = vmatprep.mubr.f32.mxu0 0.0
        %2388 = vmatmul.mubr.f32.gmra.mrb[0].mxu0 %v293
        %v2389 = vpop.f32.mrb[0].mxu0
        %v2390 = vadd.f32 0.0, %v2389
        %v2391 = vpop.f32.mrb[0].mxu0
        %2392 = vmatprep.mubr.f32.mxu0 0.0
        %2393 = vmatmul.mubr.f32.gmra.mrb[0].mxu0 %v295
        %v2394 = vpop.f32.mrb[0].mxu0
        %v2395 = vadd.f32 0.0, %v2394
        %v2396 = vpop.f32.mrb[0].mxu0
        %2397 = vmatprep.mubr.f32.mxu0 0.0
        %2398 = vmatmul.mubr.f32.gmra.mrb[0].mxu0 %v296
        %v2399 = vpop.f32.mrb[0].mxu0
        %v2400 = vadd.f32 0.0, %v2399
        %v2401 = vpop.f32.mrb[0].mxu0
        %2402 = vmatprep.mubr.f32.mxu0 0.0
        %2403 = vmatmul.mubr.f32.gmra.mrb[0].mxu0 %v298
        %v2404 = vpop.f32.mrb[0].mxu0
        %v2405 = vadd.f32 0.0, %v2404
        %v2406 = vpop.f32.mrb[0].mxu0
        %2407 = vmatprep.mubr.f32.mxu0 0.0
        %2408 = vmatmul.mubr.f32.gmra.mrb[0].mxu0 %v299
        %v2409 = vpop.f32.mrb[0].mxu0
        %v2410 = vadd.f32 0.0, %v2409
        %v2411 = vpop.f32.mrb[0].mxu0
        %2412 = vdwg.mxu0
        %v2413 = vadd.f32 %v2139, %v2255
        %v2414 = vadd.f32 %v2140, %v2260
        %v2415 = vadd.f32 %v2141, %v2265
        %v2416 = vadd.f32 %v2142, %v2270
        %v2417 = vadd.f32 %v2143, %v2275
        %v2418 = vadd.f32 %v2144, %v2280
        %v2419 = vadd.f32 %v2145, %v2285
        %v2420 = vadd.f32 %v2146, %v2290
        %v2421 = vadd.f32 %v2147, %v2295
        %v2422 = vadd.f32 %v2148, %v2300
        %v2423 = vadd.f32 %v2149, %v2305
        %v2424 = vadd.f32 %v2150, %v2310
        %v2425 = vadd.f32 %v2151, %v2315
        %v2426 = vadd.f32 %v2152, %v2320
        %v2427 = vadd.f32 %v2153, %v2325
        %v2428 = vadd.f32 %v2154, %v2330
        %v2429 = vadd.f32 %v2155, %v2335
        %v2430 = vadd.f32 %v2156, %v2340
        %v2431 = vadd.f32 %v2157, %v2345
        %v2432 = vadd.f32 %v2158, %v2350
        %v2433 = vadd.f32 %v2159, %v2355
        %v2434 = vadd.f32 %v2160, %v2360
        %v2435 = vadd.f32 %v2161, %v2365
        %v2436 = vadd.f32 %v2162, %v2370
        %v2437 = vadd.f32 %v2163, %v2375
        %v2438 = vadd.f32 %v2164, %v2380
        %v2439 = vadd.f32 %v2165, %v2385
        %v2440 = vadd.f32 %v2166, %v2390
        %v2441 = vadd.f32 %v2167, %v2395
        %v2442 = vadd.f32 %v2168, %v2400
        %v2443 = vadd.f32 %v2169, %v2405
        %v2444 = vadd.f32 %v2170, %v2410
        %v2448 = vrot.slane %v298, 1
        %v2449 = vrot.slane %v299, 1
        %v2450 = vsel %vm365, %v2448, %v2449
        %v2451 = vrot.slane %v300, 1
        %v2452 = vsel %vm365, %v2449, %v2451
        %s2455 = scalar_lea.vmem [#allocation5], 896
        %v2456 = vld [vmem:[%s2455] sm:$0xff]
        %v2457 = vld [vmem:[%s2455 + $0x8] sm:$0xff]
        %v2458 = vld [vmem:[%s2455 + $0x10] sm:$0xff]
        %v2459 = vld [vmem:[%s2455 + $0x18] sm:$0xff]
        %v2460 = vld [vmem:[%s2455 + $0x20] sm:$0xff]
        %v2461 = vld [vmem:[%s2455 + $0x28] sm:$0xff]
        %v2462 = vld [vmem:[%s2455 + $0x30] sm:$0xff]
        %v2463 = vld [vmem:[%s2455 + $0x38] sm:$0xff]
        %v2464 = vld [vmem:[%s2455 + $0x40] sm:$0xff]
        %v2465 = vld [vmem:[%s2455 + $0x48] sm:$0xff]
        %v2466 = vld [vmem:[%s2455 + $0x50] sm:$0xff]
        %v2467 = vld [vmem:[%s2455 + $0x58] sm:$0xff]
        %v2468 = vld [vmem:[%s2455 + $0x60] sm:$0xff]
        %v2469 = vld [vmem:[%s2455 + $0x68] sm:$0xff]
        %v2470 = vld [vmem:[%s2455 + $0x70] sm:$0xff]
        %v2471 = vld [vmem:[%s2455 + $0x78] sm:$0xff]
        %2472 = vmatprep.subr.mxu0 0.0
        %2473 = vmatpush1.msra.mxu0 %v2456
        %2474 = vmatprep.subr.mxu0 0.0
        %2475 = vmatpush1.msra.mxu0 %v2457
        %2476 = vmatprep.subr.mxu0 0.0
        %2477 = vmatpush1.msra.mxu0 %v2458
        %2478 = vmatprep.subr.mxu0 0.0
        %2479 = vmatpush1.msra.mxu0 %v2459
        %2480 = vmatprep.subr.mxu0 0.0
        %2481 = vmatpush1.msra.mxu0 %v2460
        %2482 = vmatprep.subr.mxu0 0.0
        %2483 = vmatpush1.msra.mxu0 %v2461
        %2484 = vmatprep.subr.mxu0 0.0
        %2485 = vmatpush1.msra.mxu0 %v2462
        %2486 = vmatprep.subr.mxu0 0.0
        %2487 = vmatpush1.msra.mxu0 %v2463
        %2488 = vmatprep.subr.mxu0 0.0
        %2489 = vmatpush1.msra.mxu0 %v2464
        %2490 = vmatprep.subr.mxu0 0.0
        %2491 = vmatpush1.msra.mxu0 %v2465
        %2492 = vmatprep.subr.mxu0 0.0
        %2493 = vmatpush1.msra.mxu0 %v2466
        %2494 = vmatprep.subr.mxu0 0.0
        %2495 = vmatpush1.msra.mxu0 %v2467
        %2496 = vmatprep.subr.mxu0 0.0
        %2497 = vmatpush1.msra.mxu0 %v2468
        %2498 = vmatprep.subr.mxu0 0.0
        %2499 = vmatpush1.msra.mxu0 %v2469
        %2500 = vmatprep.subr.mxu0 0.0
        %2501 = vmatpush1.msra.mxu0 %v2470
        %2502 = vmatprep.subr.mxu0 0.0
        %2503 = vmatpush1.msra.mxu0 %v2471
        %2504 = vmatprep.subr.mxu0 0.0
        %2505 = vmatpush1.msra.mxu0 0.0
        %2506 = vmatprep.subr.mxu0 0.0
        %2507 = vmatpush1.msra.mxu0 0.0
        %2508 = vmatprep.subr.mxu0 0.0
        %2509 = vmatpush1.msra.mxu0 0.0
        %2510 = vmatprep.subr.mxu0 0.0
        %2511 = vmatpush1.msra.mxu0 0.0
        %2512 = vmatprep.subr.mxu0 0.0
        %2513 = vmatpush1.msra.mxu0 0.0
        %2514 = vmatprep.subr.mxu0 0.0
        %2515 = vmatpush1.msra.mxu0 0.0
        %2516 = vmatprep.subr.mxu0 0.0
        %2517 = vmatpush1.msra.mxu0 0.0
        %2518 = vmatprep.subr.mxu0 0.0
        %2519 = vmatpush1.msra.mxu0 0.0
        %2520 = vmatprep.subr.mxu0 0.0
        %2521 = vmatpush1.msra.mxu0 0.0
        %2522 = vmatprep.subr.mxu0 0.0
        %2523 = vmatpush1.msra.mxu0 0.0
        %2524 = vmatprep.subr.mxu0 0.0
        %2525 = vmatpush1.msra.mxu0 0.0
        %2526 = vmatprep.subr.mxu0 0.0
        %2527 = vmatpush1.msra.mxu0 0.0
        %2528 = vmatprep.subr.mxu0 0.0
        %2529 = vmatpush1.msra.mxu0 0.0
        %2530 = vmatprep.subr.mxu0 0.0
        %2531 = vmatpush1.msra.mxu0 0.0
        %2532 = vmatprep.subr.mxu0 0.0
        %2533 = vmatpush1.msra.mxu0 0.0
        %2534 = vmatprep.subr.mxu0 0.0
        %2535 = vmatpush1.msra.mxu0 0.0
        %2536 = vmatprep.mubr.f32.mxu0 0.0
        %2537 = vmatmul.mubr.f32.gmra.mrb[0].mxu0 %v378
        %v2538 = vpop.f32.mrb[0].mxu0
        %v2539 = vadd.f32 0.0, %v2538
        %v2540 = vpop.f32.mrb[0].mxu0
        %2541 = vmatprep.mubr.f32.mxu0 0.0
        %2542 = vmatmul.mubr.f32.gmra.mrb[0].mxu0 %v380
        %v2543 = vpop.f32.mrb[0].mxu0
        %v2544 = vadd.f32 0.0, %v2543
        %v2545 = vpop.f32.mrb[0].mxu0
        %2546 = vmatprep.mubr.f32.mxu0 0.0
        %2547 = vmatmul.mubr.f32.gmra.mrb[0].mxu0 %v383
        %v2548 = vpop.f32.mrb[0].mxu0
        %v2549 = vadd.f32 0.0, %v2548
        %v2550 = vpop.f32.mrb[0].mxu0
        %2551 = vmatprep.mubr.f32.mxu0 0.0
        %2552 = vmatmul.mubr.f32.gmra.mrb[0].mxu0 %v385
        %v2553 = vpop.f32.mrb[0].mxu0
        %v2554 = vadd.f32 0.0, %v2553
        %v2555 = vpop.f32.mrb[0].mxu0
        %2556 = vmatprep.mubr.f32.mxu0 0.0
        %2557 = vmatmul.mubr.f32.gmra.mrb[0].mxu0 %v388
        %v2558 = vpop.f32.mrb[0].mxu0
        %v2559 = vadd.f32 0.0, %v2558
        %v2560 = vpop.f32.mrb[0].mxu0
        %2561 = vmatprep.mubr.f32.mxu0 0.0
        %2562 = vmatmul.mubr.f32.gmra.mrb[0].mxu0 %v390
        %v2563 = vpop.f32.mrb[0].mxu0
        %v2564 = vadd.f32 0.0, %v2563
        %v2565 = vpop.f32.mrb[0].mxu0
        %2566 = vmatprep.mubr.f32.mxu0 0.0
        %2567 = vmatmul.mubr.f32.gmra.mrb[0].mxu0 %v393
        %v2568 = vpop.f32.mrb[0].mxu0
        %v2569 = vadd.f32 0.0, %v2568
        %v2570 = vpop.f32.mrb[0].mxu0
        %2571 = vmatprep.mubr.f32.mxu0 0.0
        %2572 = vmatmul.mubr.f32.gmra.mrb[0].mxu0 %v395
        %v2573 = vpop.f32.mrb[0].mxu0
        %v2574 = vadd.f32 0.0, %v2573
        %v2575 = vpop.f32.mrb[0].mxu0
        %2576 = vmatprep.mubr.f32.mxu0 0.0
        %2577 = vmatmul.mubr.f32.gmra.mrb[0].mxu0 %v398
        %v2578 = vpop.f32.mrb[0].mxu0
        %v2579 = vadd.f32 0.0, %v2578
        %v2580 = vpop.f32.mrb[0].mxu0
        %2581 = vmatprep.mubr.f32.mxu0 0.0
        %2582 = vmatmul.mubr.f32.gmra.mrb[0].mxu0 %v400
        %v2583 = vpop.f32.mrb[0].mxu0
        %v2584 = vadd.f32 0.0, %v2583
        %v2585 = vpop.f32.mrb[0].mxu0
        %2586 = vmatprep.mubr.f32.mxu0 0.0
        %2587 = vmatmul.mubr.f32.gmra.mrb[0].mxu0 %v403
        %v2588 = vpop.f32.mrb[0].mxu0
        %v2589 = vadd.f32 0.0, %v2588
        %v2590 = vpop.f32.mrb[0].mxu0
        %2591 = vmatprep.mubr.f32.mxu0 0.0
        %2592 = vmatmul.mubr.f32.gmra.mrb[0].mxu0 %v405
        %v2593 = vpop.f32.mrb[0].mxu0
        %v2594 = vadd.f32 0.0, %v2593
        %v2595 = vpop.f32.mrb[0].mxu0
        %2596 = vmatprep.mubr.f32.mxu0 0.0
        %2597 = vmatmul.mubr.f32.gmra.mrb[0].mxu0 %v408
        %v2598 = vpop.f32.mrb[0].mxu0
        %v2599 = vadd.f32 0.0, %v2598
        %v2600 = vpop.f32.mrb[0].mxu0
        %2601 = vmatprep.mubr.f32.mxu0 0.0
        %2602 = vmatmul.mubr.f32.gmra.mrb[0].mxu0 %v410
        %v2603 = vpop.f32.mrb[0].mxu0
        %v2604 = vadd.f32 0.0, %v2603
        %v2605 = vpop.f32.mrb[0].mxu0
        %2606 = vmatprep.mubr.f32.mxu0 0.0
        %2607 = vmatmul.mubr.f32.gmra.mrb[0].mxu0 %v413
        %v2608 = vpop.f32.mrb[0].mxu0
        %v2609 = vadd.f32 0.0, %v2608
        %v2610 = vpop.f32.mrb[0].mxu0
        %2611 = vmatprep.mubr.f32.mxu0 0.0
        %2612 = vmatmul.mubr.f32.gmra.mrb[0].mxu0 %v415
        %v2613 = vpop.f32.mrb[0].mxu0
        %v2614 = vadd.f32 0.0, %v2613
        %v2615 = vpop.f32.mrb[0].mxu0
        %2616 = vmatprep.mubr.f32.mxu0 0.0
        %2617 = vmatmul.mubr.f32.gmra.mrb[0].mxu0 %v418
        %v2618 = vpop.f32.mrb[0].mxu0
        %v2619 = vadd.f32 0.0, %v2618
        %v2620 = vpop.f32.mrb[0].mxu0
        %2621 = vmatprep.mubr.f32.mxu0 0.0
        %2622 = vmatmul.mubr.f32.gmra.mrb[0].mxu0 %v420
        %v2623 = vpop.f32.mrb[0].mxu0
        %v2624 = vadd.f32 0.0, %v2623
        %v2625 = vpop.f32.mrb[0].mxu0
        %2626 = vmatprep.mubr.f32.mxu0 0.0
        %2627 = vmatmul.mubr.f32.gmra.mrb[0].mxu0 %v423
        %v2628 = vpop.f32.mrb[0].mxu0
        %v2629 = vadd.f32 0.0, %v2628
        %v2630 = vpop.f32.mrb[0].mxu0
        %2631 = vmatprep.mubr.f32.mxu0 0.0
        %2632 = vmatmul.mubr.f32.gmra.mrb[0].mxu0 %v425
        %v2633 = vpop.f32.mrb[0].mxu0
        %v2634 = vadd.f32 0.0, %v2633
        %v2635 = vpop.f32.mrb[0].mxu0
        %2636 = vmatprep.mubr.f32.mxu0 0.0
        %2637 = vmatmul.mubr.f32.gmra.mrb[0].mxu0 %v428
        %v2638 = vpop.f32.mrb[0].mxu0
        %v2639 = vadd.f32 0.0, %v2638
        %v2640 = vpop.f32.mrb[0].mxu0
        %2641 = vmatprep.mubr.f32.mxu0 0.0
        %2642 = vmatmul.mubr.f32.gmra.mrb[0].mxu0 %v430
        %v2643 = vpop.f32.mrb[0].mxu0
        %v2644 = vadd.f32 0.0, %v2643
        %v2645 = vpop.f32.mrb[0].mxu0
        %2646 = vmatprep.mubr.f32.mxu0 0.0
        %2647 = vmatmul.mubr.f32.gmra.mrb[0].mxu0 %v433
        %v2648 = vpop.f32.mrb[0].mxu0
        %v2649 = vadd.f32 0.0, %v2648
        %v2650 = vpop.f32.mrb[0].mxu0
        %2651 = vmatprep.mubr.f32.mxu0 0.0
        %2652 = vmatmul.mubr.f32.gmra.mrb[0].mxu0 %v435
        %v2653 = vpop.f32.mrb[0].mxu0
        %v2654 = vadd.f32 0.0, %v2653
        %v2655 = vpop.f32.mrb[0].mxu0
        %2656 = vmatprep.mubr.f32.mxu0 0.0
        %2657 = vmatmul.mubr.f32.gmra.mrb[0].mxu0 %v438
        %v2658 = vpop.f32.mrb[0].mxu0
        %v2659 = vadd.f32 0.0, %v2658
        %v2660 = vpop.f32.mrb[0].mxu0
        %2661 = vmatprep.mubr.f32.mxu0 0.0
        %2662 = vmatmul.mubr.f32.gmra.mrb[0].mxu0 %v440
        %v2663 = vpop.f32.mrb[0].mxu0
        %v2664 = vadd.f32 0.0, %v2663
        %v2665 = vpop.f32.mrb[0].mxu0
        %2666 = vmatprep.mubr.f32.mxu0 0.0
        %2667 = vmatmul.mubr.f32.gmra.mrb[0].mxu0 %v443
        %v2668 = vpop.f32.mrb[0].mxu0
        %v2669 = vadd.f32 0.0, %v2668
        %v2670 = vpop.f32.mrb[0].mxu0
        %2671 = vmatprep.mubr.f32.mxu0 0.0
        %2672 = vmatmul.mubr.f32.gmra.mrb[0].mxu0 %v445
        %v2673 = vpop.f32.mrb[0].mxu0
        %v2674 = vadd.f32 0.0, %v2673
        %v2675 = vpop.f32.mrb[0].mxu0
        %2676 = vmatprep.mubr.f32.mxu0 0.0
        %2677 = vmatmul.mubr.f32.gmra.mrb[0].mxu0 %v1611
        %v2678 = vpop.f32.mrb[0].mxu0
        %v2679 = vadd.f32 0.0, %v2678
        %v2680 = vpop.f32.mrb[0].mxu0
        %2681 = vmatprep.mubr.f32.mxu0 0.0
        %2682 = vmatmul.mubr.f32.gmra.mrb[0].mxu0 %v1613
        %v2683 = vpop.f32.mrb[0].mxu0
        %v2684 = vadd.f32 0.0, %v2683
        %v2685 = vpop.f32.mrb[0].mxu0
        %2686 = vmatprep.mubr.f32.mxu0 0.0
        %2687 = vmatmul.mubr.f32.gmra.mrb[0].mxu0 %v2450
        %v2688 = vpop.f32.mrb[0].mxu0
        %v2689 = vadd.f32 0.0, %v2688
        %v2690 = vpop.f32.mrb[0].mxu0
        %2691 = vmatprep.mubr.f32.mxu0 0.0
        %2692 = vmatmul.mubr.f32.gmra.mrb[0].mxu0 %v2452
        %v2693 = vpop.f32.mrb[0].mxu0
        %v2694 = vadd.f32 0.0, %v2693
        %v2695 = vpop.f32.mrb[0].mxu0
        %2696 = vdwg.mxu0
        %v2697 = vadd.f32 %v2413, %v2539
        %v2698 = vadd.f32 %v2414, %v2544
        %v2699 = vadd.f32 %v2415, %v2549
        %v2700 = vadd.f32 %v2416, %v2554
        %v2701 = vadd.f32 %v2417, %v2559
        %v2702 = vadd.f32 %v2418, %v2564
        %v2703 = vadd.f32 %v2419, %v2569
        %v2704 = vadd.f32 %v2420, %v2574
        %v2705 = vadd.f32 %v2421, %v2579
        %v2706 = vadd.f32 %v2422, %v2584
        %v2707 = vadd.f32 %v2423, %v2589
        %v2708 = vadd.f32 %v2424, %v2594
        %v2709 = vadd.f32 %v2425, %v2599
        %v2710 = vadd.f32 %v2426, %v2604
        %v2711 = vadd.f32 %v2427, %v2609
        %v2712 = vadd.f32 %v2428, %v2614
        %v2713 = vadd.f32 %v2429, %v2619
        %v2714 = vadd.f32 %v2430, %v2624
        %v2715 = vadd.f32 %v2431, %v2629
        %v2716 = vadd.f32 %v2432, %v2634
        %v2717 = vadd.f32 %v2433, %v2639
        %v2718 = vadd.f32 %v2434, %v2644
        %v2719 = vadd.f32 %v2435, %v2649
        %v2720 = vadd.f32 %v2436, %v2654
        %v2721 = vadd.f32 %v2437, %v2659
        %v2722 = vadd.f32 %v2438, %v2664
        %v2723 = vadd.f32 %v2439, %v2669
        %v2724 = vadd.f32 %v2440, %v2674
        %v2725 = vadd.f32 %v2441, %v2679
        %v2726 = vadd.f32 %v2442, %v2684
        %v2727 = vadd.f32 %v2443, %v2689
        %v2728 = vadd.f32 %v2444, %v2694
        %v2729 = vrot.slane %v298, 2
        %v2730 = vrot.slane %v299, 2
        %v2731 = vsel %vm945, %v2729, %v2730
        %v2732 = vrot.slane %v300, 2
        %v2733 = vsel %vm945, %v2730, %v2732
        %s2736 = scalar_lea.vmem [#allocation5], 1024
        %v2737 = vld [vmem:[%s2736] sm:$0xff]
        %v2738 = vld [vmem:[%s2736 + $0x8] sm:$0xff]
        %v2739 = vld [vmem:[%s2736 + $0x10] sm:$0xff]
        %v2740 = vld [vmem:[%s2736 + $0x18] sm:$0xff]
        %v2741 = vld [vmem:[%s2736 + $0x20] sm:$0xff]
        %v2742 = vld [vmem:[%s2736 + $0x28] sm:$0xff]
        %v2743 = vld [vmem:[%s2736 + $0x30] sm:$0xff]
        %v2744 = vld [vmem:[%s2736 + $0x38] sm:$0xff]
        %v2745 = vld [vmem:[%s2736 + $0x40] sm:$0xff]
        %v2746 = vld [vmem:[%s2736 + $0x48] sm:$0xff]
        %v2747 = vld [vmem:[%s2736 + $0x50] sm:$0xff]
        %v2748 = vld [vmem:[%s2736 + $0x58] sm:$0xff]
        %v2749 = vld [vmem:[%s2736 + $0x60] sm:$0xff]
        %v2750 = vld [vmem:[%s2736 + $0x68] sm:$0xff]
        %v2751 = vld [vmem:[%s2736 + $0x70] sm:$0xff]
        %v2752 = vld [vmem:[%s2736 + $0x78] sm:$0xff]
        %2753 = vmatprep.subr.mxu0 0.0
        %2754 = vmatpush1.msra.mxu0 %v2737
        %2755 = vmatprep.subr.mxu0 0.0
        %2756 = vmatpush1.msra.mxu0 %v2738
        %2757 = vmatprep.subr.mxu0 0.0
        %2758 = vmatpush1.msra.mxu0 %v2739
        %2759 = vmatprep.subr.mxu0 0.0
        %2760 = vmatpush1.msra.mxu0 %v2740
        %2761 = vmatprep.subr.mxu0 0.0
        %2762 = vmatpush1.msra.mxu0 %v2741
        %2763 = vmatprep.subr.mxu0 0.0
        %2764 = vmatpush1.msra.mxu0 %v2742
        %2765 = vmatprep.subr.mxu0 0.0
        %2766 = vmatpush1.msra.mxu0 %v2743
        %2767 = vmatprep.subr.mxu0 0.0
        %2768 = vmatpush1.msra.mxu0 %v2744
        %2769 = vmatprep.subr.mxu0 0.0
        %2770 = vmatpush1.msra.mxu0 %v2745
        %2771 = vmatprep.subr.mxu0 0.0
        %2772 = vmatpush1.msra.mxu0 %v2746
        %2773 = vmatprep.subr.mxu0 0.0
        %2774 = vmatpush1.msra.mxu0 %v2747
        %2775 = vmatprep.subr.mxu0 0.0
        %2776 = vmatpush1.msra.mxu0 %v2748
        %2777 = vmatprep.subr.mxu0 0.0
        %2778 = vmatpush1.msra.mxu0 %v2749
        %2779 = vmatprep.subr.mxu0 0.0
        %2780 = vmatpush1.msra.mxu0 %v2750
        %2781 = vmatprep.subr.mxu0 0.0
        %2782 = vmatpush1.msra.mxu0 %v2751
        %2783 = vmatprep.subr.mxu0 0.0
        %2784 = vmatpush1.msra.mxu0 %v2752
        %2785 = vmatprep.subr.mxu0 0.0
        %2786 = vmatpush1.msra.mxu0 0.0
        %2787 = vmatprep.subr.mxu0 0.0
        %2788 = vmatpush1.msra.mxu0 0.0
        %2789 = vmatprep.subr.mxu0 0.0
        %2790 = vmatpush1.msra.mxu0 0.0
        %2791 = vmatprep.subr.mxu0 0.0
        %2792 = vmatpush1.msra.mxu0 0.0
        %2793 = vmatprep.subr.mxu0 0.0
        %2794 = vmatpush1.msra.mxu0 0.0
        %2795 = vmatprep.subr.mxu0 0.0
        %2796 = vmatpush1.msra.mxu0 0.0
        %2797 = vmatprep.subr.mxu0 0.0
        %2798 = vmatpush1.msra.mxu0 0.0
        %2799 = vmatprep.subr.mxu0 0.0
        %2800 = vmatpush1.msra.mxu0 0.0
        %2801 = vmatprep.subr.mxu0 0.0
        %2802 = vmatpush1.msra.mxu0 0.0
        %2803 = vmatprep.subr.mxu0 0.0
        %2804 = vmatpush1.msra.mxu0 0.0
        %2805 = vmatprep.subr.mxu0 0.0
        %2806 = vmatpush1.msra.mxu0 0.0
        %2807 = vmatprep.subr.mxu0 0.0
        %2808 = vmatpush1.msra.mxu0 0.0
        %2809 = vmatprep.subr.mxu0 0.0
        %2810 = vmatpush1.msra.mxu0 0.0
        %2811 = vmatprep.subr.mxu0 0.0
        %2812 = vmatpush1.msra.mxu0 0.0
        %2813 = vmatprep.subr.mxu0 0.0
        %2814 = vmatpush1.msra.mxu0 0.0
        %2815 = vmatprep.subr.mxu0 0.0
        %2816 = vmatpush1.msra.mxu0 0.0
        %2817 = vmatprep.mubr.f32.mxu0 0.0
        %2818 = vmatmul.mubr.f32.gmra.mrb[0].mxu0 %v958
        %v2819 = vpop.f32.mrb[0].mxu0
        %v2820 = vadd.f32 0.0, %v2819
        %v2821 = vpop.f32.mrb[0].mxu0
        %2822 = vmatprep.mubr.f32.mxu0 0.0
        %2823 = vmatmul.mubr.f32.gmra.mrb[0].mxu0 %v960
        %v2824 = vpop.f32.mrb[0].mxu0
        %v2825 = vadd.f32 0.0, %v2824
        %v2826 = vpop.f32.mrb[0].mxu0
        %2827 = vmatprep.mubr.f32.mxu0 0.0
        %2828 = vmatmul.mubr.f32.gmra.mrb[0].mxu0 %v963
        %v2829 = vpop.f32.mrb[0].mxu0
        %v2830 = vadd.f32 0.0, %v2829
        %v2831 = vpop.f32.mrb[0].mxu0
        %2832 = vmatprep.mubr.f32.mxu0 0.0
        %2833 = vmatmul.mubr.f32.gmra.mrb[0].mxu0 %v965
        %v2834 = vpop.f32.mrb[0].mxu0
        %v2835 = vadd.f32 0.0, %v2834
        %v2836 = vpop.f32.mrb[0].mxu0
        %2837 = vmatprep.mubr.f32.mxu0 0.0
        %2838 = vmatmul.mubr.f32.gmra.mrb[0].mxu0 %v968
        %v2839 = vpop.f32.mrb[0].mxu0
        %v2840 = vadd.f32 0.0, %v2839
        %v2841 = vpop.f32.mrb[0].mxu0
        %2842 = vmatprep.mubr.f32.mxu0 0.0
        %2843 = vmatmul.mubr.f32.gmra.mrb[0].mxu0 %v970
        %v2844 = vpop.f32.mrb[0].mxu0
        %v2845 = vadd.f32 0.0, %v2844
        %v2846 = vpop.f32.mrb[0].mxu0
        %2847 = vmatprep.mubr.f32.mxu0 0.0
        %2848 = vmatmul.mubr.f32.gmra.mrb[0].mxu0 %v973
        %v2849 = vpop.f32.mrb[0].mxu0
        %v2850 = vadd.f32 0.0, %v2849
        %v2851 = vpop.f32.mrb[0].mxu0
        %2852 = vmatprep.mubr.f32.mxu0 0.0
        %2853 = vmatmul.mubr.f32.gmra.mrb[0].mxu0 %v975
        %v2854 = vpop.f32.mrb[0].mxu0
        %v2855 = vadd.f32 0.0, %v2854
        %v2856 = vpop.f32.mrb[0].mxu0
        %2857 = vmatprep.mubr.f32.mxu0 0.0
        %2858 = vmatmul.mubr.f32.gmra.mrb[0].mxu0 %v978
        %v2859 = vpop.f32.mrb[0].mxu0
        %v2860 = vadd.f32 0.0, %v2859
        %v2861 = vpop.f32.mrb[0].mxu0
        %2862 = vmatprep.mubr.f32.mxu0 0.0
        %2863 = vmatmul.mubr.f32.gmra.mrb[0].mxu0 %v980
        %v2864 = vpop.f32.mrb[0].mxu0
        %v2865 = vadd.f32 0.0, %v2864
        %v2866 = vpop.f32.mrb[0].mxu0
        %2867 = vmatprep.mubr.f32.mxu0 0.0
        %2868 = vmatmul.mubr.f32.gmra.mrb[0].mxu0 %v983
        %v2869 = vpop.f32.mrb[0].mxu0
        %v2870 = vadd.f32 0.0, %v2869
        %v2871 = vpop.f32.mrb[0].mxu0
        %2872 = vmatprep.mubr.f32.mxu0 0.0
        %2873 = vmatmul.mubr.f32.gmra.mrb[0].mxu0 %v985
        %v2874 = vpop.f32.mrb[0].mxu0
        %v2875 = vadd.f32 0.0, %v2874
        %v2876 = vpop.f32.mrb[0].mxu0
        %2877 = vmatprep.mubr.f32.mxu0 0.0
        %2878 = vmatmul.mubr.f32.gmra.mrb[0].mxu0 %v988
        %v2879 = vpop.f32.mrb[0].mxu0
        %v2880 = vadd.f32 0.0, %v2879
        %v2881 = vpop.f32.mrb[0].mxu0
        %2882 = vmatprep.mubr.f32.mxu0 0.0
        %2883 = vmatmul.mubr.f32.gmra.mrb[0].mxu0 %v990
        %v2884 = vpop.f32.mrb[0].mxu0
        %v2885 = vadd.f32 0.0, %v2884
        %v2886 = vpop.f32.mrb[0].mxu0
        %2887 = vmatprep.mubr.f32.mxu0 0.0
        %2888 = vmatmul.mubr.f32.gmra.mrb[0].mxu0 %v993
        %v2889 = vpop.f32.mrb[0].mxu0
        %v2890 = vadd.f32 0.0, %v2889
        %v2891 = vpop.f32.mrb[0].mxu0
        %2892 = vmatprep.mubr.f32.mxu0 0.0
        %2893 = vmatmul.mubr.f32.gmra.mrb[0].mxu0 %v995
        %v2894 = vpop.f32.mrb[0].mxu0
        %v2895 = vadd.f32 0.0, %v2894
        %v2896 = vpop.f32.mrb[0].mxu0
        %2897 = vmatprep.mubr.f32.mxu0 0.0
        %2898 = vmatmul.mubr.f32.gmra.mrb[0].mxu0 %v998
        %v2899 = vpop.f32.mrb[0].mxu0
        %v2900 = vadd.f32 0.0, %v2899
        %v2901 = vpop.f32.mrb[0].mxu0
        %2902 = vmatprep.mubr.f32.mxu0 0.0
        %2903 = vmatmul.mubr.f32.gmra.mrb[0].mxu0 %v1000
        %v2904 = vpop.f32.mrb[0].mxu0
        %v2905 = vadd.f32 0.0, %v2904
        %v2906 = vpop.f32.mrb[0].mxu0
        %2907 = vmatprep.mubr.f32.mxu0 0.0
        %2908 = vmatmul.mubr.f32.gmra.mrb[0].mxu0 %v1003
        %v2909 = vpop.f32.mrb[0].mxu0
        %v2910 = vadd.f32 0.0, %v2909
        %v2911 = vpop.f32.mrb[0].mxu0
        %2912 = vmatprep.mubr.f32.mxu0 0.0
        %2913 = vmatmul.mubr.f32.gmra.mrb[0].mxu0 %v1005
        %v2914 = vpop.f32.mrb[0].mxu0
        %v2915 = vadd.f32 0.0, %v2914
        %v2916 = vpop.f32.mrb[0].mxu0
        %2917 = vmatprep.mubr.f32.mxu0 0.0
        %2918 = vmatmul.mubr.f32.gmra.mrb[0].mxu0 %v1008
        %v2919 = vpop.f32.mrb[0].mxu0
        %v2920 = vadd.f32 0.0, %v2919
        %v2921 = vpop.f32.mrb[0].mxu0
        %2922 = vmatprep.mubr.f32.mxu0 0.0
        %2923 = vmatmul.mubr.f32.gmra.mrb[0].mxu0 %v1010
        %v2924 = vpop.f32.mrb[0].mxu0
        %v2925 = vadd.f32 0.0, %v2924
        %v2926 = vpop.f32.mrb[0].mxu0
        %2927 = vmatprep.mubr.f32.mxu0 0.0
        %2928 = vmatmul.mubr.f32.gmra.mrb[0].mxu0 %v1013
        %v2929 = vpop.f32.mrb[0].mxu0
        %v2930 = vadd.f32 0.0, %v2929
        %v2931 = vpop.f32.mrb[0].mxu0
        %2932 = vmatprep.mubr.f32.mxu0 0.0
        %2933 = vmatmul.mubr.f32.gmra.mrb[0].mxu0 %v1015
        %v2934 = vpop.f32.mrb[0].mxu0
        %v2935 = vadd.f32 0.0, %v2934
        %v2936 = vpop.f32.mrb[0].mxu0
        %2937 = vmatprep.mubr.f32.mxu0 0.0
        %2938 = vmatmul.mubr.f32.gmra.mrb[0].mxu0 %v1018
        %v2939 = vpop.f32.mrb[0].mxu0
        %v2940 = vadd.f32 0.0, %v2939
        %v2941 = vpop.f32.mrb[0].mxu0
        %2942 = vmatprep.mubr.f32.mxu0 0.0
        %2943 = vmatmul.mubr.f32.gmra.mrb[0].mxu0 %v1020
        %v2944 = vpop.f32.mrb[0].mxu0
        %v2945 = vadd.f32 0.0, %v2944
        %v2946 = vpop.f32.mrb[0].mxu0
        %2947 = vmatprep.mubr.f32.mxu0 0.0
        %2948 = vmatmul.mubr.f32.gmra.mrb[0].mxu0 %v1023
        %v2949 = vpop.f32.mrb[0].mxu0
        %v2950 = vadd.f32 0.0, %v2949
        %v2951 = vpop.f32.mrb[0].mxu0
        %2952 = vmatprep.mubr.f32.mxu0 0.0
        %2953 = vmatmul.mubr.f32.gmra.mrb[0].mxu0 %v1025
        %v2954 = vpop.f32.mrb[0].mxu0
        %v2955 = vadd.f32 0.0, %v2954
        %v2956 = vpop.f32.mrb[0].mxu0
        %2957 = vmatprep.mubr.f32.mxu0 0.0
        %2958 = vmatmul.mubr.f32.gmra.mrb[0].mxu0 %v1892
        %v2959 = vpop.f32.mrb[0].mxu0
        %v2960 = vadd.f32 0.0, %v2959
        %v2961 = vpop.f32.mrb[0].mxu0
        %2962 = vmatprep.mubr.f32.mxu0 0.0
        %2963 = vmatmul.mubr.f32.gmra.mrb[0].mxu0 %v1894
        %v2964 = vpop.f32.mrb[0].mxu0
        %v2965 = vadd.f32 0.0, %v2964
        %v2966 = vpop.f32.mrb[0].mxu0
        %2967 = vmatprep.mubr.f32.mxu0 0.0
        %2968 = vmatmul.mubr.f32.gmra.mrb[0].mxu0 %v2731
        %v2969 = vpop.f32.mrb[0].mxu0
        %v2970 = vadd.f32 0.0, %v2969
        %v2971 = vpop.f32.mrb[0].mxu0
        %2972 = vmatprep.mubr.f32.mxu0 0.0
        %2973 = vmatmul.mubr.f32.gmra.mrb[0].mxu0 %v2733
        %v2974 = vpop.f32.mrb[0].mxu0
        %v2975 = vadd.f32 0.0, %v2974
        %v2976 = vpop.f32.mrb[0].mxu0
        %2977 = vdwg.mxu0
        %v2978 = vadd.f32 %v2697, %v2820
        %v2979 = vadd.f32 %v2698, %v2825
        %v2980 = vadd.f32 %v2699, %v2830
        %v2981 = vadd.f32 %v2700, %v2835
        %v2982 = vadd.f32 %v2701, %v2840
        %v2983 = vadd.f32 %v2702, %v2845
        %v2984 = vadd.f32 %v2703, %v2850
        %v2985 = vadd.f32 %v2704, %v2855
        %v2986 = vadd.f32 %v2705, %v2860
        %v2987 = vadd.f32 %v2706, %v2865
        %v2988 = vadd.f32 %v2707, %v2870
        %v2989 = vadd.f32 %v2708, %v2875
        %v2990 = vadd.f32 %v2709, %v2880
        %v2991 = vadd.f32 %v2710, %v2885
        %v2992 = vadd.f32 %v2711, %v2890
        %v2993 = vadd.f32 %v2712, %v2895
        %v2994 = vadd.f32 %v2713, %v2900
        %v2995 = vadd.f32 %v2714, %v2905
        %v2996 = vadd.f32 %v2715, %v2910
        %v2997 = vadd.f32 %v2716, %v2915
        %v2998 = vadd.f32 %v2717, %v2920
        %v2999 = vadd.f32 %v2718, %v2925
        %v3000 = vadd.f32 %v2719, %v2930
        %v3001 = vadd.f32 %v2720, %v2935
        %v3002 = vadd.f32 %v2721, %v2940
        %v3003 = vadd.f32 %v2722, %v2945
        %v3004 = vadd.f32 %v2723, %v2950
        %v3005 = vadd.f32 %v2724, %v2955
        %v3006 = vadd.f32 %v2725, %v2960
        %v3007 = vadd.f32 %v2726, %v2965
        %v3008 = vadd.f32 %v2727, %v2970
        %v3009 = vadd.f32 %v2728, %v2975
        %3010 = vst [vmem:[%s234] sm:$0xff] %v2978
        %3011 = vst [vmem:[%s234 + $0x8] sm:$0xff] %v2979
        %3012 = vst [vmem:[%s234 + $0x10] sm:$0xff] %v2980
        %3013 = vst [vmem:[%s234 + $0x18] sm:$0xff] %v2981
        %3014 = vst [vmem:[%s234 + $0x20] sm:$0xff] %v2982
        %3015 = vst [vmem:[%s234 + $0x28] sm:$0xff] %v2983
        %3016 = vst [vmem:[%s234 + $0x30] sm:$0xff] %v2984
        %3017 = vst [vmem:[%s234 + $0x38] sm:$0xff] %v2985
        %3018 = vst [vmem:[%s234 + $0x40] sm:$0xff] %v2986
        %3019 = vst [vmem:[%s234 + $0x48] sm:$0xff] %v2987
        %3020 = vst [vmem:[%s234 + $0x50] sm:$0xff] %v2988
        %3021 = vst [vmem:[%s234 + $0x58] sm:$0xff] %v2989
        %3022 = vst [vmem:[%s234 + $0x60] sm:$0xff] %v2990
        %3023 = vst [vmem:[%s234 + $0x68] sm:$0xff] %v2991
        %3024 = vst [vmem:[%s234 + $0x70] sm:$0xff] %v2992
        %3025 = vst [vmem:[%s234 + $0x78] sm:$0xff] %v2993
        %3026 = vst [vmem:[%s234 + $0x80] sm:$0xff] %v2994
        %3027 = vst [vmem:[%s234 + $0x88] sm:$0xff] %v2995
        %3028 = vst [vmem:[%s234 + $0x90] sm:$0xff] %v2996
        %3029 = vst [vmem:[%s234 + $0x98] sm:$0xff] %v2997
        %3030 = vst [vmem:[%s234 + $0xa0] sm:$0xff] %v2998
        %3031 = vst [vmem:[%s234 + $0xa8] sm:$0xff] %v2999
        %3032 = vst [vmem:[%s234 + $0xb0] sm:$0xff] %v3000
        %3033 = vst [vmem:[%s234 + $0xb8] sm:$0xff] %v3001
        %3034 = vst [vmem:[%s234 + $0xc0] sm:$0xff] %v3002
        %3035 = vst [vmem:[%s234 + $0xc8] sm:$0xff] %v3003
        %3036 = vst [vmem:[%s234 + $0xd0] sm:$0xff] %v3004
        %3037 = vst [vmem:[%s234 + $0xd8] sm:$0xff] %v3005
        %3038 = vst [vmem:[%s234 + $0xe0] sm:$0xff] %v3006
        %3039 = vst [vmem:[%s234 + $0xe8] sm:$0xff] %v3007
        %3040 = vst [vmem:[%s234 + $0xf0] sm:$0xff] %v3008
        %3041 = vst [vmem:[%s234 + $0xf8] sm:$0xff] %v3009
        %v3042 = vadd.f32 %v2978, %v2979
        %v3043 = vadd.f32 %v3042, %v2980
        %v3044 = vadd.f32 %v3043, %v2981
        %v3045 = vadd.f32 %v3044, %v2982
        %v3046 = vadd.f32 %v3045, %v2983
        %v3047 = vadd.f32 %v3046, %v2984
        %v3048 = vadd.f32 %v3047, %v2985
        %v3049 = vadd.f32 %v3048, %v2986
        %v3050 = vadd.f32 %v3049, %v2987
        %v3051 = vadd.f32 %v3050, %v2988
        %v3052 = vadd.f32 %v3051, %v2989
        %v3053 = vadd.f32 %v3052, %v2990
        %v3054 = vadd.f32 %v3053, %v2991
        %v3055 = vadd.f32 %v3054, %v2992
        %v3056 = vadd.f32 %v3055, %v2993
        %v3057 = vadd.f32 %v3056, %v2994
        %v3058 = vadd.f32 %v3057, %v2995
        %v3059 = vadd.f32 %v3058, %v2996
        %v3060 = vadd.f32 %v3059, %v2997
        %v3061 = vadd.f32 %v3060, %v2998
        %v3062 = vadd.f32 %v3061, %v2999
        %v3063 = vadd.f32 %v3062, %v3000
        %v3064 = vadd.f32 %v3063, %v3001
        %v3065 = vadd.f32 %v3064, %v3002
        %v3066 = vadd.f32 %v3065, %v3003
        %v3067 = vadd.f32 %v3066, %v3004
        %v3068 = vadd.f32 %v3067, %v3005
        %v3069 = vadd.f32 %v3068, %v3006
        %v3070 = vadd.f32 %v3069, %v3007
        %v3071 = vadd.f32 %v3070, %v3008
        %v3072 = vadd.f32 %v3071, %v3009
        %v3073 = vrot.slane %v3072, 4
        %v3074 = vadd.f32 %v3072, %v3073
        %v3075 = vrot.slane %v3074, 2
        %v3076 = vadd.f32 %v3074, %v3075
        %v3077 = vrot.slane %v3076, 1
        %v3078 = vadd.f32 %v3076, %v3077
        %3079 = vst [vmem:[%s240] sm:$0x1] %v3078
        %v3080 = vmul.f32 %v2978, %v2978
        %v3081 = vmul.f32 %v2979, %v2979
        %v3082 = vmul.f32 %v2980, %v2980
        %v3083 = vmul.f32 %v2981, %v2981
        %v3084 = vmul.f32 %v2982, %v2982
        %v3085 = vmul.f32 %v2983, %v2983
        %v3086 = vmul.f32 %v2984, %v2984
        %v3087 = vmul.f32 %v2985, %v2985
        %v3088 = vmul.f32 %v2986, %v2986
        %v3089 = vmul.f32 %v2987, %v2987
        %v3090 = vmul.f32 %v2988, %v2988
        %v3091 = vmul.f32 %v2989, %v2989
        %v3092 = vmul.f32 %v2990, %v2990
        %v3093 = vmul.f32 %v2991, %v2991
        %v3094 = vmul.f32 %v2992, %v2992
        %v3095 = vmul.f32 %v2993, %v2993
        %v3096 = vmul.f32 %v2994, %v2994
        %v3097 = vmul.f32 %v2995, %v2995
        %v3098 = vmul.f32 %v2996, %v2996
        %v3099 = vmul.f32 %v2997, %v2997
        %v3100 = vmul.f32 %v2998, %v2998
        %v3101 = vmul.f32 %v2999, %v2999
        %v3102 = vmul.f32 %v3000, %v3000
        %v3103 = vmul.f32 %v3001, %v3001
        %v3104 = vmul.f32 %v3002, %v3002
        %v3105 = vmul.f32 %v3003, %v3003
        %v3106 = vmul.f32 %v3004, %v3004
        %v3107 = vmul.f32 %v3005, %v3005
        %v3108 = vmul.f32 %v3006, %v3006
        %v3109 = vmul.f32 %v3007, %v3007
        %v3110 = vmul.f32 %v3008, %v3008
        %v3111 = vmul.f32 %v3009, %v3009
        %v3112 = vadd.f32 %v3080, %v3081
        %v3113 = vadd.f32 %v3112, %v3082
        %v3114 = vadd.f32 %v3113, %v3083
        %v3115 = vadd.f32 %v3114, %v3084
        %v3116 = vadd.f32 %v3115, %v3085
        %v3117 = vadd.f32 %v3116, %v3086
        %v3118 = vadd.f32 %v3117, %v3087
        %v3119 = vadd.f32 %v3118, %v3088
        %v3120 = vadd.f32 %v3119, %v3089
        %v3121 = vadd.f32 %v3120, %v3090
        %v3122 = vadd.f32 %v3121, %v3091
        %v3123 = vadd.f32 %v3122, %v3092
        %v3124 = vadd.f32 %v3123, %v3093
        %v3125 = vadd.f32 %v3124, %v3094
        %v3126 = vadd.f32 %v3125, %v3095
        %v3127 = vadd.f32 %v3126, %v3096
        %v3128 = vadd.f32 %v3127, %v3097
        %v3129 = vadd.f32 %v3128, %v3098
        %v3130 = vadd.f32 %v3129, %v3099
        %v3131 = vadd.f32 %v3130, %v3100
        %v3132 = vadd.f32 %v3131, %v3101
        %v3133 = vadd.f32 %v3132, %v3102
        %v3134 = vadd.f32 %v3133, %v3103
        %v3135 = vadd.f32 %v3134, %v3104
        %v3136 = vadd.f32 %v3135, %v3105
        %v3137 = vadd.f32 %v3136, %v3106
        %v3138 = vadd.f32 %v3137, %v3107
        %v3139 = vadd.f32 %v3138, %v3108
        %v3140 = vadd.f32 %v3139, %v3109
        %v3141 = vadd.f32 %v3140, %v3110
        %v3142 = vadd.f32 %v3141, %v3111
        %v3143 = vrot.slane %v3142, 4
        %v3144 = vadd.f32 %v3142, %v3143
        %v3145 = vrot.slane %v3144, 2
        %v3146 = vadd.f32 %v3144, %v3145
        %v3147 = vrot.slane %v3146, 1
        %v3148 = vadd.f32 %v3146, %v3147
        %3149 = vst [vmem:[%s246] sm:$0x1] %v3148
        %s3150 = sand.u32 %s81, 1
        %s3151 = scalar_lea.sflag [#allocation4], %s3150
        %s3152 = sand.u32 %s81, 1
        %s3153 = smul.addr %s3152, 256
        %s3154 = scalar_lea.vmem [#allocation7], %s3153
        %s3155 = sand.u32 %s26, 1
        %s3156 = scalar_lea.sflag [#allocation9], %s3155
        %s3157 = sand.u32 %s107, 1
        %s3158 = scalar_lea.vmem [#allocation8], %s3157
        %s3159 = sand.u32 %s26, 1
        %s3160 = scalar_lea.sflag [#allocation9], %s3159
        %s3161 = sand.u32 %s133, 1
        %s3162 = scalar_lea.vmem [#allocation10], %s3161
        // Predicated region
        $region37: #{double_conv_forward.3} parent=27 // pred_check
          %p3163 = pneg %p91
        $region38: #{double_conv_forward.3} parent=27 // pred_check_branch
          %3165 = sbr.rel (%p3163) target = $region40
        $region39: #{double_conv_forward.3} parent=27 // pred_region
          %s3167 = ssub.s32 4096, 4096
          %3168 = vsyncadd %s3151, %s3167
          %s3169 = smul.addr %s26, 32
          %s3170 = smul.addr %s3169, 128
          %s3171 = scalar_lea.hbm %s2, %s3170
          %s3172 = sshll.u32 %s3154, 4
          %s3173 = int_to_ptr.vmem [resolvable:$true] %s3172
          %3178 = dma.vmem_to_hbm [thread:$0]  %s3173, 4096, %s3171, %s3151, 128, 128, 8
        $region40: #{double_conv_forward.3} parent=27 // pred_fallthru
          _
        // Predicated region
        $region41: #{double_conv_forward.3} parent=27 // pred_check
          %p3179 = pneg %p117
        $region42: #{double_conv_forward.3} parent=27 // pred_check_branch
          %3181 = sbr.rel (%p3179) target = $region44
        $region43: #{double_conv_forward.3} parent=27 // pred_region
          %s3183 = ssub.s32 16, 16
          %3184 = vsyncadd %s3156, %s3183
          %s3185 = smul.addr %s26, 16
          %s3186 = scalar_lea.hbm %s3, %s3185
          %s3188 = sshll.u32 %s3158, 4
          %s3189 = int_to_ptr.vmem [resolvable:$true] %s3188
          %3191 = dma.vmem_to_hbm [thread:$0]  %s3189, 16, %s3186, %s3156
        $region44: #{double_conv_forward.3} parent=27 // pred_fallthru
          _
        // Predicated region
        $region45: #{double_conv_forward.3} parent=27 // pred_check
          %p3192 = pneg %p143
        $region46: #{double_conv_forward.3} parent=27 // pred_check_branch
          %3194 = sbr.rel (%p3192) target = $region48
        $region47: #{double_conv_forward.3} parent=27 // pred_region
          %s3196 = ssub.s32 16, 16
          %3197 = vsyncadd %s3160, %s3196
          %s3198 = smul.addr %s26, 16
          %s3199 = scalar_lea.hbm %s4, %s3198
          %s3201 = sshll.u32 %s3162, 4
          %s3202 = int_to_ptr.vmem [resolvable:$true] %s3201
          %3204 = dma.vmem_to_hbm [thread:$0]  %s3202, 16, %s3199, %s3160
        $region48: #{double_conv_forward.3} parent=27 // pred_fallthru
          _
      $region28: #{double_conv_forward.3} parent=5 // pred_fallthru
        _
      %p3205 = scmp.le.s32.totalorder 2, %s21
      // Predicated region
      $region49: #{double_conv_forward.3} parent=5 // pred_check
        %p3206 = pneg %p3205
      $region50: #{double_conv_forward.3} parent=5 // pred_check_branch
        %3208 = sbr.rel (%p3206) target = $region52
      $region51: #{double_conv_forward.3} parent=5 // pred_region
        %s3209 = ssub.s32 %s21, 2
        // Predicated region
        $region53: #{double_conv_forward.3} parent=51 // pred_check
          %p3210 = pneg %p97
        $region54: #{double_conv_forward.3} parent=51 // pred_check_branch
          %3212 = sbr.rel (%p3210) target = $region56
        $region55: #{double_conv_forward.3} parent=51 // pred_region
          %s3213 = sand.u32 %s82, 1
          %s3214 = scalar_lea.sflag [#allocation4], %s3213
          %s3215 = sand.u32 %s82, 1
          %s3216 = smul.addr %s3215, 256
          %s3217 = scalar_lea.vmem [#allocation7], %s3216
          %3218 = dma.done %s3214, 4096
        $region56: #{double_conv_forward.3} parent=51 // pred_fallthru
          _
        // Predicated region
        $region57: #{double_conv_forward.3} parent=51 // pred_check
          %p3219 = pneg %p123
        $region58: #{double_conv_forward.3} parent=51 // pred_check_branch
          %3221 = sbr.rel (%p3219) target = $region60
        $region59: #{double_conv_forward.3} parent=51 // pred_region
          %s3222 = sand.u32 %s27, 1
          %s3223 = scalar_lea.sflag [#allocation9], %s3222
          %s3224 = sand.u32 %s108, 1
          %s3225 = scalar_lea.vmem [#allocation8], %s3224
          %3226 = dma.done %s3223, 16
        $region60: #{double_conv_forward.3} parent=51 // pred_fallthru
          _
        // Predicated region
        $region61: #{double_conv_forward.3} parent=51 // pred_check
          %p3227 = pneg %p149
        $region62: #{double_conv_forward.3} parent=51 // pred_check_branch
          %3229 = sbr.rel (%p3227) target = $region64
        $region63: #{double_conv_forward.3} parent=51 // pred_region
          %s3230 = sand.u32 %s27, 1
          %s3231 = scalar_lea.sflag [#allocation9], %s3230
          %s3232 = sand.u32 %s134, 1
          %s3233 = scalar_lea.vmem [#allocation10], %s3232
          %3234 = dma.done %s3231, 16
        $region64: #{double_conv_forward.3} parent=51 // pred_fallthru
          _
      $region52: #{double_conv_forward.3} parent=5 // pred_fallthru
        _
    $region6: #{double_conv_forward.3} parent=1 // loop_footer
      %s25 = sadd.s32 1, %s21
    $region7: #{double_conv_forward.3} parent=1 // loop_footer_branch
      %20 = sbr.rel target = $region3
    $region8: #{double_conv_forward.3} parent=1 // loop_exit
      _
    %3235 = vsyncpa [#allocation3], 1
    %s3236 = scalar_lea.sflag [#allocation3], 1
    %3237 = vsyncpa %s3236, 1
    %3238 = vsyncpa [#allocation6], 1
    %3239 = vsyncpa [#allocation4], 1
    %s3240 = scalar_lea.sflag [#allocation4], 1
    %3241 = vsyncpa %s3240, 1
    %3242 = vsyncpa [#allocation9], 1
    %s3243 = scalar_lea.sflag [#allocation9], 1
    %3244 = vsyncpa %s3243, 1

// kernel: double_conv_forward.4
$region0: #{double_conv_forward.4}
  #allocation0 [shape = 'u32[]', space=smem, size = 0x4, offset = 0x4, fixed_abs, tag = 'smem constant byte address 0x4 - core index']
  #allocation1 [shape = 'u32[144,128]{1,0:T(1,128)}', space=vmem, size = 0x12000, scoped, tag = 'internal scratch']
  #allocation2 [shape = 'f32[18,18,128]{2,1,0:T(8,128)}', space=vmem, size = 0x36000, scoped, tag = 'scratch operand']
  %s0 = inlined_call_operand.hbm [shape: f32[1,128], index: 0, kind: input, shape index: {}]
  %s1 = inlined_call_operand.hbm [shape: f32[1,128], index: 1, kind: input, shape index: {}]
  %s2 = inlined_call_operand.hbm [shape: f32[2,256,128], index: 2, kind: input, shape index: {}]
  %s3 = inlined_call_operand.hbm [shape: f32[9,128,128], index: 3, kind: input, shape index: {}]
  %s4 = inlined_call_operand.hbm [shape: f32[2,256,128], index: 4, kind: output, shape index: {0}]
  %s5 = inlined_call_operand.hbm [shape: f32[2,1,128], index: 5, kind: output, shape index: {1}]
  %s6 = inlined_call_operand.hbm [shape: f32[2,1,128], index: 6, kind: output, shape index: {2}]
  %7 = xla_tuple %s4, %s5, %s6
  %s8 = sld [smem:[#allocation0]]
  $region81: #{double_conv_forward.4} parent=0
    _
  %s10 = ssub.s32 1, %s8
  %s11 = scalar_select 0, %s10, %s8
  $region1: #{double_conv_forward.4} parent=0
    #allocation3 [shape = 'u8[512]{0}', space=vmem, size = 0x400, scoped, tag = 'input window, operand 0, single buffered']
    #allocation4 [shape = 's32[2]{0}', space=sflag, size = 0x8, scoped, tag = 'scoped memory for double_conv_forward.4']
    #allocation5 [shape = 's32[2]{0}', space=sflag, size = 0x8, scoped, tag = 'scoped memory for double_conv_forward.4']
    #allocation6 [shape = 'u8[512]{0}', space=vmem, size = 0x400, scoped, tag = 'input window, operand 1, single buffered']
    #allocation7 [shape = 's32[1]{0}', space=sflag, size = 0x4, scoped, tag = 'scoped memory for double_conv_forward.4']
    #allocation8 [shape = 'u8[262144]{0}', space=vmem, size = 0x40000, scoped, tag = 'input window, operand 2']
    #allocation9 [shape = 'u8[589824]{0}', space=vmem, size = 0x90000, scoped, tag = 'input window, operand 3, single buffered']
    #allocation10 [shape = 'u8[262144]{0}', space=vmem, size = 0x40000, scoped, tag = 'output window, operand 0']
    #allocation11 [shape = 'u8[1024]{0}', space=vmem, size = 0x400, scoped, tag = 'output window, operand 1']
    #allocation12 [shape = 's32[2]{0}', space=sflag, size = 0x8, scoped, tag = 'scoped memory for double_conv_forward.4']
    #allocation13 [shape = 'u8[1024]{0}', space=vmem, size = 0x400, scoped, tag = 'output window, operand 2']
    %12 = vsyncpa [#allocation4], 0
    %13 = vsyncpa [#allocation7], 0
    %14 = vsyncpa [#allocation5], 0
    %s15 = scalar_lea.sflag [#allocation5], 1
    %16 = vsyncpa %s15, 0
    %17 = vsyncpa [#allocation12], 0
    %s18 = scalar_lea.sflag [#allocation12], 1
    %19 = vsyncpa %s18, 0
    loop: start=0, step=1, limit=4
    $region2: #{double_conv_forward.4} parent=1 // loop_pre_header
      _
    $region3: #{double_conv_forward.4} parent=1 // loop_header
      %s21 = sphi 0, %s25
      %p22 = scmp.ge.s32.totalorder %s21, 4
      %s29 = sphi 0, %s29
      %s31 = sphi 0, %s29
      %s32 = sphi 0, %s31
      %s46 = sphi 0, %s32
      %s50 = sphi 0, %s50
      %s52 = sphi 0, %s50
      %s53 = sphi 0, %s52
      %s67 = sphi 0, %s53
      %s73 = sphi 0, %s75
      %s76 = sphi 0, %s73
      %s77 = sphi 0, %s76
      %s93 = sphi 0, %s77
      %s97 = sphi 0, %s97
      %s99 = sphi 0, %s97
      %s100 = sphi 0, %s99
      %s114 = sphi 0, %s100
      %s120 = sphi 0, %s122
      %s123 = sphi 0, %s120
      %s124 = sphi 0, %s123
      %s140 = sphi 0, %s124
      %s146 = sphi 0, %s148
      %s149 = sphi 0, %s146
      %s150 = sphi 0, %s149
      %s166 = sphi 0, %s150
      %s172 = sphi 0, %s174
      %s175 = sphi 0, %s172
      %s176 = sphi 0, %s175
      %s192 = sphi 0, %s176
    $region4: #{double_conv_forward.4} parent=1 // loop_header_branch
      %24 = sbr.rel (%p22) target = $region8
    $region5: #{double_conv_forward.4} parent=1 // loop_body
      %s26 = ssub.s32 %s21, 1
      %s27 = ssub.s32 %s21, 2
      %s28 = sadd.s32 %s21, 1
      %s30 = sadd.s32 %s29, 1
      %p33 = scmp.eq.s32.totalorder %s21, 1
      %p34 = scmp.ne.s32.totalorder %s29, %s31
      %p35 = scmp.eq.s32.totalorder %s21, 0
      %p36 = por %p34, %p35
      %p37 = scmp.ne.s32.totalorder %s29, %s31
      %p38 = scmp.eq.s32.totalorder %s26, 1
      %p39 = por %p37, %p38
      %p40 = scmp.ne.s32.totalorder %s31, %s32
      %p41 = scmp.eq.s32.totalorder %s26, 0
      %p42 = por %p40, %p41
      %p43 = scmp.ne.s32.totalorder %s31, %s32
      %p44 = scmp.eq.s32.totalorder %s27, 1
      %p45 = por %p43, %p44
      %p47 = scmp.ne.s32.totalorder %s32, %s46
      %p48 = scmp.eq.s32.totalorder %s27, 0
      %p49 = por %p47, %p48
      %s51 = sadd.s32 %s50, 1
      %p54 = scmp.eq.s32.totalorder %s21, 1
      %p55 = scmp.ne.s32.totalorder %s50, %s52
      %p56 = scmp.eq.s32.totalorder %s21, 0
      %p57 = por %p55, %p56
      %p58 = scmp.ne.s32.totalorder %s50, %s52
      %p59 = scmp.eq.s32.totalorder %s26, 1
      %p60 = por %p58, %p59
      %p61 = scmp.ne.s32.totalorder %s52, %s53
      %p62 = scmp.eq.s32.totalorder %s26, 0
      %p63 = por %p61, %p62
      %p64 = scmp.ne.s32.totalorder %s52, %s53
      %p65 = scmp.eq.s32.totalorder %s27, 1
      %p66 = por %p64, %p65
      %p68 = scmp.ne.s32.totalorder %s53, %s67
      %p69 = scmp.eq.s32.totalorder %s27, 0
      %p70 = por %p68, %p69
      %s71 = ssub.s32 %s21, %s28
      %p72 = scmp.eq.s32.totalorder %s71, 0
      %s74 = sadd.s32 %s73, 1
      %s75 = scalar_select %p72, %s73, %s74
      %p78 = pneg %p72
      %p79 = scmp.eq.s32.totalorder %s21, 1
      %p80 = por %p78, %p79
      %p81 = scmp.ne.s32.totalorder %s73, %s76
      %p82 = scmp.eq.s32.totalorder %s21, 0
      %p83 = por %p81, %p82
      %p84 = scmp.ne.s32.totalorder %s73, %s76
      %p85 = scmp.eq.s32.totalorder %s26, 1
      %p86 = por %p84, %p85
      %p87 = scmp.ne.s32.totalorder %s76, %s77
      %p88 = scmp.eq.s32.totalorder %s26, 0
      %p89 = por %p87, %p88
      %p90 = scmp.ne.s32.totalorder %s76, %s77
      %p91 = scmp.eq.s32.totalorder %s27, 1
      %p92 = por %p90, %p91
      %p94 = scmp.ne.s32.totalorder %s77, %s93
      %p95 = scmp.eq.s32.totalorder %s27, 0
      %p96 = por %p94, %p95
      %s98 = sadd.s32 %s97, 1
      %p101 = scmp.eq.s32.totalorder %s21, 1
      %p102 = scmp.ne.s32.totalorder %s97, %s99
      %p103 = scmp.eq.s32.totalorder %s21, 0
      %p104 = por %p102, %p103
      %p105 = scmp.ne.s32.totalorder %s97, %s99
      %p106 = scmp.eq.s32.totalorder %s26, 1
      %p107 = por %p105, %p106
      %p108 = scmp.ne.s32.totalorder %s99, %s100
      %p109 = scmp.eq.s32.totalorder %s26, 0
      %p110 = por %p108, %p109
      %p111 = scmp.ne.s32.totalorder %s99, %s100
      %p112 = scmp.eq.s32.totalorder %s27, 1
      %p113 = por %p111, %p112
      %p115 = scmp.ne.s32.totalorder %s100, %s114
      %p116 = scmp.eq.s32.totalorder %s27, 0
      %p117 = por %p115, %p116
      %s118 = ssub.s32 %s21, %s28
      %p119 = scmp.eq.s32.totalorder %s118, 0
      %s121 = sadd.s32 %s120, 1
      %s122 = scalar_select %p119, %s120, %s121
      %p125 = pneg %p119
      %p126 = scmp.eq.s32.totalorder %s21, 1
      %p127 = por %p125, %p126
      %p128 = scmp.ne.s32.totalorder %s120, %s123
      %p129 = scmp.eq.s32.totalorder %s21, 0
      %p130 = por %p128, %p129
      %p131 = scmp.ne.s32.totalorder %s120, %s123
      %p132 = scmp.eq.s32.totalorder %s26, 1
      %p133 = por %p131, %p132
      %p134 = scmp.ne.s32.totalorder %s123, %s124
      %p135 = scmp.eq.s32.totalorder %s26, 0
      %p136 = por %p134, %p135
      %p137 = scmp.ne.s32.totalorder %s123, %s124
      %p138 = scmp.eq.s32.totalorder %s27, 1
      %p139 = por %p137, %p138
      %p141 = scmp.ne.s32.totalorder %s124, %s140
      %p142 = scmp.eq.s32.totalorder %s27, 0
      %p143 = por %p141, %p142
      %s144 = ssub.s32 %s21, %s28
      %p145 = scmp.eq.s32.totalorder %s144, 0
      %s147 = sadd.s32 %s146, 1
      %s148 = scalar_select %p145, %s146, %s147
      %p151 = pneg %p145
      %p152 = scmp.eq.s32.totalorder %s21, 1
      %p153 = por %p151, %p152
      %p154 = scmp.ne.s32.totalorder %s146, %s149
      %p155 = scmp.eq.s32.totalorder %s21, 0
      %p156 = por %p154, %p155
      %p157 = scmp.ne.s32.totalorder %s146, %s149
      %p158 = scmp.eq.s32.totalorder %s26, 1
      %p159 = por %p157, %p158
      %p160 = scmp.ne.s32.totalorder %s149, %s150
      %p161 = scmp.eq.s32.totalorder %s26, 0
      %p162 = por %p160, %p161
      %p163 = scmp.ne.s32.totalorder %s149, %s150
      %p164 = scmp.eq.s32.totalorder %s27, 1
      %p165 = por %p163, %p164
      %p167 = scmp.ne.s32.totalorder %s150, %s166
      %p168 = scmp.eq.s32.totalorder %s27, 0
      %p169 = por %p167, %p168
      %s170 = ssub.s32 %s21, %s28
      %p171 = scmp.eq.s32.totalorder %s170, 0
      %s173 = sadd.s32 %s172, 1
      %s174 = scalar_select %p171, %s172, %s173
      %p177 = pneg %p171
      %p178 = scmp.eq.s32.totalorder %s21, 1
      %p179 = por %p177, %p178
      %p180 = scmp.ne.s32.totalorder %s172, %s175
      %p181 = scmp.eq.s32.totalorder %s21, 0
      %p182 = por %p180, %p181
      %p183 = scmp.ne.s32.totalorder %s172, %s175
      %p184 = scmp.eq.s32.totalorder %s26, 1
      %p185 = por %p183, %p184
      %p186 = scmp.ne.s32.totalorder %s175, %s176
      %p187 = scmp.eq.s32.totalorder %s26, 0
      %p188 = por %p186, %p187
      %p189 = scmp.ne.s32.totalorder %s175, %s176
      %p190 = scmp.eq.s32.totalorder %s27, 1
      %p191 = por %p189, %p190
      %p193 = scmp.ne.s32.totalorder %s176, %s192
      %p194 = scmp.eq.s32.totalorder %s27, 0
      %p195 = por %p193, %p194
      %p196 = scmp.le.s32.totalorder 1, %s21
      %p197 = scmp.lt.s32.totalorder %s21, 3
      %p198 = pnand %p196, %p197
      %p199 = pneg %p198
      // Predicated region
      $region9: #{double_conv_forward.4} parent=5 // pred_check
        _
      $region10: #{double_conv_forward.4} parent=5 // pred_check_branch
        %201 = sbr.rel (%p198) target = $region12
      $region11: #{double_conv_forward.4} parent=5 // pred_region
        %s202 = ssub.s32 %s21, 1
        // Predicated region
        $region13: #{double_conv_forward.4} parent=11 // pred_check
          %p203 = pneg %p42
        $region14: #{double_conv_forward.4} parent=11 // pred_check_branch
          %205 = sbr.rel (%p203) target = $region16
        $region15: #{double_conv_forward.4} parent=11 // pred_region
          %s207 = ssub.s32 16, 16
          %208 = vsyncadd [#allocation4], %s207
          %s210 = sshll.u32 [#allocation3], 4
          %s211 = int_to_ptr.vmem [resolvable:$true] %s210
          %213 = dma.hbm_to_vmem [thread:$0]  %s0, 16, %s211, [#allocation4]
        $region16: #{double_conv_forward.4} parent=11 // pred_fallthru
          _
        // Predicated region
        $region17: #{double_conv_forward.4} parent=11 // pred_check
          %p214 = pneg %p63
        $region18: #{double_conv_forward.4} parent=11 // pred_check_branch
          %216 = sbr.rel (%p214) target = $region20
        $region19: #{double_conv_forward.4} parent=11 // pred_region
          %s218 = ssub.s32 16, 16
          %219 = vsyncadd [#allocation7], %s218
          %s221 = sshll.u32 [#allocation6], 4
          %s222 = int_to_ptr.vmem [resolvable:$true] %s221
          %224 = dma.hbm_to_vmem [thread:$0]  %s1, 16, %s222, [#allocation7]
        $region20: #{double_conv_forward.4} parent=11 // pred_fallthru
          _
        // Predicated region
        $region21: #{double_conv_forward.4} parent=11 // pred_check
          %p225 = pneg %p110
        $region22: #{double_conv_forward.4} parent=11 // pred_check_branch
          %227 = sbr.rel (%p225) target = $region24
        $region23: #{double_conv_forward.4} parent=11 // pred_region
          %s229 = ssub.s32 18432, 18432
          %230 = vsyncadd [#allocation7], %s229
          %s231 = sshll.u32 [#allocation9], 4
          %s232 = int_to_ptr.vmem [resolvable:$true] %s231
          %237 = dma.hbm_to_vmem [thread:$0]  %s3, 18432, %s232, [#allocation7], 128, 128, 8
        $region24: #{double_conv_forward.4} parent=11 // pred_fallthru
          _
      $region12: #{double_conv_forward.4} parent=5 // pred_fallthru
        _
      %p238 = scmp.lt.s32.totalorder %s21, 2
      // Predicated region
      $region25: #{double_conv_forward.4} parent=5 // pred_check
        %p239 = pneg %p238
      $region26: #{double_conv_forward.4} parent=5 // pred_check_branch
        %241 = sbr.rel (%p239) target = $region28
      $region27: #{double_conv_forward.4} parent=5 // pred_region
        // Predicated region
        $region29: #{double_conv_forward.4} parent=27 // pred_check
          %p242 = pneg %p83
        $region30: #{double_conv_forward.4} parent=27 // pred_check_branch
          %244 = sbr.rel (%p242) target = $region32
        $region31: #{double_conv_forward.4} parent=27 // pred_region
          %s245 = sand.u32 %s21, 1
          %s246 = scalar_lea.sflag [#allocation4], %s245
          %s247 = sand.u32 %s73, 1
          %s248 = smul.addr %s247, 256
          %s249 = scalar_lea.vmem [#allocation8], %s248
          %s251 = ssub.s32 4096, 4096
          %252 = vsyncadd %s246, %s251
          %s253 = smul.addr %s21, 32
          %s254 = smul.addr %s253, 128
          %s255 = scalar_lea.hbm %s2, %s254
          %s256 = sshll.u32 %s249, 4
          %s257 = int_to_ptr.vmem [resolvable:$true] %s256
          %262 = dma.hbm_to_vmem [thread:$0]  %s255, 4096, %s257, %s246, 128, 128, 8
        $region32: #{double_conv_forward.4} parent=27 // pred_fallthru
          _
      $region28: #{double_conv_forward.4} parent=5 // pred_fallthru
        _
      %p263 = scmp.le.s32.totalorder 1, %s21
      %p264 = scmp.lt.s32.totalorder %s21, 3
      %p265 = pnand %p263, %p264
      %p266 = pneg %p265
      // Predicated region
      $region33: #{double_conv_forward.4} parent=5 // pred_check
        _
      $region34: #{double_conv_forward.4} parent=5 // pred_check_branch
        %268 = sbr.rel (%p265) target = $region36
      $region35: #{double_conv_forward.4} parent=5 // pred_region
        %s269 = ssub.s32 %s21, 1
        // Predicated region
        $region37: #{double_conv_forward.4} parent=35 // pred_check
          %p270 = pneg %p42
        $region38: #{double_conv_forward.4} parent=35 // pred_check_branch
          %272 = sbr.rel (%p270) target = $region40
        $region39: #{double_conv_forward.4} parent=35 // pred_region
          %273 = dma.done [#allocation4], 16
        $region40: #{double_conv_forward.4} parent=35 // pred_fallthru
          _
        // Predicated region
        $region41: #{double_conv_forward.4} parent=35 // pred_check
          %p274 = pneg %p63
        $region42: #{double_conv_forward.4} parent=35 // pred_check_branch
          %276 = sbr.rel (%p274) target = $region44
        $region43: #{double_conv_forward.4} parent=35 // pred_region
          %277 = dma.done [#allocation7], 16
        $region44: #{double_conv_forward.4} parent=35 // pred_fallthru
          _
        %s278 = sand.u32 %s26, 1
        %s279 = scalar_lea.sflag [#allocation4], %s278
        %s280 = sand.u32 %s76, 1
        %s281 = smul.addr %s280, 256
        %s282 = scalar_lea.vmem [#allocation8], %s281
        // Predicated region
        $region45: #{double_conv_forward.4} parent=35 // pred_check
          %p283 = pneg %p89
        $region46: #{double_conv_forward.4} parent=35 // pred_check_branch
          %285 = sbr.rel (%p283) target = $region48
        $region47: #{double_conv_forward.4} parent=35 // pred_region
          %286 = dma.done %s279, 4096
        $region48: #{double_conv_forward.4} parent=35 // pred_fallthru
          _
        // Predicated region
        $region49: #{double_conv_forward.4} parent=35 // pred_check
          %p287 = pneg %p110
        $region50: #{double_conv_forward.4} parent=35 // pred_check_branch
          %289 = sbr.rel (%p287) target = $region52
        $region51: #{double_conv_forward.4} parent=35 // pred_region
          %290 = dma.done [#allocation7], 18432
        $region52: #{double_conv_forward.4} parent=35 // pred_fallthru
          _
        %p291 = pneg %p42
        %p292 = pneg %p39
        %p293 = pneg %p63
        %p294 = pneg %p60
        %s295 = sand.u32 %s26, 1
        %s296 = scalar_lea.sflag [#allocation4], %s295
        %s297 = sand.u32 %s76, 1
        %s298 = smul.addr %s297, 256
        %s299 = scalar_lea.vmem [#allocation8], %s298
        %p300 = pneg %p89
        %p301 = pneg %p86
        %p302 = pneg %p110
        %p303 = pneg %p107
        %p304 = pneg %p136
        %p305 = pneg %p133
        %s306 = sand.u32 %s123, 1
        %s307 = scalar_lea.sflag [#allocation5], %s306
        %s308 = sand.u32 %s123, 1
        %s309 = smul.addr %s308, 256
        %s310 = scalar_lea.vmem [#allocation10], %s309
        %p311 = pneg %p162
        %p312 = pneg %p159
        %s313 = sand.u32 %s26, 1
        %s314 = scalar_lea.sflag [#allocation12], %s313
        %s315 = sand.u32 %s149, 1
        %s316 = scalar_lea.vmem [#allocation11], %s315
        %p317 = pneg %p188
        %p318 = pneg %p185
        %s319 = sand.u32 %s26, 1
        %s320 = scalar_lea.sflag [#allocation12], %s319
        %s321 = sand.u32 %s175, 1
        %s322 = scalar_lea.vmem [#allocation13], %s321
        %v323 = vld [vmem:[%s282] sm:$0xff]
        %v324 = vld [vmem:[%s282 + $0x8] sm:$0xff]
        %v325 = vld [vmem:[%s282 + $0x10] sm:$0xff]
        %v326 = vld [vmem:[%s282 + $0x18] sm:$0xff]
        %v327 = vld [vmem:[%s282 + $0x20] sm:$0xff]
        %v328 = vld [vmem:[%s282 + $0x28] sm:$0xff]
        %v329 = vld [vmem:[%s282 + $0x30] sm:$0xff]
        %v330 = vld [vmem:[%s282 + $0x38] sm:$0xff]
        %v331 = vld [vmem:[%s282 + $0x40] sm:$0xff]
        %v332 = vld [vmem:[%s282 + $0x48] sm:$0xff]
        %v333 = vld [vmem:[%s282 + $0x50] sm:$0xff]
        %v334 = vld [vmem:[%s282 + $0x58] sm:$0xff]
        %v335 = vld [vmem:[%s282 + $0x60] sm:$0xff]
        %v336 = vld [vmem:[%s282 + $0x68] sm:$0xff]
        %v337 = vld [vmem:[%s282 + $0x70] sm:$0xff]
        %v338 = vld [vmem:[%s282 + $0x78] sm:$0xff]
        %v339 = vld [vmem:[%s282 + $0x80] sm:$0xff]
        %v340 = vld [vmem:[%s282 + $0x88] sm:$0xff]
        %v341 = vld [vmem:[%s282 + $0x90] sm:$0xff]
        %v342 = vld [vmem:[%s282 + $0x98] sm:$0xff]
        %v343 = vld [vmem:[%s282 + $0xa0] sm:$0xff]
        %v344 = vld [vmem:[%s282 + $0xa8] sm:$0xff]
        %v345 = vld [vmem:[%s282 + $0xb0] sm:$0xff]
        %v346 = vld [vmem:[%s282 + $0xb8] sm:$0xff]
        %v347 = vld [vmem:[%s282 + $0xc0] sm:$0xff]
        %v348 = vld [vmem:[%s282 + $0xc8] sm:$0xff]
        %v349 = vld [vmem:[%s282 + $0xd0] sm:$0xff]
        %v350 = vld [vmem:[%s282 + $0xd8] sm:$0xff]
        %v351 = vld [vmem:[%s282 + $0xe0] sm:$0xff]
        %v352 = vld [vmem:[%s282 + $0xe8] sm:$0xff]
        %v353 = vld [vmem:[%s282 + $0xf0] sm:$0xff]
        %v354 = vld [vmem:[%s282 + $0xf8] sm:$0xff]
        %v355 = vld [vmem:[#allocation3] sm:$0x1]
        %v357 = vlaneseq
        %v358 = vshrl.u32 %v357, 7
        %v359 = vsub.s32 0, %v358
        %v360 = vrot.slane %v355, %v359
        %v362 = vmul.f32 %v323, %v360
        %v363 = vmul.f32 %v324, %v360
        %v364 = vmul.f32 %v325, %v360
        %v365 = vmul.f32 %v326, %v360
        %v366 = vmul.f32 %v327, %v360
        %v367 = vmul.f32 %v328, %v360
        %v368 = vmul.f32 %v329, %v360
        %v369 = vmul.f32 %v330, %v360
        %v370 = vmul.f32 %v331, %v360
        %v371 = vmul.f32 %v332, %v360
        %v372 = vmul.f32 %v333, %v360
        %v373 = vmul.f32 %v334, %v360
        %v374 = vmul.f32 %v335, %v360
        %v375 = vmul.f32 %v336, %v360
        %v376 = vmul.f32 %v337, %v360
        %v377 = vmul.f32 %v338, %v360
        %v378 = vmul.f32 %v339, %v360
        %v379 = vmul.f32 %v340, %v360
        %v380 = vmul.f32 %v341, %v360
        %v381 = vmul.f32 %v342, %v360
        %v382 = vmul.f32 %v343, %v360
        %v383 = vmul.f32 %v344, %v360
        %v384 = vmul.f32 %v345, %v360
        %v385 = vmul.f32 %v346, %v360
        %v386 = vmul.f32 %v347, %v360
        %v387 = vmul.f32 %v348, %v360
        %v388 = vmul.f32 %v349, %v360
        %v389 = vmul.f32 %v350, %v360
        %v390 = vmul.f32 %v351, %v360
        %v391 = vmul.f32 %v352, %v360
        %v392 = vmul.f32 %v353, %v360
        %v393 = vmul.f32 %v354, %v360
        %v394 = vld [vmem:[#allocation6] sm:$0x1]
        %v396 = vlaneseq
        %v397 = vshrl.u32 %v396, 7
        %v398 = vsub.s32 0, %v397
        %v399 = vrot.slane %v394, %v398
        %v401 = vadd.f32 %v362, %v399
        %v402 = vadd.f32 %v363, %v399
        %v403 = vadd.f32 %v364, %v399
        %v404 = vadd.f32 %v365, %v399
        %v405 = vadd.f32 %v366, %v399
        %v406 = vadd.f32 %v367, %v399
        %v407 = vadd.f32 %v368, %v399
        %v408 = vadd.f32 %v369, %v399
        %v409 = vadd.f32 %v370, %v399
        %v410 = vadd.f32 %v371, %v399
        %v411 = vadd.f32 %v372, %v399
        %v412 = vadd.f32 %v373, %v399
        %v413 = vadd.f32 %v374, %v399
        %v414 = vadd.f32 %v375, %v399
        %v415 = vadd.f32 %v376, %v399
        %v416 = vadd.f32 %v377, %v399
        %v417 = vadd.f32 %v378, %v399
        %v418 = vadd.f32 %v379, %v399
        %v419 = vadd.f32 %v380, %v399
        %v420 = vadd.f32 %v381, %v399
        %v421 = vadd.f32 %v382, %v399
        %v422 = vadd.f32 %v383, %v399
        %v423 = vadd.f32 %v384, %v399
        %v424 = vadd.f32 %v385, %v399
        %v425 = vadd.f32 %v386, %v399
        %v426 = vadd.f32 %v387, %v399
        %v427 = vadd.f32 %v388, %v399
        %v428 = vadd.f32 %v389, %v399
        %v429 = vadd.f32 %v390, %v399
        %v430 = vadd.f32 %v391, %v399
        %v431 = vadd.f32 %v392, %v399
        %v432 = vadd.f32 %v393, %v399
        %v433 = vmax.f32 %v401, 0.0
        %v434 = vmax.f32 %v402, 0.0
        %v435 = vmax.f32 %v403, 0.0
        %v436 = vmax.f32 %v404, 0.0
        %v437 = vmax.f32 %v405, 0.0
        %v438 = vmax.f32 %v406, 0.0
        %v439 = vmax.f32 %v407, 0.0
        %v440 = vmax.f32 %v408, 0.0
        %v441 = vmax.f32 %v409, 0.0
        %v442 = vmax.f32 %v410, 0.0
        %v443 = vmax.f32 %v411, 0.0
        %v444 = vmax.f32 %v412, 0.0
        %v445 = vmax.f32 %v413, 0.0
        %v446 = vmax.f32 %v414, 0.0
        %v447 = vmax.f32 %v415, 0.0
        %v448 = vmax.f32 %v416, 0.0
        %v449 = vmax.f32 %v417, 0.0
        %v450 = vmax.f32 %v418, 0.0
        %v451 = vmax.f32 %v419, 0.0
        %v452 = vmax.f32 %v420, 0.0
        %v453 = vmax.f32 %v421, 0.0
        %v454 = vmax.f32 %v422, 0.0
        %v455 = vmax.f32 %v423, 0.0
        %v456 = vmax.f32 %v424, 0.0
        %v457 = vmax.f32 %v425, 0.0
        %v458 = vmax.f32 %v426, 0.0
        %v459 = vmax.f32 %v427, 0.0
        %v460 = vmax.f32 %v428, 0.0
        %v461 = vmax.f32 %v429, 0.0
        %v462 = vmax.f32 %v430, 0.0
        %v463 = vmax.f32 %v431, 0.0
        %v464 = vmax.f32 %v432, 0.0
        %465 = vst [vmem:[#allocation2] sm:$0xff] 0.0
        %466 = vst [vmem:[#allocation2 + $0x8] sm:$0xff] 0.0
        %467 = vst [vmem:[#allocation2 + $0x10] sm:$0x3] 0.0
        %468 = vst [vmem:[#allocation2 + $0x18] sm:$0xff] 0.0
        %469 = vst [vmem:[#allocation2 + $0x20] sm:$0xff] 0.0
        %470 = vst [vmem:[#allocation2 + $0x28] sm:$0x3] 0.0
        %471 = vst [vmem:[#allocation2 + $0x30] sm:$0xff] 0.0
        %472 = vst [vmem:[#allocation2 + $0x38] sm:$0xff] 0.0
        %473 = vst [vmem:[#allocation2 + $0x40] sm:$0x3] 0.0
        %474 = vst [vmem:[#allocation2 + $0x48] sm:$0xff] 0.0
        %475 = vst [vmem:[#allocation2 + $0x50] sm:$0xff] 0.0
        %476 = vst [vmem:[#allocation2 + $0x58] sm:$0x3] 0.0
        %477 = vst [vmem:[#allocation2 + $0x60] sm:$0xff] 0.0
        %478 = vst [vmem:[#allocation2 + $0x68] sm:$0xff] 0.0
        %479 = vst [vmem:[#allocation2 + $0x70] sm:$0x3] 0.0
        %480 = vst [vmem:[#allocation2 + $0x78] sm:$0xff] 0.0
        %481 = vst [vmem:[#allocation2 + $0x80] sm:$0xff] 0.0
        %482 = vst [vmem:[#allocation2 + $0x88] sm:$0x3] 0.0
        %483 = vst [vmem:[#allocation2 + $0x90] sm:$0xff] 0.0
        %484 = vst [vmem:[#allocation2 + $0x98] sm:$0xff] 0.0
        %485 = vst [vmem:[#allocation2 + $0xa0] sm:$0x3] 0.0
        %486 = vst [vmem:[#allocation2 + $0xa8] sm:$0xff] 0.0
        %487 = vst [vmem:[#allocation2 + $0xb0] sm:$0xff] 0.0
        %488 = vst [vmem:[#allocation2 + $0xb8] sm:$0x3] 0.0
        %489 = vst [vmem:[#allocation2 + $0xc0] sm:$0xff] 0.0
        %490 = vst [vmem:[#allocation2 + $0xc8] sm:$0xff] 0.0
        %491 = vst [vmem:[#allocation2 + $0xd0] sm:$0x3] 0.0
        %492 = vst [vmem:[#allocation2 + $0xd8] sm:$0xff] 0.0
        %493 = vst [vmem:[#allocation2 + $0xe0] sm:$0xff] 0.0
        %494 = vst [vmem:[#allocation2 + $0xe8] sm:$0x3] 0.0
        %495 = vst [vmem:[#allocation2 + $0xf0] sm:$0xff] 0.0
        %496 = vst [vmem:[#allocation2 + $0xf8] sm:$0xff] 0.0
        %497 = vst [vmem:[#allocation2 + $0x100] sm:$0x3] 0.0
        %498 = vst [vmem:[#allocation2 + $0x108] sm:$0xff] 0.0
        %499 = vst [vmem:[#allocation2 + $0x110] sm:$0xff] 0.0
        %500 = vst [vmem:[#allocation2 + $0x118] sm:$0x3] 0.0
        %501 = vst [vmem:[#allocation2 + $0x120] sm:$0xff] 0.0
        %502 = vst [vmem:[#allocation2 + $0x128] sm:$0xff] 0.0
        %503 = vst [vmem:[#allocation2 + $0x130] sm:$0x3] 0.0
        %504 = vst [vmem:[#allocation2 + $0x138] sm:$0xff] 0.0
        %505 = vst [vmem:[#allocation2 + $0x140] sm:$0xff] 0.0
        %506 = vst [vmem:[#allocation2 + $0x148] sm:$0x3] 0.0
        %507 = vst [vmem:[#allocation2 + $0x150] sm:$0xff] 0.0
        %508 = vst [vmem:[#allocation2 + $0x158] sm:$0xff] 0.0
        %509 = vst [vmem:[#allocation2 + $0x160] sm:$0x3] 0.0
        %510 = vst [vmem:[#allocation2 + $0x168] sm:$0xff] 0.0
        %511 = vst [vmem:[#allocation2 + $0x170] sm:$0xff] 0.0
        %512 = vst [vmem:[#allocation2 + $0x178] sm:$0x3] 0.0
        %513 = vst [vmem:[#allocation2 + $0x180] sm:$0xff] 0.0
        %514 = vst [vmem:[#allocation2 + $0x188] sm:$0xff] 0.0
        %515 = vst [vmem:[#allocation2 + $0x190] sm:$0x3] 0.0
        %516 = vst [vmem:[#allocation2 + $0x198] sm:$0xff] 0.0
        %517 = vst [vmem:[#allocation2 + $0x1a0] sm:$0xff] 0.0
        %518 = vst [vmem:[#allocation2 + $0x1a8] sm:$0x3] 0.0
        %s519 = scalar_lea.vmem [#allocation2], 24
        %520 = vst [vmem:[%s519 + $0x1] sm:$0xff] %v433
        %521 = vst [vmem:[%s519 + $0x9] sm:$0xff] %v434
        %522 = vst [vmem:[%s519 + $0x19] sm:$0xff] %v435
        %523 = vst [vmem:[%s519 + $0x21] sm:$0xff] %v436
        %524 = vst [vmem:[%s519 + $0x31] sm:$0xff] %v437
        %525 = vst [vmem:[%s519 + $0x39] sm:$0xff] %v438
        %526 = vst [vmem:[%s519 + $0x49] sm:$0xff] %v439
        %527 = vst [vmem:[%s519 + $0x51] sm:$0xff] %v440
        %528 = vst [vmem:[%s519 + $0x61] sm:$0xff] %v441
        %529 = vst [vmem:[%s519 + $0x69] sm:$0xff] %v442
        %530 = vst [vmem:[%s519 + $0x79] sm:$0xff] %v443
        %531 = vst [vmem:[%s519 + $0x81] sm:$0xff] %v444
        %532 = vst [vmem:[%s519 + $0x91] sm:$0xff] %v445
        %533 = vst [vmem:[%s519 + $0x99] sm:$0xff] %v446
        %534 = vst [vmem:[%s519 + $0xa9] sm:$0xff] %v447
        %535 = vst [vmem:[%s519 + $0xb1] sm:$0xff] %v448
        %536 = vst [vmem:[%s519 + $0xc1] sm:$0xff] %v449
        %537 = vst [vmem:[%s519 + $0xc9] sm:$0xff] %v450
        %538 = vst [vmem:[%s519 + $0xd9] sm:$0xff] %v451
        %539 = vst [vmem:[%s519 + $0xe1] sm:$0xff] %v452
        %540 = vst [vmem:[%s519 + $0xf1] sm:$0xff] %v453
        %541 = vst [vmem:[%s519 + $0xf9] sm:$0xff] %v454
        %542 = vst [vmem:[%s519 + $0x109] sm:$0xff] %v455
        %543 = vst [vmem:[%s519 + $0x111] sm:$0xff] %v456
        %544 = vst [vmem:[%s519 + $0x121] sm:$0xff] %v457
        %545 = vst [vmem:[%s519 + $0x129] sm:$0xff] %v458
        %546 = vst [vmem:[%s519 + $0x139] sm:$0xff] %v459
        %547 = vst [vmem:[%s519 + $0x141] sm:$0xff] %v460
        %548 = vst [vmem:[%s519 + $0x151] sm:$0xff] %v461
        %549 = vst [vmem:[%s519 + $0x159] sm:$0xff] %v462
        %550 = vst [vmem:[%s519 + $0x169] sm:$0xff] %v463
        %551 = vst [vmem:[%s519 + $0x171] sm:$0xff] %v464
        %v552 = vld [vmem:[#allocation2] sm:$0xff]
        %v553 = vld [vmem:[#allocation2 + $0x8] sm:$0xff]
        %v554 = vld [vmem:[#allocation2 + $0x10] sm:$0x3]
        %v555 = vld [vmem:[#allocation2 + $0x18] sm:$0xff]
        %v556 = vld [vmem:[#allocation2 + $0x20] sm:$0xff]
        %v557 = vld [vmem:[#allocation2 + $0x28] sm:$0x3]
        %v558 = vld [vmem:[#allocation2 + $0x30] sm:$0xff]
        %v559 = vld [vmem:[#allocation2 + $0x38] sm:$0xff]
        %v560 = vld [vmem:[#allocation2 + $0x40] sm:$0x3]
        %v561 = vld [vmem:[#allocation2 + $0x48] sm:$0xff]
        %v562 = vld [vmem:[#allocation2 + $0x50] sm:$0xff]
        %v563 = vld [vmem:[#allocation2 + $0x58] sm:$0x3]
        %v564 = vld [vmem:[#allocation2 + $0x60] sm:$0xff]
        %v565 = vld [vmem:[#allocation2 + $0x68] sm:$0xff]
        %v566 = vld [vmem:[#allocation2 + $0x70] sm:$0x3]
        %v567 = vld [vmem:[#allocation2 + $0x78] sm:$0xff]
        %v568 = vld [vmem:[#allocation2 + $0x80] sm:$0xff]
        %v569 = vld [vmem:[#allocation2 + $0x88] sm:$0x3]
        %v570 = vld [vmem:[#allocation2 + $0x90] sm:$0xff]
        %v571 = vld [vmem:[#allocation2 + $0x98] sm:$0xff]
        %v572 = vld [vmem:[#allocation2 + $0xa0] sm:$0x3]
        %v573 = vld [vmem:[#allocation2 + $0xa8] sm:$0xff]
        %v574 = vld [vmem:[#allocation2 + $0xb0] sm:$0xff]
        %v575 = vld [vmem:[#allocation2 + $0xb8] sm:$0x3]
        %v576 = vld [vmem:[#allocation2 + $0xc0] sm:$0xff]
        %v577 = vld [vmem:[#allocation2 + $0xc8] sm:$0xff]
        %v578 = vld [vmem:[#allocation2 + $0xd0] sm:$0x3]
        %v579 = vld [vmem:[#allocation2 + $0xd8] sm:$0xff]
        %v580 = vld [vmem:[#allocation2 + $0xe0] sm:$0xff]
        %v581 = vld [vmem:[#allocation2 + $0xe8] sm:$0x3]
        %v582 = vld [vmem:[#allocation2 + $0xf0] sm:$0xff]
        %v583 = vld [vmem:[#allocation2 + $0xf8] sm:$0xff]
        %v584 = vld [vmem:[#allocation2 + $0x100] sm:$0x3]
        %v585 = vld [vmem:[#allocation2 + $0x108] sm:$0xff]
        %v586 = vld [vmem:[#allocation2 + $0x110] sm:$0xff]
        %v587 = vld [vmem:[#allocation2 + $0x118] sm:$0x3]
        %v588 = vld [vmem:[#allocation2 + $0x120] sm:$0xff]
        %v589 = vld [vmem:[#allocation2 + $0x128] sm:$0xff]
        %v590 = vld [vmem:[#allocation2 + $0x130] sm:$0x3]
        %v591 = vld [vmem:[#allocation2 + $0x138] sm:$0xff]
        %v592 = vld [vmem:[#allocation2 + $0x140] sm:$0xff]
        %v593 = vld [vmem:[#allocation2 + $0x148] sm:$0x3]
        %v594 = vld [vmem:[#allocation2 + $0x150] sm:$0xff]
        %v595 = vld [vmem:[#allocation2 + $0x158] sm:$0xff]
        %v596 = vld [vmem:[#allocation2 + $0x160] sm:$0x3]
        %v597 = vld [vmem:[#allocation2 + $0x168] sm:$0xff]
        %v598 = vld [vmem:[#allocation2 + $0x170] sm:$0xff]
        %v599 = vld [vmem:[#allocation2 + $0x178] sm:$0x3]
        %v600 = vld [vmem:[#allocation2 + $0x180] sm:$0xff]
        %v601 = vld [vmem:[#allocation2 + $0x188] sm:$0xff]
        %v602 = vld [vmem:[#allocation2 + $0x190] sm:$0x3]
        %v603 = vld [vmem:[#allocation2 + $0x198] sm:$0xff]
        %v604 = vld [vmem:[#allocation2 + $0x1a0] sm:$0xff]
        %v605 = vld [vmem:[#allocation2 + $0x1a8] sm:$0x3]
        %v606 = vld [vmem:[#allocation9] sm:$0xff]
        %v607 = vld [vmem:[#allocation9 + $0x8] sm:$0xff]
        %v608 = vld [vmem:[#allocation9 + $0x10] sm:$0xff]
        %v609 = vld [vmem:[#allocation9 + $0x18] sm:$0xff]
        %v610 = vld [vmem:[#allocation9 + $0x20] sm:$0xff]
        %v611 = vld [vmem:[#allocation9 + $0x28] sm:$0xff]
        %v612 = vld [vmem:[#allocation9 + $0x30] sm:$0xff]
        %v613 = vld [vmem:[#allocation9 + $0x38] sm:$0xff]
        %v614 = vld [vmem:[#allocation9 + $0x40] sm:$0xff]
        %v615 = vld [vmem:[#allocation9 + $0x48] sm:$0xff]
        %v616 = vld [vmem:[#allocation9 + $0x50] sm:$0xff]
        %v617 = vld [vmem:[#allocation9 + $0x58] sm:$0xff]
        %v618 = vld [vmem:[#allocation9 + $0x60] sm:$0xff]
        %v619 = vld [vmem:[#allocation9 + $0x68] sm:$0xff]
        %v620 = vld [vmem:[#allocation9 + $0x70] sm:$0xff]
        %v621 = vld [vmem:[#allocation9 + $0x78] sm:$0xff]
        %vm670 = vcmask 1046528
        %v671 = vrot.slane %v552, 1
        %v672 = vrot.slane %v553, 1
        %v673 = vsel %vm670, %v671, %v672
        %v674 = vrot.slane %v554, 1
        %v675 = vsel %vm670, %v672, %v674
        %v676 = vrot.slane %v555, 1
        %v677 = vrot.slane %v556, 1
        %v678 = vsel %vm670, %v676, %v677
        %v679 = vrot.slane %v557, 1
        %v680 = vsel %vm670, %v677, %v679
        %v681 = vrot.slane %v558, 1
        %v682 = vrot.slane %v559, 1
        %v683 = vsel %vm670, %v681, %v682
        %v684 = vrot.slane %v560, 1
        %v685 = vsel %vm670, %v682, %v684
        %v686 = vrot.slane %v561, 1
        %v687 = vrot.slane %v562, 1
        %v688 = vsel %vm670, %v686, %v687
        %v689 = vrot.slane %v563, 1
        %v690 = vsel %vm670, %v687, %v689
        %v691 = vrot.slane %v564, 1
        %v692 = vrot.slane %v565, 1
        %v693 = vsel %vm670, %v691, %v692
        %v694 = vrot.slane %v566, 1
        %v695 = vsel %vm670, %v692, %v694
        %v696 = vrot.slane %v567, 1
        %v697 = vrot.slane %v568, 1
        %v698 = vsel %vm670, %v696, %v697
        %v699 = vrot.slane %v569, 1
        %v700 = vsel %vm670, %v697, %v699
        %v701 = vrot.slane %v570, 1
        %v702 = vrot.slane %v571, 1
        %v703 = vsel %vm670, %v701, %v702
        %v704 = vrot.slane %v572, 1
        %v705 = vsel %vm670, %v702, %v704
        %v706 = vrot.slane %v573, 1
        %v707 = vrot.slane %v574, 1
        %v708 = vsel %vm670, %v706, %v707
        %v709 = vrot.slane %v575, 1
        %v710 = vsel %vm670, %v707, %v709
        %v711 = vrot.slane %v576, 1
        %v712 = vrot.slane %v577, 1
        %v713 = vsel %vm670, %v711, %v712
        %v714 = vrot.slane %v578, 1
        %v715 = vsel %vm670, %v712, %v714
        %v716 = vrot.slane %v579, 1
        %v717 = vrot.slane %v580, 1
        %v718 = vsel %vm670, %v716, %v717
        %v719 = vrot.slane %v581, 1
        %v720 = vsel %vm670, %v717, %v719
        %v721 = vrot.slane %v582, 1
        %v722 = vrot.slane %v583, 1
        %v723 = vsel %vm670, %v721, %v722
        %v724 = vrot.slane %v584, 1
        %v725 = vsel %vm670, %v722, %v724
        %v726 = vrot.slane %v585, 1
        %v727 = vrot.slane %v586, 1
        %v728 = vsel %vm670, %v726, %v727
        %v729 = vrot.slane %v587, 1
        %v730 = vsel %vm670, %v727, %v729
        %v731 = vrot.slane %v588, 1
        %v732 = vrot.slane %v589, 1
        %v733 = vsel %vm670, %v731, %v732
        %v734 = vrot.slane %v590, 1
        %v735 = vsel %vm670, %v732, %v734
        %v736 = vrot.slane %v591, 1
        %v737 = vrot.slane %v592, 1
        %v738 = vsel %vm670, %v736, %v737
        %v739 = vrot.slane %v593, 1
        %v740 = vsel %vm670, %v737, %v739
        %v741 = vrot.slane %v594, 1
        %v742 = vrot.slane %v595, 1
        %v743 = vsel %vm670, %v741, %v742
        %v744 = vrot.slane %v596, 1
        %v745 = vsel %vm670, %v742, %v744
        %v746 = vrot.slane %v597, 1
        %v747 = vrot.slane %v598, 1
        %v748 = vsel %vm670, %v746, %v747
        %v749 = vrot.slane %v599, 1
        %v750 = vsel %vm670, %v747, %v749
        %s783 = scalar_lea.vmem [#allocation9], 128
        %v784 = vld [vmem:[%s783] sm:$0xff]
        %v785 = vld [vmem:[%s783 + $0x8] sm:$0xff]
        %v786 = vld [vmem:[%s783 + $0x10] sm:$0xff]
        %v787 = vld [vmem:[%s783 + $0x18] sm:$0xff]
        %v788 = vld [vmem:[%s783 + $0x20] sm:$0xff]
        %v789 = vld [vmem:[%s783 + $0x28] sm:$0xff]
        %v790 = vld [vmem:[%s783 + $0x30] sm:$0xff]
        %v791 = vld [vmem:[%s783 + $0x38] sm:$0xff]
        %v792 = vld [vmem:[%s783 + $0x40] sm:$0xff]
        %v793 = vld [vmem:[%s783 + $0x48] sm:$0xff]
        %v794 = vld [vmem:[%s783 + $0x50] sm:$0xff]
        %v795 = vld [vmem:[%s783 + $0x58] sm:$0xff]
        %v796 = vld [vmem:[%s783 + $0x60] sm:$0xff]
        %v797 = vld [vmem:[%s783 + $0x68] sm:$0xff]
        %v798 = vld [vmem:[%s783 + $0x70] sm:$0xff]
        %v799 = vld [vmem:[%s783 + $0x78] sm:$0xff]
        %800 = vmatprep.subr.mxu0 0.0
        %801 = vmatpush1.msra.mxu0 %v784
        %802 = vmatprep.subr.mxu0 0.0
        %803 = vmatpush1.msra.mxu0 %v785
        %804 = vmatprep.subr.mxu0 0.0
        %805 = vmatpush1.msra.mxu0 %v786
        %806 = vmatprep.subr.mxu0 0.0
        %807 = vmatpush1.msra.mxu0 %v787
        %808 = vmatprep.subr.mxu0 0.0
        %809 = vmatpush1.msra.mxu0 %v788
        %810 = vmatprep.subr.mxu0 0.0
        %811 = vmatpush1.msra.mxu0 %v789
        %812 = vmatprep.subr.mxu0 0.0
        %813 = vmatpush1.msra.mxu0 %v790
        %814 = vmatprep.subr.mxu0 0.0
        %815 = vmatpush1.msra.mxu0 %v791
        %816 = vmatprep.subr.mxu0 0.0
        %817 = vmatpush1.msra.mxu0 %v792
        %818 = vmatprep.subr.mxu0 0.0
        %819 = vmatpush1.msra.mxu0 %v793
        %820 = vmatprep.subr.mxu0 0.0
        %821 = vmatpush1.msra.mxu0 %v794
        %822 = vmatprep.subr.mxu0 0.0
        %823 = vmatpush1.msra.mxu0 %v795
        %824 = vmatprep.subr.mxu0 0.0
        %825 = vmatpush1.msra.mxu0 %v796
        %826 = vmatprep.subr.mxu0 0.0
        %827 = vmatpush1.msra.mxu0 %v797
        %828 = vmatprep.subr.mxu0 0.0
        %829 = vmatpush1.msra.mxu0 %v798
        %830 = vmatprep.subr.mxu0 0.0
        %831 = vmatpush1.msra.mxu0 %v799
        %832 = vmatprep.subr.mxu0 0.0
        %833 = vmatpush1.msra.mxu0 0.0
        %834 = vmatprep.subr.mxu0 0.0
        %835 = vmatpush1.msra.mxu0 0.0
        %836 = vmatprep.subr.mxu0 0.0
        %837 = vmatpush1.msra.mxu0 0.0
        %838 = vmatprep.subr.mxu0 0.0
        %839 = vmatpush1.msra.mxu0 0.0
        %840 = vmatprep.subr.mxu0 0.0
        %841 = vmatpush1.msra.mxu0 0.0
        %842 = vmatprep.subr.mxu0 0.0
        %843 = vmatpush1.msra.mxu0 0.0
        %844 = vmatprep.subr.mxu0 0.0
        %845 = vmatpush1.msra.mxu0 0.0
        %846 = vmatprep.subr.mxu0 0.0
        %847 = vmatpush1.msra.mxu0 0.0
        %848 = vmatprep.subr.mxu0 0.0
        %849 = vmatpush1.msra.mxu0 0.0
        %850 = vmatprep.subr.mxu0 0.0
        %851 = vmatpush1.msra.mxu0 0.0
        %852 = vmatprep.subr.mxu0 0.0
        %853 = vmatpush1.msra.mxu0 0.0
        %854 = vmatprep.subr.mxu0 0.0
        %855 = vmatpush1.msra.mxu0 0.0
        %856 = vmatprep.subr.mxu0 0.0
        %857 = vmatpush1.msra.mxu0 0.0
        %858 = vmatprep.subr.mxu0 0.0
        %859 = vmatpush1.msra.mxu0 0.0
        %860 = vmatprep.subr.mxu0 0.0
        %861 = vmatpush1.msra.mxu0 0.0
        %862 = vmatprep.subr.mxu0 0.0
        %863 = vmatpush1.msra.mxu0 0.0
        %864 = vmatprep.mubr.f32.mxu0 0.0
        %865 = vmatmul.mubr.f32.gmra.mrb[0].mxu0 %v673
        %v866 = vpop.f32.mrb[0].mxu0
        %v867 = vadd.f32 0.0, %v866
        %v868 = vpop.f32.mrb[0].mxu0
        %869 = vmatprep.mubr.f32.mxu0 0.0
        %870 = vmatmul.mubr.f32.gmra.mrb[0].mxu0 %v675
        %v871 = vpop.f32.mrb[0].mxu0
        %v872 = vadd.f32 0.0, %v871
        %v873 = vpop.f32.mrb[0].mxu0
        %874 = vmatprep.mubr.f32.mxu0 0.0
        %875 = vmatmul.mubr.f32.gmra.mrb[0].mxu0 %v678
        %v876 = vpop.f32.mrb[0].mxu0
        %v877 = vadd.f32 0.0, %v876
        %v878 = vpop.f32.mrb[0].mxu0
        %879 = vmatprep.mubr.f32.mxu0 0.0
        %880 = vmatmul.mubr.f32.gmra.mrb[0].mxu0 %v680
        %v881 = vpop.f32.mrb[0].mxu0
        %v882 = vadd.f32 0.0, %v881
        %v883 = vpop.f32.mrb[0].mxu0
        %884 = vmatprep.mubr.f32.mxu0 0.0
        %885 = vmatmul.mubr.f32.gmra.mrb[0].mxu0 %v683
        %v886 = vpop.f32.mrb[0].mxu0
        %v887 = vadd.f32 0.0, %v886
        %v888 = vpop.f32.mrb[0].mxu0
        %889 = vmatprep.mubr.f32.mxu0 0.0
        %890 = vmatmul.mubr.f32.gmra.mrb[0].mxu0 %v685
        %v891 = vpop.f32.mrb[0].mxu0
        %v892 = vadd.f32 0.0, %v891
        %v893 = vpop.f32.mrb[0].mxu0
        %894 = vmatprep.mubr.f32.mxu0 0.0
        %895 = vmatmul.mubr.f32.gmra.mrb[0].mxu0 %v688
        %v896 = vpop.f32.mrb[0].mxu0
        %v897 = vadd.f32 0.0, %v896
        %v898 = vpop.f32.mrb[0].mxu0
        %899 = vmatprep.mubr.f32.mxu0 0.0
        %900 = vmatmul.mubr.f32.gmra.mrb[0].mxu0 %v690
        %v901 = vpop.f32.mrb[0].mxu0
        %v902 = vadd.f32 0.0, %v901
        %v903 = vpop.f32.mrb[0].mxu0
        %904 = vmatprep.mubr.f32.mxu0 0.0
        %905 = vmatmul.mubr.f32.gmra.mrb[0].mxu0 %v693
        %v906 = vpop.f32.mrb[0].mxu0
        %v907 = vadd.f32 0.0, %v906
        %v908 = vpop.f32.mrb[0].mxu0
        %909 = vmatprep.mubr.f32.mxu0 0.0
        %910 = vmatmul.mubr.f32.gmra.mrb[0].mxu0 %v695
        %v911 = vpop.f32.mrb[0].mxu0
        %v912 = vadd.f32 0.0, %v911
        %v913 = vpop.f32.mrb[0].mxu0
        %914 = vmatprep.mubr.f32.mxu0 0.0
        %915 = vmatmul.mubr.f32.gmra.mrb[0].mxu0 %v698
        %v916 = vpop.f32.mrb[0].mxu0
        %v917 = vadd.f32 0.0, %v916
        %v918 = vpop.f32.mrb[0].mxu0
        %919 = vmatprep.mubr.f32.mxu0 0.0
        %920 = vmatmul.mubr.f32.gmra.mrb[0].mxu0 %v700
        %v921 = vpop.f32.mrb[0].mxu0
        %v922 = vadd.f32 0.0, %v921
        %v923 = vpop.f32.mrb[0].mxu0
        %924 = vmatprep.mubr.f32.mxu0 0.0
        %925 = vmatmul.mubr.f32.gmra.mrb[0].mxu0 %v703
        %v926 = vpop.f32.mrb[0].mxu0
        %v927 = vadd.f32 0.0, %v926
        %v928 = vpop.f32.mrb[0].mxu0
        %929 = vmatprep.mubr.f32.mxu0 0.0
        %930 = vmatmul.mubr.f32.gmra.mrb[0].mxu0 %v705
        %v931 = vpop.f32.mrb[0].mxu0
        %v932 = vadd.f32 0.0, %v931
        %v933 = vpop.f32.mrb[0].mxu0
        %934 = vmatprep.mubr.f32.mxu0 0.0
        %935 = vmatmul.mubr.f32.gmra.mrb[0].mxu0 %v708
        %v936 = vpop.f32.mrb[0].mxu0
        %v937 = vadd.f32 0.0, %v936
        %v938 = vpop.f32.mrb[0].mxu0
        %939 = vmatprep.mubr.f32.mxu0 0.0
        %940 = vmatmul.mubr.f32.gmra.mrb[0].mxu0 %v710
        %v941 = vpop.f32.mrb[0].mxu0
        %v942 = vadd.f32 0.0, %v941
        %v943 = vpop.f32.mrb[0].mxu0
        %944 = vmatprep.mubr.f32.mxu0 0.0
        %945 = vmatmul.mubr.f32.gmra.mrb[0].mxu0 %v713
        %v946 = vpop.f32.mrb[0].mxu0
        %v947 = vadd.f32 0.0, %v946
        %v948 = vpop.f32.mrb[0].mxu0
        %949 = vmatprep.mubr.f32.mxu0 0.0
        %950 = vmatmul.mubr.f32.gmra.mrb[0].mxu0 %v715
        %v951 = vpop.f32.mrb[0].mxu0
        %v952 = vadd.f32 0.0, %v951
        %v953 = vpop.f32.mrb[0].mxu0
        %954 = vmatprep.mubr.f32.mxu0 0.0
        %955 = vmatmul.mubr.f32.gmra.mrb[0].mxu0 %v718
        %v956 = vpop.f32.mrb[0].mxu0
        %v957 = vadd.f32 0.0, %v956
        %v958 = vpop.f32.mrb[0].mxu0
        %959 = vmatprep.mubr.f32.mxu0 0.0
        %960 = vmatmul.mubr.f32.gmra.mrb[0].mxu0 %v720
        %v961 = vpop.f32.mrb[0].mxu0
        %v962 = vadd.f32 0.0, %v961
        %v963 = vpop.f32.mrb[0].mxu0
        %964 = vmatprep.mubr.f32.mxu0 0.0
        %965 = vmatmul.mubr.f32.gmra.mrb[0].mxu0 %v723
        %v966 = vpop.f32.mrb[0].mxu0
        %v967 = vadd.f32 0.0, %v966
        %v968 = vpop.f32.mrb[0].mxu0
        %969 = vmatprep.mubr.f32.mxu0 0.0
        %970 = vmatmul.mubr.f32.gmra.mrb[0].mxu0 %v725
        %v971 = vpop.f32.mrb[0].mxu0
        %v972 = vadd.f32 0.0, %v971
        %v973 = vpop.f32.mrb[0].mxu0
        %974 = vmatprep.mubr.f32.mxu0 0.0
        %975 = vmatmul.mubr.f32.gmra.mrb[0].mxu0 %v728
        %v976 = vpop.f32.mrb[0].mxu0
        %v977 = vadd.f32 0.0, %v976
        %v978 = vpop.f32.mrb[0].mxu0
        %979 = vmatprep.mubr.f32.mxu0 0.0
        %980 = vmatmul.mubr.f32.gmra.mrb[0].mxu0 %v730
        %v981 = vpop.f32.mrb[0].mxu0
        %v982 = vadd.f32 0.0, %v981
        %v983 = vpop.f32.mrb[0].mxu0
        %984 = vmatprep.mubr.f32.mxu0 0.0
        %985 = vmatmul.mubr.f32.gmra.mrb[0].mxu0 %v733
        %v986 = vpop.f32.mrb[0].mxu0
        %v987 = vadd.f32 0.0, %v986
        %v988 = vpop.f32.mrb[0].mxu0
        %989 = vmatprep.mubr.f32.mxu0 0.0
        %990 = vmatmul.mubr.f32.gmra.mrb[0].mxu0 %v735
        %v991 = vpop.f32.mrb[0].mxu0
        %v992 = vadd.f32 0.0, %v991
        %v993 = vpop.f32.mrb[0].mxu0
        %994 = vmatprep.mubr.f32.mxu0 0.0
        %995 = vmatmul.mubr.f32.gmra.mrb[0].mxu0 %v738
        %v996 = vpop.f32.mrb[0].mxu0
        %v997 = vadd.f32 0.0, %v996
        %v998 = vpop.f32.mrb[0].mxu0
        %999 = vmatprep.mubr.f32.mxu0 0.0
        %1000 = vmatmul.mubr.f32.gmra.mrb[0].mxu0 %v740
        %v1001 = vpop.f32.mrb[0].mxu0
        %v1002 = vadd.f32 0.0, %v1001
        %v1003 = vpop.f32.mrb[0].mxu0
        %1004 = vmatprep.mubr.f32.mxu0 0.0
        %1005 = vmatmul.mubr.f32.gmra.mrb[0].mxu0 %v743
        %v1006 = vpop.f32.mrb[0].mxu0
        %v1007 = vadd.f32 0.0, %v1006
        %v1008 = vpop.f32.mrb[0].mxu0
        %1009 = vmatprep.mubr.f32.mxu0 0.0
        %1010 = vmatmul.mubr.f32.gmra.mrb[0].mxu0 %v745
        %v1011 = vpop.f32.mrb[0].mxu0
        %v1012 = vadd.f32 0.0, %v1011
        %v1013 = vpop.f32.mrb[0].mxu0
        %1014 = vmatprep.mubr.f32.mxu0 0.0
        %1015 = vmatmul.mubr.f32.gmra.mrb[0].mxu0 %v748
        %v1016 = vpop.f32.mrb[0].mxu0
        %v1017 = vadd.f32 0.0, %v1016
        %v1018 = vpop.f32.mrb[0].mxu0
        %1019 = vmatprep.mubr.f32.mxu0 0.0
        %1020 = vmatmul.mubr.f32.gmra.mrb[0].mxu0 %v750
        %v1021 = vpop.f32.mrb[0].mxu0
        %v1022 = vadd.f32 0.0, %v1021
        %v1023 = vpop.f32.mrb[0].mxu0
        %1024 = vdwg.mxu0
        %1025 = vmatprep.subr.mxu0 0.0
        %1026 = vmatpush1.msra.mxu0 %v606
        %1027 = vmatprep.subr.mxu0 0.0
        %1028 = vmatpush1.msra.mxu0 %v607
        %1029 = vmatprep.subr.mxu0 0.0
        %1030 = vmatpush1.msra.mxu0 %v608
        %1031 = vmatprep.subr.mxu0 0.0
        %1032 = vmatpush1.msra.mxu0 %v609
        %1033 = vmatprep.subr.mxu0 0.0
        %1034 = vmatpush1.msra.mxu0 %v610
        %1035 = vmatprep.subr.mxu0 0.0
        %1036 = vmatpush1.msra.mxu0 %v611
        %1037 = vmatprep.subr.mxu0 0.0
        %1038 = vmatpush1.msra.mxu0 %v612
        %1039 = vmatprep.subr.mxu0 0.0
        %1040 = vmatpush1.msra.mxu0 %v613
        %1041 = vmatprep.subr.mxu0 0.0
        %1042 = vmatpush1.msra.mxu0 %v614
        %1043 = vmatprep.subr.mxu0 0.0
        %1044 = vmatpush1.msra.mxu0 %v615
        %1045 = vmatprep.subr.mxu0 0.0
        %1046 = vmatpush1.msra.mxu0 %v616
        %1047 = vmatprep.subr.mxu0 0.0
        %1048 = vmatpush1.msra.mxu0 %v617
        %1049 = vmatprep.subr.mxu0 0.0
        %1050 = vmatpush1.msra.mxu0 %v618
        %1051 = vmatprep.subr.mxu0 0.0
        %1052 = vmatpush1.msra.mxu0 %v619
        %1053 = vmatprep.subr.mxu0 0.0
        %1054 = vmatpush1.msra.mxu0 %v620
        %1055 = vmatprep.subr.mxu0 0.0
        %1056 = vmatpush1.msra.mxu0 %v621
        %1057 = vmatprep.subr.mxu0 0.0
        %1058 = vmatpush1.msra.mxu0 0.0
        %1059 = vmatprep.subr.mxu0 0.0
        %1060 = vmatpush1.msra.mxu0 0.0
        %1061 = vmatprep.subr.mxu0 0.0
        %1062 = vmatpush1.msra.mxu0 0.0
        %1063 = vmatprep.subr.mxu0 0.0
        %1064 = vmatpush1.msra.mxu0 0.0
        %1065 = vmatprep.subr.mxu0 0.0
        %1066 = vmatpush1.msra.mxu0 0.0
        %1067 = vmatprep.subr.mxu0 0.0
        %1068 = vmatpush1.msra.mxu0 0.0
        %1069 = vmatprep.subr.mxu0 0.0
        %1070 = vmatpush1.msra.mxu0 0.0
        %1071 = vmatprep.subr.mxu0 0.0
        %1072 = vmatpush1.msra.mxu0 0.0
        %1073 = vmatprep.subr.mxu0 0.0
        %1074 = vmatpush1.msra.mxu0 0.0
        %1075 = vmatprep.subr.mxu0 0.0
        %1076 = vmatpush1.msra.mxu0 0.0
        %1077 = vmatprep.subr.mxu0 0.0
        %1078 = vmatpush1.msra.mxu0 0.0
        %1079 = vmatprep.subr.mxu0 0.0
        %1080 = vmatpush1.msra.mxu0 0.0
        %1081 = vmatprep.subr.mxu0 0.0
        %1082 = vmatpush1.msra.mxu0 0.0
        %1083 = vmatprep.subr.mxu0 0.0
        %1084 = vmatpush1.msra.mxu0 0.0
        %1085 = vmatprep.subr.mxu0 0.0
        %1086 = vmatpush1.msra.mxu0 0.0
        %1087 = vmatprep.subr.mxu0 0.0
        %1088 = vmatpush1.msra.mxu0 0.0
        %1089 = vmatprep.mubr.f32.mxu0 0.0
        %1090 = vmatmul.mubr.f32.gmra.mrb[0].mxu0 %v552
        %v1091 = vpop.f32.mrb[0].mxu0
        %v1092 = vadd.f32 %v867, %v1091
        %v1093 = vpop.f32.mrb[0].mxu0
        %1094 = vmatprep.mubr.f32.mxu0 0.0
        %1095 = vmatmul.mubr.f32.gmra.mrb[0].mxu0 %v553
        %v1096 = vpop.f32.mrb[0].mxu0
        %v1097 = vadd.f32 %v872, %v1096
        %v1098 = vpop.f32.mrb[0].mxu0
        %1099 = vmatprep.mubr.f32.mxu0 0.0
        %1100 = vmatmul.mubr.f32.gmra.mrb[0].mxu0 %v555
        %v1101 = vpop.f32.mrb[0].mxu0
        %v1102 = vadd.f32 %v877, %v1101
        %v1103 = vpop.f32.mrb[0].mxu0
        %1104 = vmatprep.mubr.f32.mxu0 0.0
        %1105 = vmatmul.mubr.f32.gmra.mrb[0].mxu0 %v556
        %v1106 = vpop.f32.mrb[0].mxu0
        %v1107 = vadd.f32 %v882, %v1106
        %v1108 = vpop.f32.mrb[0].mxu0
        %1109 = vmatprep.mubr.f32.mxu0 0.0
        %1110 = vmatmul.mubr.f32.gmra.mrb[0].mxu0 %v558
        %v1111 = vpop.f32.mrb[0].mxu0
        %v1112 = vadd.f32 %v887, %v1111
        %v1113 = vpop.f32.mrb[0].mxu0
        %1114 = vmatprep.mubr.f32.mxu0 0.0
        %1115 = vmatmul.mubr.f32.gmra.mrb[0].mxu0 %v559
        %v1116 = vpop.f32.mrb[0].mxu0
        %v1117 = vadd.f32 %v892, %v1116
        %v1118 = vpop.f32.mrb[0].mxu0
        %1119 = vmatprep.mubr.f32.mxu0 0.0
        %1120 = vmatmul.mubr.f32.gmra.mrb[0].mxu0 %v561
        %v1121 = vpop.f32.mrb[0].mxu0
        %v1122 = vadd.f32 %v897, %v1121
        %v1123 = vpop.f32.mrb[0].mxu0
        %1124 = vmatprep.mubr.f32.mxu0 0.0
        %1125 = vmatmul.mubr.f32.gmra.mrb[0].mxu0 %v562
        %v1126 = vpop.f32.mrb[0].mxu0
        %v1127 = vadd.f32 %v902, %v1126
        %v1128 = vpop.f32.mrb[0].mxu0
        %1129 = vmatprep.mubr.f32.mxu0 0.0
        %1130 = vmatmul.mubr.f32.gmra.mrb[0].mxu0 %v564
        %v1131 = vpop.f32.mrb[0].mxu0
        %v1132 = vadd.f32 %v907, %v1131
        %v1133 = vpop.f32.mrb[0].mxu0
        %1134 = vmatprep.mubr.f32.mxu0 0.0
        %1135 = vmatmul.mubr.f32.gmra.mrb[0].mxu0 %v565
        %v1136 = vpop.f32.mrb[0].mxu0
        %v1137 = vadd.f32 %v912, %v1136
        %v1138 = vpop.f32.mrb[0].mxu0
        %1139 = vmatprep.mubr.f32.mxu0 0.0
        %1140 = vmatmul.mubr.f32.gmra.mrb[0].mxu0 %v567
        %v1141 = vpop.f32.mrb[0].mxu0
        %v1142 = vadd.f32 %v917, %v1141
        %v1143 = vpop.f32.mrb[0].mxu0
        %1144 = vmatprep.mubr.f32.mxu0 0.0
        %1145 = vmatmul.mubr.f32.gmra.mrb[0].mxu0 %v568
        %v1146 = vpop.f32.mrb[0].mxu0
        %v1147 = vadd.f32 %v922, %v1146
        %v1148 = vpop.f32.mrb[0].mxu0
        %1149 = vmatprep.mubr.f32.mxu0 0.0
        %1150 = vmatmul.mubr.f32.gmra.mrb[0].mxu0 %v570
        %v1151 = vpop.f32.mrb[0].mxu0
        %v1152 = vadd.f32 %v927, %v1151
        %v1153 = vpop.f32.mrb[0].mxu0
        %1154 = vmatprep.mubr.f32.mxu0 0.0
        %1155 = vmatmul.mubr.f32.gmra.mrb[0].mxu0 %v571
        %v1156 = vpop.f32.mrb[0].mxu0
        %v1157 = vadd.f32 %v932, %v1156
        %v1158 = vpop.f32.mrb[0].mxu0
        %1159 = vmatprep.mubr.f32.mxu0 0.0
        %1160 = vmatmul.mubr.f32.gmra.mrb[0].mxu0 %v573
        %v1161 = vpop.f32.mrb[0].mxu0
        %v1162 = vadd.f32 %v937, %v1161
        %v1163 = vpop.f32.mrb[0].mxu0
        %1164 = vmatprep.mubr.f32.mxu0 0.0
        %1165 = vmatmul.mubr.f32.gmra.mrb[0].mxu0 %v574
        %v1166 = vpop.f32.mrb[0].mxu0
        %v1167 = vadd.f32 %v942, %v1166
        %v1168 = vpop.f32.mrb[0].mxu0
        %1169 = vmatprep.mubr.f32.mxu0 0.0
        %1170 = vmatmul.mubr.f32.gmra.mrb[0].mxu0 %v576
        %v1171 = vpop.f32.mrb[0].mxu0
        %v1172 = vadd.f32 %v947, %v1171
        %v1173 = vpop.f32.mrb[0].mxu0
        %1174 = vmatprep.mubr.f32.mxu0 0.0
        %1175 = vmatmul.mubr.f32.gmra.mrb[0].mxu0 %v577
        %v1176 = vpop.f32.mrb[0].mxu0
        %v1177 = vadd.f32 %v952, %v1176
        %v1178 = vpop.f32.mrb[0].mxu0
        %1179 = vmatprep.mubr.f32.mxu0 0.0
        %1180 = vmatmul.mubr.f32.gmra.mrb[0].mxu0 %v579
        %v1181 = vpop.f32.mrb[0].mxu0
        %v1182 = vadd.f32 %v957, %v1181
        %v1183 = vpop.f32.mrb[0].mxu0
        %1184 = vmatprep.mubr.f32.mxu0 0.0
        %1185 = vmatmul.mubr.f32.gmra.mrb[0].mxu0 %v580
        %v1186 = vpop.f32.mrb[0].mxu0
        %v1187 = vadd.f32 %v962, %v1186
        %v1188 = vpop.f32.mrb[0].mxu0
        %1189 = vmatprep.mubr.f32.mxu0 0.0
        %1190 = vmatmul.mubr.f32.gmra.mrb[0].mxu0 %v582
        %v1191 = vpop.f32.mrb[0].mxu0
        %v1192 = vadd.f32 %v967, %v1191
        %v1193 = vpop.f32.mrb[0].mxu0
        %1194 = vmatprep.mubr.f32.mxu0 0.0
        %1195 = vmatmul.mubr.f32.gmra.mrb[0].mxu0 %v583
        %v1196 = vpop.f32.mrb[0].mxu0
        %v1197 = vadd.f32 %v972, %v1196
        %v1198 = vpop.f32.mrb[0].mxu0
        %1199 = vmatprep.mubr.f32.mxu0 0.0
        %1200 = vmatmul.mubr.f32.gmra.mrb[0].mxu0 %v585
        %v1201 = vpop.f32.mrb[0].mxu0
        %v1202 = vadd.f32 %v977, %v1201
        %v1203 = vpop.f32.mrb[0].mxu0
        %1204 = vmatprep.mubr.f32.mxu0 0.0
        %1205 = vmatmul.mubr.f32.gmra.mrb[0].mxu0 %v586
        %v1206 = vpop.f32.mrb[0].mxu0
        %v1207 = vadd.f32 %v982, %v1206
        %v1208 = vpop.f32.mrb[0].mxu0
        %1209 = vmatprep.mubr.f32.mxu0 0.0
        %1210 = vmatmul.mubr.f32.gmra.mrb[0].mxu0 %v588
        %v1211 = vpop.f32.mrb[0].mxu0
        %v1212 = vadd.f32 %v987, %v1211
        %v1213 = vpop.f32.mrb[0].mxu0
        %1214 = vmatprep.mubr.f32.mxu0 0.0
        %1215 = vmatmul.mubr.f32.gmra.mrb[0].mxu0 %v589
        %v1216 = vpop.f32.mrb[0].mxu0
        %v1217 = vadd.f32 %v992, %v1216
        %v1218 = vpop.f32.mrb[0].mxu0
        %1219 = vmatprep.mubr.f32.mxu0 0.0
        %1220 = vmatmul.mubr.f32.gmra.mrb[0].mxu0 %v591
        %v1221 = vpop.f32.mrb[0].mxu0
        %v1222 = vadd.f32 %v997, %v1221
        %v1223 = vpop.f32.mrb[0].mxu0
        %1224 = vmatprep.mubr.f32.mxu0 0.0
        %1225 = vmatmul.mubr.f32.gmra.mrb[0].mxu0 %v592
        %v1226 = vpop.f32.mrb[0].mxu0
        %v1227 = vadd.f32 %v1002, %v1226
        %v1228 = vpop.f32.mrb[0].mxu0
        %1229 = vmatprep.mubr.f32.mxu0 0.0
        %1230 = vmatmul.mubr.f32.gmra.mrb[0].mxu0 %v594
        %v1231 = vpop.f32.mrb[0].mxu0
        %v1232 = vadd.f32 %v1007, %v1231
        %v1233 = vpop.f32.mrb[0].mxu0
        %1234 = vmatprep.mubr.f32.mxu0 0.0
        %1235 = vmatmul.mubr.f32.gmra.mrb[0].mxu0 %v595
        %v1236 = vpop.f32.mrb[0].mxu0
        %v1237 = vadd.f32 %v1012, %v1236
        %v1238 = vpop.f32.mrb[0].mxu0
        %1239 = vmatprep.mubr.f32.mxu0 0.0
        %1240 = vmatmul.mubr.f32.gmra.mrb[0].mxu0 %v597
        %v1241 = vpop.f32.mrb[0].mxu0
        %v1242 = vadd.f32 %v1017, %v1241
        %v1243 = vpop.f32.mrb[0].mxu0
        %1244 = vmatprep.mubr.f32.mxu0 0.0
        %1245 = vmatmul.mubr.f32.gmra.mrb[0].mxu0 %v598
        %v1246 = vpop.f32.mrb[0].mxu0
        %v1247 = vadd.f32 %v1022, %v1246
        %v1248 = vpop.f32.mrb[0].mxu0
        %1249 = vdwg.mxu0
        %vm1250 = vcmask 1045504
        %v1251 = vrot.slane %v552, 2
        %v1252 = vrot.slane %v553, 2
        %v1253 = vsel %vm1250, %v1251, %v1252
        %v1254 = vrot.slane %v554, 2
        %v1255 = vsel %vm1250, %v1252, %v1254
        %v1256 = vrot.slane %v555, 2
        %v1257 = vrot.slane %v556, 2
        %v1258 = vsel %vm1250, %v1256, %v1257
        %v1259 = vrot.slane %v557, 2
        %v1260 = vsel %vm1250, %v1257, %v1259
        %v1261 = vrot.slane %v558, 2
        %v1262 = vrot.slane %v559, 2
        %v1263 = vsel %vm1250, %v1261, %v1262
        %v1264 = vrot.slane %v560, 2
        %v1265 = vsel %vm1250, %v1262, %v1264
        %v1266 = vrot.slane %v561, 2
        %v1267 = vrot.slane %v562, 2
        %v1268 = vsel %vm1250, %v1266, %v1267
        %v1269 = vrot.slane %v563, 2
        %v1270 = vsel %vm1250, %v1267, %v1269
        %v1271 = vrot.slane %v564, 2
        %v1272 = vrot.slane %v565, 2
        %v1273 = vsel %vm1250, %v1271, %v1272
        %v1274 = vrot.slane %v566, 2
        %v1275 = vsel %vm1250, %v1272, %v1274
        %v1276 = vrot.slane %v567, 2
        %v1277 = vrot.slane %v568, 2
        %v1278 = vsel %vm1250, %v1276, %v1277
        %v1279 = vrot.slane %v569, 2
        %v1280 = vsel %vm1250, %v1277, %v1279
        %v1281 = vrot.slane %v570, 2
        %v1282 = vrot.slane %v571, 2
        %v1283 = vsel %vm1250, %v1281, %v1282
        %v1284 = vrot.slane %v572, 2
        %v1285 = vsel %vm1250, %v1282, %v1284
        %v1286 = vrot.slane %v573, 2
        %v1287 = vrot.slane %v574, 2
        %v1288 = vsel %vm1250, %v1286, %v1287
        %v1289 = vrot.slane %v575, 2
        %v1290 = vsel %vm1250, %v1287, %v1289
        %v1291 = vrot.slane %v576, 2
        %v1292 = vrot.slane %v577, 2
        %v1293 = vsel %vm1250, %v1291, %v1292
        %v1294 = vrot.slane %v578, 2
        %v1295 = vsel %vm1250, %v1292, %v1294
        %v1296 = vrot.slane %v579, 2
        %v1297 = vrot.slane %v580, 2
        %v1298 = vsel %vm1250, %v1296, %v1297
        %v1299 = vrot.slane %v581, 2
        %v1300 = vsel %vm1250, %v1297, %v1299
        %v1301 = vrot.slane %v582, 2
        %v1302 = vrot.slane %v583, 2
        %v1303 = vsel %vm1250, %v1301, %v1302
        %v1304 = vrot.slane %v584, 2
        %v1305 = vsel %vm1250, %v1302, %v1304
        %v1306 = vrot.slane %v585, 2
        %v1307 = vrot.slane %v586, 2
        %v1308 = vsel %vm1250, %v1306, %v1307
        %v1309 = vrot.slane %v587, 2
        %v1310 = vsel %vm1250, %v1307, %v1309
        %v1311 = vrot.slane %v588, 2
        %v1312 = vrot.slane %v589, 2
        %v1313 = vsel %vm1250, %v1311, %v1312
        %v1314 = vrot.slane %v590, 2
        %v1315 = vsel %vm1250, %v1312, %v1314
        %v1316 = vrot.slane %v591, 2
        %v1317 = vrot.slane %v592, 2
        %v1318 = vsel %vm1250, %v1316, %v1317
        %v1319 = vrot.slane %v593, 2
        %v1320 = vsel %vm1250, %v1317, %v1319
        %v1321 = vrot.slane %v594, 2
        %v1322 = vrot.slane %v595, 2
        %v1323 = vsel %vm1250, %v1321, %v1322
        %v1324 = vrot.slane %v596, 2
        %v1325 = vsel %vm1250, %v1322, %v1324
        %v1326 = vrot.slane %v597, 2
        %v1327 = vrot.slane %v598, 2
        %v1328 = vsel %vm1250, %v1326, %v1327
        %v1329 = vrot.slane %v599, 2
        %v1330 = vsel %vm1250, %v1327, %v1329
        %s1363 = scalar_lea.vmem [#allocation9], 256
        %v1364 = vld [vmem:[%s1363] sm:$0xff]
        %v1365 = vld [vmem:[%s1363 + $0x8] sm:$0xff]
        %v1366 = vld [vmem:[%s1363 + $0x10] sm:$0xff]
        %v1367 = vld [vmem:[%s1363 + $0x18] sm:$0xff]
        %v1368 = vld [vmem:[%s1363 + $0x20] sm:$0xff]
        %v1369 = vld [vmem:[%s1363 + $0x28] sm:$0xff]
        %v1370 = vld [vmem:[%s1363 + $0x30] sm:$0xff]
        %v1371 = vld [vmem:[%s1363 + $0x38] sm:$0xff]
        %v1372 = vld [vmem:[%s1363 + $0x40] sm:$0xff]
        %v1373 = vld [vmem:[%s1363 + $0x48] sm:$0xff]
        %v1374 = vld [vmem:[%s1363 + $0x50] sm:$0xff]
        %v1375 = vld [vmem:[%s1363 + $0x58] sm:$0xff]
        %v1376 = vld [vmem:[%s1363 + $0x60] sm:$0xff]
        %v1377 = vld [vmem:[%s1363 + $0x68] sm:$0xff]
        %v1378 = vld [vmem:[%s1363 + $0x70] sm:$0xff]
        %v1379 = vld [vmem:[%s1363 + $0x78] sm:$0xff]
        %1380 = vmatprep.subr.mxu0 0.0
        %1381 = vmatpush1.msra.mxu0 %v1364
        %1382 = vmatprep.subr.mxu0 0.0
        %1383 = vmatpush1.msra.mxu0 %v1365
        %1384 = vmatprep.subr.mxu0 0.0
        %1385 = vmatpush1.msra.mxu0 %v1366
        %1386 = vmatprep.subr.mxu0 0.0
        %1387 = vmatpush1.msra.mxu0 %v1367
        %1388 = vmatprep.subr.mxu0 0.0
        %1389 = vmatpush1.msra.mxu0 %v1368
        %1390 = vmatprep.subr.mxu0 0.0
        %1391 = vmatpush1.msra.mxu0 %v1369
        %1392 = vmatprep.subr.mxu0 0.0
        %1393 = vmatpush1.msra.mxu0 %v1370
        %1394 = vmatprep.subr.mxu0 0.0
        %1395 = vmatpush1.msra.mxu0 %v1371
        %1396 = vmatprep.subr.mxu0 0.0
        %1397 = vmatpush1.msra.mxu0 %v1372
        %1398 = vmatprep.subr.mxu0 0.0
        %1399 = vmatpush1.msra.mxu0 %v1373
        %1400 = vmatprep.subr.mxu0 0.0
        %1401 = vmatpush1.msra.mxu0 %v1374
        %1402 = vmatprep.subr.mxu0 0.0
        %1403 = vmatpush1.msra.mxu0 %v1375
        %1404 = vmatprep.subr.mxu0 0.0
        %1405 = vmatpush1.msra.mxu0 %v1376
        %1406 = vmatprep.subr.mxu0 0.0
        %1407 = vmatpush1.msra.mxu0 %v1377
        %1408 = vmatprep.subr.mxu0 0.0
        %1409 = vmatpush1.msra.mxu0 %v1378
        %1410 = vmatprep.subr.mxu0 0.0
        %1411 = vmatpush1.msra.mxu0 %v1379
        %1412 = vmatprep.subr.mxu0 0.0
        %1413 = vmatpush1.msra.mxu0 0.0
        %1414 = vmatprep.subr.mxu0 0.0
        %1415 = vmatpush1.msra.mxu0 0.0
        %1416 = vmatprep.subr.mxu0 0.0
        %1417 = vmatpush1.msra.mxu0 0.0
        %1418 = vmatprep.subr.mxu0 0.0
        %1419 = vmatpush1.msra.mxu0 0.0
        %1420 = vmatprep.subr.mxu0 0.0
        %1421 = vmatpush1.msra.mxu0 0.0
        %1422 = vmatprep.subr.mxu0 0.0
        %1423 = vmatpush1.msra.mxu0 0.0
        %1424 = vmatprep.subr.mxu0 0.0
        %1425 = vmatpush1.msra.mxu0 0.0
        %1426 = vmatprep.subr.mxu0 0.0
        %1427 = vmatpush1.msra.mxu0 0.0
        %1428 = vmatprep.subr.mxu0 0.0
        %1429 = vmatpush1.msra.mxu0 0.0
        %1430 = vmatprep.subr.mxu0 0.0
        %1431 = vmatpush1.msra.mxu0 0.0
        %1432 = vmatprep.subr.mxu0 0.0
        %1433 = vmatpush1.msra.mxu0 0.0
        %1434 = vmatprep.subr.mxu0 0.0
        %1435 = vmatpush1.msra.mxu0 0.0
        %1436 = vmatprep.subr.mxu0 0.0
        %1437 = vmatpush1.msra.mxu0 0.0
        %1438 = vmatprep.subr.mxu0 0.0
        %1439 = vmatpush1.msra.mxu0 0.0
        %1440 = vmatprep.subr.mxu0 0.0
        %1441 = vmatpush1.msra.mxu0 0.0
        %1442 = vmatprep.subr.mxu0 0.0
        %1443 = vmatpush1.msra.mxu0 0.0
        %1444 = vmatprep.mubr.f32.mxu0 0.0
        %1445 = vmatmul.mubr.f32.gmra.mrb[0].mxu0 %v1253
        %v1446 = vpop.f32.mrb[0].mxu0
        %v1447 = vadd.f32 0.0, %v1446
        %v1448 = vpop.f32.mrb[0].mxu0
        %1449 = vmatprep.mubr.f32.mxu0 0.0
        %1450 = vmatmul.mubr.f32.gmra.mrb[0].mxu0 %v1255
        %v1451 = vpop.f32.mrb[0].mxu0
        %v1452 = vadd.f32 0.0, %v1451
        %v1453 = vpop.f32.mrb[0].mxu0
        %1454 = vmatprep.mubr.f32.mxu0 0.0
        %1455 = vmatmul.mubr.f32.gmra.mrb[0].mxu0 %v1258
        %v1456 = vpop.f32.mrb[0].mxu0
        %v1457 = vadd.f32 0.0, %v1456
        %v1458 = vpop.f32.mrb[0].mxu0
        %1459 = vmatprep.mubr.f32.mxu0 0.0
        %1460 = vmatmul.mubr.f32.gmra.mrb[0].mxu0 %v1260
        %v1461 = vpop.f32.mrb[0].mxu0
        %v1462 = vadd.f32 0.0, %v1461
        %v1463 = vpop.f32.mrb[0].mxu0
        %1464 = vmatprep.mubr.f32.mxu0 0.0
        %1465 = vmatmul.mubr.f32.gmra.mrb[0].mxu0 %v1263
        %v1466 = vpop.f32.mrb[0].mxu0
        %v1467 = vadd.f32 0.0, %v1466
        %v1468 = vpop.f32.mrb[0].mxu0
        %1469 = vmatprep.mubr.f32.mxu0 0.0
        %1470 = vmatmul.mubr.f32.gmra.mrb[0].mxu0 %v1265
        %v1471 = vpop.f32.mrb[0].mxu0
        %v1472 = vadd.f32 0.0, %v1471
        %v1473 = vpop.f32.mrb[0].mxu0
        %1474 = vmatprep.mubr.f32.mxu0 0.0
        %1475 = vmatmul.mubr.f32.gmra.mrb[0].mxu0 %v1268
        %v1476 = vpop.f32.mrb[0].mxu0
        %v1477 = vadd.f32 0.0, %v1476
        %v1478 = vpop.f32.mrb[0].mxu0
        %1479 = vmatprep.mubr.f32.mxu0 0.0
        %1480 = vmatmul.mubr.f32.gmra.mrb[0].mxu0 %v1270
        %v1481 = vpop.f32.mrb[0].mxu0
        %v1482 = vadd.f32 0.0, %v1481
        %v1483 = vpop.f32.mrb[0].mxu0
        %1484 = vmatprep.mubr.f32.mxu0 0.0
        %1485 = vmatmul.mubr.f32.gmra.mrb[0].mxu0 %v1273
        %v1486 = vpop.f32.mrb[0].mxu0
        %v1487 = vadd.f32 0.0, %v1486
        %v1488 = vpop.f32.mrb[0].mxu0
        %1489 = vmatprep.mubr.f32.mxu0 0.0
        %1490 = vmatmul.mubr.f32.gmra.mrb[0].mxu0 %v1275
        %v1491 = vpop.f32.mrb[0].mxu0
        %v1492 = vadd.f32 0.0, %v1491
        %v1493 = vpop.f32.mrb[0].mxu0
        %1494 = vmatprep.mubr.f32.mxu0 0.0
        %1495 = vmatmul.mubr.f32.gmra.mrb[0].mxu0 %v1278
        %v1496 = vpop.f32.mrb[0].mxu0
        %v1497 = vadd.f32 0.0, %v1496
        %v1498 = vpop.f32.mrb[0].mxu0
        %1499 = vmatprep.mubr.f32.mxu0 0.0
        %1500 = vmatmul.mubr.f32.gmra.mrb[0].mxu0 %v1280
        %v1501 = vpop.f32.mrb[0].mxu0
        %v1502 = vadd.f32 0.0, %v1501
        %v1503 = vpop.f32.mrb[0].mxu0
        %1504 = vmatprep.mubr.f32.mxu0 0.0
        %1505 = vmatmul.mubr.f32.gmra.mrb[0].mxu0 %v1283
        %v1506 = vpop.f32.mrb[0].mxu0
        %v1507 = vadd.f32 0.0, %v1506
        %v1508 = vpop.f32.mrb[0].mxu0
        %1509 = vmatprep.mubr.f32.mxu0 0.0
        %1510 = vmatmul.mubr.f32.gmra.mrb[0].mxu0 %v1285
        %v1511 = vpop.f32.mrb[0].mxu0
        %v1512 = vadd.f32 0.0, %v1511
        %v1513 = vpop.f32.mrb[0].mxu0
        %1514 = vmatprep.mubr.f32.mxu0 0.0
        %1515 = vmatmul.mubr.f32.gmra.mrb[0].mxu0 %v1288
        %v1516 = vpop.f32.mrb[0].mxu0
        %v1517 = vadd.f32 0.0, %v1516
        %v1518 = vpop.f32.mrb[0].mxu0
        %1519 = vmatprep.mubr.f32.mxu0 0.0
        %1520 = vmatmul.mubr.f32.gmra.mrb[0].mxu0 %v1290
        %v1521 = vpop.f32.mrb[0].mxu0
        %v1522 = vadd.f32 0.0, %v1521
        %v1523 = vpop.f32.mrb[0].mxu0
        %1524 = vmatprep.mubr.f32.mxu0 0.0
        %1525 = vmatmul.mubr.f32.gmra.mrb[0].mxu0 %v1293
        %v1526 = vpop.f32.mrb[0].mxu0
        %v1527 = vadd.f32 0.0, %v1526
        %v1528 = vpop.f32.mrb[0].mxu0
        %1529 = vmatprep.mubr.f32.mxu0 0.0
        %1530 = vmatmul.mubr.f32.gmra.mrb[0].mxu0 %v1295
        %v1531 = vpop.f32.mrb[0].mxu0
        %v1532 = vadd.f32 0.0, %v1531
        %v1533 = vpop.f32.mrb[0].mxu0
        %1534 = vmatprep.mubr.f32.mxu0 0.0
        %1535 = vmatmul.mubr.f32.gmra.mrb[0].mxu0 %v1298
        %v1536 = vpop.f32.mrb[0].mxu0
        %v1537 = vadd.f32 0.0, %v1536
        %v1538 = vpop.f32.mrb[0].mxu0
        %1539 = vmatprep.mubr.f32.mxu0 0.0
        %1540 = vmatmul.mubr.f32.gmra.mrb[0].mxu0 %v1300
        %v1541 = vpop.f32.mrb[0].mxu0
        %v1542 = vadd.f32 0.0, %v1541
        %v1543 = vpop.f32.mrb[0].mxu0
        %1544 = vmatprep.mubr.f32.mxu0 0.0
        %1545 = vmatmul.mubr.f32.gmra.mrb[0].mxu0 %v1303
        %v1546 = vpop.f32.mrb[0].mxu0
        %v1547 = vadd.f32 0.0, %v1546
        %v1548 = vpop.f32.mrb[0].mxu0
        %1549 = vmatprep.mubr.f32.mxu0 0.0
        %1550 = vmatmul.mubr.f32.gmra.mrb[0].mxu0 %v1305
        %v1551 = vpop.f32.mrb[0].mxu0
        %v1552 = vadd.f32 0.0, %v1551
        %v1553 = vpop.f32.mrb[0].mxu0
        %1554 = vmatprep.mubr.f32.mxu0 0.0
        %1555 = vmatmul.mubr.f32.gmra.mrb[0].mxu0 %v1308
        %v1556 = vpop.f32.mrb[0].mxu0
        %v1557 = vadd.f32 0.0, %v1556
        %v1558 = vpop.f32.mrb[0].mxu0
        %1559 = vmatprep.mubr.f32.mxu0 0.0
        %1560 = vmatmul.mubr.f32.gmra.mrb[0].mxu0 %v1310
        %v1561 = vpop.f32.mrb[0].mxu0
        %v1562 = vadd.f32 0.0, %v1561
        %v1563 = vpop.f32.mrb[0].mxu0
        %1564 = vmatprep.mubr.f32.mxu0 0.0
        %1565 = vmatmul.mubr.f32.gmra.mrb[0].mxu0 %v1313
        %v1566 = vpop.f32.mrb[0].mxu0
        %v1567 = vadd.f32 0.0, %v1566
        %v1568 = vpop.f32.mrb[0].mxu0
        %1569 = vmatprep.mubr.f32.mxu0 0.0
        %1570 = vmatmul.mubr.f32.gmra.mrb[0].mxu0 %v1315
        %v1571 = vpop.f32.mrb[0].mxu0
        %v1572 = vadd.f32 0.0, %v1571
        %v1573 = vpop.f32.mrb[0].mxu0
        %1574 = vmatprep.mubr.f32.mxu0 0.0
        %1575 = vmatmul.mubr.f32.gmra.mrb[0].mxu0 %v1318
        %v1576 = vpop.f32.mrb[0].mxu0
        %v1577 = vadd.f32 0.0, %v1576
        %v1578 = vpop.f32.mrb[0].mxu0
        %1579 = vmatprep.mubr.f32.mxu0 0.0
        %1580 = vmatmul.mubr.f32.gmra.mrb[0].mxu0 %v1320
        %v1581 = vpop.f32.mrb[0].mxu0
        %v1582 = vadd.f32 0.0, %v1581
        %v1583 = vpop.f32.mrb[0].mxu0
        %1584 = vmatprep.mubr.f32.mxu0 0.0
        %1585 = vmatmul.mubr.f32.gmra.mrb[0].mxu0 %v1323
        %v1586 = vpop.f32.mrb[0].mxu0
        %v1587 = vadd.f32 0.0, %v1586
        %v1588 = vpop.f32.mrb[0].mxu0
        %1589 = vmatprep.mubr.f32.mxu0 0.0
        %1590 = vmatmul.mubr.f32.gmra.mrb[0].mxu0 %v1325
        %v1591 = vpop.f32.mrb[0].mxu0
        %v1592 = vadd.f32 0.0, %v1591
        %v1593 = vpop.f32.mrb[0].mxu0
        %1594 = vmatprep.mubr.f32.mxu0 0.0
        %1595 = vmatmul.mubr.f32.gmra.mrb[0].mxu0 %v1328
        %v1596 = vpop.f32.mrb[0].mxu0
        %v1597 = vadd.f32 0.0, %v1596
        %v1598 = vpop.f32.mrb[0].mxu0
        %1599 = vmatprep.mubr.f32.mxu0 0.0
        %1600 = vmatmul.mubr.f32.gmra.mrb[0].mxu0 %v1330
        %v1601 = vpop.f32.mrb[0].mxu0
        %v1602 = vadd.f32 0.0, %v1601
        %v1603 = vpop.f32.mrb[0].mxu0
        %1604 = vdwg.mxu0
        %v1605 = vadd.f32 %v1092, %v1447
        %v1606 = vadd.f32 %v1097, %v1452
        %v1607 = vadd.f32 %v1102, %v1457
        %v1608 = vadd.f32 %v1107, %v1462
        %v1609 = vadd.f32 %v1112, %v1467
        %v1610 = vadd.f32 %v1117, %v1472
        %v1611 = vadd.f32 %v1122, %v1477
        %v1612 = vadd.f32 %v1127, %v1482
        %v1613 = vadd.f32 %v1132, %v1487
        %v1614 = vadd.f32 %v1137, %v1492
        %v1615 = vadd.f32 %v1142, %v1497
        %v1616 = vadd.f32 %v1147, %v1502
        %v1617 = vadd.f32 %v1152, %v1507
        %v1618 = vadd.f32 %v1157, %v1512
        %v1619 = vadd.f32 %v1162, %v1517
        %v1620 = vadd.f32 %v1167, %v1522
        %v1621 = vadd.f32 %v1172, %v1527
        %v1622 = vadd.f32 %v1177, %v1532
        %v1623 = vadd.f32 %v1182, %v1537
        %v1624 = vadd.f32 %v1187, %v1542
        %v1625 = vadd.f32 %v1192, %v1547
        %v1626 = vadd.f32 %v1197, %v1552
        %v1627 = vadd.f32 %v1202, %v1557
        %v1628 = vadd.f32 %v1207, %v1562
        %v1629 = vadd.f32 %v1212, %v1567
        %v1630 = vadd.f32 %v1217, %v1572
        %v1631 = vadd.f32 %v1222, %v1577
        %v1632 = vadd.f32 %v1227, %v1582
        %v1633 = vadd.f32 %v1232, %v1587
        %v1634 = vadd.f32 %v1237, %v1592
        %v1635 = vadd.f32 %v1242, %v1597
        %v1636 = vadd.f32 %v1247, %v1602
        %s1637 = scalar_lea.vmem [#allocation9], 384
        %v1638 = vld [vmem:[%s1637] sm:$0xff]
        %v1639 = vld [vmem:[%s1637 + $0x8] sm:$0xff]
        %v1640 = vld [vmem:[%s1637 + $0x10] sm:$0xff]
        %v1641 = vld [vmem:[%s1637 + $0x18] sm:$0xff]
        %v1642 = vld [vmem:[%s1637 + $0x20] sm:$0xff]
        %v1643 = vld [vmem:[%s1637 + $0x28] sm:$0xff]
        %v1644 = vld [vmem:[%s1637 + $0x30] sm:$0xff]
        %v1645 = vld [vmem:[%s1637 + $0x38] sm:$0xff]
        %v1646 = vld [vmem:[%s1637 + $0x40] sm:$0xff]
        %v1647 = vld [vmem:[%s1637 + $0x48] sm:$0xff]
        %v1648 = vld [vmem:[%s1637 + $0x50] sm:$0xff]
        %v1649 = vld [vmem:[%s1637 + $0x58] sm:$0xff]
        %v1650 = vld [vmem:[%s1637 + $0x60] sm:$0xff]
        %v1651 = vld [vmem:[%s1637 + $0x68] sm:$0xff]
        %v1652 = vld [vmem:[%s1637 + $0x70] sm:$0xff]
        %v1653 = vld [vmem:[%s1637 + $0x78] sm:$0xff]
        %1654 = vmatprep.subr.mxu0 0.0
        %1655 = vmatpush1.msra.mxu0 %v1638
        %1656 = vmatprep.subr.mxu0 0.0
        %1657 = vmatpush1.msra.mxu0 %v1639
        %1658 = vmatprep.subr.mxu0 0.0
        %1659 = vmatpush1.msra.mxu0 %v1640
        %1660 = vmatprep.subr.mxu0 0.0
        %1661 = vmatpush1.msra.mxu0 %v1641
        %1662 = vmatprep.subr.mxu0 0.0
        %1663 = vmatpush1.msra.mxu0 %v1642
        %1664 = vmatprep.subr.mxu0 0.0
        %1665 = vmatpush1.msra.mxu0 %v1643
        %1666 = vmatprep.subr.mxu0 0.0
        %1667 = vmatpush1.msra.mxu0 %v1644
        %1668 = vmatprep.subr.mxu0 0.0
        %1669 = vmatpush1.msra.mxu0 %v1645
        %1670 = vmatprep.subr.mxu0 0.0
        %1671 = vmatpush1.msra.mxu0 %v1646
        %1672 = vmatprep.subr.mxu0 0.0
        %1673 = vmatpush1.msra.mxu0 %v1647
        %1674 = vmatprep.subr.mxu0 0.0
        %1675 = vmatpush1.msra.mxu0 %v1648
        %1676 = vmatprep.subr.mxu0 0.0
        %1677 = vmatpush1.msra.mxu0 %v1649
        %1678 = vmatprep.subr.mxu0 0.0
        %1679 = vmatpush1.msra.mxu0 %v1650
        %1680 = vmatprep.subr.mxu0 0.0
        %1681 = vmatpush1.msra.mxu0 %v1651
        %1682 = vmatprep.subr.mxu0 0.0
        %1683 = vmatpush1.msra.mxu0 %v1652
        %1684 = vmatprep.subr.mxu0 0.0
        %1685 = vmatpush1.msra.mxu0 %v1653
        %1686 = vmatprep.subr.mxu0 0.0
        %1687 = vmatpush1.msra.mxu0 0.0
        %1688 = vmatprep.subr.mxu0 0.0
        %1689 = vmatpush1.msra.mxu0 0.0
        %1690 = vmatprep.subr.mxu0 0.0
        %1691 = vmatpush1.msra.mxu0 0.0
        %1692 = vmatprep.subr.mxu0 0.0
        %1693 = vmatpush1.msra.mxu0 0.0
        %1694 = vmatprep.subr.mxu0 0.0
        %1695 = vmatpush1.msra.mxu0 0.0
        %1696 = vmatprep.subr.mxu0 0.0
        %1697 = vmatpush1.msra.mxu0 0.0
        %1698 = vmatprep.subr.mxu0 0.0
        %1699 = vmatpush1.msra.mxu0 0.0
        %1700 = vmatprep.subr.mxu0 0.0
        %1701 = vmatpush1.msra.mxu0 0.0
        %1702 = vmatprep.subr.mxu0 0.0
        %1703 = vmatpush1.msra.mxu0 0.0
        %1704 = vmatprep.subr.mxu0 0.0
        %1705 = vmatpush1.msra.mxu0 0.0
        %1706 = vmatprep.subr.mxu0 0.0
        %1707 = vmatpush1.msra.mxu0 0.0
        %1708 = vmatprep.subr.mxu0 0.0
        %1709 = vmatpush1.msra.mxu0 0.0
        %1710 = vmatprep.subr.mxu0 0.0
        %1711 = vmatpush1.msra.mxu0 0.0
        %1712 = vmatprep.subr.mxu0 0.0
        %1713 = vmatpush1.msra.mxu0 0.0
        %1714 = vmatprep.subr.mxu0 0.0
        %1715 = vmatpush1.msra.mxu0 0.0
        %1716 = vmatprep.subr.mxu0 0.0
        %1717 = vmatpush1.msra.mxu0 0.0
        %1718 = vmatprep.mubr.f32.mxu0 0.0
        %1719 = vmatmul.mubr.f32.gmra.mrb[0].mxu0 %v555
        %v1720 = vpop.f32.mrb[0].mxu0
        %v1721 = vadd.f32 0.0, %v1720
        %v1722 = vpop.f32.mrb[0].mxu0
        %1723 = vmatprep.mubr.f32.mxu0 0.0
        %1724 = vmatmul.mubr.f32.gmra.mrb[0].mxu0 %v556
        %v1725 = vpop.f32.mrb[0].mxu0
        %v1726 = vadd.f32 0.0, %v1725
        %v1727 = vpop.f32.mrb[0].mxu0
        %1728 = vmatprep.mubr.f32.mxu0 0.0
        %1729 = vmatmul.mubr.f32.gmra.mrb[0].mxu0 %v558
        %v1730 = vpop.f32.mrb[0].mxu0
        %v1731 = vadd.f32 0.0, %v1730
        %v1732 = vpop.f32.mrb[0].mxu0
        %1733 = vmatprep.mubr.f32.mxu0 0.0
        %1734 = vmatmul.mubr.f32.gmra.mrb[0].mxu0 %v559
        %v1735 = vpop.f32.mrb[0].mxu0
        %v1736 = vadd.f32 0.0, %v1735
        %v1737 = vpop.f32.mrb[0].mxu0
        %1738 = vmatprep.mubr.f32.mxu0 0.0
        %1739 = vmatmul.mubr.f32.gmra.mrb[0].mxu0 %v561
        %v1740 = vpop.f32.mrb[0].mxu0
        %v1741 = vadd.f32 0.0, %v1740
        %v1742 = vpop.f32.mrb[0].mxu0
        %1743 = vmatprep.mubr.f32.mxu0 0.0
        %1744 = vmatmul.mubr.f32.gmra.mrb[0].mxu0 %v562
        %v1745 = vpop.f32.mrb[0].mxu0
        %v1746 = vadd.f32 0.0, %v1745
        %v1747 = vpop.f32.mrb[0].mxu0
        %1748 = vmatprep.mubr.f32.mxu0 0.0
        %1749 = vmatmul.mubr.f32.gmra.mrb[0].mxu0 %v564
        %v1750 = vpop.f32.mrb[0].mxu0
        %v1751 = vadd.f32 0.0, %v1750
        %v1752 = vpop.f32.mrb[0].mxu0
        %1753 = vmatprep.mubr.f32.mxu0 0.0
        %1754 = vmatmul.mubr.f32.gmra.mrb[0].mxu0 %v565
        %v1755 = vpop.f32.mrb[0].mxu0
        %v1756 = vadd.f32 0.0, %v1755
        %v1757 = vpop.f32.mrb[0].mxu0
        %1758 = vmatprep.mubr.f32.mxu0 0.0
        %1759 = vmatmul.mubr.f32.gmra.mrb[0].mxu0 %v567
        %v1760 = vpop.f32.mrb[0].mxu0
        %v1761 = vadd.f32 0.0, %v1760
        %v1762 = vpop.f32.mrb[0].mxu0
        %1763 = vmatprep.mubr.f32.mxu0 0.0
        %1764 = vmatmul.mubr.f32.gmra.mrb[0].mxu0 %v568
        %v1765 = vpop.f32.mrb[0].mxu0
        %v1766 = vadd.f32 0.0, %v1765
        %v1767 = vpop.f32.mrb[0].mxu0
        %1768 = vmatprep.mubr.f32.mxu0 0.0
        %1769 = vmatmul.mubr.f32.gmra.mrb[0].mxu0 %v570
        %v1770 = vpop.f32.mrb[0].mxu0
        %v1771 = vadd.f32 0.0, %v1770
        %v1772 = vpop.f32.mrb[0].mxu0
        %1773 = vmatprep.mubr.f32.mxu0 0.0
        %1774 = vmatmul.mubr.f32.gmra.mrb[0].mxu0 %v571
        %v1775 = vpop.f32.mrb[0].mxu0
        %v1776 = vadd.f32 0.0, %v1775
        %v1777 = vpop.f32.mrb[0].mxu0
        %1778 = vmatprep.mubr.f32.mxu0 0.0
        %1779 = vmatmul.mubr.f32.gmra.mrb[0].mxu0 %v573
        %v1780 = vpop.f32.mrb[0].mxu0
        %v1781 = vadd.f32 0.0, %v1780
        %v1782 = vpop.f32.mrb[0].mxu0
        %1783 = vmatprep.mubr.f32.mxu0 0.0
        %1784 = vmatmul.mubr.f32.gmra.mrb[0].mxu0 %v574
        %v1785 = vpop.f32.mrb[0].mxu0
        %v1786 = vadd.f32 0.0, %v1785
        %v1787 = vpop.f32.mrb[0].mxu0
        %1788 = vmatprep.mubr.f32.mxu0 0.0
        %1789 = vmatmul.mubr.f32.gmra.mrb[0].mxu0 %v576
        %v1790 = vpop.f32.mrb[0].mxu0
        %v1791 = vadd.f32 0.0, %v1790
        %v1792 = vpop.f32.mrb[0].mxu0
        %1793 = vmatprep.mubr.f32.mxu0 0.0
        %1794 = vmatmul.mubr.f32.gmra.mrb[0].mxu0 %v577
        %v1795 = vpop.f32.mrb[0].mxu0
        %v1796 = vadd.f32 0.0, %v1795
        %v1797 = vpop.f32.mrb[0].mxu0
        %1798 = vmatprep.mubr.f32.mxu0 0.0
        %1799 = vmatmul.mubr.f32.gmra.mrb[0].mxu0 %v579
        %v1800 = vpop.f32.mrb[0].mxu0
        %v1801 = vadd.f32 0.0, %v1800
        %v1802 = vpop.f32.mrb[0].mxu0
        %1803 = vmatprep.mubr.f32.mxu0 0.0
        %1804 = vmatmul.mubr.f32.gmra.mrb[0].mxu0 %v580
        %v1805 = vpop.f32.mrb[0].mxu0
        %v1806 = vadd.f32 0.0, %v1805
        %v1807 = vpop.f32.mrb[0].mxu0
        %1808 = vmatprep.mubr.f32.mxu0 0.0
        %1809 = vmatmul.mubr.f32.gmra.mrb[0].mxu0 %v582
        %v1810 = vpop.f32.mrb[0].mxu0
        %v1811 = vadd.f32 0.0, %v1810
        %v1812 = vpop.f32.mrb[0].mxu0
        %1813 = vmatprep.mubr.f32.mxu0 0.0
        %1814 = vmatmul.mubr.f32.gmra.mrb[0].mxu0 %v583
        %v1815 = vpop.f32.mrb[0].mxu0
        %v1816 = vadd.f32 0.0, %v1815
        %v1817 = vpop.f32.mrb[0].mxu0
        %1818 = vmatprep.mubr.f32.mxu0 0.0
        %1819 = vmatmul.mubr.f32.gmra.mrb[0].mxu0 %v585
        %v1820 = vpop.f32.mrb[0].mxu0
        %v1821 = vadd.f32 0.0, %v1820
        %v1822 = vpop.f32.mrb[0].mxu0
        %1823 = vmatprep.mubr.f32.mxu0 0.0
        %1824 = vmatmul.mubr.f32.gmra.mrb[0].mxu0 %v586
        %v1825 = vpop.f32.mrb[0].mxu0
        %v1826 = vadd.f32 0.0, %v1825
        %v1827 = vpop.f32.mrb[0].mxu0
        %1828 = vmatprep.mubr.f32.mxu0 0.0
        %1829 = vmatmul.mubr.f32.gmra.mrb[0].mxu0 %v588
        %v1830 = vpop.f32.mrb[0].mxu0
        %v1831 = vadd.f32 0.0, %v1830
        %v1832 = vpop.f32.mrb[0].mxu0
        %1833 = vmatprep.mubr.f32.mxu0 0.0
        %1834 = vmatmul.mubr.f32.gmra.mrb[0].mxu0 %v589
        %v1835 = vpop.f32.mrb[0].mxu0
        %v1836 = vadd.f32 0.0, %v1835
        %v1837 = vpop.f32.mrb[0].mxu0
        %1838 = vmatprep.mubr.f32.mxu0 0.0
        %1839 = vmatmul.mubr.f32.gmra.mrb[0].mxu0 %v591
        %v1840 = vpop.f32.mrb[0].mxu0
        %v1841 = vadd.f32 0.0, %v1840
        %v1842 = vpop.f32.mrb[0].mxu0
        %1843 = vmatprep.mubr.f32.mxu0 0.0
        %1844 = vmatmul.mubr.f32.gmra.mrb[0].mxu0 %v592
        %v1845 = vpop.f32.mrb[0].mxu0
        %v1846 = vadd.f32 0.0, %v1845
        %v1847 = vpop.f32.mrb[0].mxu0
        %1848 = vmatprep.mubr.f32.mxu0 0.0
        %1849 = vmatmul.mubr.f32.gmra.mrb[0].mxu0 %v594
        %v1850 = vpop.f32.mrb[0].mxu0
        %v1851 = vadd.f32 0.0, %v1850
        %v1852 = vpop.f32.mrb[0].mxu0
        %1853 = vmatprep.mubr.f32.mxu0 0.0
        %1854 = vmatmul.mubr.f32.gmra.mrb[0].mxu0 %v595
        %v1855 = vpop.f32.mrb[0].mxu0
        %v1856 = vadd.f32 0.0, %v1855
        %v1857 = vpop.f32.mrb[0].mxu0
        %1858 = vmatprep.mubr.f32.mxu0 0.0
        %1859 = vmatmul.mubr.f32.gmra.mrb[0].mxu0 %v597
        %v1860 = vpop.f32.mrb[0].mxu0
        %v1861 = vadd.f32 0.0, %v1860
        %v1862 = vpop.f32.mrb[0].mxu0
        %1863 = vmatprep.mubr.f32.mxu0 0.0
        %1864 = vmatmul.mubr.f32.gmra.mrb[0].mxu0 %v598
        %v1865 = vpop.f32.mrb[0].mxu0
        %v1866 = vadd.f32 0.0, %v1865
        %v1867 = vpop.f32.mrb[0].mxu0
        %1868 = vmatprep.mubr.f32.mxu0 0.0
        %1869 = vmatmul.mubr.f32.gmra.mrb[0].mxu0 %v600
        %v1870 = vpop.f32.mrb[0].mxu0
        %v1871 = vadd.f32 0.0, %v1870
        %v1872 = vpop.f32.mrb[0].mxu0
        %1873 = vmatprep.mubr.f32.mxu0 0.0
        %1874 = vmatmul.mubr.f32.gmra.mrb[0].mxu0 %v601
        %v1875 = vpop.f32.mrb[0].mxu0
        %v1876 = vadd.f32 0.0, %v1875
        %v1877 = vpop.f32.mrb[0].mxu0
        %1878 = vdwg.mxu0
        %v1879 = vadd.f32 %v1605, %v1721
        %v1880 = vadd.f32 %v1606, %v1726
        %v1881 = vadd.f32 %v1607, %v1731
        %v1882 = vadd.f32 %v1608, %v1736
        %v1883 = vadd.f32 %v1609, %v1741
        %v1884 = vadd.f32 %v1610, %v1746
        %v1885 = vadd.f32 %v1611, %v1751
        %v1886 = vadd.f32 %v1612, %v1756
        %v1887 = vadd.f32 %v1613, %v1761
        %v1888 = vadd.f32 %v1614, %v1766
        %v1889 = vadd.f32 %v1615, %v1771
        %v1890 = vadd.f32 %v1616, %v1776
        %v1891 = vadd.f32 %v1617, %v1781
        %v1892 = vadd.f32 %v1618, %v1786
        %v1893 = vadd.f32 %v1619, %v1791
        %v1894 = vadd.f32 %v1620, %v1796
        %v1895 = vadd.f32 %v1621, %v1801
        %v1896 = vadd.f32 %v1622, %v1806
        %v1897 = vadd.f32 %v1623, %v1811
        %v1898 = vadd.f32 %v1624, %v1816
        %v1899 = vadd.f32 %v1625, %v1821
        %v1900 = vadd.f32 %v1626, %v1826
        %v1901 = vadd.f32 %v1627, %v1831
        %v1902 = vadd.f32 %v1628, %v1836
        %v1903 = vadd.f32 %v1629, %v1841
        %v1904 = vadd.f32 %v1630, %v1846
        %v1905 = vadd.f32 %v1631, %v1851
        %v1906 = vadd.f32 %v1632, %v1856
        %v1907 = vadd.f32 %v1633, %v1861
        %v1908 = vadd.f32 %v1634, %v1866
        %v1909 = vadd.f32 %v1635, %v1871
        %v1910 = vadd.f32 %v1636, %v1876
        %v1914 = vrot.slane %v600, 1
        %v1915 = vrot.slane %v601, 1
        %v1916 = vsel %vm670, %v1914, %v1915
        %v1917 = vrot.slane %v602, 1
        %v1918 = vsel %vm670, %v1915, %v1917
        %s1921 = scalar_lea.vmem [#allocation9], 512
        %v1922 = vld [vmem:[%s1921] sm:$0xff]
        %v1923 = vld [vmem:[%s1921 + $0x8] sm:$0xff]
        %v1924 = vld [vmem:[%s1921 + $0x10] sm:$0xff]
        %v1925 = vld [vmem:[%s1921 + $0x18] sm:$0xff]
        %v1926 = vld [vmem:[%s1921 + $0x20] sm:$0xff]
        %v1927 = vld [vmem:[%s1921 + $0x28] sm:$0xff]
        %v1928 = vld [vmem:[%s1921 + $0x30] sm:$0xff]
        %v1929 = vld [vmem:[%s1921 + $0x38] sm:$0xff]
        %v1930 = vld [vmem:[%s1921 + $0x40] sm:$0xff]
        %v1931 = vld [vmem:[%s1921 + $0x48] sm:$0xff]
        %v1932 = vld [vmem:[%s1921 + $0x50] sm:$0xff]
        %v1933 = vld [vmem:[%s1921 + $0x58] sm:$0xff]
        %v1934 = vld [vmem:[%s1921 + $0x60] sm:$0xff]
        %v1935 = vld [vmem:[%s1921 + $0x68] sm:$0xff]
        %v1936 = vld [vmem:[%s1921 + $0x70] sm:$0xff]
        %v1937 = vld [vmem:[%s1921 + $0x78] sm:$0xff]
        %1938 = vmatprep.subr.mxu0 0.0
        %1939 = vmatpush1.msra.mxu0 %v1922
        %1940 = vmatprep.subr.mxu0 0.0
        %1941 = vmatpush1.msra.mxu0 %v1923
        %1942 = vmatprep.subr.mxu0 0.0
        %1943 = vmatpush1.msra.mxu0 %v1924
        %1944 = vmatprep.subr.mxu0 0.0
        %1945 = vmatpush1.msra.mxu0 %v1925
        %1946 = vmatprep.subr.mxu0 0.0
        %1947 = vmatpush1.msra.mxu0 %v1926
        %1948 = vmatprep.subr.mxu0 0.0
        %1949 = vmatpush1.msra.mxu0 %v1927
        %1950 = vmatprep.subr.mxu0 0.0
        %1951 = vmatpush1.msra.mxu0 %v1928
        %1952 = vmatprep.subr.mxu0 0.0
        %1953 = vmatpush1.msra.mxu0 %v1929
        %1954 = vmatprep.subr.mxu0 0.0
        %1955 = vmatpush1.msra.mxu0 %v1930
        %1956 = vmatprep.subr.mxu0 0.0
        %1957 = vmatpush1.msra.mxu0 %v1931
        %1958 = vmatprep.subr.mxu0 0.0
        %1959 = vmatpush1.msra.mxu0 %v1932
        %1960 = vmatprep.subr.mxu0 0.0
        %1961 = vmatpush1.msra.mxu0 %v1933
        %1962 = vmatprep.subr.mxu0 0.0
        %1963 = vmatpush1.msra.mxu0 %v1934
        %1964 = vmatprep.subr.mxu0 0.0
        %1965 = vmatpush1.msra.mxu0 %v1935
        %1966 = vmatprep.subr.mxu0 0.0
        %1967 = vmatpush1.msra.mxu0 %v1936
        %1968 = vmatprep.subr.mxu0 0.0
        %1969 = vmatpush1.msra.mxu0 %v1937
        %1970 = vmatprep.subr.mxu0 0.0
        %1971 = vmatpush1.msra.mxu0 0.0
        %1972 = vmatprep.subr.mxu0 0.0
        %1973 = vmatpush1.msra.mxu0 0.0
        %1974 = vmatprep.subr.mxu0 0.0
        %1975 = vmatpush1.msra.mxu0 0.0
        %1976 = vmatprep.subr.mxu0 0.0
        %1977 = vmatpush1.msra.mxu0 0.0
        %1978 = vmatprep.subr.mxu0 0.0
        %1979 = vmatpush1.msra.mxu0 0.0
        %1980 = vmatprep.subr.mxu0 0.0
        %1981 = vmatpush1.msra.mxu0 0.0
        %1982 = vmatprep.subr.mxu0 0.0
        %1983 = vmatpush1.msra.mxu0 0.0
        %1984 = vmatprep.subr.mxu0 0.0
        %1985 = vmatpush1.msra.mxu0 0.0
        %1986 = vmatprep.subr.mxu0 0.0
        %1987 = vmatpush1.msra.mxu0 0.0
        %1988 = vmatprep.subr.mxu0 0.0
        %1989 = vmatpush1.msra.mxu0 0.0
        %1990 = vmatprep.subr.mxu0 0.0
        %1991 = vmatpush1.msra.mxu0 0.0
        %1992 = vmatprep.subr.mxu0 0.0
        %1993 = vmatpush1.msra.mxu0 0.0
        %1994 = vmatprep.subr.mxu0 0.0
        %1995 = vmatpush1.msra.mxu0 0.0
        %1996 = vmatprep.subr.mxu0 0.0
        %1997 = vmatpush1.msra.mxu0 0.0
        %1998 = vmatprep.subr.mxu0 0.0
        %1999 = vmatpush1.msra.mxu0 0.0
        %2000 = vmatprep.subr.mxu0 0.0
        %2001 = vmatpush1.msra.mxu0 0.0
        %2002 = vmatprep.mubr.f32.mxu0 0.0
        %2003 = vmatmul.mubr.f32.gmra.mrb[0].mxu0 %v678
        %v2004 = vpop.f32.mrb[0].mxu0
        %v2005 = vadd.f32 0.0, %v2004
        %v2006 = vpop.f32.mrb[0].mxu0
        %2007 = vmatprep.mubr.f32.mxu0 0.0
        %2008 = vmatmul.mubr.f32.gmra.mrb[0].mxu0 %v680
        %v2009 = vpop.f32.mrb[0].mxu0
        %v2010 = vadd.f32 0.0, %v2009
        %v2011 = vpop.f32.mrb[0].mxu0
        %2012 = vmatprep.mubr.f32.mxu0 0.0
        %2013 = vmatmul.mubr.f32.gmra.mrb[0].mxu0 %v683
        %v2014 = vpop.f32.mrb[0].mxu0
        %v2015 = vadd.f32 0.0, %v2014
        %v2016 = vpop.f32.mrb[0].mxu0
        %2017 = vmatprep.mubr.f32.mxu0 0.0
        %2018 = vmatmul.mubr.f32.gmra.mrb[0].mxu0 %v685
        %v2019 = vpop.f32.mrb[0].mxu0
        %v2020 = vadd.f32 0.0, %v2019
        %v2021 = vpop.f32.mrb[0].mxu0
        %2022 = vmatprep.mubr.f32.mxu0 0.0
        %2023 = vmatmul.mubr.f32.gmra.mrb[0].mxu0 %v688
        %v2024 = vpop.f32.mrb[0].mxu0
        %v2025 = vadd.f32 0.0, %v2024
        %v2026 = vpop.f32.mrb[0].mxu0
        %2027 = vmatprep.mubr.f32.mxu0 0.0
        %2028 = vmatmul.mubr.f32.gmra.mrb[0].mxu0 %v690
        %v2029 = vpop.f32.mrb[0].mxu0
        %v2030 = vadd.f32 0.0, %v2029
        %v2031 = vpop.f32.mrb[0].mxu0
        %2032 = vmatprep.mubr.f32.mxu0 0.0
        %2033 = vmatmul.mubr.f32.gmra.mrb[0].mxu0 %v693
        %v2034 = vpop.f32.mrb[0].mxu0
        %v2035 = vadd.f32 0.0, %v2034
        %v2036 = vpop.f32.mrb[0].mxu0
        %2037 = vmatprep.mubr.f32.mxu0 0.0
        %2038 = vmatmul.mubr.f32.gmra.mrb[0].mxu0 %v695
        %v2039 = vpop.f32.mrb[0].mxu0
        %v2040 = vadd.f32 0.0, %v2039
        %v2041 = vpop.f32.mrb[0].mxu0
        %2042 = vmatprep.mubr.f32.mxu0 0.0
        %2043 = vmatmul.mubr.f32.gmra.mrb[0].mxu0 %v698
        %v2044 = vpop.f32.mrb[0].mxu0
        %v2045 = vadd.f32 0.0, %v2044
        %v2046 = vpop.f32.mrb[0].mxu0
        %2047 = vmatprep.mubr.f32.mxu0 0.0
        %2048 = vmatmul.mubr.f32.gmra.mrb[0].mxu0 %v700
        %v2049 = vpop.f32.mrb[0].mxu0
        %v2050 = vadd.f32 0.0, %v2049
        %v2051 = vpop.f32.mrb[0].mxu0
        %2052 = vmatprep.mubr.f32.mxu0 0.0
        %2053 = vmatmul.mubr.f32.gmra.mrb[0].mxu0 %v703
        %v2054 = vpop.f32.mrb[0].mxu0
        %v2055 = vadd.f32 0.0, %v2054
        %v2056 = vpop.f32.mrb[0].mxu0
        %2057 = vmatprep.mubr.f32.mxu0 0.0
        %2058 = vmatmul.mubr.f32.gmra.mrb[0].mxu0 %v705
        %v2059 = vpop.f32.mrb[0].mxu0
        %v2060 = vadd.f32 0.0, %v2059
        %v2061 = vpop.f32.mrb[0].mxu0
        %2062 = vmatprep.mubr.f32.mxu0 0.0
        %2063 = vmatmul.mubr.f32.gmra.mrb[0].mxu0 %v708
        %v2064 = vpop.f32.mrb[0].mxu0
        %v2065 = vadd.f32 0.0, %v2064
        %v2066 = vpop.f32.mrb[0].mxu0
        %2067 = vmatprep.mubr.f32.mxu0 0.0
        %2068 = vmatmul.mubr.f32.gmra.mrb[0].mxu0 %v710
        %v2069 = vpop.f32.mrb[0].mxu0
        %v2070 = vadd.f32 0.0, %v2069
        %v2071 = vpop.f32.mrb[0].mxu0
        %2072 = vmatprep.mubr.f32.mxu0 0.0
        %2073 = vmatmul.mubr.f32.gmra.mrb[0].mxu0 %v713
        %v2074 = vpop.f32.mrb[0].mxu0
        %v2075 = vadd.f32 0.0, %v2074
        %v2076 = vpop.f32.mrb[0].mxu0
        %2077 = vmatprep.mubr.f32.mxu0 0.0
        %2078 = vmatmul.mubr.f32.gmra.mrb[0].mxu0 %v715
        %v2079 = vpop.f32.mrb[0].mxu0
        %v2080 = vadd.f32 0.0, %v2079
        %v2081 = vpop.f32.mrb[0].mxu0
        %2082 = vmatprep.mubr.f32.mxu0 0.0
        %2083 = vmatmul.mubr.f32.gmra.mrb[0].mxu0 %v718
        %v2084 = vpop.f32.mrb[0].mxu0
        %v2085 = vadd.f32 0.0, %v2084
        %v2086 = vpop.f32.mrb[0].mxu0
        %2087 = vmatprep.mubr.f32.mxu0 0.0
        %2088 = vmatmul.mubr.f32.gmra.mrb[0].mxu0 %v720
        %v2089 = vpop.f32.mrb[0].mxu0
        %v2090 = vadd.f32 0.0, %v2089
        %v2091 = vpop.f32.mrb[0].mxu0
        %2092 = vmatprep.mubr.f32.mxu0 0.0
        %2093 = vmatmul.mubr.f32.gmra.mrb[0].mxu0 %v723
        %v2094 = vpop.f32.mrb[0].mxu0
        %v2095 = vadd.f32 0.0, %v2094
        %v2096 = vpop.f32.mrb[0].mxu0
        %2097 = vmatprep.mubr.f32.mxu0 0.0
        %2098 = vmatmul.mubr.f32.gmra.mrb[0].mxu0 %v725
        %v2099 = vpop.f32.mrb[0].mxu0
        %v2100 = vadd.f32 0.0, %v2099
        %v2101 = vpop.f32.mrb[0].mxu0
        %2102 = vmatprep.mubr.f32.mxu0 0.0
        %2103 = vmatmul.mubr.f32.gmra.mrb[0].mxu0 %v728
        %v2104 = vpop.f32.mrb[0].mxu0
        %v2105 = vadd.f32 0.0, %v2104
        %v2106 = vpop.f32.mrb[0].mxu0
        %2107 = vmatprep.mubr.f32.mxu0 0.0
        %2108 = vmatmul.mubr.f32.gmra.mrb[0].mxu0 %v730
        %v2109 = vpop.f32.mrb[0].mxu0
        %v2110 = vadd.f32 0.0, %v2109
        %v2111 = vpop.f32.mrb[0].mxu0
        %2112 = vmatprep.mubr.f32.mxu0 0.0
        %2113 = vmatmul.mubr.f32.gmra.mrb[0].mxu0 %v733
        %v2114 = vpop.f32.mrb[0].mxu0
        %v2115 = vadd.f32 0.0, %v2114
        %v2116 = vpop.f32.mrb[0].mxu0
        %2117 = vmatprep.mubr.f32.mxu0 0.0
        %2118 = vmatmul.mubr.f32.gmra.mrb[0].mxu0 %v735
        %v2119 = vpop.f32.mrb[0].mxu0
        %v2120 = vadd.f32 0.0, %v2119
        %v2121 = vpop.f32.mrb[0].mxu0
        %2122 = vmatprep.mubr.f32.mxu0 0.0
        %2123 = vmatmul.mubr.f32.gmra.mrb[0].mxu0 %v738
        %v2124 = vpop.f32.mrb[0].mxu0
        %v2125 = vadd.f32 0.0, %v2124
        %v2126 = vpop.f32.mrb[0].mxu0
        %2127 = vmatprep.mubr.f32.mxu0 0.0
        %2128 = vmatmul.mubr.f32.gmra.mrb[0].mxu0 %v740
        %v2129 = vpop.f32.mrb[0].mxu0
        %v2130 = vadd.f32 0.0, %v2129
        %v2131 = vpop.f32.mrb[0].mxu0
        %2132 = vmatprep.mubr.f32.mxu0 0.0
        %2133 = vmatmul.mubr.f32.gmra.mrb[0].mxu0 %v743
        %v2134 = vpop.f32.mrb[0].mxu0
        %v2135 = vadd.f32 0.0, %v2134
        %v2136 = vpop.f32.mrb[0].mxu0
        %2137 = vmatprep.mubr.f32.mxu0 0.0
        %2138 = vmatmul.mubr.f32.gmra.mrb[0].mxu0 %v745
        %v2139 = vpop.f32.mrb[0].mxu0
        %v2140 = vadd.f32 0.0, %v2139
        %v2141 = vpop.f32.mrb[0].mxu0
        %2142 = vmatprep.mubr.f32.mxu0 0.0
        %2143 = vmatmul.mubr.f32.gmra.mrb[0].mxu0 %v748
        %v2144 = vpop.f32.mrb[0].mxu0
        %v2145 = vadd.f32 0.0, %v2144
        %v2146 = vpop.f32.mrb[0].mxu0
        %2147 = vmatprep.mubr.f32.mxu0 0.0
        %2148 = vmatmul.mubr.f32.gmra.mrb[0].mxu0 %v750
        %v2149 = vpop.f32.mrb[0].mxu0
        %v2150 = vadd.f32 0.0, %v2149
        %v2151 = vpop.f32.mrb[0].mxu0
        %2152 = vmatprep.mubr.f32.mxu0 0.0
        %2153 = vmatmul.mubr.f32.gmra.mrb[0].mxu0 %v1916
        %v2154 = vpop.f32.mrb[0].mxu0
        %v2155 = vadd.f32 0.0, %v2154
        %v2156 = vpop.f32.mrb[0].mxu0
        %2157 = vmatprep.mubr.f32.mxu0 0.0
        %2158 = vmatmul.mubr.f32.gmra.mrb[0].mxu0 %v1918
        %v2159 = vpop.f32.mrb[0].mxu0
        %v2160 = vadd.f32 0.0, %v2159
        %v2161 = vpop.f32.mrb[0].mxu0
        %2162 = vdwg.mxu0
        %v2163 = vadd.f32 %v1879, %v2005
        %v2164 = vadd.f32 %v1880, %v2010
        %v2165 = vadd.f32 %v1881, %v2015
        %v2166 = vadd.f32 %v1882, %v2020
        %v2167 = vadd.f32 %v1883, %v2025
        %v2168 = vadd.f32 %v1884, %v2030
        %v2169 = vadd.f32 %v1885, %v2035
        %v2170 = vadd.f32 %v1886, %v2040
        %v2171 = vadd.f32 %v1887, %v2045
        %v2172 = vadd.f32 %v1888, %v2050
        %v2173 = vadd.f32 %v1889, %v2055
        %v2174 = vadd.f32 %v1890, %v2060
        %v2175 = vadd.f32 %v1891, %v2065
        %v2176 = vadd.f32 %v1892, %v2070
        %v2177 = vadd.f32 %v1893, %v2075
        %v2178 = vadd.f32 %v1894, %v2080
        %v2179 = vadd.f32 %v1895, %v2085
        %v2180 = vadd.f32 %v1896, %v2090
        %v2181 = vadd.f32 %v1897, %v2095
        %v2182 = vadd.f32 %v1898, %v2100
        %v2183 = vadd.f32 %v1899, %v2105
        %v2184 = vadd.f32 %v1900, %v2110
        %v2185 = vadd.f32 %v1901, %v2115
        %v2186 = vadd.f32 %v1902, %v2120
        %v2187 = vadd.f32 %v1903, %v2125
        %v2188 = vadd.f32 %v1904, %v2130
        %v2189 = vadd.f32 %v1905, %v2135
        %v2190 = vadd.f32 %v1906, %v2140
        %v2191 = vadd.f32 %v1907, %v2145
        %v2192 = vadd.f32 %v1908, %v2150
        %v2193 = vadd.f32 %v1909, %v2155
        %v2194 = vadd.f32 %v1910, %v2160
        %v2195 = vrot.slane %v600, 2
        %v2196 = vrot.slane %v601, 2
        %v2197 = vsel %vm1250, %v2195, %v2196
        %v2198 = vrot.slane %v602, 2
        %v2199 = vsel %vm1250, %v2196, %v2198
        %s2202 = scalar_lea.vmem [#allocation9], 640
        %v2203 = vld [vmem:[%s2202] sm:$0xff]
        %v2204 = vld [vmem:[%s2202 + $0x8] sm:$0xff]
        %v2205 = vld [vmem:[%s2202 + $0x10] sm:$0xff]
        %v2206 = vld [vmem:[%s2202 + $0x18] sm:$0xff]
        %v2207 = vld [vmem:[%s2202 + $0x20] sm:$0xff]
        %v2208 = vld [vmem:[%s2202 + $0x28] sm:$0xff]
        %v2209 = vld [vmem:[%s2202 + $0x30] sm:$0xff]
        %v2210 = vld [vmem:[%s2202 + $0x38] sm:$0xff]
        %v2211 = vld [vmem:[%s2202 + $0x40] sm:$0xff]
        %v2212 = vld [vmem:[%s2202 + $0x48] sm:$0xff]
        %v2213 = vld [vmem:[%s2202 + $0x50] sm:$0xff]
        %v2214 = vld [vmem:[%s2202 + $0x58] sm:$0xff]
        %v2215 = vld [vmem:[%s2202 + $0x60] sm:$0xff]
        %v2216 = vld [vmem:[%s2202 + $0x68] sm:$0xff]
        %v2217 = vld [vmem:[%s2202 + $0x70] sm:$0xff]
        %v2218 = vld [vmem:[%s2202 + $0x78] sm:$0xff]
        %2219 = vmatprep.subr.mxu0 0.0
        %2220 = vmatpush1.msra.mxu0 %v2203
        %2221 = vmatprep.subr.mxu0 0.0
        %2222 = vmatpush1.msra.mxu0 %v2204
        %2223 = vmatprep.subr.mxu0 0.0
        %2224 = vmatpush1.msra.mxu0 %v2205
        %2225 = vmatprep.subr.mxu0 0.0
        %2226 = vmatpush1.msra.mxu0 %v2206
        %2227 = vmatprep.subr.mxu0 0.0
        %2228 = vmatpush1.msra.mxu0 %v2207
        %2229 = vmatprep.subr.mxu0 0.0
        %2230 = vmatpush1.msra.mxu0 %v2208
        %2231 = vmatprep.subr.mxu0 0.0
        %2232 = vmatpush1.msra.mxu0 %v2209
        %2233 = vmatprep.subr.mxu0 0.0
        %2234 = vmatpush1.msra.mxu0 %v2210
        %2235 = vmatprep.subr.mxu0 0.0
        %2236 = vmatpush1.msra.mxu0 %v2211
        %2237 = vmatprep.subr.mxu0 0.0
        %2238 = vmatpush1.msra.mxu0 %v2212
        %2239 = vmatprep.subr.mxu0 0.0
        %2240 = vmatpush1.msra.mxu0 %v2213
        %2241 = vmatprep.subr.mxu0 0.0
        %2242 = vmatpush1.msra.mxu0 %v2214
        %2243 = vmatprep.subr.mxu0 0.0
        %2244 = vmatpush1.msra.mxu0 %v2215
        %2245 = vmatprep.subr.mxu0 0.0
        %2246 = vmatpush1.msra.mxu0 %v2216
        %2247 = vmatprep.subr.mxu0 0.0
        %2248 = vmatpush1.msra.mxu0 %v2217
        %2249 = vmatprep.subr.mxu0 0.0
        %2250 = vmatpush1.msra.mxu0 %v2218
        %2251 = vmatprep.subr.mxu0 0.0
        %2252 = vmatpush1.msra.mxu0 0.0
        %2253 = vmatprep.subr.mxu0 0.0
        %2254 = vmatpush1.msra.mxu0 0.0
        %2255 = vmatprep.subr.mxu0 0.0
        %2256 = vmatpush1.msra.mxu0 0.0
        %2257 = vmatprep.subr.mxu0 0.0
        %2258 = vmatpush1.msra.mxu0 0.0
        %2259 = vmatprep.subr.mxu0 0.0
        %2260 = vmatpush1.msra.mxu0 0.0
        %2261 = vmatprep.subr.mxu0 0.0
        %2262 = vmatpush1.msra.mxu0 0.0
        %2263 = vmatprep.subr.mxu0 0.0
        %2264 = vmatpush1.msra.mxu0 0.0
        %2265 = vmatprep.subr.mxu0 0.0
        %2266 = vmatpush1.msra.mxu0 0.0
        %2267 = vmatprep.subr.mxu0 0.0
        %2268 = vmatpush1.msra.mxu0 0.0
        %2269 = vmatprep.subr.mxu0 0.0
        %2270 = vmatpush1.msra.mxu0 0.0
        %2271 = vmatprep.subr.mxu0 0.0
        %2272 = vmatpush1.msra.mxu0 0.0
        %2273 = vmatprep.subr.mxu0 0.0
        %2274 = vmatpush1.msra.mxu0 0.0
        %2275 = vmatprep.subr.mxu0 0.0
        %2276 = vmatpush1.msra.mxu0 0.0
        %2277 = vmatprep.subr.mxu0 0.0
        %2278 = vmatpush1.msra.mxu0 0.0
        %2279 = vmatprep.subr.mxu0 0.0
        %2280 = vmatpush1.msra.mxu0 0.0
        %2281 = vmatprep.subr.mxu0 0.0
        %2282 = vmatpush1.msra.mxu0 0.0
        %2283 = vmatprep.mubr.f32.mxu0 0.0
        %2284 = vmatmul.mubr.f32.gmra.mrb[0].mxu0 %v1258
        %v2285 = vpop.f32.mrb[0].mxu0
        %v2286 = vadd.f32 0.0, %v2285
        %v2287 = vpop.f32.mrb[0].mxu0
        %2288 = vmatprep.mubr.f32.mxu0 0.0
        %2289 = vmatmul.mubr.f32.gmra.mrb[0].mxu0 %v1260
        %v2290 = vpop.f32.mrb[0].mxu0
        %v2291 = vadd.f32 0.0, %v2290
        %v2292 = vpop.f32.mrb[0].mxu0
        %2293 = vmatprep.mubr.f32.mxu0 0.0
        %2294 = vmatmul.mubr.f32.gmra.mrb[0].mxu0 %v1263
        %v2295 = vpop.f32.mrb[0].mxu0
        %v2296 = vadd.f32 0.0, %v2295
        %v2297 = vpop.f32.mrb[0].mxu0
        %2298 = vmatprep.mubr.f32.mxu0 0.0
        %2299 = vmatmul.mubr.f32.gmra.mrb[0].mxu0 %v1265
        %v2300 = vpop.f32.mrb[0].mxu0
        %v2301 = vadd.f32 0.0, %v2300
        %v2302 = vpop.f32.mrb[0].mxu0
        %2303 = vmatprep.mubr.f32.mxu0 0.0
        %2304 = vmatmul.mubr.f32.gmra.mrb[0].mxu0 %v1268
        %v2305 = vpop.f32.mrb[0].mxu0
        %v2306 = vadd.f32 0.0, %v2305
        %v2307 = vpop.f32.mrb[0].mxu0
        %2308 = vmatprep.mubr.f32.mxu0 0.0
        %2309 = vmatmul.mubr.f32.gmra.mrb[0].mxu0 %v1270
        %v2310 = vpop.f32.mrb[0].mxu0
        %v2311 = vadd.f32 0.0, %v2310
        %v2312 = vpop.f32.mrb[0].mxu0
        %2313 = vmatprep.mubr.f32.mxu0 0.0
        %2314 = vmatmul.mubr.f32.gmra.mrb[0].mxu0 %v1273
        %v2315 = vpop.f32.mrb[0].mxu0
        %v2316 = vadd.f32 0.0, %v2315
        %v2317 = vpop.f32.mrb[0].mxu0
        %2318 = vmatprep.mubr.f32.mxu0 0.0
        %2319 = vmatmul.mubr.f32.gmra.mrb[0].mxu0 %v1275
        %v2320 = vpop.f32.mrb[0].mxu0
        %v2321 = vadd.f32 0.0, %v2320
        %v2322 = vpop.f32.mrb[0].mxu0
        %2323 = vmatprep.mubr.f32.mxu0 0.0
        %2324 = vmatmul.mubr.f32.gmra.mrb[0].mxu0 %v1278
        %v2325 = vpop.f32.mrb[0].mxu0
        %v2326 = vadd.f32 0.0, %v2325
        %v2327 = vpop.f32.mrb[0].mxu0
        %2328 = vmatprep.mubr.f32.mxu0 0.0
        %2329 = vmatmul.mubr.f32.gmra.mrb[0].mxu0 %v1280
        %v2330 = vpop.f32.mrb[0].mxu0
        %v2331 = vadd.f32 0.0, %v2330
        %v2332 = vpop.f32.mrb[0].mxu0
        %2333 = vmatprep.mubr.f32.mxu0 0.0
        %2334 = vmatmul.mubr.f32.gmra.mrb[0].mxu0 %v1283
        %v2335 = vpop.f32.mrb[0].mxu0
        %v2336 = vadd.f32 0.0, %v2335
        %v2337 = vpop.f32.mrb[0].mxu0
        %2338 = vmatprep.mubr.f32.mxu0 0.0
        %2339 = vmatmul.mubr.f32.gmra.mrb[0].mxu0 %v1285
        %v2340 = vpop.f32.mrb[0].mxu0
        %v2341 = vadd.f32 0.0, %v2340
        %v2342 = vpop.f32.mrb[0].mxu0
        %2343 = vmatprep.mubr.f32.mxu0 0.0
        %2344 = vmatmul.mubr.f32.gmra.mrb[0].mxu0 %v1288
        %v2345 = vpop.f32.mrb[0].mxu0
        %v2346 = vadd.f32 0.0, %v2345
        %v2347 = vpop.f32.mrb[0].mxu0
        %2348 = vmatprep.mubr.f32.mxu0 0.0
        %2349 = vmatmul.mubr.f32.gmra.mrb[0].mxu0 %v1290
        %v2350 = vpop.f32.mrb[0].mxu0
        %v2351 = vadd.f32 0.0, %v2350
        %v2352 = vpop.f32.mrb[0].mxu0
        %2353 = vmatprep.mubr.f32.mxu0 0.0
        %2354 = vmatmul.mubr.f32.gmra.mrb[0].mxu0 %v1293
        %v2355 = vpop.f32.mrb[0].mxu0
        %v2356 = vadd.f32 0.0, %v2355
        %v2357 = vpop.f32.mrb[0].mxu0
        %2358 = vmatprep.mubr.f32.mxu0 0.0
        %2359 = vmatmul.mubr.f32.gmra.mrb[0].mxu0 %v1295
        %v2360 = vpop.f32.mrb[0].mxu0
        %v2361 = vadd.f32 0.0, %v2360
        %v2362 = vpop.f32.mrb[0].mxu0
        %2363 = vmatprep.mubr.f32.mxu0 0.0
        %2364 = vmatmul.mubr.f32.gmra.mrb[0].mxu0 %v1298
        %v2365 = vpop.f32.mrb[0].mxu0
        %v2366 = vadd.f32 0.0, %v2365
        %v2367 = vpop.f32.mrb[0].mxu0
        %2368 = vmatprep.mubr.f32.mxu0 0.0
        %2369 = vmatmul.mubr.f32.gmra.mrb[0].mxu0 %v1300
        %v2370 = vpop.f32.mrb[0].mxu0
        %v2371 = vadd.f32 0.0, %v2370
        %v2372 = vpop.f32.mrb[0].mxu0
        %2373 = vmatprep.mubr.f32.mxu0 0.0
        %2374 = vmatmul.mubr.f32.gmra.mrb[0].mxu0 %v1303
        %v2375 = vpop.f32.mrb[0].mxu0
        %v2376 = vadd.f32 0.0, %v2375
        %v2377 = vpop.f32.mrb[0].mxu0
        %2378 = vmatprep.mubr.f32.mxu0 0.0
        %2379 = vmatmul.mubr.f32.gmra.mrb[0].mxu0 %v1305
        %v2380 = vpop.f32.mrb[0].mxu0
        %v2381 = vadd.f32 0.0, %v2380
        %v2382 = vpop.f32.mrb[0].mxu0
        %2383 = vmatprep.mubr.f32.mxu0 0.0
        %2384 = vmatmul.mubr.f32.gmra.mrb[0].mxu0 %v1308
        %v2385 = vpop.f32.mrb[0].mxu0
        %v2386 = vadd.f32 0.0, %v2385
        %v2387 = vpop.f32.mrb[0].mxu0
        %2388 = vmatprep.mubr.f32.mxu0 0.0
        %2389 = vmatmul.mubr.f32.gmra.mrb[0].mxu0 %v1310
        %v2390 = vpop.f32.mrb[0].mxu0
        %v2391 = vadd.f32 0.0, %v2390
        %v2392 = vpop.f32.mrb[0].mxu0
        %2393 = vmatprep.mubr.f32.mxu0 0.0
        %2394 = vmatmul.mubr.f32.gmra.mrb[0].mxu0 %v1313
        %v2395 = vpop.f32.mrb[0].mxu0
        %v2396 = vadd.f32 0.0, %v2395
        %v2397 = vpop.f32.mrb[0].mxu0
        %2398 = vmatprep.mubr.f32.mxu0 0.0
        %2399 = vmatmul.mubr.f32.gmra.mrb[0].mxu0 %v1315
        %v2400 = vpop.f32.mrb[0].mxu0
        %v2401 = vadd.f32 0.0, %v2400
        %v2402 = vpop.f32.mrb[0].mxu0
        %2403 = vmatprep.mubr.f32.mxu0 0.0
        %2404 = vmatmul.mubr.f32.gmra.mrb[0].mxu0 %v1318
        %v2405 = vpop.f32.mrb[0].mxu0
        %v2406 = vadd.f32 0.0, %v2405
        %v2407 = vpop.f32.mrb[0].mxu0
        %2408 = vmatprep.mubr.f32.mxu0 0.0
        %2409 = vmatmul.mubr.f32.gmra.mrb[0].mxu0 %v1320
        %v2410 = vpop.f32.mrb[0].mxu0
        %v2411 = vadd.f32 0.0, %v2410
        %v2412 = vpop.f32.mrb[0].mxu0
        %2413 = vmatprep.mubr.f32.mxu0 0.0
        %2414 = vmatmul.mubr.f32.gmra.mrb[0].mxu0 %v1323
        %v2415 = vpop.f32.mrb[0].mxu0
        %v2416 = vadd.f32 0.0, %v2415
        %v2417 = vpop.f32.mrb[0].mxu0
        %2418 = vmatprep.mubr.f32.mxu0 0.0
        %2419 = vmatmul.mubr.f32.gmra.mrb[0].mxu0 %v1325
        %v2420 = vpop.f32.mrb[0].mxu0
        %v2421 = vadd.f32 0.0, %v2420
        %v2422 = vpop.f32.mrb[0].mxu0
        %2423 = vmatprep.mubr.f32.mxu0 0.0
        %2424 = vmatmul.mubr.f32.gmra.mrb[0].mxu0 %v1328
        %v2425 = vpop.f32.mrb[0].mxu0
        %v2426 = vadd.f32 0.0, %v2425
        %v2427 = vpop.f32.mrb[0].mxu0
        %2428 = vmatprep.mubr.f32.mxu0 0.0
        %2429 = vmatmul.mubr.f32.gmra.mrb[0].mxu0 %v1330
        %v2430 = vpop.f32.mrb[0].mxu0
        %v2431 = vadd.f32 0.0, %v2430
        %v2432 = vpop.f32.mrb[0].mxu0
        %2433 = vmatprep.mubr.f32.mxu0 0.0
        %2434 = vmatmul.mubr.f32.gmra.mrb[0].mxu0 %v2197
        %v2435 = vpop.f32.mrb[0].mxu0
        %v2436 = vadd.f32 0.0, %v2435
        %v2437 = vpop.f32.mrb[0].mxu0
        %2438 = vmatprep.mubr.f32.mxu0 0.0
        %2439 = vmatmul.mubr.f32.gmra.mrb[0].mxu0 %v2199
        %v2440 = vpop.f32.mrb[0].mxu0
        %v2441 = vadd.f32 0.0, %v2440
        %v2442 = vpop.f32.mrb[0].mxu0
        %2443 = vdwg.mxu0
        %v2444 = vadd.f32 %v2163, %v2286
        %v2445 = vadd.f32 %v2164, %v2291
        %v2446 = vadd.f32 %v2165, %v2296
        %v2447 = vadd.f32 %v2166, %v2301
        %v2448 = vadd.f32 %v2167, %v2306
        %v2449 = vadd.f32 %v2168, %v2311
        %v2450 = vadd.f32 %v2169, %v2316
        %v2451 = vadd.f32 %v2170, %v2321
        %v2452 = vadd.f32 %v2171, %v2326
        %v2453 = vadd.f32 %v2172, %v2331
        %v2454 = vadd.f32 %v2173, %v2336
        %v2455 = vadd.f32 %v2174, %v2341
        %v2456 = vadd.f32 %v2175, %v2346
        %v2457 = vadd.f32 %v2176, %v2351
        %v2458 = vadd.f32 %v2177, %v2356
        %v2459 = vadd.f32 %v2178, %v2361
        %v2460 = vadd.f32 %v2179, %v2366
        %v2461 = vadd.f32 %v2180, %v2371
        %v2462 = vadd.f32 %v2181, %v2376
        %v2463 = vadd.f32 %v2182, %v2381
        %v2464 = vadd.f32 %v2183, %v2386
        %v2465 = vadd.f32 %v2184, %v2391
        %v2466 = vadd.f32 %v2185, %v2396
        %v2467 = vadd.f32 %v2186, %v2401
        %v2468 = vadd.f32 %v2187, %v2406
        %v2469 = vadd.f32 %v2188, %v2411
        %v2470 = vadd.f32 %v2189, %v2416
        %v2471 = vadd.f32 %v2190, %v2421
        %v2472 = vadd.f32 %v2191, %v2426
        %v2473 = vadd.f32 %v2192, %v2431
        %v2474 = vadd.f32 %v2193, %v2436
        %v2475 = vadd.f32 %v2194, %v2441
        %s2476 = scalar_lea.vmem [#allocation9], 768
        %v2477 = vld [vmem:[%s2476] sm:$0xff]
        %v2478 = vld [vmem:[%s2476 + $0x8] sm:$0xff]
        %v2479 = vld [vmem:[%s2476 + $0x10] sm:$0xff]
        %v2480 = vld [vmem:[%s2476 + $0x18] sm:$0xff]
        %v2481 = vld [vmem:[%s2476 + $0x20] sm:$0xff]
        %v2482 = vld [vmem:[%s2476 + $0x28] sm:$0xff]
        %v2483 = vld [vmem:[%s2476 + $0x30] sm:$0xff]
        %v2484 = vld [vmem:[%s2476 + $0x38] sm:$0xff]
        %v2485 = vld [vmem:[%s2476 + $0x40] sm:$0xff]
        %v2486 = vld [vmem:[%s2476 + $0x48] sm:$0xff]
        %v2487 = vld [vmem:[%s2476 + $0x50] sm:$0xff]
        %v2488 = vld [vmem:[%s2476 + $0x58] sm:$0xff]
        %v2489 = vld [vmem:[%s2476 + $0x60] sm:$0xff]
        %v2490 = vld [vmem:[%s2476 + $0x68] sm:$0xff]
        %v2491 = vld [vmem:[%s2476 + $0x70] sm:$0xff]
        %v2492 = vld [vmem:[%s2476 + $0x78] sm:$0xff]
        %2493 = vmatprep.subr.mxu0 0.0
        %2494 = vmatpush1.msra.mxu0 %v2477
        %2495 = vmatprep.subr.mxu0 0.0
        %2496 = vmatpush1.msra.mxu0 %v2478
        %2497 = vmatprep.subr.mxu0 0.0
        %2498 = vmatpush1.msra.mxu0 %v2479
        %2499 = vmatprep.subr.mxu0 0.0
        %2500 = vmatpush1.msra.mxu0 %v2480
        %2501 = vmatprep.subr.mxu0 0.0
        %2502 = vmatpush1.msra.mxu0 %v2481
        %2503 = vmatprep.subr.mxu0 0.0
        %2504 = vmatpush1.msra.mxu0 %v2482
        %2505 = vmatprep.subr.mxu0 0.0
        %2506 = vmatpush1.msra.mxu0 %v2483
        %2507 = vmatprep.subr.mxu0 0.0
        %2508 = vmatpush1.msra.mxu0 %v2484
        %2509 = vmatprep.subr.mxu0 0.0
        %2510 = vmatpush1.msra.mxu0 %v2485
        %2511 = vmatprep.subr.mxu0 0.0
        %2512 = vmatpush1.msra.mxu0 %v2486
        %2513 = vmatprep.subr.mxu0 0.0
        %2514 = vmatpush1.msra.mxu0 %v2487
        %2515 = vmatprep.subr.mxu0 0.0
        %2516 = vmatpush1.msra.mxu0 %v2488
        %2517 = vmatprep.subr.mxu0 0.0
        %2518 = vmatpush1.msra.mxu0 %v2489
        %2519 = vmatprep.subr.mxu0 0.0
        %2520 = vmatpush1.msra.mxu0 %v2490
        %2521 = vmatprep.subr.mxu0 0.0
        %2522 = vmatpush1.msra.mxu0 %v2491
        %2523 = vmatprep.subr.mxu0 0.0
        %2524 = vmatpush1.msra.mxu0 %v2492
        %2525 = vmatprep.subr.mxu0 0.0
        %2526 = vmatpush1.msra.mxu0 0.0
        %2527 = vmatprep.subr.mxu0 0.0
        %2528 = vmatpush1.msra.mxu0 0.0
        %2529 = vmatprep.subr.mxu0 0.0
        %2530 = vmatpush1.msra.mxu0 0.0
        %2531 = vmatprep.subr.mxu0 0.0
        %2532 = vmatpush1.msra.mxu0 0.0
        %2533 = vmatprep.subr.mxu0 0.0
        %2534 = vmatpush1.msra.mxu0 0.0
        %2535 = vmatprep.subr.mxu0 0.0
        %2536 = vmatpush1.msra.mxu0 0.0
        %2537 = vmatprep.subr.mxu0 0.0
        %2538 = vmatpush1.msra.mxu0 0.0
        %2539 = vmatprep.subr.mxu0 0.0
        %2540 = vmatpush1.msra.mxu0 0.0
        %2541 = vmatprep.subr.mxu0 0.0
        %2542 = vmatpush1.msra.mxu0 0.0
        %2543 = vmatprep.subr.mxu0 0.0
        %2544 = vmatpush1.msra.mxu0 0.0
        %2545 = vmatprep.subr.mxu0 0.0
        %2546 = vmatpush1.msra.mxu0 0.0
        %2547 = vmatprep.subr.mxu0 0.0
        %2548 = vmatpush1.msra.mxu0 0.0
        %2549 = vmatprep.subr.mxu0 0.0
        %2550 = vmatpush1.msra.mxu0 0.0
        %2551 = vmatprep.subr.mxu0 0.0
        %2552 = vmatpush1.msra.mxu0 0.0
        %2553 = vmatprep.subr.mxu0 0.0
        %2554 = vmatpush1.msra.mxu0 0.0
        %2555 = vmatprep.subr.mxu0 0.0
        %2556 = vmatpush1.msra.mxu0 0.0
        %2557 = vmatprep.mubr.f32.mxu0 0.0
        %2558 = vmatmul.mubr.f32.gmra.mrb[0].mxu0 %v558
        %v2559 = vpop.f32.mrb[0].mxu0
        %v2560 = vadd.f32 0.0, %v2559
        %v2561 = vpop.f32.mrb[0].mxu0
        %2562 = vmatprep.mubr.f32.mxu0 0.0
        %2563 = vmatmul.mubr.f32.gmra.mrb[0].mxu0 %v559
        %v2564 = vpop.f32.mrb[0].mxu0
        %v2565 = vadd.f32 0.0, %v2564
        %v2566 = vpop.f32.mrb[0].mxu0
        %2567 = vmatprep.mubr.f32.mxu0 0.0
        %2568 = vmatmul.mubr.f32.gmra.mrb[0].mxu0 %v561
        %v2569 = vpop.f32.mrb[0].mxu0
        %v2570 = vadd.f32 0.0, %v2569
        %v2571 = vpop.f32.mrb[0].mxu0
        %2572 = vmatprep.mubr.f32.mxu0 0.0
        %2573 = vmatmul.mubr.f32.gmra.mrb[0].mxu0 %v562
        %v2574 = vpop.f32.mrb[0].mxu0
        %v2575 = vadd.f32 0.0, %v2574
        %v2576 = vpop.f32.mrb[0].mxu0
        %2577 = vmatprep.mubr.f32.mxu0 0.0
        %2578 = vmatmul.mubr.f32.gmra.mrb[0].mxu0 %v564
        %v2579 = vpop.f32.mrb[0].mxu0
        %v2580 = vadd.f32 0.0, %v2579
        %v2581 = vpop.f32.mrb[0].mxu0
        %2582 = vmatprep.mubr.f32.mxu0 0.0
        %2583 = vmatmul.mubr.f32.gmra.mrb[0].mxu0 %v565
        %v2584 = vpop.f32.mrb[0].mxu0
        %v2585 = vadd.f32 0.0, %v2584
        %v2586 = vpop.f32.mrb[0].mxu0
        %2587 = vmatprep.mubr.f32.mxu0 0.0
        %2588 = vmatmul.mubr.f32.gmra.mrb[0].mxu0 %v567
        %v2589 = vpop.f32.mrb[0].mxu0
        %v2590 = vadd.f32 0.0, %v2589
        %v2591 = vpop.f32.mrb[0].mxu0
        %2592 = vmatprep.mubr.f32.mxu0 0.0
        %2593 = vmatmul.mubr.f32.gmra.mrb[0].mxu0 %v568
        %v2594 = vpop.f32.mrb[0].mxu0
        %v2595 = vadd.f32 0.0, %v2594
        %v2596 = vpop.f32.mrb[0].mxu0
        %2597 = vmatprep.mubr.f32.mxu0 0.0
        %2598 = vmatmul.mubr.f32.gmra.mrb[0].mxu0 %v570
        %v2599 = vpop.f32.mrb[0].mxu0
        %v2600 = vadd.f32 0.0, %v2599
        %v2601 = vpop.f32.mrb[0].mxu0
        %2602 = vmatprep.mubr.f32.mxu0 0.0
        %2603 = vmatmul.mubr.f32.gmra.mrb[0].mxu0 %v571
        %v2604 = vpop.f32.mrb[0].mxu0
        %v2605 = vadd.f32 0.0, %v2604
        %v2606 = vpop.f32.mrb[0].mxu0
        %2607 = vmatprep.mubr.f32.mxu0 0.0
        %2608 = vmatmul.mubr.f32.gmra.mrb[0].mxu0 %v573
        %v2609 = vpop.f32.mrb[0].mxu0
        %v2610 = vadd.f32 0.0, %v2609
        %v2611 = vpop.f32.mrb[0].mxu0
        %2612 = vmatprep.mubr.f32.mxu0 0.0
        %2613 = vmatmul.mubr.f32.gmra.mrb[0].mxu0 %v574
        %v2614 = vpop.f32.mrb[0].mxu0
        %v2615 = vadd.f32 0.0, %v2614
        %v2616 = vpop.f32.mrb[0].mxu0
        %2617 = vmatprep.mubr.f32.mxu0 0.0
        %2618 = vmatmul.mubr.f32.gmra.mrb[0].mxu0 %v576
        %v2619 = vpop.f32.mrb[0].mxu0
        %v2620 = vadd.f32 0.0, %v2619
        %v2621 = vpop.f32.mrb[0].mxu0
        %2622 = vmatprep.mubr.f32.mxu0 0.0
        %2623 = vmatmul.mubr.f32.gmra.mrb[0].mxu0 %v577
        %v2624 = vpop.f32.mrb[0].mxu0
        %v2625 = vadd.f32 0.0, %v2624
        %v2626 = vpop.f32.mrb[0].mxu0
        %2627 = vmatprep.mubr.f32.mxu0 0.0
        %2628 = vmatmul.mubr.f32.gmra.mrb[0].mxu0 %v579
        %v2629 = vpop.f32.mrb[0].mxu0
        %v2630 = vadd.f32 0.0, %v2629
        %v2631 = vpop.f32.mrb[0].mxu0
        %2632 = vmatprep.mubr.f32.mxu0 0.0
        %2633 = vmatmul.mubr.f32.gmra.mrb[0].mxu0 %v580
        %v2634 = vpop.f32.mrb[0].mxu0
        %v2635 = vadd.f32 0.0, %v2634
        %v2636 = vpop.f32.mrb[0].mxu0
        %2637 = vmatprep.mubr.f32.mxu0 0.0
        %2638 = vmatmul.mubr.f32.gmra.mrb[0].mxu0 %v582
        %v2639 = vpop.f32.mrb[0].mxu0
        %v2640 = vadd.f32 0.0, %v2639
        %v2641 = vpop.f32.mrb[0].mxu0
        %2642 = vmatprep.mubr.f32.mxu0 0.0
        %2643 = vmatmul.mubr.f32.gmra.mrb[0].mxu0 %v583
        %v2644 = vpop.f32.mrb[0].mxu0
        %v2645 = vadd.f32 0.0, %v2644
        %v2646 = vpop.f32.mrb[0].mxu0
        %2647 = vmatprep.mubr.f32.mxu0 0.0
        %2648 = vmatmul.mubr.f32.gmra.mrb[0].mxu0 %v585
        %v2649 = vpop.f32.mrb[0].mxu0
        %v2650 = vadd.f32 0.0, %v2649
        %v2651 = vpop.f32.mrb[0].mxu0
        %2652 = vmatprep.mubr.f32.mxu0 0.0
        %2653 = vmatmul.mubr.f32.gmra.mrb[0].mxu0 %v586
        %v2654 = vpop.f32.mrb[0].mxu0
        %v2655 = vadd.f32 0.0, %v2654
        %v2656 = vpop.f32.mrb[0].mxu0
        %2657 = vmatprep.mubr.f32.mxu0 0.0
        %2658 = vmatmul.mubr.f32.gmra.mrb[0].mxu0 %v588
        %v2659 = vpop.f32.mrb[0].mxu0
        %v2660 = vadd.f32 0.0, %v2659
        %v2661 = vpop.f32.mrb[0].mxu0
        %2662 = vmatprep.mubr.f32.mxu0 0.0
        %2663 = vmatmul.mubr.f32.gmra.mrb[0].mxu0 %v589
        %v2664 = vpop.f32.mrb[0].mxu0
        %v2665 = vadd.f32 0.0, %v2664
        %v2666 = vpop.f32.mrb[0].mxu0
        %2667 = vmatprep.mubr.f32.mxu0 0.0
        %2668 = vmatmul.mubr.f32.gmra.mrb[0].mxu0 %v591
        %v2669 = vpop.f32.mrb[0].mxu0
        %v2670 = vadd.f32 0.0, %v2669
        %v2671 = vpop.f32.mrb[0].mxu0
        %2672 = vmatprep.mubr.f32.mxu0 0.0
        %2673 = vmatmul.mubr.f32.gmra.mrb[0].mxu0 %v592
        %v2674 = vpop.f32.mrb[0].mxu0
        %v2675 = vadd.f32 0.0, %v2674
        %v2676 = vpop.f32.mrb[0].mxu0
        %2677 = vmatprep.mubr.f32.mxu0 0.0
        %2678 = vmatmul.mubr.f32.gmra.mrb[0].mxu0 %v594
        %v2679 = vpop.f32.mrb[0].mxu0
        %v2680 = vadd.f32 0.0, %v2679
        %v2681 = vpop.f32.mrb[0].mxu0
        %2682 = vmatprep.mubr.f32.mxu0 0.0
        %2683 = vmatmul.mubr.f32.gmra.mrb[0].mxu0 %v595
        %v2684 = vpop.f32.mrb[0].mxu0
        %v2685 = vadd.f32 0.0, %v2684
        %v2686 = vpop.f32.mrb[0].mxu0
        %2687 = vmatprep.mubr.f32.mxu0 0.0
        %2688 = vmatmul.mubr.f32.gmra.mrb[0].mxu0 %v597
        %v2689 = vpop.f32.mrb[0].mxu0
        %v2690 = vadd.f32 0.0, %v2689
        %v2691 = vpop.f32.mrb[0].mxu0
        %2692 = vmatprep.mubr.f32.mxu0 0.0
        %2693 = vmatmul.mubr.f32.gmra.mrb[0].mxu0 %v598
        %v2694 = vpop.f32.mrb[0].mxu0
        %v2695 = vadd.f32 0.0, %v2694
        %v2696 = vpop.f32.mrb[0].mxu0
        %2697 = vmatprep.mubr.f32.mxu0 0.0
        %2698 = vmatmul.mubr.f32.gmra.mrb[0].mxu0 %v600
        %v2699 = vpop.f32.mrb[0].mxu0
        %v2700 = vadd.f32 0.0, %v2699
        %v2701 = vpop.f32.mrb[0].mxu0
        %2702 = vmatprep.mubr.f32.mxu0 0.0
        %2703 = vmatmul.mubr.f32.gmra.mrb[0].mxu0 %v601
        %v2704 = vpop.f32.mrb[0].mxu0
        %v2705 = vadd.f32 0.0, %v2704
        %v2706 = vpop.f32.mrb[0].mxu0
        %2707 = vmatprep.mubr.f32.mxu0 0.0
        %2708 = vmatmul.mubr.f32.gmra.mrb[0].mxu0 %v603
        %v2709 = vpop.f32.mrb[0].mxu0
        %v2710 = vadd.f32 0.0, %v2709
        %v2711 = vpop.f32.mrb[0].mxu0
        %2712 = vmatprep.mubr.f32.mxu0 0.0
        %2713 = vmatmul.mubr.f32.gmra.mrb[0].mxu0 %v604
        %v2714 = vpop.f32.mrb[0].mxu0
        %v2715 = vadd.f32 0.0, %v2714
        %v2716 = vpop.f32.mrb[0].mxu0
        %2717 = vdwg.mxu0
        %v2718 = vadd.f32 %v2444, %v2560
        %v2719 = vadd.f32 %v2445, %v2565
        %v2720 = vadd.f32 %v2446, %v2570
        %v2721 = vadd.f32 %v2447, %v2575
        %v2722 = vadd.f32 %v2448, %v2580
        %v2723 = vadd.f32 %v2449, %v2585
        %v2724 = vadd.f32 %v2450, %v2590
        %v2725 = vadd.f32 %v2451, %v2595
        %v2726 = vadd.f32 %v2452, %v2600
        %v2727 = vadd.f32 %v2453, %v2605
        %v2728 = vadd.f32 %v2454, %v2610
        %v2729 = vadd.f32 %v2455, %v2615
        %v2730 = vadd.f32 %v2456, %v2620
        %v2731 = vadd.f32 %v2457, %v2625
        %v2732 = vadd.f32 %v2458, %v2630
        %v2733 = vadd.f32 %v2459, %v2635
        %v2734 = vadd.f32 %v2460, %v2640
        %v2735 = vadd.f32 %v2461, %v2645
        %v2736 = vadd.f32 %v2462, %v2650
        %v2737 = vadd.f32 %v2463, %v2655
        %v2738 = vadd.f32 %v2464, %v2660
        %v2739 = vadd.f32 %v2465, %v2665
        %v2740 = vadd.f32 %v2466, %v2670
        %v2741 = vadd.f32 %v2467, %v2675
        %v2742 = vadd.f32 %v2468, %v2680
        %v2743 = vadd.f32 %v2469, %v2685
        %v2744 = vadd.f32 %v2470, %v2690
        %v2745 = vadd.f32 %v2471, %v2695
        %v2746 = vadd.f32 %v2472, %v2700
        %v2747 = vadd.f32 %v2473, %v2705
        %v2748 = vadd.f32 %v2474, %v2710
        %v2749 = vadd.f32 %v2475, %v2715
        %v2753 = vrot.slane %v603, 1
        %v2754 = vrot.slane %v604, 1
        %v2755 = vsel %vm670, %v2753, %v2754
        %v2756 = vrot.slane %v605, 1
        %v2757 = vsel %vm670, %v2754, %v2756
        %s2760 = scalar_lea.vmem [#allocation9], 896
        %v2761 = vld [vmem:[%s2760] sm:$0xff]
        %v2762 = vld [vmem:[%s2760 + $0x8] sm:$0xff]
        %v2763 = vld [vmem:[%s2760 + $0x10] sm:$0xff]
        %v2764 = vld [vmem:[%s2760 + $0x18] sm:$0xff]
        %v2765 = vld [vmem:[%s2760 + $0x20] sm:$0xff]
        %v2766 = vld [vmem:[%s2760 + $0x28] sm:$0xff]
        %v2767 = vld [vmem:[%s2760 + $0x30] sm:$0xff]
        %v2768 = vld [vmem:[%s2760 + $0x38] sm:$0xff]
        %v2769 = vld [vmem:[%s2760 + $0x40] sm:$0xff]
        %v2770 = vld [vmem:[%s2760 + $0x48] sm:$0xff]
        %v2771 = vld [vmem:[%s2760 + $0x50] sm:$0xff]
        %v2772 = vld [vmem:[%s2760 + $0x58] sm:$0xff]
        %v2773 = vld [vmem:[%s2760 + $0x60] sm:$0xff]
        %v2774 = vld [vmem:[%s2760 + $0x68] sm:$0xff]
        %v2775 = vld [vmem:[%s2760 + $0x70] sm:$0xff]
        %v2776 = vld [vmem:[%s2760 + $0x78] sm:$0xff]
        %2777 = vmatprep.subr.mxu0 0.0
        %2778 = vmatpush1.msra.mxu0 %v2761
        %2779 = vmatprep.subr.mxu0 0.0
        %2780 = vmatpush1.msra.mxu0 %v2762
        %2781 = vmatprep.subr.mxu0 0.0
        %2782 = vmatpush1.msra.mxu0 %v2763
        %2783 = vmatprep.subr.mxu0 0.0
        %2784 = vmatpush1.msra.mxu0 %v2764
        %2785 = vmatprep.subr.mxu0 0.0
        %2786 = vmatpush1.msra.mxu0 %v2765
        %2787 = vmatprep.subr.mxu0 0.0
        %2788 = vmatpush1.msra.mxu0 %v2766
        %2789 = vmatprep.subr.mxu0 0.0
        %2790 = vmatpush1.msra.mxu0 %v2767
        %2791 = vmatprep.subr.mxu0 0.0
        %2792 = vmatpush1.msra.mxu0 %v2768
        %2793 = vmatprep.subr.mxu0 0.0
        %2794 = vmatpush1.msra.mxu0 %v2769
        %2795 = vmatprep.subr.mxu0 0.0
        %2796 = vmatpush1.msra.mxu0 %v2770
        %2797 = vmatprep.subr.mxu0 0.0
        %2798 = vmatpush1.msra.mxu0 %v2771
        %2799 = vmatprep.subr.mxu0 0.0
        %2800 = vmatpush1.msra.mxu0 %v2772
        %2801 = vmatprep.subr.mxu0 0.0
        %2802 = vmatpush1.msra.mxu0 %v2773
        %2803 = vmatprep.subr.mxu0 0.0
        %2804 = vmatpush1.msra.mxu0 %v2774
        %2805 = vmatprep.subr.mxu0 0.0
        %2806 = vmatpush1.msra.mxu0 %v2775
        %2807 = vmatprep.subr.mxu0 0.0
        %2808 = vmatpush1.msra.mxu0 %v2776
        %2809 = vmatprep.subr.mxu0 0.0
        %2810 = vmatpush1.msra.mxu0 0.0
        %2811 = vmatprep.subr.mxu0 0.0
        %2812 = vmatpush1.msra.mxu0 0.0
        %2813 = vmatprep.subr.mxu0 0.0
        %2814 = vmatpush1.msra.mxu0 0.0
        %2815 = vmatprep.subr.mxu0 0.0
        %2816 = vmatpush1.msra.mxu0 0.0
        %2817 = vmatprep.subr.mxu0 0.0
        %2818 = vmatpush1.msra.mxu0 0.0
        %2819 = vmatprep.subr.mxu0 0.0
        %2820 = vmatpush1.msra.mxu0 0.0
        %2821 = vmatprep.subr.mxu0 0.0
        %2822 = vmatpush1.msra.mxu0 0.0
        %2823 = vmatprep.subr.mxu0 0.0
        %2824 = vmatpush1.msra.mxu0 0.0
        %2825 = vmatprep.subr.mxu0 0.0
        %2826 = vmatpush1.msra.mxu0 0.0
        %2827 = vmatprep.subr.mxu0 0.0
        %2828 = vmatpush1.msra.mxu0 0.0
        %2829 = vmatprep.subr.mxu0 0.0
        %2830 = vmatpush1.msra.mxu0 0.0
        %2831 = vmatprep.subr.mxu0 0.0
        %2832 = vmatpush1.msra.mxu0 0.0
        %2833 = vmatprep.subr.mxu0 0.0
        %2834 = vmatpush1.msra.mxu0 0.0
        %2835 = vmatprep.subr.mxu0 0.0
        %2836 = vmatpush1.msra.mxu0 0.0
        %2837 = vmatprep.subr.mxu0 0.0
        %2838 = vmatpush1.msra.mxu0 0.0
        %2839 = vmatprep.subr.mxu0 0.0
        %2840 = vmatpush1.msra.mxu0 0.0
        %2841 = vmatprep.mubr.f32.mxu0 0.0
        %2842 = vmatmul.mubr.f32.gmra.mrb[0].mxu0 %v683
        %v2843 = vpop.f32.mrb[0].mxu0
        %v2844 = vadd.f32 0.0, %v2843
        %v2845 = vpop.f32.mrb[0].mxu0
        %2846 = vmatprep.mubr.f32.mxu0 0.0
        %2847 = vmatmul.mubr.f32.gmra.mrb[0].mxu0 %v685
        %v2848 = vpop.f32.mrb[0].mxu0
        %v2849 = vadd.f32 0.0, %v2848
        %v2850 = vpop.f32.mrb[0].mxu0
        %2851 = vmatprep.mubr.f32.mxu0 0.0
        %2852 = vmatmul.mubr.f32.gmra.mrb[0].mxu0 %v688
        %v2853 = vpop.f32.mrb[0].mxu0
        %v2854 = vadd.f32 0.0, %v2853
        %v2855 = vpop.f32.mrb[0].mxu0
        %2856 = vmatprep.mubr.f32.mxu0 0.0
        %2857 = vmatmul.mubr.f32.gmra.mrb[0].mxu0 %v690
        %v2858 = vpop.f32.mrb[0].mxu0
        %v2859 = vadd.f32 0.0, %v2858
        %v2860 = vpop.f32.mrb[0].mxu0
        %2861 = vmatprep.mubr.f32.mxu0 0.0
        %2862 = vmatmul.mubr.f32.gmra.mrb[0].mxu0 %v693
        %v2863 = vpop.f32.mrb[0].mxu0
        %v2864 = vadd.f32 0.0, %v2863
        %v2865 = vpop.f32.mrb[0].mxu0
        %2866 = vmatprep.mubr.f32.mxu0 0.0
        %2867 = vmatmul.mubr.f32.gmra.mrb[0].mxu0 %v695
        %v2868 = vpop.f32.mrb[0].mxu0
        %v2869 = vadd.f32 0.0, %v2868
        %v2870 = vpop.f32.mrb[0].mxu0
        %2871 = vmatprep.mubr.f32.mxu0 0.0
        %2872 = vmatmul.mubr.f32.gmra.mrb[0].mxu0 %v698
        %v2873 = vpop.f32.mrb[0].mxu0
        %v2874 = vadd.f32 0.0, %v2873
        %v2875 = vpop.f32.mrb[0].mxu0
        %2876 = vmatprep.mubr.f32.mxu0 0.0
        %2877 = vmatmul.mubr.f32.gmra.mrb[0].mxu0 %v700
        %v2878 = vpop.f32.mrb[0].mxu0
        %v2879 = vadd.f32 0.0, %v2878
        %v2880 = vpop.f32.mrb[0].mxu0
        %2881 = vmatprep.mubr.f32.mxu0 0.0
        %2882 = vmatmul.mubr.f32.gmra.mrb[0].mxu0 %v703
        %v2883 = vpop.f32.mrb[0].mxu0
        %v2884 = vadd.f32 0.0, %v2883
        %v2885 = vpop.f32.mrb[0].mxu0
        %2886 = vmatprep.mubr.f32.mxu0 0.0
        %2887 = vmatmul.mubr.f32.gmra.mrb[0].mxu0 %v705
        %v2888 = vpop.f32.mrb[0].mxu0
        %v2889 = vadd.f32 0.0, %v2888
        %v2890 = vpop.f32.mrb[0].mxu0
        %2891 = vmatprep.mubr.f32.mxu0 0.0
        %2892 = vmatmul.mubr.f32.gmra.mrb[0].mxu0 %v708
        %v2893 = vpop.f32.mrb[0].mxu0
        %v2894 = vadd.f32 0.0, %v2893
        %v2895 = vpop.f32.mrb[0].mxu0
        %2896 = vmatprep.mubr.f32.mxu0 0.0
        %2897 = vmatmul.mubr.f32.gmra.mrb[0].mxu0 %v710
        %v2898 = vpop.f32.mrb[0].mxu0
        %v2899 = vadd.f32 0.0, %v2898
        %v2900 = vpop.f32.mrb[0].mxu0
        %2901 = vmatprep.mubr.f32.mxu0 0.0
        %2902 = vmatmul.mubr.f32.gmra.mrb[0].mxu0 %v713
        %v2903 = vpop.f32.mrb[0].mxu0
        %v2904 = vadd.f32 0.0, %v2903
        %v2905 = vpop.f32.mrb[0].mxu0
        %2906 = vmatprep.mubr.f32.mxu0 0.0
        %2907 = vmatmul.mubr.f32.gmra.mrb[0].mxu0 %v715
        %v2908 = vpop.f32.mrb[0].mxu0
        %v2909 = vadd.f32 0.0, %v2908
        %v2910 = vpop.f32.mrb[0].mxu0
        %2911 = vmatprep.mubr.f32.mxu0 0.0
        %2912 = vmatmul.mubr.f32.gmra.mrb[0].mxu0 %v718
        %v2913 = vpop.f32.mrb[0].mxu0
        %v2914 = vadd.f32 0.0, %v2913
        %v2915 = vpop.f32.mrb[0].mxu0
        %2916 = vmatprep.mubr.f32.mxu0 0.0
        %2917 = vmatmul.mubr.f32.gmra.mrb[0].mxu0 %v720
        %v2918 = vpop.f32.mrb[0].mxu0
        %v2919 = vadd.f32 0.0, %v2918
        %v2920 = vpop.f32.mrb[0].mxu0
        %2921 = vmatprep.mubr.f32.mxu0 0.0
        %2922 = vmatmul.mubr.f32.gmra.mrb[0].mxu0 %v723
        %v2923 = vpop.f32.mrb[0].mxu0
        %v2924 = vadd.f32 0.0, %v2923
        %v2925 = vpop.f32.mrb[0].mxu0
        %2926 = vmatprep.mubr.f32.mxu0 0.0
        %2927 = vmatmul.mubr.f32.gmra.mrb[0].mxu0 %v725
        %v2928 = vpop.f32.mrb[0].mxu0
        %v2929 = vadd.f32 0.0, %v2928
        %v2930 = vpop.f32.mrb[0].mxu0
        %2931 = vmatprep.mubr.f32.mxu0 0.0
        %2932 = vmatmul.mubr.f32.gmra.mrb[0].mxu0 %v728
        %v2933 = vpop.f32.mrb[0].mxu0
        %v2934 = vadd.f32 0.0, %v2933
        %v2935 = vpop.f32.mrb[0].mxu0
        %2936 = vmatprep.mubr.f32.mxu0 0.0
        %2937 = vmatmul.mubr.f32.gmra.mrb[0].mxu0 %v730
        %v2938 = vpop.f32.mrb[0].mxu0
        %v2939 = vadd.f32 0.0, %v2938
        %v2940 = vpop.f32.mrb[0].mxu0
        %2941 = vmatprep.mubr.f32.mxu0 0.0
        %2942 = vmatmul.mubr.f32.gmra.mrb[0].mxu0 %v733
        %v2943 = vpop.f32.mrb[0].mxu0
        %v2944 = vadd.f32 0.0, %v2943
        %v2945 = vpop.f32.mrb[0].mxu0
        %2946 = vmatprep.mubr.f32.mxu0 0.0
        %2947 = vmatmul.mubr.f32.gmra.mrb[0].mxu0 %v735
        %v2948 = vpop.f32.mrb[0].mxu0
        %v2949 = vadd.f32 0.0, %v2948
        %v2950 = vpop.f32.mrb[0].mxu0
        %2951 = vmatprep.mubr.f32.mxu0 0.0
        %2952 = vmatmul.mubr.f32.gmra.mrb[0].mxu0 %v738
        %v2953 = vpop.f32.mrb[0].mxu0
        %v2954 = vadd.f32 0.0, %v2953
        %v2955 = vpop.f32.mrb[0].mxu0
        %2956 = vmatprep.mubr.f32.mxu0 0.0
        %2957 = vmatmul.mubr.f32.gmra.mrb[0].mxu0 %v740
        %v2958 = vpop.f32.mrb[0].mxu0
        %v2959 = vadd.f32 0.0, %v2958
        %v2960 = vpop.f32.mrb[0].mxu0
        %2961 = vmatprep.mubr.f32.mxu0 0.0
        %2962 = vmatmul.mubr.f32.gmra.mrb[0].mxu0 %v743
        %v2963 = vpop.f32.mrb[0].mxu0
        %v2964 = vadd.f32 0.0, %v2963
        %v2965 = vpop.f32.mrb[0].mxu0
        %2966 = vmatprep.mubr.f32.mxu0 0.0
        %2967 = vmatmul.mubr.f32.gmra.mrb[0].mxu0 %v745
        %v2968 = vpop.f32.mrb[0].mxu0
        %v2969 = vadd.f32 0.0, %v2968
        %v2970 = vpop.f32.mrb[0].mxu0
        %2971 = vmatprep.mubr.f32.mxu0 0.0
        %2972 = vmatmul.mubr.f32.gmra.mrb[0].mxu0 %v748
        %v2973 = vpop.f32.mrb[0].mxu0
        %v2974 = vadd.f32 0.0, %v2973
        %v2975 = vpop.f32.mrb[0].mxu0
        %2976 = vmatprep.mubr.f32.mxu0 0.0
        %2977 = vmatmul.mubr.f32.gmra.mrb[0].mxu0 %v750
        %v2978 = vpop.f32.mrb[0].mxu0
        %v2979 = vadd.f32 0.0, %v2978
        %v2980 = vpop.f32.mrb[0].mxu0
        %2981 = vmatprep.mubr.f32.mxu0 0.0
        %2982 = vmatmul.mubr.f32.gmra.mrb[0].mxu0 %v1916
        %v2983 = vpop.f32.mrb[0].mxu0
        %v2984 = vadd.f32 0.0, %v2983
        %v2985 = vpop.f32.mrb[0].mxu0
        %2986 = vmatprep.mubr.f32.mxu0 0.0
        %2987 = vmatmul.mubr.f32.gmra.mrb[0].mxu0 %v1918
        %v2988 = vpop.f32.mrb[0].mxu0
        %v2989 = vadd.f32 0.0, %v2988
        %v2990 = vpop.f32.mrb[0].mxu0
        %2991 = vmatprep.mubr.f32.mxu0 0.0
        %2992 = vmatmul.mubr.f32.gmra.mrb[0].mxu0 %v2755
        %v2993 = vpop.f32.mrb[0].mxu0
        %v2994 = vadd.f32 0.0, %v2993
        %v2995 = vpop.f32.mrb[0].mxu0
        %2996 = vmatprep.mubr.f32.mxu0 0.0
        %2997 = vmatmul.mubr.f32.gmra.mrb[0].mxu0 %v2757
        %v2998 = vpop.f32.mrb[0].mxu0
        %v2999 = vadd.f32 0.0, %v2998
        %v3000 = vpop.f32.mrb[0].mxu0
        %3001 = vdwg.mxu0
        %v3002 = vadd.f32 %v2718, %v2844
        %v3003 = vadd.f32 %v2719, %v2849
        %v3004 = vadd.f32 %v2720, %v2854
        %v3005 = vadd.f32 %v2721, %v2859
        %v3006 = vadd.f32 %v2722, %v2864
        %v3007 = vadd.f32 %v2723, %v2869
        %v3008 = vadd.f32 %v2724, %v2874
        %v3009 = vadd.f32 %v2725, %v2879
        %v3010 = vadd.f32 %v2726, %v2884
        %v3011 = vadd.f32 %v2727, %v2889
        %v3012 = vadd.f32 %v2728, %v2894
        %v3013 = vadd.f32 %v2729, %v2899
        %v3014 = vadd.f32 %v2730, %v2904
        %v3015 = vadd.f32 %v2731, %v2909
        %v3016 = vadd.f32 %v2732, %v2914
        %v3017 = vadd.f32 %v2733, %v2919
        %v3018 = vadd.f32 %v2734, %v2924
        %v3019 = vadd.f32 %v2735, %v2929
        %v3020 = vadd.f32 %v2736, %v2934
        %v3021 = vadd.f32 %v2737, %v2939
        %v3022 = vadd.f32 %v2738, %v2944
        %v3023 = vadd.f32 %v2739, %v2949
        %v3024 = vadd.f32 %v2740, %v2954
        %v3025 = vadd.f32 %v2741, %v2959
        %v3026 = vadd.f32 %v2742, %v2964
        %v3027 = vadd.f32 %v2743, %v2969
        %v3028 = vadd.f32 %v2744, %v2974
        %v3029 = vadd.f32 %v2745, %v2979
        %v3030 = vadd.f32 %v2746, %v2984
        %v3031 = vadd.f32 %v2747, %v2989
        %v3032 = vadd.f32 %v2748, %v2994
        %v3033 = vadd.f32 %v2749, %v2999
        %v3034 = vrot.slane %v603, 2
        %v3035 = vrot.slane %v604, 2
        %v3036 = vsel %vm1250, %v3034, %v3035
        %v3037 = vrot.slane %v605, 2
        %v3038 = vsel %vm1250, %v3035, %v3037
        %s3041 = scalar_lea.vmem [#allocation9], 1024
        %v3042 = vld [vmem:[%s3041] sm:$0xff]
        %v3043 = vld [vmem:[%s3041 + $0x8] sm:$0xff]
        %v3044 = vld [vmem:[%s3041 + $0x10] sm:$0xff]
        %v3045 = vld [vmem:[%s3041 + $0x18] sm:$0xff]
        %v3046 = vld [vmem:[%s3041 + $0x20] sm:$0xff]
        %v3047 = vld [vmem:[%s3041 + $0x28] sm:$0xff]
        %v3048 = vld [vmem:[%s3041 + $0x30] sm:$0xff]
        %v3049 = vld [vmem:[%s3041 + $0x38] sm:$0xff]
        %v3050 = vld [vmem:[%s3041 + $0x40] sm:$0xff]
        %v3051 = vld [vmem:[%s3041 + $0x48] sm:$0xff]
        %v3052 = vld [vmem:[%s3041 + $0x50] sm:$0xff]
        %v3053 = vld [vmem:[%s3041 + $0x58] sm:$0xff]
        %v3054 = vld [vmem:[%s3041 + $0x60] sm:$0xff]
        %v3055 = vld [vmem:[%s3041 + $0x68] sm:$0xff]
        %v3056 = vld [vmem:[%s3041 + $0x70] sm:$0xff]
        %v3057 = vld [vmem:[%s3041 + $0x78] sm:$0xff]
        %3058 = vmatprep.subr.mxu0 0.0
        %3059 = vmatpush1.msra.mxu0 %v3042
        %3060 = vmatprep.subr.mxu0 0.0
        %3061 = vmatpush1.msra.mxu0 %v3043
        %3062 = vmatprep.subr.mxu0 0.0
        %3063 = vmatpush1.msra.mxu0 %v3044
        %3064 = vmatprep.subr.mxu0 0.0
        %3065 = vmatpush1.msra.mxu0 %v3045
        %3066 = vmatprep.subr.mxu0 0.0
        %3067 = vmatpush1.msra.mxu0 %v3046
        %3068 = vmatprep.subr.mxu0 0.0
        %3069 = vmatpush1.msra.mxu0 %v3047
        %3070 = vmatprep.subr.mxu0 0.0
        %3071 = vmatpush1.msra.mxu0 %v3048
        %3072 = vmatprep.subr.mxu0 0.0
        %3073 = vmatpush1.msra.mxu0 %v3049
        %3074 = vmatprep.subr.mxu0 0.0
        %3075 = vmatpush1.msra.mxu0 %v3050
        %3076 = vmatprep.subr.mxu0 0.0
        %3077 = vmatpush1.msra.mxu0 %v3051
        %3078 = vmatprep.subr.mxu0 0.0
        %3079 = vmatpush1.msra.mxu0 %v3052
        %3080 = vmatprep.subr.mxu0 0.0
        %3081 = vmatpush1.msra.mxu0 %v3053
        %3082 = vmatprep.subr.mxu0 0.0
        %3083 = vmatpush1.msra.mxu0 %v3054
        %3084 = vmatprep.subr.mxu0 0.0
        %3085 = vmatpush1.msra.mxu0 %v3055
        %3086 = vmatprep.subr.mxu0 0.0
        %3087 = vmatpush1.msra.mxu0 %v3056
        %3088 = vmatprep.subr.mxu0 0.0
        %3089 = vmatpush1.msra.mxu0 %v3057
        %3090 = vmatprep.subr.mxu0 0.0
        %3091 = vmatpush1.msra.mxu0 0.0
        %3092 = vmatprep.subr.mxu0 0.0
        %3093 = vmatpush1.msra.mxu0 0.0
        %3094 = vmatprep.subr.mxu0 0.0
        %3095 = vmatpush1.msra.mxu0 0.0
        %3096 = vmatprep.subr.mxu0 0.0
        %3097 = vmatpush1.msra.mxu0 0.0
        %3098 = vmatprep.subr.mxu0 0.0
        %3099 = vmatpush1.msra.mxu0 0.0
        %3100 = vmatprep.subr.mxu0 0.0
        %3101 = vmatpush1.msra.mxu0 0.0
        %3102 = vmatprep.subr.mxu0 0.0
        %3103 = vmatpush1.msra.mxu0 0.0
        %3104 = vmatprep.subr.mxu0 0.0
        %3105 = vmatpush1.msra.mxu0 0.0
        %3106 = vmatprep.subr.mxu0 0.0
        %3107 = vmatpush1.msra.mxu0 0.0
        %3108 = vmatprep.subr.mxu0 0.0
        %3109 = vmatpush1.msra.mxu0 0.0
        %3110 = vmatprep.subr.mxu0 0.0
        %3111 = vmatpush1.msra.mxu0 0.0
        %3112 = vmatprep.subr.mxu0 0.0
        %3113 = vmatpush1.msra.mxu0 0.0
        %3114 = vmatprep.subr.mxu0 0.0
        %3115 = vmatpush1.msra.mxu0 0.0
        %3116 = vmatprep.subr.mxu0 0.0
        %3117 = vmatpush1.msra.mxu0 0.0
        %3118 = vmatprep.subr.mxu0 0.0
        %3119 = vmatpush1.msra.mxu0 0.0
        %3120 = vmatprep.subr.mxu0 0.0
        %3121 = vmatpush1.msra.mxu0 0.0
        %3122 = vmatprep.mubr.f32.mxu0 0.0
        %3123 = vmatmul.mubr.f32.gmra.mrb[0].mxu0 %v1263
        %v3124 = vpop.f32.mrb[0].mxu0
        %v3125 = vadd.f32 0.0, %v3124
        %v3126 = vpop.f32.mrb[0].mxu0
        %3127 = vmatprep.mubr.f32.mxu0 0.0
        %3128 = vmatmul.mubr.f32.gmra.mrb[0].mxu0 %v1265
        %v3129 = vpop.f32.mrb[0].mxu0
        %v3130 = vadd.f32 0.0, %v3129
        %v3131 = vpop.f32.mrb[0].mxu0
        %3132 = vmatprep.mubr.f32.mxu0 0.0
        %3133 = vmatmul.mubr.f32.gmra.mrb[0].mxu0 %v1268
        %v3134 = vpop.f32.mrb[0].mxu0
        %v3135 = vadd.f32 0.0, %v3134
        %v3136 = vpop.f32.mrb[0].mxu0
        %3137 = vmatprep.mubr.f32.mxu0 0.0
        %3138 = vmatmul.mubr.f32.gmra.mrb[0].mxu0 %v1270
        %v3139 = vpop.f32.mrb[0].mxu0
        %v3140 = vadd.f32 0.0, %v3139
        %v3141 = vpop.f32.mrb[0].mxu0
        %3142 = vmatprep.mubr.f32.mxu0 0.0
        %3143 = vmatmul.mubr.f32.gmra.mrb[0].mxu0 %v1273
        %v3144 = vpop.f32.mrb[0].mxu0
        %v3145 = vadd.f32 0.0, %v3144
        %v3146 = vpop.f32.mrb[0].mxu0
        %3147 = vmatprep.mubr.f32.mxu0 0.0
        %3148 = vmatmul.mubr.f32.gmra.mrb[0].mxu0 %v1275
        %v3149 = vpop.f32.mrb[0].mxu0
        %v3150 = vadd.f32 0.0, %v3149
        %v3151 = vpop.f32.mrb[0].mxu0
        %3152 = vmatprep.mubr.f32.mxu0 0.0
        %3153 = vmatmul.mubr.f32.gmra.mrb[0].mxu0 %v1278
        %v3154 = vpop.f32.mrb[0].mxu0
        %v3155 = vadd.f32 0.0, %v3154
        %v3156 = vpop.f32.mrb[0].mxu0
        %3157 = vmatprep.mubr.f32.mxu0 0.0
        %3158 = vmatmul.mubr.f32.gmra.mrb[0].mxu0 %v1280
        %v3159 = vpop.f32.mrb[0].mxu0
        %v3160 = vadd.f32 0.0, %v3159
        %v3161 = vpop.f32.mrb[0].mxu0
        %3162 = vmatprep.mubr.f32.mxu0 0.0
        %3163 = vmatmul.mubr.f32.gmra.mrb[0].mxu0 %v1283
        %v3164 = vpop.f32.mrb[0].mxu0
        %v3165 = vadd.f32 0.0, %v3164
        %v3166 = vpop.f32.mrb[0].mxu0
        %3167 = vmatprep.mubr.f32.mxu0 0.0
        %3168 = vmatmul.mubr.f32.gmra.mrb[0].mxu0 %v1285
        %v3169 = vpop.f32.mrb[0].mxu0
        %v3170 = vadd.f32 0.0, %v3169
        %v3171 = vpop.f32.mrb[0].mxu0
        %3172 = vmatprep.mubr.f32.mxu0 0.0
        %3173 = vmatmul.mubr.f32.gmra.mrb[0].mxu0 %v1288
        %v3174 = vpop.f32.mrb[0].mxu0
        %v3175 = vadd.f32 0.0, %v3174
        %v3176 = vpop.f32.mrb[0].mxu0
        %3177 = vmatprep.mubr.f32.mxu0 0.0
        %3178 = vmatmul.mubr.f32.gmra.mrb[0].mxu0 %v1290
        %v3179 = vpop.f32.mrb[0].mxu0
        %v3180 = vadd.f32 0.0, %v3179
        %v3181 = vpop.f32.mrb[0].mxu0
        %3182 = vmatprep.mubr.f32.mxu0 0.0
        %3183 = vmatmul.mubr.f32.gmra.mrb[0].mxu0 %v1293
        %v3184 = vpop.f32.mrb[0].mxu0
        %v3185 = vadd.f32 0.0, %v3184
        %v3186 = vpop.f32.mrb[0].mxu0
        %3187 = vmatprep.mubr.f32.mxu0 0.0
        %3188 = vmatmul.mubr.f32.gmra.mrb[0].mxu0 %v1295
        %v3189 = vpop.f32.mrb[0].mxu0
        %v3190 = vadd.f32 0.0, %v3189
        %v3191 = vpop.f32.mrb[0].mxu0
        %3192 = vmatprep.mubr.f32.mxu0 0.0
        %3193 = vmatmul.mubr.f32.gmra.mrb[0].mxu0 %v1298
        %v3194 = vpop.f32.mrb[0].mxu0
        %v3195 = vadd.f32 0.0, %v3194
        %v3196 = vpop.f32.mrb[0].mxu0
        %3197 = vmatprep.mubr.f32.mxu0 0.0
        %3198 = vmatmul.mubr.f32.gmra.mrb[0].mxu0 %v1300
        %v3199 = vpop.f32.mrb[0].mxu0
        %v3200 = vadd.f32 0.0, %v3199
        %v3201 = vpop.f32.mrb[0].mxu0
        %3202 = vmatprep.mubr.f32.mxu0 0.0
        %3203 = vmatmul.mubr.f32.gmra.mrb[0].mxu0 %v1303
        %v3204 = vpop.f32.mrb[0].mxu0
        %v3205 = vadd.f32 0.0, %v3204
        %v3206 = vpop.f32.mrb[0].mxu0
        %3207 = vmatprep.mubr.f32.mxu0 0.0
        %3208 = vmatmul.mubr.f32.gmra.mrb[0].mxu0 %v1305
        %v3209 = vpop.f32.mrb[0].mxu0
        %v3210 = vadd.f32 0.0, %v3209
        %v3211 = vpop.f32.mrb[0].mxu0
        %3212 = vmatprep.mubr.f32.mxu0 0.0
        %3213 = vmatmul.mubr.f32.gmra.mrb[0].mxu0 %v1308
        %v3214 = vpop.f32.mrb[0].mxu0
        %v3215 = vadd.f32 0.0, %v3214
        %v3216 = vpop.f32.mrb[0].mxu0
        %3217 = vmatprep.mubr.f32.mxu0 0.0
        %3218 = vmatmul.mubr.f32.gmra.mrb[0].mxu0 %v1310
        %v3219 = vpop.f32.mrb[0].mxu0
        %v3220 = vadd.f32 0.0, %v3219
        %v3221 = vpop.f32.mrb[0].mxu0
        %3222 = vmatprep.mubr.f32.mxu0 0.0
        %3223 = vmatmul.mubr.f32.gmra.mrb[0].mxu0 %v1313
        %v3224 = vpop.f32.mrb[0].mxu0
        %v3225 = vadd.f32 0.0, %v3224
        %v3226 = vpop.f32.mrb[0].mxu0
        %3227 = vmatprep.mubr.f32.mxu0 0.0
        %3228 = vmatmul.mubr.f32.gmra.mrb[0].mxu0 %v1315
        %v3229 = vpop.f32.mrb[0].mxu0
        %v3230 = vadd.f32 0.0, %v3229
        %v3231 = vpop.f32.mrb[0].mxu0
        %3232 = vmatprep.mubr.f32.mxu0 0.0
        %3233 = vmatmul.mubr.f32.gmra.mrb[0].mxu0 %v1318
        %v3234 = vpop.f32.mrb[0].mxu0
        %v3235 = vadd.f32 0.0, %v3234
        %v3236 = vpop.f32.mrb[0].mxu0
        %3237 = vmatprep.mubr.f32.mxu0 0.0
        %3238 = vmatmul.mubr.f32.gmra.mrb[0].mxu0 %v1320
        %v3239 = vpop.f32.mrb[0].mxu0
        %v3240 = vadd.f32 0.0, %v3239
        %v3241 = vpop.f32.mrb[0].mxu0
        %3242 = vmatprep.mubr.f32.mxu0 0.0
        %3243 = vmatmul.mubr.f32.gmra.mrb[0].mxu0 %v1323
        %v3244 = vpop.f32.mrb[0].mxu0
        %v3245 = vadd.f32 0.0, %v3244
        %v3246 = vpop.f32.mrb[0].mxu0
        %3247 = vmatprep.mubr.f32.mxu0 0.0
        %3248 = vmatmul.mubr.f32.gmra.mrb[0].mxu0 %v1325
        %v3249 = vpop.f32.mrb[0].mxu0
        %v3250 = vadd.f32 0.0, %v3249
        %v3251 = vpop.f32.mrb[0].mxu0
        %3252 = vmatprep.mubr.f32.mxu0 0.0
        %3253 = vmatmul.mubr.f32.gmra.mrb[0].mxu0 %v1328
        %v3254 = vpop.f32.mrb[0].mxu0
        %v3255 = vadd.f32 0.0, %v3254
        %v3256 = vpop.f32.mrb[0].mxu0
        %3257 = vmatprep.mubr.f32.mxu0 0.0
        %3258 = vmatmul.mubr.f32.gmra.mrb[0].mxu0 %v1330
        %v3259 = vpop.f32.mrb[0].mxu0
        %v3260 = vadd.f32 0.0, %v3259
        %v3261 = vpop.f32.mrb[0].mxu0
        %3262 = vmatprep.mubr.f32.mxu0 0.0
        %3263 = vmatmul.mubr.f32.gmra.mrb[0].mxu0 %v2197
        %v3264 = vpop.f32.mrb[0].mxu0
        %v3265 = vadd.f32 0.0, %v3264
        %v3266 = vpop.f32.mrb[0].mxu0
        %3267 = vmatprep.mubr.f32.mxu0 0.0
        %3268 = vmatmul.mubr.f32.gmra.mrb[0].mxu0 %v2199
        %v3269 = vpop.f32.mrb[0].mxu0
        %v3270 = vadd.f32 0.0, %v3269
        %v3271 = vpop.f32.mrb[0].mxu0
        %3272 = vmatprep.mubr.f32.mxu0 0.0
        %3273 = vmatmul.mubr.f32.gmra.mrb[0].mxu0 %v3036
        %v3274 = vpop.f32.mrb[0].mxu0
        %v3275 = vadd.f32 0.0, %v3274
        %v3276 = vpop.f32.mrb[0].mxu0
        %3277 = vmatprep.mubr.f32.mxu0 0.0
        %3278 = vmatmul.mubr.f32.gmra.mrb[0].mxu0 %v3038
        %v3279 = vpop.f32.mrb[0].mxu0
        %v3280 = vadd.f32 0.0, %v3279
        %v3281 = vpop.f32.mrb[0].mxu0
        %3282 = vdwg.mxu0
        %v3283 = vadd.f32 %v3002, %v3125
        %v3284 = vadd.f32 %v3003, %v3130
        %v3285 = vadd.f32 %v3004, %v3135
        %v3286 = vadd.f32 %v3005, %v3140
        %v3287 = vadd.f32 %v3006, %v3145
        %v3288 = vadd.f32 %v3007, %v3150
        %v3289 = vadd.f32 %v3008, %v3155
        %v3290 = vadd.f32 %v3009, %v3160
        %v3291 = vadd.f32 %v3010, %v3165
        %v3292 = vadd.f32 %v3011, %v3170
        %v3293 = vadd.f32 %v3012, %v3175
        %v3294 = vadd.f32 %v3013, %v3180
        %v3295 = vadd.f32 %v3014, %v3185
        %v3296 = vadd.f32 %v3015, %v3190
        %v3297 = vadd.f32 %v3016, %v3195
        %v3298 = vadd.f32 %v3017, %v3200
        %v3299 = vadd.f32 %v3018, %v3205
        %v3300 = vadd.f32 %v3019, %v3210
        %v3301 = vadd.f32 %v3020, %v3215
        %v3302 = vadd.f32 %v3021, %v3220
        %v3303 = vadd.f32 %v3022, %v3225
        %v3304 = vadd.f32 %v3023, %v3230
        %v3305 = vadd.f32 %v3024, %v3235
        %v3306 = vadd.f32 %v3025, %v3240
        %v3307 = vadd.f32 %v3026, %v3245
        %v3308 = vadd.f32 %v3027, %v3250
        %v3309 = vadd.f32 %v3028, %v3255
        %v3310 = vadd.f32 %v3029, %v3260
        %v3311 = vadd.f32 %v3030, %v3265
        %v3312 = vadd.f32 %v3031, %v3270
        %v3313 = vadd.f32 %v3032, %v3275
        %v3314 = vadd.f32 %v3033, %v3280
        %3315 = vst [vmem:[%s310] sm:$0xff] %v3283
        %3316 = vst [vmem:[%s310 + $0x8] sm:$0xff] %v3284
        %3317 = vst [vmem:[%s310 + $0x10] sm:$0xff] %v3285
        %3318 = vst [vmem:[%s310 + $0x18] sm:$0xff] %v3286
        %3319 = vst [vmem:[%s310 + $0x20] sm:$0xff] %v3287
        %3320 = vst [vmem:[%s310 + $0x28] sm:$0xff] %v3288
        %3321 = vst [vmem:[%s310 + $0x30] sm:$0xff] %v3289
        %3322 = vst [vmem:[%s310 + $0x38] sm:$0xff] %v3290
        %3323 = vst [vmem:[%s310 + $0x40] sm:$0xff] %v3291
        %3324 = vst [vmem:[%s310 + $0x48] sm:$0xff] %v3292
        %3325 = vst [vmem:[%s310 + $0x50] sm:$0xff] %v3293
        %3326 = vst [vmem:[%s310 + $0x58] sm:$0xff] %v3294
        %3327 = vst [vmem:[%s310 + $0x60] sm:$0xff] %v3295
        %3328 = vst [vmem:[%s310 + $0x68] sm:$0xff] %v3296
        %3329 = vst [vmem:[%s310 + $0x70] sm:$0xff] %v3297
        %3330 = vst [vmem:[%s310 + $0x78] sm:$0xff] %v3298
        %3331 = vst [vmem:[%s310 + $0x80] sm:$0xff] %v3299
        %3332 = vst [vmem:[%s310 + $0x88] sm:$0xff] %v3300
        %3333 = vst [vmem:[%s310 + $0x90] sm:$0xff] %v3301
        %3334 = vst [vmem:[%s310 + $0x98] sm:$0xff] %v3302
        %3335 = vst [vmem:[%s310 + $0xa0] sm:$0xff] %v3303
        %3336 = vst [vmem:[%s310 + $0xa8] sm:$0xff] %v3304
        %3337 = vst [vmem:[%s310 + $0xb0] sm:$0xff] %v3305
        %3338 = vst [vmem:[%s310 + $0xb8] sm:$0xff] %v3306
        %3339 = vst [vmem:[%s310 + $0xc0] sm:$0xff] %v3307
        %3340 = vst [vmem:[%s310 + $0xc8] sm:$0xff] %v3308
        %3341 = vst [vmem:[%s310 + $0xd0] sm:$0xff] %v3309
        %3342 = vst [vmem:[%s310 + $0xd8] sm:$0xff] %v3310
        %3343 = vst [vmem:[%s310 + $0xe0] sm:$0xff] %v3311
        %3344 = vst [vmem:[%s310 + $0xe8] sm:$0xff] %v3312
        %3345 = vst [vmem:[%s310 + $0xf0] sm:$0xff] %v3313
        %3346 = vst [vmem:[%s310 + $0xf8] sm:$0xff] %v3314
        %v3347 = vadd.f32 %v3283, %v3284
        %v3348 = vadd.f32 %v3347, %v3285
        %v3349 = vadd.f32 %v3348, %v3286
        %v3350 = vadd.f32 %v3349, %v3287
        %v3351 = vadd.f32 %v3350, %v3288
        %v3352 = vadd.f32 %v3351, %v3289
        %v3353 = vadd.f32 %v3352, %v3290
        %v3354 = vadd.f32 %v3353, %v3291
        %v3355 = vadd.f32 %v3354, %v3292
        %v3356 = vadd.f32 %v3355, %v3293
        %v3357 = vadd.f32 %v3356, %v3294
        %v3358 = vadd.f32 %v3357, %v3295
        %v3359 = vadd.f32 %v3358, %v3296
        %v3360 = vadd.f32 %v3359, %v3297
        %v3361 = vadd.f32 %v3360, %v3298
        %v3362 = vadd.f32 %v3361, %v3299
        %v3363 = vadd.f32 %v3362, %v3300
        %v3364 = vadd.f32 %v3363, %v3301
        %v3365 = vadd.f32 %v3364, %v3302
        %v3366 = vadd.f32 %v3365, %v3303
        %v3367 = vadd.f32 %v3366, %v3304
        %v3368 = vadd.f32 %v3367, %v3305
        %v3369 = vadd.f32 %v3368, %v3306
        %v3370 = vadd.f32 %v3369, %v3307
        %v3371 = vadd.f32 %v3370, %v3308
        %v3372 = vadd.f32 %v3371, %v3309
        %v3373 = vadd.f32 %v3372, %v3310
        %v3374 = vadd.f32 %v3373, %v3311
        %v3375 = vadd.f32 %v3374, %v3312
        %v3376 = vadd.f32 %v3375, %v3313
        %v3377 = vadd.f32 %v3376, %v3314
        %v3378 = vrot.slane %v3377, 4
        %v3379 = vadd.f32 %v3377, %v3378
        %v3380 = vrot.slane %v3379, 2
        %v3381 = vadd.f32 %v3379, %v3380
        %v3382 = vrot.slane %v3381, 1
        %v3383 = vadd.f32 %v3381, %v3382
        %3384 = vst [vmem:[%s316] sm:$0x1] %v3383
        %v3385 = vmul.f32 %v3283, %v3283
        %v3386 = vmul.f32 %v3284, %v3284
        %v3387 = vmul.f32 %v3285, %v3285
        %v3388 = vmul.f32 %v3286, %v3286
        %v3389 = vmul.f32 %v3287, %v3287
        %v3390 = vmul.f32 %v3288, %v3288
        %v3391 = vmul.f32 %v3289, %v3289
        %v3392 = vmul.f32 %v3290, %v3290
        %v3393 = vmul.f32 %v3291, %v3291
        %v3394 = vmul.f32 %v3292, %v3292
        %v3395 = vmul.f32 %v3293, %v3293
        %v3396 = vmul.f32 %v3294, %v3294
        %v3397 = vmul.f32 %v3295, %v3295
        %v3398 = vmul.f32 %v3296, %v3296
        %v3399 = vmul.f32 %v3297, %v3297
        %v3400 = vmul.f32 %v3298, %v3298
        %v3401 = vmul.f32 %v3299, %v3299
        %v3402 = vmul.f32 %v3300, %v3300
        %v3403 = vmul.f32 %v3301, %v3301
        %v3404 = vmul.f32 %v3302, %v3302
        %v3405 = vmul.f32 %v3303, %v3303
        %v3406 = vmul.f32 %v3304, %v3304
        %v3407 = vmul.f32 %v3305, %v3305
        %v3408 = vmul.f32 %v3306, %v3306
        %v3409 = vmul.f32 %v3307, %v3307
        %v3410 = vmul.f32 %v3308, %v3308
        %v3411 = vmul.f32 %v3309, %v3309
        %v3412 = vmul.f32 %v3310, %v3310
        %v3413 = vmul.f32 %v3311, %v3311
        %v3414 = vmul.f32 %v3312, %v3312
        %v3415 = vmul.f32 %v3313, %v3313
        %v3416 = vmul.f32 %v3314, %v3314
        %v3417 = vadd.f32 %v3385, %v3386
        %v3418 = vadd.f32 %v3417, %v3387
        %v3419 = vadd.f32 %v3418, %v3388
        %v3420 = vadd.f32 %v3419, %v3389
        %v3421 = vadd.f32 %v3420, %v3390
        %v3422 = vadd.f32 %v3421, %v3391
        %v3423 = vadd.f32 %v3422, %v3392
        %v3424 = vadd.f32 %v3423, %v3393
        %v3425 = vadd.f32 %v3424, %v3394
        %v3426 = vadd.f32 %v3425, %v3395
        %v3427 = vadd.f32 %v3426, %v3396
        %v3428 = vadd.f32 %v3427, %v3397
        %v3429 = vadd.f32 %v3428, %v3398
        %v3430 = vadd.f32 %v3429, %v3399
        %v3431 = vadd.f32 %v3430, %v3400
        %v3432 = vadd.f32 %v3431, %v3401
        %v3433 = vadd.f32 %v3432, %v3402
        %v3434 = vadd.f32 %v3433, %v3403
        %v3435 = vadd.f32 %v3434, %v3404
        %v3436 = vadd.f32 %v3435, %v3405
        %v3437 = vadd.f32 %v3436, %v3406
        %v3438 = vadd.f32 %v3437, %v3407
        %v3439 = vadd.f32 %v3438, %v3408
        %v3440 = vadd.f32 %v3439, %v3409
        %v3441 = vadd.f32 %v3440, %v3410
        %v3442 = vadd.f32 %v3441, %v3411
        %v3443 = vadd.f32 %v3442, %v3412
        %v3444 = vadd.f32 %v3443, %v3413
        %v3445 = vadd.f32 %v3444, %v3414
        %v3446 = vadd.f32 %v3445, %v3415
        %v3447 = vadd.f32 %v3446, %v3416
        %v3448 = vrot.slane %v3447, 4
        %v3449 = vadd.f32 %v3447, %v3448
        %v3450 = vrot.slane %v3449, 2
        %v3451 = vadd.f32 %v3449, %v3450
        %v3452 = vrot.slane %v3451, 1
        %v3453 = vadd.f32 %v3451, %v3452
        %3454 = vst [vmem:[%s322] sm:$0x1] %v3453
        %s3455 = sand.u32 %s123, 1
        %s3456 = scalar_lea.sflag [#allocation5], %s3455
        %s3457 = sand.u32 %s123, 1
        %s3458 = smul.addr %s3457, 256
        %s3459 = scalar_lea.vmem [#allocation10], %s3458
        %s3460 = sand.u32 %s26, 1
        %s3461 = scalar_lea.sflag [#allocation12], %s3460
        %s3462 = sand.u32 %s149, 1
        %s3463 = scalar_lea.vmem [#allocation11], %s3462
        %s3464 = sand.u32 %s26, 1
        %s3465 = scalar_lea.sflag [#allocation12], %s3464
        %s3466 = sand.u32 %s175, 1
        %s3467 = scalar_lea.vmem [#allocation13], %s3466
        // Predicated region
        $region53: #{double_conv_forward.4} parent=35 // pred_check
          %p3468 = pneg %p133
        $region54: #{double_conv_forward.4} parent=35 // pred_check_branch
          %3470 = sbr.rel (%p3468) target = $region56
        $region55: #{double_conv_forward.4} parent=35 // pred_region
          %s3472 = ssub.s32 4096, 4096
          %3473 = vsyncadd %s3456, %s3472
          %s3474 = smul.addr %s26, 32
          %s3475 = smul.addr %s3474, 128
          %s3476 = scalar_lea.hbm %s4, %s3475
          %s3477 = sshll.u32 %s3459, 4
          %s3478 = int_to_ptr.vmem [resolvable:$true] %s3477
          %3483 = dma.vmem_to_hbm [thread:$0]  %s3478, 4096, %s3476, %s3456, 128, 128, 8
        $region56: #{double_conv_forward.4} parent=35 // pred_fallthru
          _
        // Predicated region
        $region57: #{double_conv_forward.4} parent=35 // pred_check
          %p3484 = pneg %p159
        $region58: #{double_conv_forward.4} parent=35 // pred_check_branch
          %3486 = sbr.rel (%p3484) target = $region60
        $region59: #{double_conv_forward.4} parent=35 // pred_region
          %s3488 = ssub.s32 16, 16
          %3489 = vsyncadd %s3461, %s3488
          %s3490 = smul.addr %s26, 16
          %s3491 = scalar_lea.hbm %s5, %s3490
          %s3493 = sshll.u32 %s3463, 4
          %s3494 = int_to_ptr.vmem [resolvable:$true] %s3493
          %3496 = dma.vmem_to_hbm [thread:$0]  %s3494, 16, %s3491, %s3461
        $region60: #{double_conv_forward.4} parent=35 // pred_fallthru
          _
        // Predicated region
        $region61: #{double_conv_forward.4} parent=35 // pred_check
          %p3497 = pneg %p185
        $region62: #{double_conv_forward.4} parent=35 // pred_check_branch
          %3499 = sbr.rel (%p3497) target = $region64
        $region63: #{double_conv_forward.4} parent=35 // pred_region
          %s3501 = ssub.s32 16, 16
          %3502 = vsyncadd %s3465, %s3501
          %s3503 = smul.addr %s26, 16
          %s3504 = scalar_lea.hbm %s6, %s3503
          %s3506 = sshll.u32 %s3467, 4
          %s3507 = int_to_ptr.vmem [resolvable:$true] %s3506
          %3509 = dma.vmem_to_hbm [thread:$0]  %s3507, 16, %s3504, %s3465
        $region64: #{double_conv_forward.4} parent=35 // pred_fallthru
          _
      $region36: #{double_conv_forward.4} parent=5 // pred_fallthru
        _
      %p3510 = scmp.le.s32.totalorder 2, %s21
      // Predicated region
      $region65: #{double_conv_forward.4} parent=5 // pred_check
        %p3511 = pneg %p3510
      $region66: #{double_conv_forward.4} parent=5 // pred_check_branch
        %3513 = sbr.rel (%p3511) target = $region68
      $region67: #{double_conv_forward.4} parent=5 // pred_region
        %s3514 = ssub.s32 %s21, 2
        // Predicated region
        $region69: #{double_conv_forward.4} parent=67 // pred_check
          %p3515 = pneg %p139
        $region70: #{double_conv_forward.4} parent=67 // pred_check_branch
          %3517 = sbr.rel (%p3515) target = $region72
        $region71: #{double_conv_forward.4} parent=67 // pred_region
          %s3518 = sand.u32 %s124, 1
          %s3519 = scalar_lea.sflag [#allocation5], %s3518
          %s3520 = sand.u32 %s124, 1
          %s3521 = smul.addr %s3520, 256
          %s3522 = scalar_lea.vmem [#allocation10], %s3521
          %3523 = dma.done %s3519, 4096
        $region72: #{double_conv_forward.4} parent=67 // pred_fallthru
          _
        // Predicated region
        $region73: #{double_conv_forward.4} parent=67 // pred_check
          %p3524 = pneg %p165
        $region74: #{double_conv_forward.4} parent=67 // pred_check_branch
          %3526 = sbr.rel (%p3524) target = $region76
        $region75: #{double_conv_forward.4} parent=67 // pred_region
          %s3527 = sand.u32 %s27, 1
          %s3528 = scalar_lea.sflag [#allocation12], %s3527
          %s3529 = sand.u32 %s150, 1
          %s3530 = scalar_lea.vmem [#allocation11], %s3529
          %3531 = dma.done %s3528, 16
        $region76: #{double_conv_forward.4} parent=67 // pred_fallthru
          _
        // Predicated region
        $region77: #{double_conv_forward.4} parent=67 // pred_check
          %p3532 = pneg %p191
        $region78: #{double_conv_forward.4} parent=67 // pred_check_branch
          %3534 = sbr.rel (%p3532) target = $region80
        $region79: #{double_conv_forward.4} parent=67 // pred_region
          %s3535 = sand.u32 %s27, 1
          %s3536 = scalar_lea.sflag [#allocation12], %s3535
          %s3537 = sand.u32 %s176, 1
          %s3538 = scalar_lea.vmem [#allocation13], %s3537
          %3539 = dma.done %s3536, 16
        $region80: #{double_conv_forward.4} parent=67 // pred_fallthru
          _
      $region68: #{double_conv_forward.4} parent=5 // pred_fallthru
        _
    $region6: #{double_conv_forward.4} parent=1 // loop_footer
      %s25 = sadd.s32 1, %s21
    $region7: #{double_conv_forward.4} parent=1 // loop_footer_branch
      %20 = sbr.rel target = $region3
    $region8: #{double_conv_forward.4} parent=1 // loop_exit
      _
    %3540 = vsyncpa [#allocation4], 1
    %s3541 = scalar_lea.sflag [#allocation4], 1
    %3542 = vsyncpa %s3541, 1
    %3543 = vsyncpa [#allocation7], 1
    %3544 = vsyncpa [#allocation5], 1
    %s3545 = scalar_lea.sflag [#allocation5], 1
    %3546 = vsyncpa %s3545, 1
    %3547 = vsyncpa [#allocation12], 1
    %s3548 = scalar_lea.sflag [#allocation12], 1
    %3549 = vsyncpa %s3548, 1

</llo_original>
